<compile_context>
chip_gen: v7x
topology: tpu7x:2x2x1
jax: 0.10.0
libtpu: 0.0.40
codegen_flags: <defaults>
</compile_context>

<pallas_src>
import functools
import math

import jax
import jax.numpy as jnp
from jax.experimental import pallas as pl
from jax.experimental.pallas import tpu as pltpu

# ----------------------- synthetic config -----------------------
IMG_SIZE = 16
PATCH = 8
IN_CH = 3
V_DIM = 32          # vision_width
V_DEPTH = 2
V_HEADS = 4
V_MLP = V_DIM * 4

T_DIM = 32          # text hidden size
T_DEPTH = 2
T_HEADS = 4
T_MLP = T_DIM * 4
VOCAB = 64
MAX_POS = 40
TYPE_VOCAB = 2
ENC_TOKEN_ID = VOCAB - 1     # stands in for tokenizer.enc_token_id
EMBED_DIM = 16               # BLIP projection dim (exists in __init__, unused by forward)

LN_EPS_VIT = 1e-6
LN_EPS_BERT = 1e-12


# ----------------------- in-kernel math helpers -----------------------
def _ln(x, g, b, eps):
    # f32 LayerNorm (keep stats / elementwise in f32 even with bf16 matmuls).
    mean = jnp.mean(x, axis=-1, keepdims=True)
    var = jnp.mean((x - mean) ** 2, axis=-1, keepdims=True)
    return (x - mean) * jax.lax.rsqrt(var + eps) * g + b


def _gelu(x):
    # tanh-form GELU in f32: transcendental lands on the EUP slot.
    c = math.sqrt(2.0 / math.pi)
    return 0.5 * x * (1.0 + jnp.tanh(c * (x + 0.044715 * x * x * x)))


def _mm(a, w_bf16):
    # bf16 operands on the MXU, f32 accumulation.
    return jnp.dot(a.astype(jnp.bfloat16), w_bf16,
                   preferred_element_type=jnp.float32)


def _attention(q, k, v, proj_w, num_heads, mask_add=None):
    """Batched multi-head attention fused with the output projection.

    q: (Sq, D) f32, k/v: (Sk, D) f32, proj_w: (D, Dout) bf16,
    mask_add: (1, Sk) additive f32 or None.
    Heads are batched in one dot_general (no per-head unroll); the context is
    assembled back to (Sq, D) and projected with ONE full-K matmul.
    """
    sq, d = q.shape
    sk = k.shape[0]
    dh = d // num_heads
    scale = 1.0 / math.sqrt(dh)
    qh = q.reshape(sq, num_heads, dh).astype(jnp.bfloat16)
    kh = k.reshape(sk, num_heads, dh).astype(jnp.bfloat16)
    vh = v.reshape(sk, num_heads, dh).astype(jnp.bfloat16)
    # scores: (H, Sq, Sk) — single batched dot_general, head dim is the batch dim
    s = jnp.einsum("qhd,khd->hqk", qh, kh,
                   preferred_element_type=jnp.float32) * scale
    if mask_add is not None:
        s = s + mask_add                         # (1, Sk) broadcasts over H, Sq
    s = s - jnp.max(s, axis=-1, keepdims=True)
    p = jnp.exp(s)
    p = p * pl.reciprocal(jnp.sum(p, axis=-1, keepdims=True), approx=True)
    # context: (Sq, H, dh) — last dim stays on lanes (layout-preserving)
    ctx = jnp.einsum("hqk,khd->qhd", p.astype(jnp.bfloat16), vh,
                     preferred_element_type=jnp.float32)
    ctx = ctx.reshape(sq, d)
    return jnp.dot(ctx.astype(jnp.bfloat16), proj_w,
                   preferred_element_type=jnp.float32)


# ----------------------- spec helpers -----------------------
def _act_spec(shape):
    # (B, S, D) activation: one (squeezed) batch row per grid step
    _, s, d = shape
    return pl.BlockSpec((None, s, d), lambda b: (b, 0, 0))


def _w_spec(w):
    # weight / bias (2D): full block, same index every step -> VMEM resident
    return pl.BlockSpec(w.shape, lambda b: (0, 0))


_PARALLEL = pltpu.CompilerParams(
    dimension_semantics=("parallel",),
    vmem_limit_bytes=64 * 1024 * 1024,
)


# ----------------------- fused ViT kernels -----------------------
def _vit_embed_kernel(patch_ref, w_ref, b_ref, cls_ref, pos_ref, o_ref):
    # patch_ref: (N, C*P*P); conv(kernel=stride=PATCH) == unfold + matmul
    pe = _mm(patch_ref[...], w_ref[...]) + b_ref[...]              # (N, D) f32
    # Build the full (N+1, D) tile and do ONE aligned full-block store.
    full = jnp.concatenate([cls_ref[...], pe], axis=0) + pos_ref[...]
    o_ref[...] = full.astype(o_ref.dtype)


def vit_embed(image, p):
    bsz, c, hh, ww = image.shape
    gh, gw = hh // PATCH, ww // PATCH
    n = gh * gw
    cpp = c * PATCH * PATCH
    patches = image.reshape(bsz, c, gh, PATCH, gw, PATCH)
    patches = patches.transpose(0, 2, 4, 1, 3, 5).reshape(bsz, n, cpp)
    in_specs = [
        pl.BlockSpec((None, n, cpp), lambda b: (b, 0, 0)),
        _w_spec(p["patch_w"]),
        _w_spec(p["patch_b"]),
        pl.BlockSpec((None, 1, V_DIM), lambda b: (0, 0, 0)),        # cls_token
        pl.BlockSpec((None, n + 1, V_DIM), lambda b: (0, 0, 0)),    # pos_embed
    ]
    return pl.pallas_call(
        _vit_embed_kernel,
        out_shape=jax.ShapeDtypeStruct((bsz, n + 1, V_DIM), jnp.float32),
        grid=(bsz,),
        in_specs=in_specs,
        out_specs=pl.BlockSpec((None, n + 1, V_DIM), lambda b: (b, 0, 0)),
        compiler_params=_PARALLEL,
    )(patches, p["patch_w"], p["patch_b"], p["cls_token"], p["pos_embed"])


def _vit_block_kernel(*refs, num_heads, eps, final_ln):
    if final_ln:
        (x_ref, ln1g, ln1b, qkvw, qkvb, projw, projb,
         ln2g, ln2b, fc1w, fc1b, fc2w, fc2b, fng, fnb, o_ref) = refs
    else:
        (x_ref, ln1g, ln1b, qkvw, qkvb, projw, projb,
         ln2g, ln2b, fc1w, fc1b, fc2w, fc2b, o_ref) = refs
        fng = fnb = None

    x = x_ref[...]                                                  # (S, D) f32
    d = x.shape[-1]
    h = _ln(x, ln1g[...], ln1b[...], eps)
    qkv = _mm(h, qkvw[...]) + qkvb[...]
    # vision self-attention mask is identically zero -> no mask path at all
    a = _attention(qkv[:, :d], qkv[:, d:2 * d], qkv[:, 2 * d:],
                   projw[...], num_heads) + projb[...]
    x = x + a
    h2 = _ln(x, ln2g[...], ln2b[...], eps)
    f = _gelu(_mm(h2, fc1w[...]) + fc1b[...])
    x = x + _mm(f, fc2w[...]) + fc2b[...]
    if final_ln:
        # final post-block LayerNorm fused into the last block kernel
        x = _ln(x, fng[...], fnb[...], eps)
    o_ref[...] = x.astype(o_ref.dtype)


def vit_block(x, p, final_norm=None):
    bsz, s, d = x.shape
    weights = (p["ln1_g"], p["ln1_b"], p["qkv_w"], p["qkv_b"],
               p["proj_w"], p["proj_b"], p["ln2_g"], p["ln2_b"],
               p["fc1_w"], p["fc1_b"], p["fc2_w"], p["fc2_b"])
    if final_norm is not None:
        weights = weights + final_norm
    in_specs = [_act_spec(x.shape)] + [_w_spec(w) for w in weights]
    return pl.pallas_call(
        functools.partial(_vit_block_kernel, num_heads=V_HEADS, eps=LN_EPS_VIT,
                          final_ln=final_norm is not None),
        out_shape=jax.ShapeDtypeStruct((bsz, s, d), jnp.float32),
        grid=(bsz,),
        in_specs=in_specs,
        out_specs=_act_spec((bsz, s, d)),
        compiler_params=_PARALLEL,
    )(x, *weights)


def vit_forward(image, p):
    x = vit_embed(image, p)
    last = len(p["blocks"]) - 1
    for i, bp in enumerate(p["blocks"]):
        fn = (p["norm_g"], p["norm_b"]) if i == last else None
        x = vit_block(x, bp, final_norm=fn)
    return x


# ----------------------- fused med-BERT kernels -----------------------
def _bert_layer_kernel(*refs, num_heads, eps, cross, fuse_emb):
    refs = list(refs)
    x_ref = refs.pop(0)
    mask_ref = refs.pop(0)
    enc_ref = refs.pop(0) if cross else None
    if fuse_emb:
        posty_ref = refs.pop(0)
        eg_ref = refs.pop(0)
        eb_ref = refs.pop(0)
    qkvw, qkvb, ow, ob, sag, sab = refs[:6]
    refs = refs[6:]
    if cross:
        cqw, cqb, ckvw, ckvb, cow, cob, cag, cab = refs[:8]
        refs = refs[8:]
    fiw, fib, fow, fob, flg, flb = refs[:6]
    refs = refs[6:]
    (o_ref,) = refs

    x = x_ref[...]                                  # (S, D) f32
    if fuse_emb:
        # embeddings: word_emb + (pos_emb + type_emb) then LN, fused here
        x = _ln(x + posty_ref[...], eg_ref[...], eb_ref[...], eps)
    mask = mask_ref[...]                            # (1, S) additive f32
    d = x.shape[-1]

    # self-attention (fused QKV) + output dense + post-LN
    qkv = _mm(x, qkvw[...]) + qkvb[...]
    a = _attention(qkv[:, :d], qkv[:, d:2 * d], qkv[:, 2 * d:],
                   ow[...], num_heads, mask_add=mask) + ob[...]
    x = _ln(x + a, sag[...], sab[...], eps)

    if cross:
        # cross-attention; image_atts == ones -> additive mask is 0, dropped
        enc = enc_ref[...]                          # (S_img, V_DIM)
        q = _mm(x, cqw[...]) + cqb[...]
        kv = _mm(enc, ckvw[...]) + ckvb[...]        # fused K|V
        a = _attention(q, kv[:, :d], kv[:, d:], cow[...], num_heads) + cob[...]
        x = _ln(x + a, cag[...], cab[...], eps)

    # FFN + post-LN
    f = _gelu(_mm(x, fiw[...]) + fib[...])
    f = _mm(f, fow[...]) + fob[...]
    o_ref[...] = _ln(x + f, flg[...], flb[...], eps).astype(o_ref.dtype)


def bert_layer(x, mask_add, p, enc_hidden=None, embed_ln=None):
    bsz, s, d = x.shape
    cross = enc_hidden is not None
    fuse_emb = embed_ln is not None

    args = [x, mask_add]
    in_specs = [_act_spec(x.shape),
                pl.BlockSpec((None, 1, s), lambda b: (b, 0, 0))]
    if cross:
        _, se, de = enc_hidden.shape
        args.append(enc_hidden)
        in_specs.append(pl.BlockSpec((None, se, de), lambda b: (b, 0, 0)))
    if fuse_emb:
        posty, eg, eb = embed_ln
        args.append(posty)
        in_specs.append(pl.BlockSpec((None, s, d), lambda b: (0, 0, 0)))
        args += [eg, eb]
        in_specs += [_w_spec(eg), _w_spec(eb)]

    weights = (p["sa_qkv_w"], p["sa_qkv_b"], p["sa_o_w"], p["sa_o_b"],
               p["sa_ln_g"], p["sa_ln_b"])
    if cross:
        weights += (p["ca_q_w"], p["ca_q_b"], p["ca_kv_w"], p["ca_kv_b"],
                    p["ca_o_w"], p["ca_o_b"], p["ca_ln_g"], p["ca_ln_b"])
    weights += (p["ffn_i_w"], p["ffn_i_b"], p["ffn_o_w"], p["ffn_o_b"],
                p["ffn_ln_g"], p["ffn_ln_b"])
    args += list(weights)
    in_specs += [_w_spec(w) for w in weights]

    return pl.pallas_call(
        functools.partial(_bert_layer_kernel, num_heads=T_HEADS,
                          eps=LN_EPS_BERT, cross=cross, fuse_emb=fuse_emb),
        out_shape=jax.ShapeDtypeStruct((bsz, s, d), jnp.float32),
        grid=(bsz,),
        in_specs=in_specs,
        out_specs=_act_spec((bsz, s, d)),
        compiler_params=_PARALLEL,
    )(*args)


def extended_mask(mask_2d):
    # HF / BLIP-med extended attention mask: (1 - m) * -10000, shape (B, 1, S)
    return ((1.0 - mask_2d.astype(jnp.float32)) * -10000.0)[:, None, :]


def bert_forward(input_ids, attention_mask, p, enc_hidden=None):
    bsz, seq = input_ids.shape
    mask_add = extended_mask(attention_mask)
    we = jnp.take(p["word_emb"], input_ids, axis=0)             # gather (wrapper glue)
    posty = (p["pos_emb"][:seq] + p["type_emb"][0])[None, :, :]  # (1, S, D)
    embed_ln = (posty, p["emb_ln_g"], p["emb_ln_b"])
    x = we
    for i, lp in enumerate(p["layers"]):
        x = bert_layer(x, mask_add, lp, enc_hidden=enc_hidden,
                       embed_ln=embed_ln if i == 0 else None)
    return x


# ----------------------- BLIP_Base.forward -----------------------
def blip_base_forward(image, input_ids, attention_mask, mode, params):
    assert mode in ("image", "text", "multimodal"), \
        "mode parameter must be image, text, or multimodal"
    if mode == "image":
        return vit_forward(image, params["visual"])
    if mode == "text":
        return bert_forward(input_ids, attention_mask, params["text"])
    # multimodal
    image_embeds = vit_forward(image, params["visual"])
    # image_atts = ones -> encoder extended mask is identically zero -> dropped
    ids = input_ids.at[:, 0].set(ENC_TOKEN_ID)   # text.input_ids[:,0] = enc_token_id
    return bert_forward(ids, attention_mask, params["text"],
                        enc_hidden=image_embeds)


# ----------------------- parameter preparation -----------------------
def prepare_params(params):
    """One-time weight prep: bf16 matmul weights (so DMAs are bf16), fused
    QKV / cross-KV weights, 1-D vectors reshaped to (1, D). LN params, biases
    and embeddings stay f32 (added after f32 accumulation)."""
    def bf(w): return w.astype(jnp.bfloat16)
    def r2(v): return v.reshape(1, -1)

    v = params["visual"]
    visual = dict(
        patch_w=bf(v["patch_w"]), patch_b=r2(v["patch_b"]),
        cls_token=v["cls_token"], pos_embed=v["pos_embed"],
        norm_g=r2(v["norm_g"]), norm_b=r2(v["norm_b"]),
        blocks=[dict(
            ln1_g=r2(b["ln1_g"]), ln1_b=r2(b["ln1_b"]),
            qkv_w=bf(b["qkv_w"]), qkv_b=r2(b["qkv_b"]),
            proj_w=bf(b["proj_w"]), proj_b=r2(b["proj_b"]),
            ln2_g=r2(b["ln2_g"]), ln2_b=r2(b["ln2_b"]),
            fc1_w=bf(b["fc1_w"]), fc1_b=r2(b["fc1_b"]),
            fc2_w=bf(b["fc2_w"]), fc2_b=r2(b["fc2_b"]),
        ) for b in v["blocks"]],
    )

    t = params["text"]
    text = dict(
        word_emb=t["word_emb"], pos_emb=t["pos_emb"], type_emb=t["type_emb"],
        emb_ln_g=r2(t["emb_ln_g"]), emb_ln_b=r2(t["emb_ln_b"]),
        layers=[dict(
            sa_qkv_w=bf(jnp.concatenate([l["sa_q_w"], l["sa_k_w"], l["sa_v_w"]],
                                        axis=1)),
            sa_qkv_b=r2(jnp.concatenate([l["sa_q_b"], l["sa_k_b"], l["sa_v_b"]])),
            sa_o_w=bf(l["sa_o_w"]), sa_o_b=r2(l["sa_o_b"]),
            sa_ln_g=r2(l["sa_ln_g"]), sa_ln_b=r2(l["sa_ln_b"]),
            ca_q_w=bf(l["ca_q_w"]), ca_q_b=r2(l["ca_q_b"]),
            ca_kv_w=bf(jnp.concatenate([l["ca_k_w"], l["ca_v_w"]], axis=1)),
            ca_kv_b=r2(jnp.concatenate([l["ca_k_b"], l["ca_v_b"]])),
            ca_o_w=bf(l["ca_o_w"]), ca_o_b=r2(l["ca_o_b"]),
            ca_ln_g=r2(l["ca_ln_g"]), ca_ln_b=r2(l["ca_ln_b"]),
            ffn_i_w=bf(l["ffn_i_w"]), ffn_i_b=r2(l["ffn_i_b"]),
            ffn_o_w=bf(l["ffn_o_w"]), ffn_o_b=r2(l["ffn_o_b"]),
            ffn_ln_g=r2(l["ffn_ln_g"]), ffn_ln_b=r2(l["ffn_ln_b"]),
        ) for l in t["layers"]],
    )
    return dict(visual=visual, text=text, proj=params["proj"])


# ----------------------- deterministic parameter init -----------------------
def init_params(key):
    keys = iter(jax.random.split(key, 512))

    def nrm(shape, scale=0.02):
        return jax.random.normal(next(keys), shape, jnp.float32) * scale

    def zeros(shape):
        return jnp.zeros(shape, jnp.float32)

    def ones(shape):
        return jnp.ones(shape, jnp.float32)

    visual = dict(
        patch_w=nrm((IN_CH * PATCH * PATCH, V_DIM)),
        patch_b=zeros((V_DIM,)),
        cls_token=nrm((1, 1, V_DIM)),
        pos_embed=nrm((1, (IMG_SIZE // PATCH) ** 2 + 1, V_DIM)),
        norm_g=ones((V_DIM,)), norm_b=zeros((V_DIM,)),
        blocks=[],
    )
    for _ in range(V_DEPTH):
        visual["blocks"].append(dict(
            ln1_g=ones((V_DIM,)), ln1_b=zeros((V_DIM,)),
            qkv_w=nrm((V_DIM, 3 * V_DIM)), qkv_b=zeros((3 * V_DIM,)),
            proj_w=nrm((V_DIM, V_DIM)), proj_b=zeros((V_DIM,)),
            ln2_g=ones((V_DIM,)), ln2_b=zeros((V_DIM,)),
            fc1_w=nrm((V_DIM, V_MLP)), fc1_b=zeros((V_MLP,)),
            fc2_w=nrm((V_MLP, V_DIM)), fc2_b=zeros((V_DIM,)),
        ))

    text = dict(
        word_emb=nrm((VOCAB, T_DIM)),
        pos_emb=nrm((MAX_POS, T_DIM)),
        type_emb=nrm((TYPE_VOCAB, T_DIM)),
        emb_ln_g=ones((T_DIM,)), emb_ln_b=zeros((T_DIM,)),
        layers=[],
    )
    for _ in range(T_DEPTH):
        text["layers"].append(dict(
            sa_q_w=nrm((T_DIM, T_DIM)), sa_q_b=zeros((T_DIM,)),
            sa_k_w=nrm((T_DIM, T_DIM)), sa_k_b=zeros((T_DIM,)),
            sa_v_w=nrm((T_DIM, T_DIM)), sa_v_b=zeros((T_DIM,)),
            sa_o_w=nrm((T_DIM, T_DIM)), sa_o_b=zeros((T_DIM,)),
            sa_ln_g=ones((T_DIM,)), sa_ln_b=zeros((T_DIM,)),
            ca_q_w=nrm((T_DIM, T_DIM)), ca_q_b=zeros((T_DIM,)),
            ca_k_w=nrm((V_DIM, T_DIM)), ca_k_b=zeros((T_DIM,)),   # encoder_width -> hidden
            ca_v_w=nrm((V_DIM, T_DIM)), ca_v_b=zeros((T_DIM,)),
            ca_o_w=nrm((T_DIM, T_DIM)), ca_o_b=zeros((T_DIM,)),
            ca_ln_g=ones((T_DIM,)), ca_ln_b=zeros((T_DIM,)),
            ffn_i_w=nrm((T_DIM, T_MLP)), ffn_i_b=zeros((T_MLP,)),
            ffn_o_w=nrm((T_MLP, T_DIM)), ffn_o_b=zeros((T_DIM,)),
            ffn_ln_g=ones((T_DIM,)), ffn_ln_b=zeros((T_DIM,)),
        ))

    # vision_proj / text_proj exist in __init__ but are not used by forward()
    proj = dict(
        vision_proj_w=nrm((V_DIM, EMBED_DIM)), vision_proj_b=zeros((EMBED_DIM,)),
        text_proj_w=nrm((T_DIM, EMBED_DIM)), text_proj_b=zeros((EMBED_DIM,)),
    )
    return dict(visual=visual, text=text, proj=proj)


# ----------------------- demo -----------------------
if __name__ == "__main__":
    key = jax.random.PRNGKey(0)
    pk, ik, tk = jax.random.split(key, 3)

    params = prepare_params(init_params(pk))          # bf16 weights, fused QKV/KV
    image = jax.random.normal(ik, (2, IN_CH, IMG_SIZE, IMG_SIZE), jnp.float32)
    input_ids = jax.random.randint(tk, (2, 8), 0, VOCAB - 2)   # pre-tokenized ids
    attention_mask = jnp.ones((2, 8), jnp.int32)

    fwd = jax.jit(blip_base_forward, static_argnums=(3,))

    out_img = fwd(image, input_ids, attention_mask, "image", params)
    out_txt = fwd(image, input_ids, attention_mask, "text", params)
    out_mm = fwd(image, input_ids, attention_mask, "multimodal", params)
    jax.block_until_ready((out_img, out_txt, out_mm))

    n_tokens = (IMG_SIZE // PATCH) ** 2 + 1
    assert out_img.shape == (2, n_tokens, V_DIM)
    assert out_txt.shape == (2, 8, T_DIM)
    assert out_mm.shape == (2, 8, T_DIM)
    assert all(bool(jnp.all(jnp.isfinite(o))) for o in (out_img, out_txt, out_mm))

    print("KERNEL_OK")
</pallas_src>

<mosaic_0001>
module attributes {stable_mosaic.version = 11 : i64} {
  func.func @_vit_embed_kernel(%arg0: i32, %arg1: memref<1x4x192xf32, #tpu.memory_space<vmem>>, %arg2: memref<192x32xbf16, #tpu.memory_space<vmem>>, %arg3: memref<1x32xf32, #tpu.memory_space<vmem>>, %arg4: memref<1x1x32xf32, #tpu.memory_space<vmem>>, %arg5: memref<1x5x32xf32, #tpu.memory_space<vmem>>, %arg6: memref<1x5x32xf32, #tpu.memory_space<vmem>>) attributes {dimension_semantics = [#tpu.dimension_semantics<parallel>], iteration_bounds = array<i64: 2>, scalar_prefetch = 0 : i64, scratch_operands = 0 : i64, tpu.core_type = #tpu.core_type<tc>, window_params = [{transform_indices = @transform_0, window_bounds = array<i64: 1, 4, 192>}, {pipeline_mode = #tpu.pipeline_mode<synchronous>, transform_indices = @transform_1, window_bounds = array<i64: 192, 32>}, {pipeline_mode = #tpu.pipeline_mode<synchronous>, transform_indices = @transform_2, window_bounds = array<i64: 1, 32>}, {pipeline_mode = #tpu.pipeline_mode<synchronous>, transform_indices = @transform_3, window_bounds = array<i64: 1, 1, 32>}, {pipeline_mode = #tpu.pipeline_mode<synchronous>, transform_indices = @transform_4, window_bounds = array<i64: 1, 5, 32>}, {transform_indices = @transform_5, window_bounds = array<i64: 1, 5, 32>}]} {
    %c0 = arith.constant 0 : index
    %c0_0 = arith.constant 0 : index
    %c0_1 = arith.constant 0 : index
    %0 = vector.load %arg1[%c0, %c0_0, %c0_1] : memref<1x4x192xf32, #tpu.memory_space<vmem>>, vector<1x4x192xf32>
    %1 = vector.shape_cast %0 : vector<1x4x192xf32> to vector<4x192xf32>
    %c0_2 = arith.constant 0 : index
    %c0_3 = arith.constant 0 : index
    %2 = vector.load %arg2[%c0_2, %c0_3] : memref<192x32xbf16, #tpu.memory_space<vmem>>, vector<192x32xbf16>
    %3 = arith.truncf %1 : vector<4x192xf32> to vector<4x192xbf16>
    %cst = arith.constant dense<0.000000e+00> : vector<4x32xf32>
    %4 = tpu.matmul %3, %2, %cst {dimension_numbers = #tpu.dot_dimension_numbers<[1], [0], [0], [1], [0, 0, 1, 1], [], []>} : vector<4x192xbf16>, vector<192x32xbf16>, vector<4x32xf32> -> vector<4x32xf32>
    %c0_4 = arith.constant 0 : index
    %c0_5 = arith.constant 0 : index
    %5 = vector.load %arg3[%c0_4, %c0_5] : memref<1x32xf32, #tpu.memory_space<vmem>>, vector<1x32xf32>
    %6 = vector.broadcast %5 : vector<1x32xf32> to vector<4x32xf32>
    %7 = arith.addf %4, %6 : vector<4x32xf32>
    %c0_6 = arith.constant 0 : index
    %c0_7 = arith.constant 0 : index
    %c0_8 = arith.constant 0 : index
    %8 = vector.load %arg4[%c0_6, %c0_7, %c0_8] : memref<1x1x32xf32, #tpu.memory_space<vmem>>, vector<1x1x32xf32>
    %9 = vector.shape_cast %8 : vector<1x1x32xf32> to vector<1x32xf32>
    %10 = tpu.concatenate %9, %7 in 0 : vector<1x32xf32>, vector<4x32xf32> -> vector<5x32xf32>
    %c0_9 = arith.constant 0 : index
    %c0_10 = arith.constant 0 : index
    %c0_11 = arith.constant 0 : index
    %11 = vector.load %arg5[%c0_9, %c0_10, %c0_11] : memref<1x5x32xf32, #tpu.memory_space<vmem>>, vector<1x5x32xf32>
    %12 = vector.shape_cast %11 : vector<1x5x32xf32> to vector<5x32xf32>
    %13 = arith.addf %10, %12 : vector<5x32xf32>
    %c0_12 = arith.constant 0 : index
    %c0_13 = arith.constant 0 : index
    %c0_14 = arith.constant 0 : index
    %14 = vector.load %arg6[%c0_12, %c0_13, %c0_14] : memref<1x5x32xf32, #tpu.memory_space<vmem>>, vector<1x5x32xf32>
    %15 = vector.shape_cast %14 : vector<1x5x32xf32> to vector<5x32xf32>
    %16 = vector.shape_cast %13 : vector<5x32xf32> to vector<1x5x32xf32>
    tpu.vector_store %arg6[%c0_12, %c0_13, %c0_14], %16 {strides = array<i32>} : memref<1x5x32xf32, #tpu.memory_space<vmem>>, vector<1x5x32xf32>,
    return
  }
  func.func @transform_0(%arg0: i32) -> (i32, i32, i32) {
    %c0_i32 = arith.constant 0 : i32
    %c0_i32_0 = arith.constant 0 : i32
    %c0_i32_1 = arith.constant 0 : i32
    return %arg0, %c0_i32, %c0_i32_0 : i32, i32, i32
  }
  func.func @transform_1(%arg0: i32) -> (i32, i32) {
    %c0_i32 = arith.constant 0 : i32
    %c0_i32_0 = arith.constant 0 : i32
    %c0_i32_1 = arith.constant 0 : i32
    return %c0_i32, %c0_i32_0 : i32, i32
  }
  func.func @transform_2(%arg0: i32) -> (i32, i32) {
    %c0_i32 = arith.constant 0 : i32
    %c0_i32_0 = arith.constant 0 : i32
    %c0_i32_1 = arith.constant 0 : i32
    return %c0_i32, %c0_i32_0 : i32, i32
  }
  func.func @transform_3(%arg0: i32) -> (i32, i32, i32) {
    %c0_i32 = arith.constant 0 : i32
    %c0_i32_0 = arith.constant 0 : i32
    %c0_i32_1 = arith.constant 0 : i32
    %c0_i32_2 = arith.constant 0 : i32
    return %c0_i32, %c0_i32_0, %c0_i32_1 : i32, i32, i32
  }
  func.func @transform_4(%arg0: i32) -> (i32, i32, i32) {
    %c0_i32 = arith.constant 0 : i32
    %c0_i32_0 = arith.constant 0 : i32
    %c0_i32_1 = arith.constant 0 : i32
    %c0_i32_2 = arith.constant 0 : i32
    return %c0_i32, %c0_i32_0, %c0_i32_1 : i32, i32, i32
  }
  func.func @transform_5(%arg0: i32) -> (i32, i32, i32) {
    %c0_i32 = arith.constant 0 : i32
    %c0_i32_0 = arith.constant 0 : i32
    %c0_i32_1 = arith.constant 0 : i32
    return %arg0, %c0_i32, %c0_i32_0 : i32, i32, i32
  }
}

module attributes {stable_mosaic.version = 11 : i64} {
  func.func @_vit_block_kernel(%arg0: i32, %arg1: memref<1x5x32xf32, #tpu.memory_space<vmem>>, %arg2: memref<1x32xf32, #tpu.memory_space<vmem>>, %arg3: memref<1x32xf32, #tpu.memory_space<vmem>>, %arg4: memref<32x96xbf16, #tpu.memory_space<vmem>>, %arg5: memref<1x96xf32, #tpu.memory_space<vmem>>, %arg6: memref<32x32xbf16, #tpu.memory_space<vmem>>, %arg7: memref<1x32xf32, #tpu.memory_space<vmem>>, %arg8: memref<1x32xf32, #tpu.memory_space<vmem>>, %arg9: memref<1x32xf32, #tpu.memory_space<vmem>>, %arg10: memref<32x128xbf16, #tpu.memory_space<vmem>>, %arg11: memref<1x128xf32, #tpu.memory_space<vmem>>, %arg12: memref<128x32xbf16, #tpu.memory_space<vmem>>, %arg13: memref<1x32xf32, #tpu.memory_space<vmem>>, %arg14: memref<1x5x32xf32, #tpu.memory_space<vmem>>) attributes {dimension_semantics = [#tpu.dimension_semantics<parallel>], iteration_bounds = array<i64: 2>, scalar_prefetch = 0 : i64, scratch_operands = 0 : i64, tpu.core_type = #tpu.core_type<tc>, window_params = [{transform_indices = @transform_0, window_bounds = array<i64: 1, 5, 32>}, {pipeline_mode = #tpu.pipeline_mode<synchronous>, transform_indices = @transform_1, window_bounds = array<i64: 1, 32>}, {pipeline_mode = #tpu.pipeline_mode<synchronous>, transform_indices = @transform_2, window_bounds = array<i64: 1, 32>}, {pipeline_mode = #tpu.pipeline_mode<synchronous>, transform_indices = @transform_3, window_bounds = array<i64: 32, 96>}, {pipeline_mode = #tpu.pipeline_mode<synchronous>, transform_indices = @transform_4, window_bounds = array<i64: 1, 96>}, {pipeline_mode = #tpu.pipeline_mode<synchronous>, transform_indices = @transform_5, window_bounds = array<i64: 32, 32>}, {pipeline_mode = #tpu.pipeline_mode<synchronous>, transform_indices = @transform_6, window_bounds = array<i64: 1, 32>}, {pipeline_mode = #tpu.pipeline_mode<synchronous>, transform_indices = @transform_7, window_bounds = array<i64: 1, 32>}, {pipeline_mode = #tpu.pipeline_mode<synchronous>, transform_indices = @transform_8, window_bounds = array<i64: 1, 32>}, {pipeline_mode = #tpu.pipeline_mode<synchronous>, transform_indices = @transform_9, window_bounds = array<i64: 32, 128>}, {pipeline_mode = #tpu.pipeline_mode<synchronous>, transform_indices = @transform_10, window_bounds = array<i64: 1, 128>}, {pipeline_mode = #tpu.pipeline_mode<synchronous>, transform_indices = @transform_11, window_bounds = array<i64: 128, 32>}, {pipeline_mode = #tpu.pipeline_mode<synchronous>, transform_indices = @transform_12, window_bounds = array<i64: 1, 32>}, {transform_indices = @transform_13, window_bounds = array<i64: 1, 5, 32>}]} {
    %c0 = arith.constant 0 : index
    %c0_0 = arith.constant 0 : index
    %c0_1 = arith.constant 0 : index
    %0 = vector.load %arg1[%c0, %c0_0, %c0_1] : memref<1x5x32xf32, #tpu.memory_space<vmem>>, vector<1x5x32xf32>
    %1 = vector.shape_cast %0 : vector<1x5x32xf32> to vector<5x32xf32>
    %c0_2 = arith.constant 0 : index
    %c0_3 = arith.constant 0 : index
    %2 = vector.load %arg2[%c0_2, %c0_3] : memref<1x32xf32, #tpu.memory_space<vmem>>, vector<1x32xf32>
    %c0_4 = arith.constant 0 : index
    %c0_5 = arith.constant 0 : index
    %3 = vector.load %arg3[%c0_4, %c0_5] : memref<1x32xf32, #tpu.memory_space<vmem>>, vector<1x32xf32>
    %cst = arith.constant dense<0.000000e+00> : vector<5xf32>
    %4 = vector.multi_reduction <add>, %1, %cst [1] : vector<5x32xf32> to vector<5xf32>
    %5 = vector.shape_cast %4 : vector<5xf32> to vector<5x1xf32>
    %cst_6 = arith.constant 3.200000e+01 : f32
    %6 = vector.broadcast %cst_6 : f32 to vector<5x1xf32>
    %7 = arith.divf %5, %6 : vector<5x1xf32>
    %8 = vector.broadcast %7 : vector<5x1xf32> to vector<5x32xf32>
    %9 = arith.subf %1, %8 : vector<5x32xf32>
    %10 = arith.mulf %9, %9 : vector<5x32xf32>
    %cst_7 = arith.constant dense<0.000000e+00> : vector<5xf32>
    %11 = vector.multi_reduction <add>, %10, %cst_7 [1] : vector<5x32xf32> to vector<5xf32>
    %12 = vector.shape_cast %11 : vector<5xf32> to vector<5x1xf32>
    %cst_8 = arith.constant 3.200000e+01 : f32
    %13 = vector.broadcast %cst_8 : f32 to vector<5x1xf32>
    %14 = arith.divf %12, %13 : vector<5x1xf32>
    %15 = vector.broadcast %7 : vector<5x1xf32> to vector<5x32xf32>
    %16 = arith.subf %1, %15 : vector<5x32xf32>
    %cst_9 = arith.constant 9.99999997E-7 : f32
    %17 = vector.broadcast %cst_9 : f32 to vector<5x1xf32>
    %18 = arith.addf %14, %17 : vector<5x1xf32>
    %19 = math.rsqrt %18 : vector<5x1xf32>
    %20 = vector.broadcast %19 : vector<5x1xf32> to vector<5x32xf32>
    %21 = arith.mulf %16, %20 : vector<5x32xf32>
    %22 = vector.broadcast %2 : vector<1x32xf32> to vector<5x32xf32>
    %23 = arith.mulf %21, %22 : vector<5x32xf32>
    %24 = vector.broadcast %3 : vector<1x32xf32> to vector<5x32xf32>
    %25 = arith.addf %23, %24 : vector<5x32xf32>
    %c0_10 = arith.constant 0 : index
    %c0_11 = arith.constant 0 : index
    %26 = vector.load %arg4[%c0_10, %c0_11] : memref<32x96xbf16, #tpu.memory_space<vmem>>, vector<32x96xbf16>
    %27 = arith.truncf %25 : vector<5x32xf32> to vector<5x32xbf16>
    %cst_12 = arith.constant dense<0.000000e+00> : vector<5x96xf32>
    %28 = tpu.matmul %27, %26, %cst_12 {dimension_numbers = #tpu.dot_dimension_numbers<[1], [0], [0], [1], [0, 0, 1, 1], [], []>} : vector<5x32xbf16>, vector<32x96xbf16>, vector<5x96xf32> -> vector<5x96xf32>
    %c0_13 = arith.constant 0 : index
    %c0_14 = arith.constant 0 : index
    %29 = vector.load %arg5[%c0_13, %c0_14] : memref<1x96xf32, #tpu.memory_space<vmem>>, vector<1x96xf32>
    %30 = vector.broadcast %29 : vector<1x96xf32> to vector<5x96xf32>
    %31 = arith.addf %28, %30 : vector<5x96xf32>
    %32 = vector.extract_strided_slice %31 {offsets = [0, 0], sizes = [5, 32], strides = [1, 1]} : vector<5x96xf32> to vector<5x32xf32>
    %33 = vector.extract_strided_slice %31 {offsets = [0, 32], sizes = [5, 32], strides = [1, 1]} : vector<5x96xf32> to vector<5x32xf32>
    %34 = vector.extract_strided_slice %31 {offsets = [0, 64], sizes = [5, 32], strides = [1, 1]} : vector<5x96xf32> to vector<5x32xf32>
    %c0_15 = arith.constant 0 : index
    %c0_16 = arith.constant 0 : index
    %35 = vector.load %arg6[%c0_15, %c0_16] : memref<32x32xbf16, #tpu.memory_space<vmem>>, vector<32x32xbf16>
    %36 = vector.shape_cast %32 : vector<5x32xf32> to vector<5x4x8xf32>
    %37 = arith.truncf %36 : vector<5x4x8xf32> to vector<5x4x8xbf16>
    %38 = vector.shape_cast %33 : vector<5x32xf32> to vector<5x4x8xf32>
    %39 = arith.truncf %38 : vector<5x4x8xf32> to vector<5x4x8xbf16>
    %40 = vector.shape_cast %34 : vector<5x32xf32> to vector<5x4x8xf32>
    %41 = arith.truncf %40 : vector<5x4x8xf32> to vector<5x4x8xbf16>
    "tpu.trace_start"() <{level = 10 : i32, message = "qhd,khd->hqk"}> : () -> ()
    %cst_17 = arith.constant dense<0.000000e+00> : vector<4x5x5xf32>
    %42 = tpu.matmul %37, %39, %cst_17 {dimension_numbers = #tpu.dot_dimension_numbers<[2], [2], [0], [0], [0, 1, 0, 0, 1, 0], [1], [1]>} : vector<5x4x8xbf16>, vector<5x4x8xbf16>, vector<4x5x5xf32> -> vector<4x5x5xf32>
    "tpu.trace_stop"() : () -> ()
    %cst_18 = arith.constant 0.353553385 : f32
    %43 = vector.broadcast %cst_18 : f32 to vector<4x5x5xf32>
    %44 = arith.mulf %42, %43 : vector<4x5x5xf32>
    %cst_19 = arith.constant dense<0xFF800000> : vector<4x5xf32>
    %45 = vector.multi_reduction <maximumf>, %44, %cst_19 [2] : vector<4x5x5xf32> to vector<4x5xf32>
    %46 = vector.shape_cast %45 : vector<4x5xf32> to vector<4x5x1xf32>
    %47 = vector.broadcast %46 : vector<4x5x1xf32> to vector<4x5x5xf32>
    %48 = arith.subf %44, %47 : vector<4x5x5xf32>
    %49 = math.exp %48 : vector<4x5x5xf32>
    %cst_20 = arith.constant dense<0.000000e+00> : vector<4x5xf32>
    %50 = vector.multi_reduction <add>, %49, %cst_20 [2] : vector<4x5x5xf32> to vector<4x5xf32>
    %51 = vector.shape_cast %50 : vector<4x5xf32> to vector<4x5x1xf32>
    %52 = tpu.reciprocal %51 {approx = true} : vector<4x5x1xf32> -> vector<4x5x1xf32>
    %53 = vector.broadcast %52 : vector<4x5x1xf32> to vector<4x5x5xf32>
    %54 = arith.mulf %49, %53 : vector<4x5x5xf32>
    %55 = arith.truncf %54 : vector<4x5x5xf32> to vector<4x5x5xbf16>
    "tpu.trace_start"() <{level = 10 : i32, message = "hqk,khd->qhd"}> : () -> ()
    %cst_21 = arith.constant dense<0.000000e+00> : vector<4x8x5xf32>
    %56 = tpu.matmul %41, %55, %cst_21 {dimension_numbers = #tpu.dot_dimension_numbers<[0], [2], [2], [1], [0, 1, 0, 2, 1, 1], [1], [0]>} : vector<5x4x8xbf16>, vector<4x5x5xbf16>, vector<4x8x5xf32> -> vector<4x8x5xf32>
    %57 = tpu.transpose %56, [2, 0, 1] : vector<4x8x5xf32> -> vector<5x4x8xf32>
    "tpu.trace_stop"() : () -> ()
    %58 = vector.shape_cast %57 : vector<5x4x8xf32> to vector<5x32xf32>
    %59 = arith.truncf %58 : vector<5x32xf32> to vector<5x32xbf16>
    %cst_22 = arith.constant dense<0.000000e+00> : vector<5x32xf32>
    %60 = tpu.matmul %59, %35, %cst_22 {dimension_numbers = #tpu.dot_dimension_numbers<[1], [0], [0], [1], [0, 0, 1, 1], [], []>} : vector<5x32xbf16>, vector<32x32xbf16>, vector<5x32xf32> -> vector<5x32xf32>
    %c0_23 = arith.constant 0 : index
    %c0_24 = arith.constant 0 : index
    %61 = vector.load %arg7[%c0_23, %c0_24] : memref<1x32xf32, #tpu.memory_space<vmem>>, vector<1x32xf32>
    %62 = vector.broadcast %61 : vector<1x32xf32> to vector<5x32xf32>
    %63 = arith.addf %60, %62 : vector<5x32xf32>
    %64 = arith.addf %1, %63 : vector<5x32xf32>
    %c0_25 = arith.constant 0 : index
    %c0_26 = arith.constant 0 : index
    %65 = vector.load %arg8[%c0_25, %c0_26] : memref<1x32xf32, #tpu.memory_space<vmem>>, vector<1x32xf32>
    %c0_27 = arith.constant 0 : index
    %c0_28 = arith.constant 0 : index
    %66 = vector.load %arg9[%c0_27, %c0_28] : memref<1x32xf32, #tpu.memory_space<vmem>>, vector<1x32xf32>
    %cst_29 = arith.constant dense<0.000000e+00> : vector<5xf32>
    %67 = vector.multi_reduction <add>, %64, %cst_29 [1] : vector<5x32xf32> to vector<5xf32>
    %68 = vector.shape_cast %67 : vector<5xf32> to vector<5x1xf32>
    %cst_30 = arith.constant 3.200000e+01 : f32
    %69 = vector.broadcast %cst_30 : f32 to vector<5x1xf32>
    %70 = arith.divf %68, %69 : vector<5x1xf32>
    %71 = vector.broadcast %70 : vector<5x1xf32> to vector<5x32xf32>
    %72 = arith.subf %64, %71 : vector<5x32xf32>
    %73 = arith.mulf %72, %72 : vector<5x32xf32>
    %cst_31 = arith.constant dense<0.000000e+00> : vector<5xf32>
    %74 = vector.multi_reduction <add>, %73, %cst_31 [1] : vector<5x32xf32> to vector<5xf32>
    %75 = vector.shape_cast %74 : vector<5xf32> to vector<5x1xf32>
    %cst_32 = arith.constant 3.200000e+01 : f32
    %76 = vector.broadcast %cst_32 : f32 to vector<5x1xf32>
    %77 = arith.divf %75, %76 : vector<5x1xf32>
    %78 = vector.broadcast %70 : vector<5x1xf32> to vector<5x32xf32>
    %79 = arith.subf %64, %78 : vector<5x32xf32>
    %cst_33 = arith.constant 9.99999997E-7 : f32
    %80 = vector.broadcast %cst_33 : f32 to vector<5x1xf32>
    %81 = arith.addf %77, %80 : vector<5x1xf32>
    %82 = math.rsqrt %81 : vector<5x1xf32>
    %83 = vector.broadcast %82 : vector<5x1xf32> to vector<5x32xf32>
    %84 = arith.mulf %79, %83 : vector<5x32xf32>
    %85 = vector.broadcast %65 : vector<1x32xf32> to vector<5x32xf32>
    %86 = arith.mulf %84, %85 : vector<5x32xf32>
    %87 = vector.broadcast %66 : vector<1x32xf32> to vector<5x32xf32>
    %88 = arith.addf %86, %87 : vector<5x32xf32>
    %c0_34 = arith.constant 0 : index
    %c0_35 = arith.constant 0 : index
    %89 = vector.load %arg10[%c0_34, %c0_35] : memref<32x128xbf16, #tpu.memory_space<vmem>>, vector<32x128xbf16>
    %90 = arith.truncf %88 : vector<5x32xf32> to vector<5x32xbf16>
    %cst_36 = arith.constant dense<0.000000e+00> : vector<5x128xf32>
    %91 = tpu.matmul %90, %89, %cst_36 {dimension_numbers = #tpu.dot_dimension_numbers<[1], [0], [0], [1], [0, 0, 1, 1], [], []>} : vector<5x32xbf16>, vector<32x128xbf16>, vector<5x128xf32> -> vector<5x128xf32>
    %c0_37 = arith.constant 0 : index
    %c0_38 = arith.constant 0 : index
    %92 = vector.load %arg11[%c0_37, %c0_38] : memref<1x128xf32, #tpu.memory_space<vmem>>, vector<1x128xf32>
    %93 = vector.broadcast %92 : vector<1x128xf32> to vector<5x128xf32>
    %94 = arith.addf %91, %93 : vector<5x128xf32>
    %cst_39 = arith.constant 5.000000e-01 : f32
    %95 = vector.broadcast %cst_39 : f32 to vector<5x128xf32>
    %96 = arith.mulf %95, %94 : vector<5x128xf32>
    %cst_40 = arith.constant 4.471500e-02 : f32
    %97 = vector.broadcast %cst_40 : f32 to vector<5x128xf32>
    %98 = arith.mulf %97, %94 : vector<5x128xf32>
    %99 = arith.mulf %98, %94 : vector<5x128xf32>
    %100 = arith.mulf %99, %94 : vector<5x128xf32>
    %101 = arith.addf %94, %100 : vector<5x128xf32>
    %cst_41 = arith.constant 0.797884583 : f32
    %102 = vector.broadcast %cst_41 : f32 to vector<5x128xf32>
    %103 = arith.mulf %102, %101 : vector<5x128xf32>
    %104 = math.tanh %103 : vector<5x128xf32>
    %cst_42 = arith.constant 1.000000e+00 : f32
    %105 = vector.broadcast %cst_42 : f32 to vector<5x128xf32>
    %106 = arith.addf %105, %104 : vector<5x128xf32>
    %107 = arith.mulf %96, %106 : vector<5x128xf32>
    %c0_43 = arith.constant 0 : index
    %c0_44 = arith.constant 0 : index
    %108 = vector.load %arg12[%c0_43, %c0_44] : memref<128x32xbf16, #tpu.memory_space<vmem>>, vector<128x32xbf16>
    %109 = arith.truncf %107 : vector<5x128xf32> to vector<5x128xbf16>
    %cst_45 = arith.constant dense<0.000000e+00> : vector<5x32xf32>
    %110 = tpu.matmul %109, %108, %cst_45 {dimension_numbers = #tpu.dot_dimension_numbers<[1], [0], [0], [1], [0, 0, 1, 1], [], []>} : vector<5x128xbf16>, vector<128x32xbf16>, vector<5x32xf32> -> vector<5x32xf32>
    %111 = arith.addf %64, %110 : vector<5x32xf32>
    %c0_46 = arith.constant 0 : index
    %c0_47 = arith.constant 0 : index
    %112 = vector.load %arg13[%c0_46, %c0_47] : memref<1x32xf32, #tpu.memory_space<vmem>>, vector<1x32xf32>
    %113 = vector.broadcast %112 : vector<1x32xf32> to vector<5x32xf32>
    %114 = arith.addf %111, %113 : vector<5x32xf32>
    %c0_48 = arith.constant 0 : index
    %c0_49 = arith.constant 0 : index
    %c0_50 = arith.constant 0 : index
    %115 = vector.load %arg14[%c0_48, %c0_49, %c0_50] : memref<1x5x32xf32, #tpu.memory_space<vmem>>, vector<1x5x32xf32>
    %116 = vector.shape_cast %115 : vector<1x5x32xf32> to vector<5x32xf32>
    %117 = vector.shape_cast %114 : vector<5x32xf32> to vector<1x5x32xf32>
    tpu.vector_store %arg14[%c0_48, %c0_49, %c0_50], %117 {strides = array<i32>} : memref<1x5x32xf32, #tpu.memory_space<vmem>>, vector<1x5x32xf32>,
    return
  }
  func.func @transform_0(%arg0: i32) -> (i32, i32, i32) {
    %c0_i32 = arith.constant 0 : i32
    %c0_i32_0 = arith.constant 0 : i32
    %c0_i32_1 = arith.constant 0 : i32
    return %arg0, %c0_i32, %c0_i32_0 : i32, i32, i32
  }
  func.func @transform_1(%arg0: i32) -> (i32, i32) {
    %c0_i32 = arith.constant 0 : i32
    %c0_i32_0 = arith.constant 0 : i32
    %c0_i32_1 = arith.constant 0 : i32
    return %c0_i32, %c0_i32_0 : i32, i32
  }
  func.func @transform_2(%arg0: i32) -> (i32, i32) {
    %c0_i32 = arith.constant 0 : i32
    %c0_i32_0 = arith.constant 0 : i32
    %c0_i32_1 = arith.constant 0 : i32
    return %c0_i32, %c0_i32_0 : i32, i32
  }
  func.func @transform_3(%arg0: i32) -> (i32, i32) {
    %c0_i32 = arith.constant 0 : i32
    %c0_i32_0 = arith.constant 0 : i32
    %c0_i32_1 = arith.constant 0 : i32
    return %c0_i32, %c0_i32_0 : i32, i32
  }
  func.func @transform_4(%arg0: i32) -> (i32, i32) {
    %c0_i32 = arith.constant 0 : i32
    %c0_i32_0 = arith.constant 0 : i32
    %c0_i32_1 = arith.constant 0 : i32
    return %c0_i32, %c0_i32_0 : i32, i32
  }
  func.func @transform_5(%arg0: i32) -> (i32, i32) {
    %c0_i32 = arith.constant 0 : i32
    %c0_i32_0 = arith.constant 0 : i32
    %c0_i32_1 = arith.constant 0 : i32
    return %c0_i32, %c0_i32_0 : i32, i32
  }
  func.func @transform_6(%arg0: i32) -> (i32, i32) {
    %c0_i32 = arith.constant 0 : i32
    %c0_i32_0 = arith.constant 0 : i32
    %c0_i32_1 = arith.constant 0 : i32
    return %c0_i32, %c0_i32_0 : i32, i32
  }
  func.func @transform_7(%arg0: i32) -> (i32, i32) {
    %c0_i32 = arith.constant 0 : i32
    %c0_i32_0 = arith.constant 0 : i32
    %c0_i32_1 = arith.constant 0 : i32
    return %c0_i32, %c0_i32_0 : i32, i32
  }
  func.func @transform_8(%arg0: i32) -> (i32, i32) {
    %c0_i32 = arith.constant 0 : i32
    %c0_i32_0 = arith.constant 0 : i32
    %c0_i32_1 = arith.constant 0 : i32
    return %c0_i32, %c0_i32_0 : i32, i32
  }
  func.func @transform_9(%arg0: i32) -> (i32, i32) {
    %c0_i32 = arith.constant 0 : i32
    %c0_i32_0 = arith.constant 0 : i32
    %c0_i32_1 = arith.constant 0 : i32
    return %c0_i32, %c0_i32_0 : i32, i32
  }
  func.func @transform_10(%arg0: i32) -> (i32, i32) {
    %c0_i32 = arith.constant 0 : i32
    %c0_i32_0 = arith.constant 0 : i32
    %c0_i32_1 = arith.constant 0 : i32
    return %c0_i32, %c0_i32_0 : i32, i32
  }
  func.func @transform_11(%arg0: i32) -> (i32, i32) {
    %c0_i32 = arith.constant 0 : i32
    %c0_i32_0 = arith.constant 0 : i32
    %c0_i32_1 = arith.constant 0 : i32
    return %c0_i32, %c0_i32_0 : i32, i32
  }
  func.func @transform_12(%arg0: i32) -> (i32, i32) {
    %c0_i32 = arith.constant 0 : i32
    %c0_i32_0 = arith.constant 0 : i32
    %c0_i32_1 = arith.constant 0 : i32
    return %c0_i32, %c0_i32_0 : i32, i32
  }
  func.func @transform_13(%arg0: i32) -> (i32, i32, i32) {
    %c0_i32 = arith.constant 0 : i32
    %c0_i32_0 = arith.constant 0 : i32
    %c0_i32_1 = arith.constant 0 : i32
    return %arg0, %c0_i32, %c0_i32_0 : i32, i32, i32
  }
}

module attributes {stable_mosaic.version = 11 : i64} {
  func.func @_vit_block_kernel(%arg0: i32, %arg1: memref<1x5x32xf32, #tpu.memory_space<vmem>>, %arg2: memref<1x32xf32, #tpu.memory_space<vmem>>, %arg3: memref<1x32xf32, #tpu.memory_space<vmem>>, %arg4: memref<32x96xbf16, #tpu.memory_space<vmem>>, %arg5: memref<1x96xf32, #tpu.memory_space<vmem>>, %arg6: memref<32x32xbf16, #tpu.memory_space<vmem>>, %arg7: memref<1x32xf32, #tpu.memory_space<vmem>>, %arg8: memref<1x32xf32, #tpu.memory_space<vmem>>, %arg9: memref<1x32xf32, #tpu.memory_space<vmem>>, %arg10: memref<32x128xbf16, #tpu.memory_space<vmem>>, %arg11: memref<1x128xf32, #tpu.memory_space<vmem>>, %arg12: memref<128x32xbf16, #tpu.memory_space<vmem>>, %arg13: memref<1x32xf32, #tpu.memory_space<vmem>>, %arg14: memref<1x32xf32, #tpu.memory_space<vmem>>, %arg15: memref<1x32xf32, #tpu.memory_space<vmem>>, %arg16: memref<1x5x32xf32, #tpu.memory_space<vmem>>) attributes {dimension_semantics = [#tpu.dimension_semantics<parallel>], iteration_bounds = array<i64: 2>, scalar_prefetch = 0 : i64, scratch_operands = 0 : i64, tpu.core_type = #tpu.core_type<tc>, window_params = [{transform_indices = @transform_0, window_bounds = array<i64: 1, 5, 32>}, {pipeline_mode = #tpu.pipeline_mode<synchronous>, transform_indices = @transform_1, window_bounds = array<i64: 1, 32>}, {pipeline_mode = #tpu.pipeline_mode<synchronous>, transform_indices = @transform_2, window_bounds = array<i64: 1, 32>}, {pipeline_mode = #tpu.pipeline_mode<synchronous>, transform_indices = @transform_3, window_bounds = array<i64: 32, 96>}, {pipeline_mode = #tpu.pipeline_mode<synchronous>, transform_indices = @transform_4, window_bounds = array<i64: 1, 96>}, {pipeline_mode = #tpu.pipeline_mode<synchronous>, transform_indices = @transform_5, window_bounds = array<i64: 32, 32>}, {pipeline_mode = #tpu.pipeline_mode<synchronous>, transform_indices = @transform_6, window_bounds = array<i64: 1, 32>}, {pipeline_mode = #tpu.pipeline_mode<synchronous>, transform_indices = @transform_7, window_bounds = array<i64: 1, 32>}, {pipeline_mode = #tpu.pipeline_mode<synchronous>, transform_indices = @transform_8, window_bounds = array<i64: 1, 32>}, {pipeline_mode = #tpu.pipeline_mode<synchronous>, transform_indices = @transform_9, window_bounds = array<i64: 32, 128>}, {pipeline_mode = #tpu.pipeline_mode<synchronous>, transform_indices = @transform_10, window_bounds = array<i64: 1, 128>}, {pipeline_mode = #tpu.pipeline_mode<synchronous>, transform_indices = @transform_11, window_bounds = array<i64: 128, 32>}, {pipeline_mode = #tpu.pipeline_mode<synchronous>, transform_indices = @transform_12, window_bounds = array<i64: 1, 32>}, {pipeline_mode = #tpu.pipeline_mode<synchronous>, transform_indices = @transform_13, window_bounds = array<i64: 1, 32>}, {pipeline_mode = #tpu.pipeline_mode<synchronous>, transform_indices = @transform_14, window_bounds = array<i64: 1, 32>}, {transform_indices = @transform_15, window_bounds = array<i64: 1, 5, 32>}]} {
    %c0 = arith.constant 0 : index
    %c0_0 = arith.constant 0 : index
    %c0_1 = arith.constant 0 : index
    %0 = vector.load %arg1[%c0, %c0_0, %c0_1] : memref<1x5x32xf32, #tpu.memory_space<vmem>>, vector<1x5x32xf32>
    %1 = vector.shape_cast %0 : vector<1x5x32xf32> to vector<5x32xf32>
    %c0_2 = arith.constant 0 : index
    %c0_3 = arith.constant 0 : index
    %2 = vector.load %arg2[%c0_2, %c0_3] : memref<1x32xf32, #tpu.memory_space<vmem>>, vector<1x32xf32>
    %c0_4 = arith.constant 0 : index
    %c0_5 = arith.constant 0 : index
    %3 = vector.load %arg3[%c0_4, %c0_5] : memref<1x32xf32, #tpu.memory_space<vmem>>, vector<1x32xf32>
    %cst = arith.constant dense<0.000000e+00> : vector<5xf32>
    %4 = vector.multi_reduction <add>, %1, %cst [1] : vector<5x32xf32> to vector<5xf32>
    %5 = vector.shape_cast %4 : vector<5xf32> to vector<5x1xf32>
    %cst_6 = arith.constant 3.200000e+01 : f32
    %6 = vector.broadcast %cst_6 : f32 to vector<5x1xf32>
    %7 = arith.divf %5, %6 : vector<5x1xf32>
    %8 = vector.broadcast %7 : vector<5x1xf32> to vector<5x32xf32>
    %9 = arith.subf %1, %8 : vector<5x32xf32>
    %10 = arith.mulf %9, %9 : vector<5x32xf32>
    %cst_7 = arith.constant dense<0.000000e+00> : vector<5xf32>
    %11 = vector.multi_reduction <add>, %10, %cst_7 [1] : vector<5x32xf32> to vector<5xf32>
    %12 = vector.shape_cast %11 : vector<5xf32> to vector<5x1xf32>
    %cst_8 = arith.constant 3.200000e+01 : f32
    %13 = vector.broadcast %cst_8 : f32 to vector<5x1xf32>
    %14 = arith.divf %12, %13 : vector<5x1xf32>
    %15 = vector.broadcast %7 : vector<5x1xf32> to vector<5x32xf32>
    %16 = arith.subf %1, %15 : vector<5x32xf32>
    %cst_9 = arith.constant 9.99999997E-7 : f32
    %17 = vector.broadcast %cst_9 : f32 to vector<5x1xf32>
    %18 = arith.addf %14, %17 : vector<5x1xf32>
    %19 = math.rsqrt %18 : vector<5x1xf32>
    %20 = vector.broadcast %19 : vector<5x1xf32> to vector<5x32xf32>
    %21 = arith.mulf %16, %20 : vector<5x32xf32>
    %22 = vector.broadcast %2 : vector<1x32xf32> to vector<5x32xf32>
    %23 = arith.mulf %21, %22 : vector<5x32xf32>
    %24 = vector.broadcast %3 : vector<1x32xf32> to vector<5x32xf32>
    %25 = arith.addf %23, %24 : vector<5x32xf32>
    %c0_10 = arith.constant 0 : index
    %c0_11 = arith.constant 0 : index
    %26 = vector.load %arg4[%c0_10, %c0_11] : memref<32x96xbf16, #tpu.memory_space<vmem>>, vector<32x96xbf16>
    %27 = arith.truncf %25 : vector<5x32xf32> to vector<5x32xbf16>
    %cst_12 = arith.constant dense<0.000000e+00> : vector<5x96xf32>
    %28 = tpu.matmul %27, %26, %cst_12 {dimension_numbers = #tpu.dot_dimension_numbers<[1], [0], [0], [1], [0, 0, 1, 1], [], []>} : vector<5x32xbf16>, vector<32x96xbf16>, vector<5x96xf32> -> vector<5x96xf32>
    %c0_13 = arith.constant 0 : index
    %c0_14 = arith.constant 0 : index
    %29 = vector.load %arg5[%c0_13, %c0_14] : memref<1x96xf32, #tpu.memory_space<vmem>>, vector<1x96xf32>
    %30 = vector.broadcast %29 : vector<1x96xf32> to vector<5x96xf32>
    %31 = arith.addf %28, %30 : vector<5x96xf32>
    %32 = vector.extract_strided_slice %31 {offsets = [0, 0], sizes = [5, 32], strides = [1, 1]} : vector<5x96xf32> to vector<5x32xf32>
    %33 = vector.extract_strided_slice %31 {offsets = [0, 32], sizes = [5, 32], strides = [1, 1]} : vector<5x96xf32> to vector<5x32xf32>
    %34 = vector.extract_strided_slice %31 {offsets = [0, 64], sizes = [5, 32], strides = [1, 1]} : vector<5x96xf32> to vector<5x32xf32>
    %c0_15 = arith.constant 0 : index
    %c0_16 = arith.constant 0 : index
    %35 = vector.load %arg6[%c0_15, %c0_16] : memref<32x32xbf16, #tpu.memory_space<vmem>>, vector<32x32xbf16>
    %36 = vector.shape_cast %32 : vector<5x32xf32> to vector<5x4x8xf32>
    %37 = arith.truncf %36 : vector<5x4x8xf32> to vector<5x4x8xbf16>
    %38 = vector.shape_cast %33 : vector<5x32xf32> to vector<5x4x8xf32>
    %39 = arith.truncf %38 : vector<5x4x8xf32> to vector<5x4x8xbf16>
    %40 = vector.shape_cast %34 : vector<5x32xf32> to vector<5x4x8xf32>
    %41 = arith.truncf %40 : vector<5x4x8xf32> to vector<5x4x8xbf16>
    "tpu.trace_start"() <{level = 10 : i32, message = "qhd,khd->hqk"}> : () -> ()
    %cst_17 = arith.constant dense<0.000000e+00> : vector<4x5x5xf32>
    %42 = tpu.matmul %37, %39, %cst_17 {dimension_numbers = #tpu.dot_dimension_numbers<[2], [2], [0], [0], [0, 1, 0, 0, 1, 0], [1], [1]>} : vector<5x4x8xbf16>, vector<5x4x8xbf16>, vector<4x5x5xf32> -> vector<4x5x5xf32>
    "tpu.trace_stop"() : () -> ()
    %cst_18 = arith.constant 0.353553385 : f32
    %43 = vector.broadcast %cst_18 : f32 to vector<4x5x5xf32>
    %44 = arith.mulf %42, %43 : vector<4x5x5xf32>
    %cst_19 = arith.constant dense<0xFF800000> : vector<4x5xf32>
    %45 = vector.multi_reduction <maximumf>, %44, %cst_19 [2] : vector<4x5x5xf32> to vector<4x5xf32>
    %46 = vector.shape_cast %45 : vector<4x5xf32> to vector<4x5x1xf32>
    %47 = vector.broadcast %46 : vector<4x5x1xf32> to vector<4x5x5xf32>
    %48 = arith.subf %44, %47 : vector<4x5x5xf32>
    %49 = math.exp %48 : vector<4x5x5xf32>
    %cst_20 = arith.constant dense<0.000000e+00> : vector<4x5xf32>
    %50 = vector.multi_reduction <add>, %49, %cst_20 [2] : vector<4x5x5xf32> to vector<4x5xf32>
    %51 = vector.shape_cast %50 : vector<4x5xf32> to vector<4x5x1xf32>
    %52 = tpu.reciprocal %51 {approx = true} : vector<4x5x1xf32> -> vector<4x5x1xf32>
    %53 = vector.broadcast %52 : vector<4x5x1xf32> to vector<4x5x5xf32>
    %54 = arith.mulf %49, %53 : vector<4x5x5xf32>
    %55 = arith.truncf %54 : vector<4x5x5xf32> to vector<4x5x5xbf16>
    "tpu.trace_start"() <{level = 10 : i32, message = "hqk,khd->qhd"}> : () -> ()
    %cst_21 = arith.constant dense<0.000000e+00> : vector<4x8x5xf32>
    %56 = tpu.matmul %41, %55, %cst_21 {dimension_numbers = #tpu.dot_dimension_numbers<[0], [2], [2], [1], [0, 1, 0, 2, 1, 1], [1], [0]>} : vector<5x4x8xbf16>, vector<4x5x5xbf16>, vector<4x8x5xf32> -> vector<4x8x5xf32>
    %57 = tpu.transpose %56, [2, 0, 1] : vector<4x8x5xf32> -> vector<5x4x8xf32>
    "tpu.trace_stop"() : () -> ()
    %58 = vector.shape_cast %57 : vector<5x4x8xf32> to vector<5x32xf32>
    %59 = arith.truncf %58 : vector<5x32xf32> to vector<5x32xbf16>
    %cst_22 = arith.constant dense<0.000000e+00> : vector<5x32xf32>
    %60 = tpu.matmul %59, %35, %cst_22 {dimension_numbers = #tpu.dot_dimension_numbers<[1], [0], [0], [1], [0, 0, 1, 1], [], []>} : vector<5x32xbf16>, vector<32x32xbf16>, vector<5x32xf32> -> vector<5x32xf32>
    %c0_23 = arith.constant 0 : index
    %c0_24 = arith.constant 0 : index
    %61 = vector.load %arg7[%c0_23, %c0_24] : memref<1x32xf32, #tpu.memory_space<vmem>>, vector<1x32xf32>
    %62 = vector.broadcast %61 : vector<1x32xf32> to vector<5x32xf32>
    %63 = arith.addf %60, %62 : vector<5x32xf32>
    %64 = arith.addf %1, %63 : vector<5x32xf32>
    %c0_25 = arith.constant 0 : index
    %c0_26 = arith.constant 0 : index
    %65 = vector.load %arg8[%c0_25, %c0_26] : memref<1x32xf32, #tpu.memory_space<vmem>>, vector<1x32xf32>
    %c0_27 = arith.constant 0 : index
    %c0_28 = arith.constant 0 : index
    %66 = vector.load %arg9[%c0_27, %c0_28] : memref<1x32xf32, #tpu.memory_space<vmem>>, vector<1x32xf32>
    %cst_29 = arith.constant dense<0.000000e+00> : vector<5xf32>
    %67 = vector.multi_reduction <add>, %64, %cst_29 [1] : vector<5x32xf32> to vector<5xf32>
    %68 = vector.shape_cast %67 : vector<5xf32> to vector<5x1xf32>
    %cst_30 = arith.constant 3.200000e+01 : f32
    %69 = vector.broadcast %cst_30 : f32 to vector<5x1xf32>
    %70 = arith.divf %68, %69 : vector<5x1xf32>
    %71 = vector.broadcast %70 : vector<5x1xf32> to vector<5x32xf32>
    %72 = arith.subf %64, %71 : vector<5x32xf32>
    %73 = arith.mulf %72, %72 : vector<5x32xf32>
    %cst_31 = arith.constant dense<0.000000e+00> : vector<5xf32>
    %74 = vector.multi_reduction <add>, %73, %cst_31 [1] : vector<5x32xf32> to vector<5xf32>
    %75 = vector.shape_cast %74 : vector<5xf32> to vector<5x1xf32>
    %cst_32 = arith.constant 3.200000e+01 : f32
    %76 = vector.broadcast %cst_32 : f32 to vector<5x1xf32>
    %77 = arith.divf %75, %76 : vector<5x1xf32>
    %78 = vector.broadcast %70 : vector<5x1xf32> to vector<5x32xf32>
    %79 = arith.subf %64, %78 : vector<5x32xf32>
    %cst_33 = arith.constant 9.99999997E-7 : f32
    %80 = vector.broadcast %cst_33 : f32 to vector<5x1xf32>
    %81 = arith.addf %77, %80 : vector<5x1xf32>
    %82 = math.rsqrt %81 : vector<5x1xf32>
    %83 = vector.broadcast %82 : vector<5x1xf32> to vector<5x32xf32>
    %84 = arith.mulf %79, %83 : vector<5x32xf32>
    %85 = vector.broadcast %65 : vector<1x32xf32> to vector<5x32xf32>
    %86 = arith.mulf %84, %85 : vector<5x32xf32>
    %87 = vector.broadcast %66 : vector<1x32xf32> to vector<5x32xf32>
    %88 = arith.addf %86, %87 : vector<5x32xf32>
    %c0_34 = arith.constant 0 : index
    %c0_35 = arith.constant 0 : index
    %89 = vector.load %arg10[%c0_34, %c0_35] : memref<32x128xbf16, #tpu.memory_space<vmem>>, vector<32x128xbf16>
    %90 = arith.truncf %88 : vector<5x32xf32> to vector<5x32xbf16>
    %cst_36 = arith.constant dense<0.000000e+00> : vector<5x128xf32>
    %91 = tpu.matmul %90, %89, %cst_36 {dimension_numbers = #tpu.dot_dimension_numbers<[1], [0], [0], [1], [0, 0, 1, 1], [], []>} : vector<5x32xbf16>, vector<32x128xbf16>, vector<5x128xf32> -> vector<5x128xf32>
    %c0_37 = arith.constant 0 : index
    %c0_38 = arith.constant 0 : index
    %92 = vector.load %arg11[%c0_37, %c0_38] : memref<1x128xf32, #tpu.memory_space<vmem>>, vector<1x128xf32>
    %93 = vector.broadcast %92 : vector<1x128xf32> to vector<5x128xf32>
    %94 = arith.addf %91, %93 : vector<5x128xf32>
    %cst_39 = arith.constant 5.000000e-01 : f32
    %95 = vector.broadcast %cst_39 : f32 to vector<5x128xf32>
    %96 = arith.mulf %95, %94 : vector<5x128xf32>
    %cst_40 = arith.constant 4.471500e-02 : f32
    %97 = vector.broadcast %cst_40 : f32 to vector<5x128xf32>
    %98 = arith.mulf %97, %94 : vector<5x128xf32>
    %99 = arith.mulf %98, %94 : vector<5x128xf32>
    %100 = arith.mulf %99, %94 : vector<5x128xf32>
    %101 = arith.addf %94, %100 : vector<5x128xf32>
    %cst_41 = arith.constant 0.797884583 : f32
    %102 = vector.broadcast %cst_41 : f32 to vector<5x128xf32>
    %103 = arith.mulf %102, %101 : vector<5x128xf32>
    %104 = math.tanh %103 : vector<5x128xf32>
    %cst_42 = arith.constant 1.000000e+00 : f32
    %105 = vector.broadcast %cst_42 : f32 to vector<5x128xf32>
    %106 = arith.addf %105, %104 : vector<5x128xf32>
    %107 = arith.mulf %96, %106 : vector<5x128xf32>
    %c0_43 = arith.constant 0 : index
    %c0_44 = arith.constant 0 : index
    %108 = vector.load %arg12[%c0_43, %c0_44] : memref<128x32xbf16, #tpu.memory_space<vmem>>, vector<128x32xbf16>
    %109 = arith.truncf %107 : vector<5x128xf32> to vector<5x128xbf16>
    %cst_45 = arith.constant dense<0.000000e+00> : vector<5x32xf32>
    %110 = tpu.matmul %109, %108, %cst_45 {dimension_numbers = #tpu.dot_dimension_numbers<[1], [0], [0], [1], [0, 0, 1, 1], [], []>} : vector<5x128xbf16>, vector<128x32xbf16>, vector<5x32xf32> -> vector<5x32xf32>
    %111 = arith.addf %64, %110 : vector<5x32xf32>
    %c0_46 = arith.constant 0 : index
    %c0_47 = arith.constant 0 : index
    %112 = vector.load %arg13[%c0_46, %c0_47] : memref<1x32xf32, #tpu.memory_space<vmem>>, vector<1x32xf32>
    %113 = vector.broadcast %112 : vector<1x32xf32> to vector<5x32xf32>
    %114 = arith.addf %111, %113 : vector<5x32xf32>
    %c0_48 = arith.constant 0 : index
    %c0_49 = arith.constant 0 : index
    %115 = vector.load %arg14[%c0_48, %c0_49] : memref<1x32xf32, #tpu.memory_space<vmem>>, vector<1x32xf32>
    %c0_50 = arith.constant 0 : index
    %c0_51 = arith.constant 0 : index
    %116 = vector.load %arg15[%c0_50, %c0_51] : memref<1x32xf32, #tpu.memory_space<vmem>>, vector<1x32xf32>
    %cst_52 = arith.constant dense<0.000000e+00> : vector<5xf32>
    %117 = vector.multi_reduction <add>, %114, %cst_52 [1] : vector<5x32xf32> to vector<5xf32>
    %118 = vector.shape_cast %117 : vector<5xf32> to vector<5x1xf32>
    %cst_53 = arith.constant 3.200000e+01 : f32
    %119 = vector.broadcast %cst_53 : f32 to vector<5x1xf32>
    %120 = arith.divf %118, %119 : vector<5x1xf32>
    %121 = vector.broadcast %120 : vector<5x1xf32> to vector<5x32xf32>
    %122 = arith.subf %114, %121 : vector<5x32xf32>
    %123 = arith.mulf %122, %122 : vector<5x32xf32>
    %cst_54 = arith.constant dense<0.000000e+00> : vector<5xf32>
    %124 = vector.multi_reduction <add>, %123, %cst_54 [1] : vector<5x32xf32> to vector<5xf32>
    %125 = vector.shape_cast %124 : vector<5xf32> to vector<5x1xf32>
    %cst_55 = arith.constant 3.200000e+01 : f32
    %126 = vector.broadcast %cst_55 : f32 to vector<5x1xf32>
    %127 = arith.divf %125, %126 : vector<5x1xf32>
    %128 = vector.broadcast %120 : vector<5x1xf32> to vector<5x32xf32>
    %129 = arith.subf %114, %128 : vector<5x32xf32>
    %cst_56 = arith.constant 9.99999997E-7 : f32
    %130 = vector.broadcast %cst_56 : f32 to vector<5x1xf32>
    %131 = arith.addf %127, %130 : vector<5x1xf32>
    %132 = math.rsqrt %131 : vector<5x1xf32>
    %133 = vector.broadcast %132 : vector<5x1xf32> to vector<5x32xf32>
    %134 = arith.mulf %129, %133 : vector<5x32xf32>
    %135 = vector.broadcast %115 : vector<1x32xf32> to vector<5x32xf32>
    %136 = arith.mulf %134, %135 : vector<5x32xf32>
    %137 = vector.broadcast %116 : vector<1x32xf32> to vector<5x32xf32>
    %138 = arith.addf %136, %137 : vector<5x32xf32>
    %c0_57 = arith.constant 0 : index
    %c0_58 = arith.constant 0 : index
    %c0_59 = arith.constant 0 : index
    %139 = vector.load %arg16[%c0_57, %c0_58, %c0_59] : memref<1x5x32xf32, #tpu.memory_space<vmem>>, vector<1x5x32xf32>
    %140 = vector.shape_cast %139 : vector<1x5x32xf32> to vector<5x32xf32>
    %141 = vector.shape_cast %138 : vector<5x32xf32> to vector<1x5x32xf32>
    tpu.vector_store %arg16[%c0_57, %c0_58, %c0_59], %141 {strides = array<i32>} : memref<1x5x32xf32, #tpu.memory_space<vmem>>, vector<1x5x32xf32>,
    return
  }
  func.func @transform_0(%arg0: i32) -> (i32, i32, i32) {
    %c0_i32 = arith.constant 0 : i32
    %c0_i32_0 = arith.constant 0 : i32
    %c0_i32_1 = arith.constant 0 : i32
    return %arg0, %c0_i32, %c0_i32_0 : i32, i32, i32
  }
  func.func @transform_1(%arg0: i32) -> (i32, i32) {
    %c0_i32 = arith.constant 0 : i32
    %c0_i32_0 = arith.constant 0 : i32
    %c0_i32_1 = arith.constant 0 : i32
    return %c0_i32, %c0_i32_0 : i32, i32
  }
  func.func @transform_2(%arg0: i32) -> (i32, i32) {
    %c0_i32 = arith.constant 0 : i32
    %c0_i32_0 = arith.constant 0 : i32
    %c0_i32_1 = arith.constant 0 : i32
    return %c0_i32, %c0_i32_0 : i32, i32
  }
  func.func @transform_3(%arg0: i32) -> (i32, i32) {
    %c0_i32 = arith.constant 0 : i32
    %c0_i32_0 = arith.constant 0 : i32
    %c0_i32_1 = arith.constant 0 : i32
    return %c0_i32, %c0_i32_0 : i32, i32
  }
  func.func @transform_4(%arg0: i32) -> (i32, i32) {
    %c0_i32 = arith.constant 0 : i32
    %c0_i32_0 = arith.constant 0 : i32
    %c0_i32_1 = arith.constant 0 : i32
    return %c0_i32, %c0_i32_0 : i32, i32
  }
  func.func @transform_5(%arg0: i32) -> (i32, i32) {
    %c0_i32 = arith.constant 0 : i32
    %c0_i32_0 = arith.constant 0 : i32
    %c0_i32_1 = arith.constant 0 : i32
    return %c0_i32, %c0_i32_0 : i32, i32
  }
  func.func @transform_6(%arg0: i32) -> (i32, i32) {
    %c0_i32 = arith.constant 0 : i32
    %c0_i32_0 = arith.constant 0 : i32
    %c0_i32_1 = arith.constant 0 : i32
    return %c0_i32, %c0_i32_0 : i32, i32
  }
  func.func @transform_7(%arg0: i32) -> (i32, i32) {
    %c0_i32 = arith.constant 0 : i32
    %c0_i32_0 = arith.constant 0 : i32
    %c0_i32_1 = arith.constant 0 : i32
    return %c0_i32, %c0_i32_0 : i32, i32
  }
  func.func @transform_8(%arg0: i32) -> (i32, i32) {
    %c0_i32 = arith.constant 0 : i32
    %c0_i32_0 = arith.constant 0 : i32
    %c0_i32_1 = arith.constant 0 : i32
    return %c0_i32, %c0_i32_0 : i32, i32
  }
  func.func @transform_9(%arg0: i32) -> (i32, i32) {
    %c0_i32 = arith.constant 0 : i32
    %c0_i32_0 = arith.constant 0 : i32
    %c0_i32_1 = arith.constant 0 : i32
    return %c0_i32, %c0_i32_0 : i32, i32
  }
  func.func @transform_10(%arg0: i32) -> (i32, i32) {
    %c0_i32 = arith.constant 0 : i32
    %c0_i32_0 = arith.constant 0 : i32
    %c0_i32_1 = arith.constant 0 : i32
    return %c0_i32, %c0_i32_0 : i32, i32
  }
  func.func @transform_11(%arg0: i32) -> (i32, i32) {
    %c0_i32 = arith.constant 0 : i32
    %c0_i32_0 = arith.constant 0 : i32
    %c0_i32_1 = arith.constant 0 : i32
    return %c0_i32, %c0_i32_0 : i32, i32
  }
  func.func @transform_12(%arg0: i32) -> (i32, i32) {
    %c0_i32 = arith.constant 0 : i32
    %c0_i32_0 = arith.constant 0 : i32
    %c0_i32_1 = arith.constant 0 : i32
    return %c0_i32, %c0_i32_0 : i32, i32
  }
  func.func @transform_13(%arg0: i32) -> (i32, i32) {
    %c0_i32 = arith.constant 0 : i32
    %c0_i32_0 = arith.constant 0 : i32
    %c0_i32_1 = arith.constant 0 : i32
    return %c0_i32, %c0_i32_0 : i32, i32
  }
  func.func @transform_14(%arg0: i32) -> (i32, i32) {
    %c0_i32 = arith.constant 0 : i32
    %c0_i32_0 = arith.constant 0 : i32
    %c0_i32_1 = arith.constant 0 : i32
    return %c0_i32, %c0_i32_0 : i32, i32
  }
  func.func @transform_15(%arg0: i32) -> (i32, i32, i32) {
    %c0_i32 = arith.constant 0 : i32
    %c0_i32_0 = arith.constant 0 : i32
    %c0_i32_1 = arith.constant 0 : i32
    return %arg0, %c0_i32, %c0_i32_0 : i32, i32, i32
  }
}

</mosaic_0001>

<llo_original>
// kernel: blip_base_forward.3
$region0: #{blip_base_forward.3}
  #allocation0 [shape = 'u32[]', space=smem, size = 0x4, offset = 0x4, fixed_abs, tag = 'smem constant byte address 0x4 - core index']
  #allocation1 [shape = 'u32[144,128]{1,0:T(1,128)}', space=vmem, size = 0x12000, scoped, tag = 'internal scratch']
  %s0 = inlined_call_operand.hbm [shape: f32[2,4,192], index: 0, kind: input, shape index: {}]
  %s1 = inlined_call_operand.hbm [shape: bf16[192,32], index: 1, kind: input, shape index: {}]
  %s2 = inlined_call_operand.hbm [shape: f32[1,32], index: 2, kind: input, shape index: {}]
  %s3 = inlined_call_operand.hbm [shape: f32[1,1,32], index: 3, kind: input, shape index: {}]
  %s4 = inlined_call_operand.hbm [shape: f32[1,5,32], index: 4, kind: input, shape index: {}]
  %s5 = inlined_call_operand.hbm [shape: f32[2,5,32], index: 5, kind: output, shape index: {}]
  %s6 = sld [smem:[#allocation0]]
  $region73: #{blip_base_forward.3} parent=0
    _
  %s8 = ssub.s32 1, %s6
  %s9 = scalar_select 0, %s8, %s6
  $region1: #{blip_base_forward.3} parent=0
    #allocation2 [shape = 'u8[8192]{0}', space=vmem, size = 0x2000, scoped, tag = 'input window, operand 0']
    #allocation3 [shape = 's32[2]{0}', space=sflag, size = 0x8, scoped, tag = 'scoped memory for blip_base_forward.3']
    #allocation4 [shape = 's32[2]{0}', space=sflag, size = 0x8, scoped, tag = 'scoped memory for blip_base_forward.3']
    #allocation5 [shape = 'u8[49152]{0}', space=vmem, size = 0xc000, scoped, tag = 'input window, operand 1, single buffered']
    #allocation6 [shape = 's32[1]{0}', space=sflag, size = 0x4, scoped, tag = 'scoped memory for blip_base_forward.3']
    #allocation7 [shape = 'u8[512]{0}', space=vmem, size = 0x400, scoped, tag = 'input window, operand 2, single buffered']
    #allocation8 [shape = 'u8[512]{0}', space=vmem, size = 0x400, scoped, tag = 'input window, operand 3, single buffered']
    #allocation9 [shape = 's32[1]{0}', space=sflag, size = 0x4, scoped, tag = 'scoped memory for blip_base_forward.3']
    #allocation10 [shape = 'u8[4096]{0}', space=vmem, size = 0x1000, scoped, tag = 'input window, operand 4, single buffered']
    #allocation11 [shape = 'u8[8192]{0}', space=vmem, size = 0x2000, scoped, tag = 'output window, operand 0']
    %10 = vsyncpa [#allocation3], 0
    %s11 = scalar_lea.sflag [#allocation3], 1
    %12 = vsyncpa %s11, 0
    %13 = vsyncpa [#allocation6], 0
    %14 = vsyncpa [#allocation9], 0
    %15 = vsyncpa [#allocation4], 0
    %s16 = scalar_lea.sflag [#allocation4], 1
    %17 = vsyncpa %s16, 0
    loop: start=0, step=1, limit=4
    $region2: #{blip_base_forward.3} parent=1 // loop_pre_header
      _
    $region3: #{blip_base_forward.3} parent=1 // loop_header
      %s19 = sphi 0, %s23
      %p20 = scmp.ge.s32.totalorder %s19, 4
      %s29 = sphi 0, %s31
      %s32 = sphi 0, %s29
      %s33 = sphi 0, %s32
      %s49 = sphi 0, %s33
      %s53 = sphi 0, %s53
      %s55 = sphi 0, %s53
      %s56 = sphi 0, %s55
      %s70 = sphi 0, %s56
      %s74 = sphi 0, %s74
      %s76 = sphi 0, %s74
      %s77 = sphi 0, %s76
      %s91 = sphi 0, %s77
      %s95 = sphi 0, %s95
      %s97 = sphi 0, %s95
      %s98 = sphi 0, %s97
      %s112 = sphi 0, %s98
      %s116 = sphi 0, %s116
      %s118 = sphi 0, %s116
      %s119 = sphi 0, %s118
      %s133 = sphi 0, %s119
      %s139 = sphi 0, %s141
      %s142 = sphi 0, %s139
      %s143 = sphi 0, %s142
      %s159 = sphi 0, %s143
    $region4: #{blip_base_forward.3} parent=1 // loop_header_branch
      %22 = sbr.rel (%p20) target = $region8
    $region5: #{blip_base_forward.3} parent=1 // loop_body
      %s24 = ssub.s32 %s19, 1
      %s25 = ssub.s32 %s19, 2
      %s26 = sadd.s32 %s19, 1
      %s27 = ssub.s32 %s19, %s26
      %p28 = scmp.eq.s32.totalorder %s27, 0
      %s30 = sadd.s32 %s29, 1
      %s31 = scalar_select %p28, %s29, %s30
      %p34 = pneg %p28
      %p35 = scmp.eq.s32.totalorder %s19, 1
      %p36 = por %p34, %p35
      %p37 = scmp.ne.s32.totalorder %s29, %s32
      %p38 = scmp.eq.s32.totalorder %s19, 0
      %p39 = por %p37, %p38
      %p40 = scmp.ne.s32.totalorder %s29, %s32
      %p41 = scmp.eq.s32.totalorder %s24, 1
      %p42 = por %p40, %p41
      %p43 = scmp.ne.s32.totalorder %s32, %s33
      %p44 = scmp.eq.s32.totalorder %s24, 0
      %p45 = por %p43, %p44
      %p46 = scmp.ne.s32.totalorder %s32, %s33
      %p47 = scmp.eq.s32.totalorder %s25, 1
      %p48 = por %p46, %p47
      %p50 = scmp.ne.s32.totalorder %s33, %s49
      %p51 = scmp.eq.s32.totalorder %s25, 0
      %p52 = por %p50, %p51
      %s54 = sadd.s32 %s53, 1
      %p57 = scmp.eq.s32.totalorder %s19, 1
      %p58 = scmp.ne.s32.totalorder %s53, %s55
      %p59 = scmp.eq.s32.totalorder %s19, 0
      %p60 = por %p58, %p59
      %p61 = scmp.ne.s32.totalorder %s53, %s55
      %p62 = scmp.eq.s32.totalorder %s24, 1
      %p63 = por %p61, %p62
      %p64 = scmp.ne.s32.totalorder %s55, %s56
      %p65 = scmp.eq.s32.totalorder %s24, 0
      %p66 = por %p64, %p65
      %p67 = scmp.ne.s32.totalorder %s55, %s56
      %p68 = scmp.eq.s32.totalorder %s25, 1
      %p69 = por %p67, %p68
      %p71 = scmp.ne.s32.totalorder %s56, %s70
      %p72 = scmp.eq.s32.totalorder %s25, 0
      %p73 = por %p71, %p72
      %s75 = sadd.s32 %s74, 1
      %p78 = scmp.eq.s32.totalorder %s19, 1
      %p79 = scmp.ne.s32.totalorder %s74, %s76
      %p80 = scmp.eq.s32.totalorder %s19, 0
      %p81 = por %p79, %p80
      %p82 = scmp.ne.s32.totalorder %s74, %s76
      %p83 = scmp.eq.s32.totalorder %s24, 1
      %p84 = por %p82, %p83
      %p85 = scmp.ne.s32.totalorder %s76, %s77
      %p86 = scmp.eq.s32.totalorder %s24, 0
      %p87 = por %p85, %p86
      %p88 = scmp.ne.s32.totalorder %s76, %s77
      %p89 = scmp.eq.s32.totalorder %s25, 1
      %p90 = por %p88, %p89
      %p92 = scmp.ne.s32.totalorder %s77, %s91
      %p93 = scmp.eq.s32.totalorder %s25, 0
      %p94 = por %p92, %p93
      %s96 = sadd.s32 %s95, 1
      %p99 = scmp.eq.s32.totalorder %s19, 1
      %p100 = scmp.ne.s32.totalorder %s95, %s97
      %p101 = scmp.eq.s32.totalorder %s19, 0
      %p102 = por %p100, %p101
      %p103 = scmp.ne.s32.totalorder %s95, %s97
      %p104 = scmp.eq.s32.totalorder %s24, 1
      %p105 = por %p103, %p104
      %p106 = scmp.ne.s32.totalorder %s97, %s98
      %p107 = scmp.eq.s32.totalorder %s24, 0
      %p108 = por %p106, %p107
      %p109 = scmp.ne.s32.totalorder %s97, %s98
      %p110 = scmp.eq.s32.totalorder %s25, 1
      %p111 = por %p109, %p110
      %p113 = scmp.ne.s32.totalorder %s98, %s112
      %p114 = scmp.eq.s32.totalorder %s25, 0
      %p115 = por %p113, %p114
      %s117 = sadd.s32 %s116, 1
      %p120 = scmp.eq.s32.totalorder %s19, 1
      %p121 = scmp.ne.s32.totalorder %s116, %s118
      %p122 = scmp.eq.s32.totalorder %s19, 0
      %p123 = por %p121, %p122
      %p124 = scmp.ne.s32.totalorder %s116, %s118
      %p125 = scmp.eq.s32.totalorder %s24, 1
      %p126 = por %p124, %p125
      %p127 = scmp.ne.s32.totalorder %s118, %s119
      %p128 = scmp.eq.s32.totalorder %s24, 0
      %p129 = por %p127, %p128
      %p130 = scmp.ne.s32.totalorder %s118, %s119
      %p131 = scmp.eq.s32.totalorder %s25, 1
      %p132 = por %p130, %p131
      %p134 = scmp.ne.s32.totalorder %s119, %s133
      %p135 = scmp.eq.s32.totalorder %s25, 0
      %p136 = por %p134, %p135
      %s137 = ssub.s32 %s19, %s26
      %p138 = scmp.eq.s32.totalorder %s137, 0
      %s140 = sadd.s32 %s139, 1
      %s141 = scalar_select %p138, %s139, %s140
      %p144 = pneg %p138
      %p145 = scmp.eq.s32.totalorder %s19, 1
      %p146 = por %p144, %p145
      %p147 = scmp.ne.s32.totalorder %s139, %s142
      %p148 = scmp.eq.s32.totalorder %s19, 0
      %p149 = por %p147, %p148
      %p150 = scmp.ne.s32.totalorder %s139, %s142
      %p151 = scmp.eq.s32.totalorder %s24, 1
      %p152 = por %p150, %p151
      %p153 = scmp.ne.s32.totalorder %s142, %s143
      %p154 = scmp.eq.s32.totalorder %s24, 0
      %p155 = por %p153, %p154
      %p156 = scmp.ne.s32.totalorder %s142, %s143
      %p157 = scmp.eq.s32.totalorder %s25, 1
      %p158 = por %p156, %p157
      %p160 = scmp.ne.s32.totalorder %s143, %s159
      %p161 = scmp.eq.s32.totalorder %s25, 0
      %p162 = por %p160, %p161
      %p163 = scmp.le.s32.totalorder 1, %s19
      %p164 = scmp.lt.s32.totalorder %s19, 3
      %p165 = pnand %p163, %p164
      %p166 = pneg %p165
      // Predicated region
      $region9: #{blip_base_forward.3} parent=5 // pred_check
        _
      $region10: #{blip_base_forward.3} parent=5 // pred_check_branch
        %168 = sbr.rel (%p165) target = $region12
      $region11: #{blip_base_forward.3} parent=5 // pred_region
        %s169 = ssub.s32 %s19, 1
        // Predicated region
        $region13: #{blip_base_forward.3} parent=11 // pred_check
          %p170 = pneg %p66
        $region14: #{blip_base_forward.3} parent=11 // pred_check_branch
          %172 = sbr.rel (%p170) target = $region16
        $region15: #{blip_base_forward.3} parent=11 // pred_region
          %s174 = ssub.s32 1536, 1536
          %175 = vsyncadd [#allocation6], %s174
          %s176 = sshll.u32 [#allocation5], 4
          %s177 = int_to_ptr.vmem [resolvable:$true] %s176
          %182 = dma.hbm_to_vmem [thread:$0]  %s1, 1536, %s177, [#allocation6], 64, 64, 4
        $region16: #{blip_base_forward.3} parent=11 // pred_fallthru
          _
        // Predicated region
        $region17: #{blip_base_forward.3} parent=11 // pred_check
          %p183 = pneg %p87
        $region18: #{blip_base_forward.3} parent=11 // pred_check_branch
          %185 = sbr.rel (%p183) target = $region20
        $region19: #{blip_base_forward.3} parent=11 // pred_region
          %s187 = ssub.s32 16, 16
          %188 = vsyncadd [#allocation6], %s187
          %s190 = sshll.u32 [#allocation7], 4
          %s191 = int_to_ptr.vmem [resolvable:$true] %s190
          %193 = dma.hbm_to_vmem [thread:$0]  %s2, 16, %s191, [#allocation6]
        $region20: #{blip_base_forward.3} parent=11 // pred_fallthru
          _
        // Predicated region
        $region21: #{blip_base_forward.3} parent=11 // pred_check
          %p194 = pneg %p108
        $region22: #{blip_base_forward.3} parent=11 // pred_check_branch
          %196 = sbr.rel (%p194) target = $region24
        $region23: #{blip_base_forward.3} parent=11 // pred_region
          %s198 = ssub.s32 16, 16
          %199 = vsyncadd [#allocation9], %s198
          %s201 = sshll.u32 [#allocation8], 4
          %s202 = int_to_ptr.vmem [resolvable:$true] %s201
          %204 = dma.hbm_to_vmem [thread:$0]  %s3, 16, %s202, [#allocation9]
        $region24: #{blip_base_forward.3} parent=11 // pred_fallthru
          _
        // Predicated region
        $region25: #{blip_base_forward.3} parent=11 // pred_check
          %p205 = pneg %p129
        $region26: #{blip_base_forward.3} parent=11 // pred_check_branch
          %207 = sbr.rel (%p205) target = $region28
        $region27: #{blip_base_forward.3} parent=11 // pred_region
          %s209 = ssub.s32 128, 128
          %210 = vsyncadd [#allocation9], %s209
          %s212 = sshll.u32 [#allocation10], 4
          %s213 = int_to_ptr.vmem [resolvable:$true] %s212
          %215 = dma.hbm_to_vmem [thread:$0]  %s4, 128, %s213, [#allocation9]
        $region28: #{blip_base_forward.3} parent=11 // pred_fallthru
          _
      $region12: #{blip_base_forward.3} parent=5 // pred_fallthru
        _
      %p216 = scmp.lt.s32.totalorder %s19, 2
      // Predicated region
      $region29: #{blip_base_forward.3} parent=5 // pred_check
        %p217 = pneg %p216
      $region30: #{blip_base_forward.3} parent=5 // pred_check_branch
        %219 = sbr.rel (%p217) target = $region32
      $region31: #{blip_base_forward.3} parent=5 // pred_region
        // Predicated region
        $region33: #{blip_base_forward.3} parent=31 // pred_check
          %p220 = pneg %p39
        $region34: #{blip_base_forward.3} parent=31 // pred_check_branch
          %222 = sbr.rel (%p220) target = $region36
        $region35: #{blip_base_forward.3} parent=31 // pred_region
          %s223 = sand.u32 %s29, 1
          %s224 = scalar_lea.sflag [#allocation3], %s223
          %s225 = sand.u32 %s29, 1
          %s226 = smul.addr %s225, 8
          %s227 = scalar_lea.vmem [#allocation2], %s226
          %s229 = ssub.s32 128, 128
          %230 = vsyncadd %s224, %s229
          %s231 = smul.addr %s19, 2
          %s232 = smul.addr %s231, 64
          %s233 = scalar_lea.hbm %s0, %s232
          %s235 = sshll.u32 %s227, 4
          %s236 = int_to_ptr.vmem [resolvable:$true] %s235
          %238 = dma.hbm_to_vmem [thread:$0]  %s233, 128, %s236, %s224
        $region36: #{blip_base_forward.3} parent=31 // pred_fallthru
          _
      $region32: #{blip_base_forward.3} parent=5 // pred_fallthru
        _
      %p239 = scmp.le.s32.totalorder 1, %s19
      %p240 = scmp.lt.s32.totalorder %s19, 3
      %p241 = pnand %p239, %p240
      %p242 = pneg %p241
      // Predicated region
      $region37: #{blip_base_forward.3} parent=5 // pred_check
        _
      $region38: #{blip_base_forward.3} parent=5 // pred_check_branch
        %244 = sbr.rel (%p241) target = $region40
      $region39: #{blip_base_forward.3} parent=5 // pred_region
        %s245 = ssub.s32 %s19, 1
        %s246 = sand.u32 %s32, 1
        %s247 = scalar_lea.sflag [#allocation3], %s246
        %s248 = sand.u32 %s32, 1
        %s249 = smul.addr %s248, 8
        %s250 = scalar_lea.vmem [#allocation2], %s249
        // Predicated region
        $region41: #{blip_base_forward.3} parent=39 // pred_check
          %p251 = pneg %p45
        $region42: #{blip_base_forward.3} parent=39 // pred_check_branch
          %253 = sbr.rel (%p251) target = $region44
        $region43: #{blip_base_forward.3} parent=39 // pred_region
          %254 = dma.done %s247, 128
        $region44: #{blip_base_forward.3} parent=39 // pred_fallthru
          _
        // Predicated region
        $region45: #{blip_base_forward.3} parent=39 // pred_check
          %p255 = pneg %p66
        $region46: #{blip_base_forward.3} parent=39 // pred_check_branch
          %257 = sbr.rel (%p255) target = $region48
        $region47: #{blip_base_forward.3} parent=39 // pred_region
          %258 = dma.done [#allocation6], 1536
        $region48: #{blip_base_forward.3} parent=39 // pred_fallthru
          _
        // Predicated region
        $region49: #{blip_base_forward.3} parent=39 // pred_check
          %p259 = pneg %p87
        $region50: #{blip_base_forward.3} parent=39 // pred_check_branch
          %261 = sbr.rel (%p259) target = $region52
        $region51: #{blip_base_forward.3} parent=39 // pred_region
          %262 = dma.done [#allocation6], 16
        $region52: #{blip_base_forward.3} parent=39 // pred_fallthru
          _
        // Predicated region
        $region53: #{blip_base_forward.3} parent=39 // pred_check
          %p263 = pneg %p108
        $region54: #{blip_base_forward.3} parent=39 // pred_check_branch
          %265 = sbr.rel (%p263) target = $region56
        $region55: #{blip_base_forward.3} parent=39 // pred_region
          %266 = dma.done [#allocation9], 16
        $region56: #{blip_base_forward.3} parent=39 // pred_fallthru
          _
        // Predicated region
        $region57: #{blip_base_forward.3} parent=39 // pred_check
          %p267 = pneg %p129
        $region58: #{blip_base_forward.3} parent=39 // pred_check_branch
          %269 = sbr.rel (%p267) target = $region60
        $region59: #{blip_base_forward.3} parent=39 // pred_region
          %270 = dma.done [#allocation9], 128
        $region60: #{blip_base_forward.3} parent=39 // pred_fallthru
          _
        %s271 = sand.u32 %s32, 1
        %s272 = scalar_lea.sflag [#allocation3], %s271
        %s273 = sand.u32 %s32, 1
        %s274 = smul.addr %s273, 8
        %s275 = scalar_lea.vmem [#allocation2], %s274
        %p276 = pneg %p45
        %p277 = pneg %p42
        %p278 = pneg %p66
        %p279 = pneg %p63
        %p280 = pneg %p87
        %p281 = pneg %p84
        %p282 = pneg %p108
        %p283 = pneg %p105
        %p284 = pneg %p129
        %p285 = pneg %p126
        %p286 = pneg %p155
        %p287 = pneg %p152
        %s288 = sand.u32 %s142, 1
        %s289 = scalar_lea.sflag [#allocation4], %s288
        %s290 = sand.u32 %s142, 1
        %s291 = smul.addr %s290, 8
        %s292 = scalar_lea.vmem [#allocation11], %s291
        %v294 = vld [vmem:[%s250] sm:$0xff]
        %v295 = vld [vmem:[#allocation5] sm:$0xf]
        %v296 = vld [vmem:[#allocation5 + $0x4] sm:$0xf]
        %v297 = vld [vmem:[#allocation5 + $0x8] sm:$0xf]
        %v298 = vld [vmem:[#allocation5 + $0xc] sm:$0xf]
        %v299 = vld [vmem:[#allocation5 + $0x10] sm:$0xf]
        %v300 = vld [vmem:[#allocation5 + $0x14] sm:$0xf]
        %v301 = vld [vmem:[#allocation5 + $0x18] sm:$0xf]
        %v302 = vld [vmem:[#allocation5 + $0x1c] sm:$0xf]
        %v303 = vld [vmem:[#allocation5 + $0x20] sm:$0xf]
        %v304 = vld [vmem:[#allocation5 + $0x24] sm:$0xf]
        %v305 = vld [vmem:[#allocation5 + $0x28] sm:$0xf]
        %v306 = vld [vmem:[#allocation5 + $0x2c] sm:$0xf]
        %v307 = vld [vmem:[#allocation5 + $0x30] sm:$0xf]
        %v308 = vld [vmem:[#allocation5 + $0x34] sm:$0xf]
        %v309 = vld [vmem:[#allocation5 + $0x38] sm:$0xf]
        %v310 = vld [vmem:[#allocation5 + $0x3c] sm:$0xf]
        %v311 = vld [vmem:[#allocation5 + $0x40] sm:$0xf]
        %v312 = vld [vmem:[#allocation5 + $0x44] sm:$0xf]
        %v313 = vld [vmem:[#allocation5 + $0x48] sm:$0xf]
        %v314 = vld [vmem:[#allocation5 + $0x4c] sm:$0xf]
        %v315 = vld [vmem:[#allocation5 + $0x50] sm:$0xf]
        %v316 = vld [vmem:[#allocation5 + $0x54] sm:$0xf]
        %v317 = vld [vmem:[#allocation5 + $0x58] sm:$0xf]
        %v318 = vld [vmem:[#allocation5 + $0x5c] sm:$0xf]
        %v320 = vcombine.high %v294, %v294
        %v322 = vpack.c.bf16 %v294, %v294
        %v323 = vpack.c.bf16 %v320, %v320
        %v324 = vld [vmem:[#allocation7] sm:$0x1]
        %v326 = vlaneseq
        %v327 = vshrl.u32 %v326, 7
        %v328 = vsub.s32 0, %v327
        %v329 = vrot.slane %v324, %v328
        %v355 = vunpack.c.l.b16 %v295
        %v356 = vunpack.c.l.b16 %v296
        %v357 = vunpack.c.l.b16 %v297
        %v358 = vunpack.c.l.b16 %v298
        %v359 = vunpack.c.l.b16 %v299
        %v360 = vunpack.c.l.b16 %v300
        %v361 = vunpack.c.l.b16 %v301
        %v362 = vunpack.c.l.b16 %v302
        %v363 = vunpack.c.l.b16 %v303
        %v364 = vunpack.c.l.b16 %v304
        %v365 = vunpack.c.l.b16 %v305
        %v366 = vunpack.c.l.b16 %v306
        %v367 = vunpack.c.l.b16 %v307
        %v368 = vunpack.c.l.b16 %v308
        %v369 = vunpack.c.l.b16 %v309
        %v370 = vunpack.c.l.b16 %v310
        %v371 = vunpack.c.l.b16 %v311
        %v372 = vunpack.c.l.b16 %v312
        %v373 = vunpack.c.l.b16 %v313
        %v374 = vunpack.c.l.b16 %v314
        %v375 = vunpack.c.l.b16 %v315
        %v376 = vunpack.c.l.b16 %v316
        %v377 = vunpack.c.l.b16 %v317
        %v378 = vunpack.c.l.b16 %v318
        %v379 = vpack.c.b16 %v356, %v355
        %v380 = vpack.c.b16 %v358, %v357
        %v381 = vpack.c.b16 %v360, %v359
        %v382 = vpack.c.b16 %v362, %v361
        %v383 = vpack.c.b16 %v364, %v363
        %v384 = vpack.c.b16 %v366, %v365
        %v385 = vpack.c.b16 %v368, %v367
        %v386 = vpack.c.b16 %v370, %v369
        %v387 = vpack.c.b16 %v372, %v371
        %v388 = vpack.c.b16 %v374, %v373
        %v389 = vpack.c.b16 %v376, %v375
        %v390 = vpack.c.b16 %v378, %v377
        %vm403 = vcmask 523264
        %v405 = vsel %vm403, %v323, 0
        %407 = vmatprep.subr.bf16.mxu0 0
        %408 = vmatpush1.bf16.msra.mxu0 %v379
        %409 = vmatprep.subr.bf16.mxu0 0
        %410 = vmatpush1.bf16.msra.mxu0 %v380
        %411 = vmatprep.subr.bf16.mxu0 0
        %412 = vmatpush1.bf16.msra.mxu0 %v381
        %413 = vmatprep.subr.bf16.mxu0 0
        %414 = vmatpush1.bf16.msra.mxu0 %v382
        %415 = vmatprep.subr.bf16.mxu0 0
        %416 = vmatpush1.bf16.msra.mxu0 %v383
        %417 = vmatprep.subr.bf16.mxu0 0
        %418 = vmatpush1.bf16.msra.mxu0 %v384
        %419 = vmatprep.subr.bf16.mxu0 0
        %420 = vmatpush1.bf16.msra.mxu0 %v385
        %421 = vmatprep.subr.bf16.mxu0 0
        %422 = vmatpush1.bf16.msra.mxu0 %v386
        %423 = vmatprep.subr.bf16.mxu0 0
        %424 = vmatpush1.bf16.msra.mxu0 %v387
        %425 = vmatprep.subr.bf16.mxu0 0
        %426 = vmatpush1.bf16.msra.mxu0 %v388
        %427 = vmatprep.subr.bf16.mxu0 0
        %428 = vmatpush1.bf16.msra.mxu0 %v389
        %429 = vmatprep.subr.bf16.mxu0 0
        %430 = vmatpush1.bf16.msra.mxu0 %v390
        %431 = vmatprep.subr.bf16.mxu0 0
        %432 = vmatpush1.bf16.msra.mxu0 0
        %433 = vmatprep.subr.bf16.mxu0 0
        %434 = vmatpush1.bf16.msra.mxu0 0
        %435 = vmatprep.subr.bf16.mxu0 0
        %436 = vmatpush1.bf16.msra.mxu0 0
        %437 = vmatprep.subr.bf16.mxu0 0
        %438 = vmatpush1.bf16.msra.mxu0 0
        %439 = vmatprep.mubr.bf16.mxu0 %v405
        %440 = vmatmul.mubr.bf16.gmra.mrb[0].mxu0 %v322
        %v441 = vpop.f32.mrb[0].mxu0
        %v442 = vadd.f32 %v329, %v441
        %v443 = vpop.f32.mrb[0].mxu0
        %v444 = vpop.f32.mrb[0].mxu0
        %v445 = vpop.f32.mrb[0].mxu0
        %446 = vdwg.mxu0
        %v447 = vld [vmem:[#allocation8] sm:$0x1]
        %v449 = vrot.slane %v442, 7
        %vm451 = vcmask 1040384
        %v452 = vsel %vm451, %v447, %v449
        %v453 = vld [vmem:[#allocation10] sm:$0x1f]
        %v454 = vadd.f32 %v452, %v453
        %vm455 = vcmask 258048
        %456 = vst.msk [vmem:[%s292] sm:$0x1f] %vm455, %v454
        %s457 = sand.u32 %s142, 1
        %s458 = scalar_lea.sflag [#allocation4], %s457
        %s459 = sand.u32 %s142, 1
        %s460 = smul.addr %s459, 8
        %s461 = scalar_lea.vmem [#allocation11], %s460
        // Predicated region
        $region61: #{blip_base_forward.3} parent=39 // pred_check
          %p462 = pneg %p152
        $region62: #{blip_base_forward.3} parent=39 // pred_check_branch
          %464 = sbr.rel (%p462) target = $region64
        $region63: #{blip_base_forward.3} parent=39 // pred_region
          %s466 = ssub.s32 128, 128
          %467 = vsyncadd %s458, %s466
          %s468 = smul.addr %s24, 128
          %s469 = scalar_lea.hbm %s5, %s468
          %s471 = sshll.u32 %s461, 4
          %s472 = int_to_ptr.vmem [resolvable:$true] %s471
          %474 = dma.vmem_to_hbm [thread:$0]  %s472, 128, %s469, %s458
        $region64: #{blip_base_forward.3} parent=39 // pred_fallthru
          _
      $region40: #{blip_base_forward.3} parent=5 // pred_fallthru
        _
      %p475 = scmp.le.s32.totalorder 2, %s19
      // Predicated region
      $region65: #{blip_base_forward.3} parent=5 // pred_check
        %p476 = pneg %p475
      $region66: #{blip_base_forward.3} parent=5 // pred_check_branch
        %478 = sbr.rel (%p476) target = $region68
      $region67: #{blip_base_forward.3} parent=5 // pred_region
        %s479 = ssub.s32 %s19, 2
        // Predicated region
        $region69: #{blip_base_forward.3} parent=67 // pred_check
          %p480 = pneg %p158
        $region70: #{blip_base_forward.3} parent=67 // pred_check_branch
          %482 = sbr.rel (%p480) target = $region72
        $region71: #{blip_base_forward.3} parent=67 // pred_region
          %s483 = sand.u32 %s143, 1
          %s484 = scalar_lea.sflag [#allocation4], %s483
          %s485 = sand.u32 %s143, 1
          %s486 = smul.addr %s485, 8
          %s487 = scalar_lea.vmem [#allocation11], %s486
          %488 = dma.done %s484, 128
        $region72: #{blip_base_forward.3} parent=67 // pred_fallthru
          _
      $region68: #{blip_base_forward.3} parent=5 // pred_fallthru
        _
    $region6: #{blip_base_forward.3} parent=1 // loop_footer
      %s23 = sadd.s32 1, %s19
    $region7: #{blip_base_forward.3} parent=1 // loop_footer_branch
      %18 = sbr.rel target = $region3
    $region8: #{blip_base_forward.3} parent=1 // loop_exit
      _
    %489 = vsyncpa [#allocation3], 1
    %s490 = scalar_lea.sflag [#allocation3], 1
    %491 = vsyncpa %s490, 1
    %492 = vsyncpa [#allocation6], 1
    %493 = vsyncpa [#allocation9], 1
    %494 = vsyncpa [#allocation4], 1
    %s495 = scalar_lea.sflag [#allocation4], 1
    %496 = vsyncpa %s495, 1

// kernel: blip_base_forward.5
$region0: #{blip_base_forward.5}
  #allocation0 [shape = 'u32[]', space=smem, size = 0x4, offset = 0x4, fixed_abs, tag = 'smem constant byte address 0x4 - core index']
  #allocation1 [shape = 'u32[144,128]{1,0:T(1,128)}', space=vmem, size = 0x12000, scoped, tag = 'internal scratch']
  %s0 = inlined_call_operand.hbm [shape: f32[2,5,32], index: 0, kind: input, shape index: {}]
  %s1 = inlined_call_operand.hbm [shape: f32[1,32], index: 1, kind: input, shape index: {}]
  %s2 = inlined_call_operand.hbm [shape: f32[1,32], index: 2, kind: input, shape index: {}]
  %s3 = inlined_call_operand.hbm [shape: bf16[32,96], index: 3, kind: input, shape index: {}]
  %s4 = inlined_call_operand.hbm [shape: f32[1,96], index: 4, kind: input, shape index: {}]
  %s5 = inlined_call_operand.hbm [shape: bf16[32,32], index: 5, kind: input, shape index: {}]
  %s6 = inlined_call_operand.hbm [shape: f32[1,32], index: 6, kind: input, shape index: {}]
  %s7 = inlined_call_operand.hbm [shape: f32[1,32], index: 7, kind: input, shape index: {}]
  %s8 = inlined_call_operand.hbm [shape: f32[1,32], index: 8, kind: input, shape index: {}]
  %s9 = inlined_call_operand.hbm [shape: bf16[32,128], index: 9, kind: input, shape index: {}]
  %s10 = inlined_call_operand.hbm [shape: f32[1,128], index: 10, kind: input, shape index: {}]
  %s11 = inlined_call_operand.hbm [shape: bf16[128,32], index: 11, kind: input, shape index: {}]
  %s12 = inlined_call_operand.hbm [shape: f32[1,32], index: 12, kind: input, shape index: {}]
  %s13 = inlined_call_operand.hbm [shape: f32[1,32], index: 13, kind: input, shape index: {}]
  %s14 = inlined_call_operand.hbm [shape: f32[1,32], index: 14, kind: input, shape index: {}]
  %s15 = inlined_call_operand.hbm [shape: f32[2,5,32], index: 15, kind: output, shape index: {}]
  %s16 = sld [smem:[#allocation0]]
  $region153: #{blip_base_forward.5} parent=0
    _
  %s18 = ssub.s32 1, %s16
  %s19 = scalar_select 0, %s18, %s16
  $region1: #{blip_base_forward.5} parent=0
    #allocation2 [shape = 'u8[8192]{0}', space=vmem, size = 0x2000, scoped, tag = 'input window, operand 0']
    #allocation3 [shape = 's32[2]{0}', space=sflag, size = 0x8, scoped, tag = 'scoped memory for blip_base_forward.5']
    #allocation4 [shape = 's32[2]{0}', space=sflag, size = 0x8, scoped, tag = 'scoped memory for blip_base_forward.5']
    #allocation5 [shape = 'u8[512]{0}', space=vmem, size = 0x400, scoped, tag = 'input window, operand 1, single buffered']
    #allocation6 [shape = 's32[1]{0}', space=sflag, size = 0x4, scoped, tag = 'scoped memory for blip_base_forward.5']
    #allocation7 [shape = 'u8[512]{0}', space=vmem, size = 0x400, scoped, tag = 'input window, operand 2, single buffered']
    #allocation8 [shape = 'u8[8192]{0}', space=vmem, size = 0x2000, scoped, tag = 'input window, operand 3, single buffered']
    #allocation9 [shape = 's32[1]{0}', space=sflag, size = 0x4, scoped, tag = 'scoped memory for blip_base_forward.5']
    #allocation10 [shape = 'u8[512]{0}', space=vmem, size = 0x400, scoped, tag = 'input window, operand 4, single buffered']
    #allocation11 [shape = 'u8[8192]{0}', space=vmem, size = 0x2000, scoped, tag = 'input window, operand 5, single buffered']
    #allocation12 [shape = 's32[1]{0}', space=sflag, size = 0x4, scoped, tag = 'scoped memory for blip_base_forward.5']
    #allocation13 [shape = 'u8[512]{0}', space=vmem, size = 0x400, scoped, tag = 'input window, operand 6, single buffered']
    #allocation14 [shape = 'u8[512]{0}', space=vmem, size = 0x400, scoped, tag = 'input window, operand 7, single buffered']
    #allocation15 [shape = 's32[1]{0}', space=sflag, size = 0x4, scoped, tag = 'scoped memory for blip_base_forward.5']
    #allocation16 [shape = 'u8[512]{0}', space=vmem, size = 0x400, scoped, tag = 'input window, operand 8, single buffered']
    #allocation17 [shape = 'u8[8192]{0}', space=vmem, size = 0x2000, scoped, tag = 'input window, operand 9, single buffered']
    #allocation18 [shape = 's32[1]{0}', space=sflag, size = 0x4, scoped, tag = 'scoped memory for blip_base_forward.5']
    #allocation19 [shape = 'u8[512]{0}', space=vmem, size = 0x400, scoped, tag = 'input window, operand 10, single buffered']
    #allocation20 [shape = 'u8[32768]{0}', space=vmem, size = 0x8000, scoped, tag = 'input window, operand 11, single buffered']
    #allocation21 [shape = 's32[1]{0}', space=sflag, size = 0x4, scoped, tag = 'scoped memory for blip_base_forward.5']
    #allocation22 [shape = 'u8[512]{0}', space=vmem, size = 0x400, scoped, tag = 'input window, operand 12, single buffered']
    #allocation23 [shape = 'u8[512]{0}', space=vmem, size = 0x400, scoped, tag = 'input window, operand 13, single buffered']
    #allocation24 [shape = 's32[1]{0}', space=sflag, size = 0x4, scoped, tag = 'scoped memory for blip_base_forward.5']
    #allocation25 [shape = 'u8[512]{0}', space=vmem, size = 0x400, scoped, tag = 'input window, operand 14, single buffered']
    #allocation26 [shape = 'u8[8192]{0}', space=vmem, size = 0x2000, scoped, tag = 'output window, operand 0']
    %20 = vsyncpa [#allocation3], 0
    %s21 = scalar_lea.sflag [#allocation3], 1
    %22 = vsyncpa %s21, 0
    %23 = vsyncpa [#allocation6], 0
    %24 = vsyncpa [#allocation9], 0
    %25 = vsyncpa [#allocation12], 0
    %26 = vsyncpa [#allocation15], 0
    %27 = vsyncpa [#allocation18], 0
    %28 = vsyncpa [#allocation21], 0
    %29 = vsyncpa [#allocation24], 0
    %30 = vsyncpa [#allocation4], 0
    %s31 = scalar_lea.sflag [#allocation4], 1
    %32 = vsyncpa %s31, 0
    loop: start=0, step=1, limit=4
    $region2: #{blip_base_forward.5} parent=1 // loop_pre_header
      _
    $region3: #{blip_base_forward.5} parent=1 // loop_header
      %s34 = sphi 0, %s38
      %p35 = scmp.ge.s32.totalorder %s34, 4
      %s44 = sphi 0, %s46
      %s47 = sphi 0, %s44
      %s48 = sphi 0, %s47
      %s64 = sphi 0, %s48
      %s68 = sphi 0, %s68
      %s70 = sphi 0, %s68
      %s71 = sphi 0, %s70
      %s85 = sphi 0, %s71
      %s89 = sphi 0, %s89
      %s91 = sphi 0, %s89
      %s92 = sphi 0, %s91
      %s106 = sphi 0, %s92
      %s110 = sphi 0, %s110
      %s112 = sphi 0, %s110
      %s113 = sphi 0, %s112
      %s127 = sphi 0, %s113
      %s131 = sphi 0, %s131
      %s133 = sphi 0, %s131
      %s134 = sphi 0, %s133
      %s148 = sphi 0, %s134
      %s152 = sphi 0, %s152
      %s154 = sphi 0, %s152
      %s155 = sphi 0, %s154
      %s169 = sphi 0, %s155
      %s173 = sphi 0, %s173
      %s175 = sphi 0, %s173
      %s176 = sphi 0, %s175
      %s190 = sphi 0, %s176
      %s194 = sphi 0, %s194
      %s196 = sphi 0, %s194
      %s197 = sphi 0, %s196
      %s211 = sphi 0, %s197
      %s215 = sphi 0, %s215
      %s217 = sphi 0, %s215
      %s218 = sphi 0, %s217
      %s232 = sphi 0, %s218
      %s236 = sphi 0, %s236
      %s238 = sphi 0, %s236
      %s239 = sphi 0, %s238
      %s253 = sphi 0, %s239
      %s257 = sphi 0, %s257
      %s259 = sphi 0, %s257
      %s260 = sphi 0, %s259
      %s274 = sphi 0, %s260
      %s278 = sphi 0, %s278
      %s280 = sphi 0, %s278
      %s281 = sphi 0, %s280
      %s295 = sphi 0, %s281
      %s299 = sphi 0, %s299
      %s301 = sphi 0, %s299
      %s302 = sphi 0, %s301
      %s316 = sphi 0, %s302
      %s320 = sphi 0, %s320
      %s322 = sphi 0, %s320
      %s323 = sphi 0, %s322
      %s337 = sphi 0, %s323
      %s341 = sphi 0, %s341
      %s343 = sphi 0, %s341
      %s344 = sphi 0, %s343
      %s358 = sphi 0, %s344
      %s364 = sphi 0, %s366
      %s367 = sphi 0, %s364
      %s368 = sphi 0, %s367
      %s384 = sphi 0, %s368
    $region4: #{blip_base_forward.5} parent=1 // loop_header_branch
      %37 = sbr.rel (%p35) target = $region8
    $region5: #{blip_base_forward.5} parent=1 // loop_body
      %s39 = ssub.s32 %s34, 1
      %s40 = ssub.s32 %s34, 2
      %s41 = sadd.s32 %s34, 1
      %s42 = ssub.s32 %s34, %s41
      %p43 = scmp.eq.s32.totalorder %s42, 0
      %s45 = sadd.s32 %s44, 1
      %s46 = scalar_select %p43, %s44, %s45
      %p49 = pneg %p43
      %p50 = scmp.eq.s32.totalorder %s34, 1
      %p51 = por %p49, %p50
      %p52 = scmp.ne.s32.totalorder %s44, %s47
      %p53 = scmp.eq.s32.totalorder %s34, 0
      %p54 = por %p52, %p53
      %p55 = scmp.ne.s32.totalorder %s44, %s47
      %p56 = scmp.eq.s32.totalorder %s39, 1
      %p57 = por %p55, %p56
      %p58 = scmp.ne.s32.totalorder %s47, %s48
      %p59 = scmp.eq.s32.totalorder %s39, 0
      %p60 = por %p58, %p59
      %p61 = scmp.ne.s32.totalorder %s47, %s48
      %p62 = scmp.eq.s32.totalorder %s40, 1
      %p63 = por %p61, %p62
      %p65 = scmp.ne.s32.totalorder %s48, %s64
      %p66 = scmp.eq.s32.totalorder %s40, 0
      %p67 = por %p65, %p66
      %s69 = sadd.s32 %s68, 1
      %p72 = scmp.eq.s32.totalorder %s34, 1
      %p73 = scmp.ne.s32.totalorder %s68, %s70
      %p74 = scmp.eq.s32.totalorder %s34, 0
      %p75 = por %p73, %p74
      %p76 = scmp.ne.s32.totalorder %s68, %s70
      %p77 = scmp.eq.s32.totalorder %s39, 1
      %p78 = por %p76, %p77
      %p79 = scmp.ne.s32.totalorder %s70, %s71
      %p80 = scmp.eq.s32.totalorder %s39, 0
      %p81 = por %p79, %p80
      %p82 = scmp.ne.s32.totalorder %s70, %s71
      %p83 = scmp.eq.s32.totalorder %s40, 1
      %p84 = por %p82, %p83
      %p86 = scmp.ne.s32.totalorder %s71, %s85
      %p87 = scmp.eq.s32.totalorder %s40, 0
      %p88 = por %p86, %p87
      %s90 = sadd.s32 %s89, 1
      %p93 = scmp.eq.s32.totalorder %s34, 1
      %p94 = scmp.ne.s32.totalorder %s89, %s91
      %p95 = scmp.eq.s32.totalorder %s34, 0
      %p96 = por %p94, %p95
      %p97 = scmp.ne.s32.totalorder %s89, %s91
      %p98 = scmp.eq.s32.totalorder %s39, 1
      %p99 = por %p97, %p98
      %p100 = scmp.ne.s32.totalorder %s91, %s92
      %p101 = scmp.eq.s32.totalorder %s39, 0
      %p102 = por %p100, %p101
      %p103 = scmp.ne.s32.totalorder %s91, %s92
      %p104 = scmp.eq.s32.totalorder %s40, 1
      %p105 = por %p103, %p104
      %p107 = scmp.ne.s32.totalorder %s92, %s106
      %p108 = scmp.eq.s32.totalorder %s40, 0
      %p109 = por %p107, %p108
      %s111 = sadd.s32 %s110, 1
      %p114 = scmp.eq.s32.totalorder %s34, 1
      %p115 = scmp.ne.s32.totalorder %s110, %s112
      %p116 = scmp.eq.s32.totalorder %s34, 0
      %p117 = por %p115, %p116
      %p118 = scmp.ne.s32.totalorder %s110, %s112
      %p119 = scmp.eq.s32.totalorder %s39, 1
      %p120 = por %p118, %p119
      %p121 = scmp.ne.s32.totalorder %s112, %s113
      %p122 = scmp.eq.s32.totalorder %s39, 0
      %p123 = por %p121, %p122
      %p124 = scmp.ne.s32.totalorder %s112, %s113
      %p125 = scmp.eq.s32.totalorder %s40, 1
      %p126 = por %p124, %p125
      %p128 = scmp.ne.s32.totalorder %s113, %s127
      %p129 = scmp.eq.s32.totalorder %s40, 0
      %p130 = por %p128, %p129
      %s132 = sadd.s32 %s131, 1
      %p135 = scmp.eq.s32.totalorder %s34, 1
      %p136 = scmp.ne.s32.totalorder %s131, %s133
      %p137 = scmp.eq.s32.totalorder %s34, 0
      %p138 = por %p136, %p137
      %p139 = scmp.ne.s32.totalorder %s131, %s133
      %p140 = scmp.eq.s32.totalorder %s39, 1
      %p141 = por %p139, %p140
      %p142 = scmp.ne.s32.totalorder %s133, %s134
      %p143 = scmp.eq.s32.totalorder %s39, 0
      %p144 = por %p142, %p143
      %p145 = scmp.ne.s32.totalorder %s133, %s134
      %p146 = scmp.eq.s32.totalorder %s40, 1
      %p147 = por %p145, %p146
      %p149 = scmp.ne.s32.totalorder %s134, %s148
      %p150 = scmp.eq.s32.totalorder %s40, 0
      %p151 = por %p149, %p150
      %s153 = sadd.s32 %s152, 1
      %p156 = scmp.eq.s32.totalorder %s34, 1
      %p157 = scmp.ne.s32.totalorder %s152, %s154
      %p158 = scmp.eq.s32.totalorder %s34, 0
      %p159 = por %p157, %p158
      %p160 = scmp.ne.s32.totalorder %s152, %s154
      %p161 = scmp.eq.s32.totalorder %s39, 1
      %p162 = por %p160, %p161
      %p163 = scmp.ne.s32.totalorder %s154, %s155
      %p164 = scmp.eq.s32.totalorder %s39, 0
      %p165 = por %p163, %p164
      %p166 = scmp.ne.s32.totalorder %s154, %s155
      %p167 = scmp.eq.s32.totalorder %s40, 1
      %p168 = por %p166, %p167
      %p170 = scmp.ne.s32.totalorder %s155, %s169
      %p171 = scmp.eq.s32.totalorder %s40, 0
      %p172 = por %p170, %p171
      %s174 = sadd.s32 %s173, 1
      %p177 = scmp.eq.s32.totalorder %s34, 1
      %p178 = scmp.ne.s32.totalorder %s173, %s175
      %p179 = scmp.eq.s32.totalorder %s34, 0
      %p180 = por %p178, %p179
      %p181 = scmp.ne.s32.totalorder %s173, %s175
      %p182 = scmp.eq.s32.totalorder %s39, 1
      %p183 = por %p181, %p182
      %p184 = scmp.ne.s32.totalorder %s175, %s176
      %p185 = scmp.eq.s32.totalorder %s39, 0
      %p186 = por %p184, %p185
      %p187 = scmp.ne.s32.totalorder %s175, %s176
      %p188 = scmp.eq.s32.totalorder %s40, 1
      %p189 = por %p187, %p188
      %p191 = scmp.ne.s32.totalorder %s176, %s190
      %p192 = scmp.eq.s32.totalorder %s40, 0
      %p193 = por %p191, %p192
      %s195 = sadd.s32 %s194, 1
      %p198 = scmp.eq.s32.totalorder %s34, 1
      %p199 = scmp.ne.s32.totalorder %s194, %s196
      %p200 = scmp.eq.s32.totalorder %s34, 0
      %p201 = por %p199, %p200
      %p202 = scmp.ne.s32.totalorder %s194, %s196
      %p203 = scmp.eq.s32.totalorder %s39, 1
      %p204 = por %p202, %p203
      %p205 = scmp.ne.s32.totalorder %s196, %s197
      %p206 = scmp.eq.s32.totalorder %s39, 0
      %p207 = por %p205, %p206
      %p208 = scmp.ne.s32.totalorder %s196, %s197
      %p209 = scmp.eq.s32.totalorder %s40, 1
      %p210 = por %p208, %p209
      %p212 = scmp.ne.s32.totalorder %s197, %s211
      %p213 = scmp.eq.s32.totalorder %s40, 0
      %p214 = por %p212, %p213
      %s216 = sadd.s32 %s215, 1
      %p219 = scmp.eq.s32.totalorder %s34, 1
      %p220 = scmp.ne.s32.totalorder %s215, %s217
      %p221 = scmp.eq.s32.totalorder %s34, 0
      %p222 = por %p220, %p221
      %p223 = scmp.ne.s32.totalorder %s215, %s217
      %p224 = scmp.eq.s32.totalorder %s39, 1
      %p225 = por %p223, %p224
      %p226 = scmp.ne.s32.totalorder %s217, %s218
      %p227 = scmp.eq.s32.totalorder %s39, 0
      %p228 = por %p226, %p227
      %p229 = scmp.ne.s32.totalorder %s217, %s218
      %p230 = scmp.eq.s32.totalorder %s40, 1
      %p231 = por %p229, %p230
      %p233 = scmp.ne.s32.totalorder %s218, %s232
      %p234 = scmp.eq.s32.totalorder %s40, 0
      %p235 = por %p233, %p234
      %s237 = sadd.s32 %s236, 1
      %p240 = scmp.eq.s32.totalorder %s34, 1
      %p241 = scmp.ne.s32.totalorder %s236, %s238
      %p242 = scmp.eq.s32.totalorder %s34, 0
      %p243 = por %p241, %p242
      %p244 = scmp.ne.s32.totalorder %s236, %s238
      %p245 = scmp.eq.s32.totalorder %s39, 1
      %p246 = por %p244, %p245
      %p247 = scmp.ne.s32.totalorder %s238, %s239
      %p248 = scmp.eq.s32.totalorder %s39, 0
      %p249 = por %p247, %p248
      %p250 = scmp.ne.s32.totalorder %s238, %s239
      %p251 = scmp.eq.s32.totalorder %s40, 1
      %p252 = por %p250, %p251
      %p254 = scmp.ne.s32.totalorder %s239, %s253
      %p255 = scmp.eq.s32.totalorder %s40, 0
      %p256 = por %p254, %p255
      %s258 = sadd.s32 %s257, 1
      %p261 = scmp.eq.s32.totalorder %s34, 1
      %p262 = scmp.ne.s32.totalorder %s257, %s259
      %p263 = scmp.eq.s32.totalorder %s34, 0
      %p264 = por %p262, %p263
      %p265 = scmp.ne.s32.totalorder %s257, %s259
      %p266 = scmp.eq.s32.totalorder %s39, 1
      %p267 = por %p265, %p266
      %p268 = scmp.ne.s32.totalorder %s259, %s260
      %p269 = scmp.eq.s32.totalorder %s39, 0
      %p270 = por %p268, %p269
      %p271 = scmp.ne.s32.totalorder %s259, %s260
      %p272 = scmp.eq.s32.totalorder %s40, 1
      %p273 = por %p271, %p272
      %p275 = scmp.ne.s32.totalorder %s260, %s274
      %p276 = scmp.eq.s32.totalorder %s40, 0
      %p277 = por %p275, %p276
      %s279 = sadd.s32 %s278, 1
      %p282 = scmp.eq.s32.totalorder %s34, 1
      %p283 = scmp.ne.s32.totalorder %s278, %s280
      %p284 = scmp.eq.s32.totalorder %s34, 0
      %p285 = por %p283, %p284
      %p286 = scmp.ne.s32.totalorder %s278, %s280
      %p287 = scmp.eq.s32.totalorder %s39, 1
      %p288 = por %p286, %p287
      %p289 = scmp.ne.s32.totalorder %s280, %s281
      %p290 = scmp.eq.s32.totalorder %s39, 0
      %p291 = por %p289, %p290
      %p292 = scmp.ne.s32.totalorder %s280, %s281
      %p293 = scmp.eq.s32.totalorder %s40, 1
      %p294 = por %p292, %p293
      %p296 = scmp.ne.s32.totalorder %s281, %s295
      %p297 = scmp.eq.s32.totalorder %s40, 0
      %p298 = por %p296, %p297
      %s300 = sadd.s32 %s299, 1
      %p303 = scmp.eq.s32.totalorder %s34, 1
      %p304 = scmp.ne.s32.totalorder %s299, %s301
      %p305 = scmp.eq.s32.totalorder %s34, 0
      %p306 = por %p304, %p305
      %p307 = scmp.ne.s32.totalorder %s299, %s301
      %p308 = scmp.eq.s32.totalorder %s39, 1
      %p309 = por %p307, %p308
      %p310 = scmp.ne.s32.totalorder %s301, %s302
      %p311 = scmp.eq.s32.totalorder %s39, 0
      %p312 = por %p310, %p311
      %p313 = scmp.ne.s32.totalorder %s301, %s302
      %p314 = scmp.eq.s32.totalorder %s40, 1
      %p315 = por %p313, %p314
      %p317 = scmp.ne.s32.totalorder %s302, %s316
      %p318 = scmp.eq.s32.totalorder %s40, 0
      %p319 = por %p317, %p318
      %s321 = sadd.s32 %s320, 1
      %p324 = scmp.eq.s32.totalorder %s34, 1
      %p325 = scmp.ne.s32.totalorder %s320, %s322
      %p326 = scmp.eq.s32.totalorder %s34, 0
      %p327 = por %p325, %p326
      %p328 = scmp.ne.s32.totalorder %s320, %s322
      %p329 = scmp.eq.s32.totalorder %s39, 1
      %p330 = por %p328, %p329
      %p331 = scmp.ne.s32.totalorder %s322, %s323
      %p332 = scmp.eq.s32.totalorder %s39, 0
      %p333 = por %p331, %p332
      %p334 = scmp.ne.s32.totalorder %s322, %s323
      %p335 = scmp.eq.s32.totalorder %s40, 1
      %p336 = por %p334, %p335
      %p338 = scmp.ne.s32.totalorder %s323, %s337
      %p339 = scmp.eq.s32.totalorder %s40, 0
      %p340 = por %p338, %p339
      %s342 = sadd.s32 %s341, 1
      %p345 = scmp.eq.s32.totalorder %s34, 1
      %p346 = scmp.ne.s32.totalorder %s341, %s343
      %p347 = scmp.eq.s32.totalorder %s34, 0
      %p348 = por %p346, %p347
      %p349 = scmp.ne.s32.totalorder %s341, %s343
      %p350 = scmp.eq.s32.totalorder %s39, 1
      %p351 = por %p349, %p350
      %p352 = scmp.ne.s32.totalorder %s343, %s344
      %p353 = scmp.eq.s32.totalorder %s39, 0
      %p354 = por %p352, %p353
      %p355 = scmp.ne.s32.totalorder %s343, %s344
      %p356 = scmp.eq.s32.totalorder %s40, 1
      %p357 = por %p355, %p356
      %p359 = scmp.ne.s32.totalorder %s344, %s358
      %p360 = scmp.eq.s32.totalorder %s40, 0
      %p361 = por %p359, %p360
      %s362 = ssub.s32 %s34, %s41
      %p363 = scmp.eq.s32.totalorder %s362, 0
      %s365 = sadd.s32 %s364, 1
      %s366 = scalar_select %p363, %s364, %s365
      %p369 = pneg %p363
      %p370 = scmp.eq.s32.totalorder %s34, 1
      %p371 = por %p369, %p370
      %p372 = scmp.ne.s32.totalorder %s364, %s367
      %p373 = scmp.eq.s32.totalorder %s34, 0
      %p374 = por %p372, %p373
      %p375 = scmp.ne.s32.totalorder %s364, %s367
      %p376 = scmp.eq.s32.totalorder %s39, 1
      %p377 = por %p375, %p376
      %p378 = scmp.ne.s32.totalorder %s367, %s368
      %p379 = scmp.eq.s32.totalorder %s39, 0
      %p380 = por %p378, %p379
      %p381 = scmp.ne.s32.totalorder %s367, %s368
      %p382 = scmp.eq.s32.totalorder %s40, 1
      %p383 = por %p381, %p382
      %p385 = scmp.ne.s32.totalorder %s368, %s384
      %p386 = scmp.eq.s32.totalorder %s40, 0
      %p387 = por %p385, %p386
      %p388 = scmp.le.s32.totalorder 1, %s34
      %p389 = scmp.lt.s32.totalorder %s34, 3
      %p390 = pnand %p388, %p389
      %p391 = pneg %p390
      // Predicated region
      $region9: #{blip_base_forward.5} parent=5 // pred_check
        _
      $region10: #{blip_base_forward.5} parent=5 // pred_check_branch
        %393 = sbr.rel (%p390) target = $region12
      $region11: #{blip_base_forward.5} parent=5 // pred_region
        %s394 = ssub.s32 %s34, 1
        // Predicated region
        $region13: #{blip_base_forward.5} parent=11 // pred_check
          %p395 = pneg %p81
        $region14: #{blip_base_forward.5} parent=11 // pred_check_branch
          %397 = sbr.rel (%p395) target = $region16
        $region15: #{blip_base_forward.5} parent=11 // pred_region
          %s399 = ssub.s32 16, 16
          %400 = vsyncadd [#allocation6], %s399
          %s402 = sshll.u32 [#allocation5], 4
          %s403 = int_to_ptr.vmem [resolvable:$true] %s402
          %405 = dma.hbm_to_vmem [thread:$0]  %s1, 16, %s403, [#allocation6]
        $region16: #{blip_base_forward.5} parent=11 // pred_fallthru
          _
        // Predicated region
        $region17: #{blip_base_forward.5} parent=11 // pred_check
          %p406 = pneg %p102
        $region18: #{blip_base_forward.5} parent=11 // pred_check_branch
          %408 = sbr.rel (%p406) target = $region20
        $region19: #{blip_base_forward.5} parent=11 // pred_region
          %s410 = ssub.s32 16, 16
          %411 = vsyncadd [#allocation6], %s410
          %s413 = sshll.u32 [#allocation7], 4
          %s414 = int_to_ptr.vmem [resolvable:$true] %s413
          %416 = dma.hbm_to_vmem [thread:$0]  %s2, 16, %s414, [#allocation6]
        $region20: #{blip_base_forward.5} parent=11 // pred_fallthru
          _
        // Predicated region
        $region21: #{blip_base_forward.5} parent=11 // pred_check
          %p417 = pneg %p123
        $region22: #{blip_base_forward.5} parent=11 // pred_check_branch
          %419 = sbr.rel (%p417) target = $region24
        $region23: #{blip_base_forward.5} parent=11 // pred_region
          %s421 = ssub.s32 256, 256
          %422 = vsyncadd [#allocation9], %s421
          %s423 = sshll.u32 [#allocation8], 4
          %s424 = int_to_ptr.vmem [resolvable:$true] %s423
          %429 = dma.hbm_to_vmem [thread:$0]  %s3, 256, %s424, [#allocation9], 64, 64, 4
        $region24: #{blip_base_forward.5} parent=11 // pred_fallthru
          _
        // Predicated region
        $region25: #{blip_base_forward.5} parent=11 // pred_check
          %p430 = pneg %p144
        $region26: #{blip_base_forward.5} parent=11 // pred_check_branch
          %432 = sbr.rel (%p430) target = $region28
        $region27: #{blip_base_forward.5} parent=11 // pred_region
          %s434 = ssub.s32 16, 16
          %435 = vsyncadd [#allocation9], %s434
          %s437 = sshll.u32 [#allocation10], 4
          %s438 = int_to_ptr.vmem [resolvable:$true] %s437
          %440 = dma.hbm_to_vmem [thread:$0]  %s4, 16, %s438, [#allocation9]
        $region28: #{blip_base_forward.5} parent=11 // pred_fallthru
          _
        // Predicated region
        $region29: #{blip_base_forward.5} parent=11 // pred_check
          %p441 = pneg %p165
        $region30: #{blip_base_forward.5} parent=11 // pred_check_branch
          %443 = sbr.rel (%p441) target = $region32
        $region31: #{blip_base_forward.5} parent=11 // pred_region
          %s445 = ssub.s32 256, 256
          %446 = vsyncadd [#allocation12], %s445
          %s447 = sshll.u32 [#allocation11], 4
          %s448 = int_to_ptr.vmem [resolvable:$true] %s447
          %453 = dma.hbm_to_vmem [thread:$0]  %s5, 256, %s448, [#allocation12], 64, 64, 4
        $region32: #{blip_base_forward.5} parent=11 // pred_fallthru
          _
        // Predicated region
        $region33: #{blip_base_forward.5} parent=11 // pred_check
          %p454 = pneg %p186
        $region34: #{blip_base_forward.5} parent=11 // pred_check_branch
          %456 = sbr.rel (%p454) target = $region36
        $region35: #{blip_base_forward.5} parent=11 // pred_region
          %s458 = ssub.s32 16, 16
          %459 = vsyncadd [#allocation12], %s458
          %s461 = sshll.u32 [#allocation13], 4
          %s462 = int_to_ptr.vmem [resolvable:$true] %s461
          %464 = dma.hbm_to_vmem [thread:$0]  %s6, 16, %s462, [#allocation12]
        $region36: #{blip_base_forward.5} parent=11 // pred_fallthru
          _
        // Predicated region
        $region37: #{blip_base_forward.5} parent=11 // pred_check
          %p465 = pneg %p207
        $region38: #{blip_base_forward.5} parent=11 // pred_check_branch
          %467 = sbr.rel (%p465) target = $region40
        $region39: #{blip_base_forward.5} parent=11 // pred_region
          %s469 = ssub.s32 16, 16
          %470 = vsyncadd [#allocation15], %s469
          %s472 = sshll.u32 [#allocation14], 4
          %s473 = int_to_ptr.vmem [resolvable:$true] %s472
          %475 = dma.hbm_to_vmem [thread:$0]  %s7, 16, %s473, [#allocation15]
        $region40: #{blip_base_forward.5} parent=11 // pred_fallthru
          _
        // Predicated region
        $region41: #{blip_base_forward.5} parent=11 // pred_check
          %p476 = pneg %p228
        $region42: #{blip_base_forward.5} parent=11 // pred_check_branch
          %478 = sbr.rel (%p476) target = $region44
        $region43: #{blip_base_forward.5} parent=11 // pred_region
          %s480 = ssub.s32 16, 16
          %481 = vsyncadd [#allocation15], %s480
          %s483 = sshll.u32 [#allocation16], 4
          %s484 = int_to_ptr.vmem [resolvable:$true] %s483
          %486 = dma.hbm_to_vmem [thread:$0]  %s8, 16, %s484, [#allocation15]
        $region44: #{blip_base_forward.5} parent=11 // pred_fallthru
          _
        // Predicated region
        $region45: #{blip_base_forward.5} parent=11 // pred_check
          %p487 = pneg %p249
        $region46: #{blip_base_forward.5} parent=11 // pred_check_branch
          %489 = sbr.rel (%p487) target = $region48
        $region47: #{blip_base_forward.5} parent=11 // pred_region
          %s491 = ssub.s32 256, 256
          %492 = vsyncadd [#allocation18], %s491
          %s493 = sshll.u32 [#allocation17], 4
          %s494 = int_to_ptr.vmem [resolvable:$true] %s493
          %499 = dma.hbm_to_vmem [thread:$0]  %s9, 256, %s494, [#allocation18], 64, 64, 4
        $region48: #{blip_base_forward.5} parent=11 // pred_fallthru
          _
        // Predicated region
        $region49: #{blip_base_forward.5} parent=11 // pred_check
          %p500 = pneg %p270
        $region50: #{blip_base_forward.5} parent=11 // pred_check_branch
          %502 = sbr.rel (%p500) target = $region52
        $region51: #{blip_base_forward.5} parent=11 // pred_region
          %s504 = ssub.s32 16, 16
          %505 = vsyncadd [#allocation18], %s504
          %s507 = sshll.u32 [#allocation19], 4
          %s508 = int_to_ptr.vmem [resolvable:$true] %s507
          %510 = dma.hbm_to_vmem [thread:$0]  %s10, 16, %s508, [#allocation18]
        $region52: #{blip_base_forward.5} parent=11 // pred_fallthru
          _
        // Predicated region
        $region53: #{blip_base_forward.5} parent=11 // pred_check
          %p511 = pneg %p291
        $region54: #{blip_base_forward.5} parent=11 // pred_check_branch
          %513 = sbr.rel (%p511) target = $region56
        $region55: #{blip_base_forward.5} parent=11 // pred_region
          %s515 = ssub.s32 1024, 1024
          %516 = vsyncadd [#allocation21], %s515
          %s517 = sshll.u32 [#allocation20], 4
          %s518 = int_to_ptr.vmem [resolvable:$true] %s517
          %523 = dma.hbm_to_vmem [thread:$0]  %s11, 1024, %s518, [#allocation21], 64, 64, 4
        $region56: #{blip_base_forward.5} parent=11 // pred_fallthru
          _
        // Predicated region
        $region57: #{blip_base_forward.5} parent=11 // pred_check
          %p524 = pneg %p312
        $region58: #{blip_base_forward.5} parent=11 // pred_check_branch
          %526 = sbr.rel (%p524) target = $region60
        $region59: #{blip_base_forward.5} parent=11 // pred_region
          %s528 = ssub.s32 16, 16
          %529 = vsyncadd [#allocation21], %s528
          %s531 = sshll.u32 [#allocation22], 4
          %s532 = int_to_ptr.vmem [resolvable:$true] %s531
          %534 = dma.hbm_to_vmem [thread:$0]  %s12, 16, %s532, [#allocation21]
        $region60: #{blip_base_forward.5} parent=11 // pred_fallthru
          _
        // Predicated region
        $region61: #{blip_base_forward.5} parent=11 // pred_check
          %p535 = pneg %p333
        $region62: #{blip_base_forward.5} parent=11 // pred_check_branch
          %537 = sbr.rel (%p535) target = $region64
        $region63: #{blip_base_forward.5} parent=11 // pred_region
          %s539 = ssub.s32 16, 16
          %540 = vsyncadd [#allocation24], %s539
          %s542 = sshll.u32 [#allocation23], 4
          %s543 = int_to_ptr.vmem [resolvable:$true] %s542
          %545 = dma.hbm_to_vmem [thread:$0]  %s13, 16, %s543, [#allocation24]
        $region64: #{blip_base_forward.5} parent=11 // pred_fallthru
          _
        // Predicated region
        $region65: #{blip_base_forward.5} parent=11 // pred_check
          %p546 = pneg %p354
        $region66: #{blip_base_forward.5} parent=11 // pred_check_branch
          %548 = sbr.rel (%p546) target = $region68
        $region67: #{blip_base_forward.5} parent=11 // pred_region
          %s550 = ssub.s32 16, 16
          %551 = vsyncadd [#allocation24], %s550
          %s553 = sshll.u32 [#allocation25], 4
          %s554 = int_to_ptr.vmem [resolvable:$true] %s553
          %556 = dma.hbm_to_vmem [thread:$0]  %s14, 16, %s554, [#allocation24]
        $region68: #{blip_base_forward.5} parent=11 // pred_fallthru
          _
      $region12: #{blip_base_forward.5} parent=5 // pred_fallthru
        _
      %p557 = scmp.lt.s32.totalorder %s34, 2
      // Predicated region
      $region69: #{blip_base_forward.5} parent=5 // pred_check
        %p558 = pneg %p557
      $region70: #{blip_base_forward.5} parent=5 // pred_check_branch
        %560 = sbr.rel (%p558) target = $region72
      $region71: #{blip_base_forward.5} parent=5 // pred_region
        // Predicated region
        $region73: #{blip_base_forward.5} parent=71 // pred_check
          %p561 = pneg %p54
        $region74: #{blip_base_forward.5} parent=71 // pred_check_branch
          %563 = sbr.rel (%p561) target = $region76
        $region75: #{blip_base_forward.5} parent=71 // pred_region
          %s564 = sand.u32 %s44, 1
          %s565 = scalar_lea.sflag [#allocation3], %s564
          %s566 = sand.u32 %s44, 1
          %s567 = smul.addr %s566, 8
          %s568 = scalar_lea.vmem [#allocation2], %s567
          %s570 = ssub.s32 128, 128
          %571 = vsyncadd %s565, %s570
          %s572 = smul.addr %s34, 128
          %s573 = scalar_lea.hbm %s0, %s572
          %s575 = sshll.u32 %s568, 4
          %s576 = int_to_ptr.vmem [resolvable:$true] %s575
          %578 = dma.hbm_to_vmem [thread:$0]  %s573, 128, %s576, %s565
        $region76: #{blip_base_forward.5} parent=71 // pred_fallthru
          _
      $region72: #{blip_base_forward.5} parent=5 // pred_fallthru
        _
      %p579 = scmp.le.s32.totalorder 1, %s34
      %p580 = scmp.lt.s32.totalorder %s34, 3
      %p581 = pnand %p579, %p580
      %p582 = pneg %p581
      // Predicated region
      $region77: #{blip_base_forward.5} parent=5 // pred_check
        _
      $region78: #{blip_base_forward.5} parent=5 // pred_check_branch
        %584 = sbr.rel (%p581) target = $region80
      $region79: #{blip_base_forward.5} parent=5 // pred_region
        %s585 = ssub.s32 %s34, 1
        %s586 = sand.u32 %s47, 1
        %s587 = scalar_lea.sflag [#allocation3], %s586
        %s588 = sand.u32 %s47, 1
        %s589 = smul.addr %s588, 8
        %s590 = scalar_lea.vmem [#allocation2], %s589
        // Predicated region
        $region81: #{blip_base_forward.5} parent=79 // pred_check
          %p591 = pneg %p60
        $region82: #{blip_base_forward.5} parent=79 // pred_check_branch
          %593 = sbr.rel (%p591) target = $region84
        $region83: #{blip_base_forward.5} parent=79 // pred_region
          %594 = dma.done %s587, 128
        $region84: #{blip_base_forward.5} parent=79 // pred_fallthru
          _
        // Predicated region
        $region85: #{blip_base_forward.5} parent=79 // pred_check
          %p595 = pneg %p81
        $region86: #{blip_base_forward.5} parent=79 // pred_check_branch
          %597 = sbr.rel (%p595) target = $region88
        $region87: #{blip_base_forward.5} parent=79 // pred_region
          %598 = dma.done [#allocation6], 16
        $region88: #{blip_base_forward.5} parent=79 // pred_fallthru
          _
        // Predicated region
        $region89: #{blip_base_forward.5} parent=79 // pred_check
          %p599 = pneg %p102
        $region90: #{blip_base_forward.5} parent=79 // pred_check_branch
          %601 = sbr.rel (%p599) target = $region92
        $region91: #{blip_base_forward.5} parent=79 // pred_region
          %602 = dma.done [#allocation6], 16
        $region92: #{blip_base_forward.5} parent=79 // pred_fallthru
          _
        // Predicated region
        $region93: #{blip_base_forward.5} parent=79 // pred_check
          %p603 = pneg %p123
        $region94: #{blip_base_forward.5} parent=79 // pred_check_branch
          %605 = sbr.rel (%p603) target = $region96
        $region95: #{blip_base_forward.5} parent=79 // pred_region
          %606 = dma.done [#allocation9], 256
        $region96: #{blip_base_forward.5} parent=79 // pred_fallthru
          _
        // Predicated region
        $region97: #{blip_base_forward.5} parent=79 // pred_check
          %p607 = pneg %p144
        $region98: #{blip_base_forward.5} parent=79 // pred_check_branch
          %609 = sbr.rel (%p607) target = $region100
        $region99: #{blip_base_forward.5} parent=79 // pred_region
          %610 = dma.done [#allocation9], 16
        $region100: #{blip_base_forward.5} parent=79 // pred_fallthru
          _
        // Predicated region
        $region101: #{blip_base_forward.5} parent=79 // pred_check
          %p611 = pneg %p165
        $region102: #{blip_base_forward.5} parent=79 // pred_check_branch
          %613 = sbr.rel (%p611) target = $region104
        $region103: #{blip_base_forward.5} parent=79 // pred_region
          %614 = dma.done [#allocation12], 256
        $region104: #{blip_base_forward.5} parent=79 // pred_fallthru
          _
        // Predicated region
        $region105: #{blip_base_forward.5} parent=79 // pred_check
          %p615 = pneg %p186
        $region106: #{blip_base_forward.5} parent=79 // pred_check_branch
          %617 = sbr.rel (%p615) target = $region108
        $region107: #{blip_base_forward.5} parent=79 // pred_region
          %618 = dma.done [#allocation12], 16
        $region108: #{blip_base_forward.5} parent=79 // pred_fallthru
          _
        // Predicated region
        $region109: #{blip_base_forward.5} parent=79 // pred_check
          %p619 = pneg %p207
        $region110: #{blip_base_forward.5} parent=79 // pred_check_branch
          %621 = sbr.rel (%p619) target = $region112
        $region111: #{blip_base_forward.5} parent=79 // pred_region
          %622 = dma.done [#allocation15], 16
        $region112: #{blip_base_forward.5} parent=79 // pred_fallthru
          _
        // Predicated region
        $region113: #{blip_base_forward.5} parent=79 // pred_check
          %p623 = pneg %p228
        $region114: #{blip_base_forward.5} parent=79 // pred_check_branch
          %625 = sbr.rel (%p623) target = $region116
        $region115: #{blip_base_forward.5} parent=79 // pred_region
          %626 = dma.done [#allocation15], 16
        $region116: #{blip_base_forward.5} parent=79 // pred_fallthru
          _
        // Predicated region
        $region117: #{blip_base_forward.5} parent=79 // pred_check
          %p627 = pneg %p249
        $region118: #{blip_base_forward.5} parent=79 // pred_check_branch
          %629 = sbr.rel (%p627) target = $region120
        $region119: #{blip_base_forward.5} parent=79 // pred_region
          %630 = dma.done [#allocation18], 256
        $region120: #{blip_base_forward.5} parent=79 // pred_fallthru
          _
        // Predicated region
        $region121: #{blip_base_forward.5} parent=79 // pred_check
          %p631 = pneg %p270
        $region122: #{blip_base_forward.5} parent=79 // pred_check_branch
          %633 = sbr.rel (%p631) target = $region124
        $region123: #{blip_base_forward.5} parent=79 // pred_region
          %634 = dma.done [#allocation18], 16
        $region124: #{blip_base_forward.5} parent=79 // pred_fallthru
          _
        // Predicated region
        $region125: #{blip_base_forward.5} parent=79 // pred_check
          %p635 = pneg %p291
        $region126: #{blip_base_forward.5} parent=79 // pred_check_branch
          %637 = sbr.rel (%p635) target = $region128
        $region127: #{blip_base_forward.5} parent=79 // pred_region
          %638 = dma.done [#allocation21], 1024
        $region128: #{blip_base_forward.5} parent=79 // pred_fallthru
          _
        // Predicated region
        $region129: #{blip_base_forward.5} parent=79 // pred_check
          %p639 = pneg %p312
        $region130: #{blip_base_forward.5} parent=79 // pred_check_branch
          %641 = sbr.rel (%p639) target = $region132
        $region131: #{blip_base_forward.5} parent=79 // pred_region
          %642 = dma.done [#allocation21], 16
        $region132: #{blip_base_forward.5} parent=79 // pred_fallthru
          _
        // Predicated region
        $region133: #{blip_base_forward.5} parent=79 // pred_check
          %p643 = pneg %p333
        $region134: #{blip_base_forward.5} parent=79 // pred_check_branch
          %645 = sbr.rel (%p643) target = $region136
        $region135: #{blip_base_forward.5} parent=79 // pred_region
          %646 = dma.done [#allocation24], 16
        $region136: #{blip_base_forward.5} parent=79 // pred_fallthru
          _
        // Predicated region
        $region137: #{blip_base_forward.5} parent=79 // pred_check
          %p647 = pneg %p354
        $region138: #{blip_base_forward.5} parent=79 // pred_check_branch
          %649 = sbr.rel (%p647) target = $region140
        $region139: #{blip_base_forward.5} parent=79 // pred_region
          %650 = dma.done [#allocation24], 16
        $region140: #{blip_base_forward.5} parent=79 // pred_fallthru
          _
        %s651 = sand.u32 %s47, 1
        %s652 = scalar_lea.sflag [#allocation3], %s651
        %s653 = sand.u32 %s47, 1
        %s654 = smul.addr %s653, 8
        %s655 = scalar_lea.vmem [#allocation2], %s654
        %p656 = pneg %p60
        %p657 = pneg %p57
        %p658 = pneg %p81
        %p659 = pneg %p78
        %p660 = pneg %p102
        %p661 = pneg %p99
        %p662 = pneg %p123
        %p663 = pneg %p120
        %p664 = pneg %p144
        %p665 = pneg %p141
        %p666 = pneg %p165
        %p667 = pneg %p162
        %p668 = pneg %p186
        %p669 = pneg %p183
        %p670 = pneg %p207
        %p671 = pneg %p204
        %p672 = pneg %p228
        %p673 = pneg %p225
        %p674 = pneg %p249
        %p675 = pneg %p246
        %p676 = pneg %p270
        %p677 = pneg %p267
        %p678 = pneg %p291
        %p679 = pneg %p288
        %p680 = pneg %p312
        %p681 = pneg %p309
        %p682 = pneg %p333
        %p683 = pneg %p330
        %p684 = pneg %p354
        %p685 = pneg %p351
        %p686 = pneg %p380
        %p687 = pneg %p377
        %s688 = sand.u32 %s367, 1
        %s689 = scalar_lea.sflag [#allocation4], %s688
        %s690 = sand.u32 %s367, 1
        %s691 = smul.addr %s690, 8
        %s692 = scalar_lea.vmem [#allocation26], %s691
        %v694 = vld [vmem:[%s590] sm:$0x1f]
        %v695 = vld [vmem:[#allocation5] sm:$0x1]
        %v696 = vld [vmem:[#allocation7] sm:$0x1]
        %vm697 = vcmask 258048
        %v698 = vsel %vm697, %v694, 0.0
        %699 = vadd.xlane.f32.xlu0 %v698
        %v700 = vpop.xlane.xlu0 %699
        %v701 = vrcp.pop 32.0
        %v702 = vmul.f32 %v700, %v701
        %v703 = vsub.f32 %v694, %v702
        %v704 = vmul.f32 %v703, %v703
        %v705 = vsel %vm697, %v704, 0.0
        %706 = vadd.xlane.f32.xlu0 %v705
        %v707 = vpop.xlane.xlu0 %706
        %v708 = vmul.f32 %v707, %v701
        %v709 = vadd.f32 %v708, 1e-06
        %v710 = vrsqrt.pop %v709
        %v711 = vmul.f32 %v703, %v710
        %v713 = vlaneseq
        %v714 = vshrl.u32 %v713, 7
        %v715 = vsub.s32 0, %v714
        %v716 = vrot.slane %v695, %v715
        %v718 = vmul.f32 %v711, %v716
        %v720 = vlaneseq
        %v721 = vshrl.u32 %v720, 7
        %v722 = vsub.s32 0, %v721
        %v723 = vrot.slane %v696, %v722
        %v725 = vadd.f32 %v718, %v723
        %v726 = vld [vmem:[#allocation8] sm:$0xf]
        %v727 = vld [vmem:[#allocation8 + $0x4] sm:$0xf]
        %v728 = vld [vmem:[#allocation8 + $0x8] sm:$0xf]
        %v729 = vld [vmem:[#allocation8 + $0xc] sm:$0xf]
        %v730 = vpack.c.bf16 %v725, %v725
        %v731 = vld [vmem:[#allocation10] sm:$0x1]
        %v733 = vlaneseq
        %v734 = vshrl.u32 %v733, 7
        %v735 = vsub.s32 0, %v734
        %v736 = vrot.slane %v731, %v735
        %v742 = vunpack.c.l.b16 %v726
        %v743 = vunpack.c.l.b16 %v727
        %v744 = vunpack.c.l.b16 %v728
        %v745 = vunpack.c.l.b16 %v729
        %v746 = vpack.c.b16 %v743, %v742
        %v747 = vpack.c.b16 %v745, %v744
        %vm750 = vcmask 261120
        %v752 = vsel %vm750, %v730, 0
        %754 = vmatprep.subr.bf16.mxu0 0
        %755 = vmatpush1.bf16.msra.mxu0 %v746
        %756 = vmatprep.subr.bf16.mxu0 0
        %757 = vmatpush1.bf16.msra.mxu0 %v747
        %758 = vmatprep.subr.bf16.mxu0 0
        %759 = vmatpush1.bf16.msra.mxu0 0
        %760 = vmatprep.subr.bf16.mxu0 0
        %761 = vmatpush1.bf16.msra.mxu0 0
        %762 = vmatprep.subr.bf16.mxu0 0
        %763 = vmatpush1.bf16.msra.mxu0 0
        %764 = vmatprep.subr.bf16.mxu0 0
        %765 = vmatpush1.bf16.msra.mxu0 0
        %766 = vmatprep.subr.bf16.mxu0 0
        %767 = vmatpush1.bf16.msra.mxu0 0
        %768 = vmatprep.subr.bf16.mxu0 0
        %769 = vmatpush1.bf16.msra.mxu0 0
        %770 = vmatprep.subr.bf16.mxu0 0
        %771 = vmatpush1.bf16.msra.mxu0 0
        %772 = vmatprep.subr.bf16.mxu0 0
        %773 = vmatpush1.bf16.msra.mxu0 0
        %774 = vmatprep.subr.bf16.mxu0 0
        %775 = vmatpush1.bf16.msra.mxu0 0
        %776 = vmatprep.subr.bf16.mxu0 0
        %777 = vmatpush1.bf16.msra.mxu0 0
        %778 = vmatprep.subr.bf16.mxu0 0
        %779 = vmatpush1.bf16.msra.mxu0 0
        %780 = vmatprep.subr.bf16.mxu0 0
        %781 = vmatpush1.bf16.msra.mxu0 0
        %782 = vmatprep.subr.bf16.mxu0 0
        %783 = vmatpush1.bf16.msra.mxu0 0
        %784 = vmatprep.subr.bf16.mxu0 0
        %785 = vmatpush1.bf16.msra.mxu0 0
        %786 = vmatprep.mubr.bf16.mxu0 0
        %787 = vmatmul.mubr.bf16.gmra.mrb[0].mxu0 %v752
        %v788 = vpop.f32.mrb[0].mxu0
        %v789 = vadd.f32 %v736, %v788
        %v790 = vpop.f32.mrb[0].mxu0
        %v791 = vpop.f32.mrb[0].mxu0
        %v792 = vpop.f32.mrb[0].mxu0
        %793 = vdwg.mxu0
        %v794 = vld [vmem:[#allocation11] sm:$0xf]
        %v795 = vld [vmem:[#allocation11 + $0x4] sm:$0xf]
        %v796 = vld [vmem:[#allocation11 + $0x8] sm:$0xf]
        %v797 = vld [vmem:[#allocation11 + $0xc] sm:$0xf]
        %799 = vrot.lane.b32.xlu0 %v789, 120
        %v800 = vpop.permute.xlu0 %799
        %802 = vrot.lane.b32.xlu0 %v789, 112
        %v803 = vpop.permute.xlu0 %802
        %805 = vrot.lane.b32.xlu0 %v789, 104
        %v806 = vpop.permute.xlu0 %805
        %v808 = vcombine.low %v789, %v803
        %v809 = vcombine.high %v789, %v803
        %v811 = vunpack.c.l.s4 1983009808
        %v812 = vunpack.c.0.s8 %v811
        %v813 = vlaneseq
        %v814 = vshrl.u32 %v813, 7
        %v815 = vsub.s32 %v812, %v814
        %v816 = vrot.slane %v808, %v815
        %v818 = vunpack.c.l.s4 1983009808
        %v819 = vunpack.c.0.s8 %v818
        %v820 = vlaneseq
        %v821 = vshrl.u32 %v820, 7
        %v822 = vsub.s32 %v819, %v821
        %v823 = vrot.slane %v809, %v822
        %v824 = vcombine.low %v800, %v806
        %v825 = vcombine.high %v800, %v806
        %v827 = vunpack.c.l.s4 1983009808
        %v828 = vunpack.c.0.s8 %v827
        %v829 = vlaneseq
        %v830 = vshrl.u32 %v829, 7
        %v831 = vsub.s32 %v828, %v830
        %v832 = vrot.slane %v824, %v831
        %v834 = vunpack.c.l.s4 1983009808
        %v835 = vunpack.c.0.s8 %v834
        %v836 = vlaneseq
        %v837 = vshrl.u32 %v836, 7
        %v838 = vsub.s32 %v835, %v837
        %v839 = vrot.slane %v825, %v838
        %v840 = vcombine.low %v816, %v832
        %v841 = vcombine.high %v816, %v832
        %v843 = vunpack.c.l.s4 1934713408
        %v844 = vunpack.c.0.s8 %v843
        %v845 = vlaneseq
        %v846 = vshrl.u32 %v845, 7
        %v847 = vsub.s32 %v844, %v846
        %v848 = vrot.slane %v840, %v847
        %v850 = vunpack.c.l.s4 1934713408
        %v851 = vunpack.c.0.s8 %v850
        %v852 = vlaneseq
        %v853 = vshrl.u32 %v852, 7
        %v854 = vsub.s32 %v851, %v853
        %v855 = vrot.slane %v841, %v854
        %v856 = vcombine.low %v823, %v839
        %v857 = vcombine.high %v848, 0.0
        %v858 = vcombine.high %v855, 0.0
        %v860 = vunpack.c.l.s4 1934713408
        %v861 = vunpack.c.0.s8 %v860
        %v862 = vlaneseq
        %v863 = vshrl.u32 %v862, 7
        %v864 = vsub.s32 %v861, %v863
        %v865 = vrot.slane %v856, %v864
        %v866 = vpack.c.bf16 %v848, %v848
        %v867 = vpack.c.bf16 %v865, %v865
        %868 = vrot.lane.b32.xlu0 %v789, 96
        %v869 = vpop.permute.xlu0 %868
        %870 = vrot.lane.b32.xlu0 %v800, 96
        %v871 = vpop.permute.xlu0 %870
        %872 = vrot.lane.b32.xlu0 %v803, 96
        %v873 = vpop.permute.xlu0 %872
        %874 = vrot.lane.b32.xlu0 %v806, 96
        %v875 = vpop.permute.xlu0 %874
        %v880 = vcombine.low %v869, %v873
        %v881 = vcombine.high %v869, %v873
        %v883 = vunpack.c.l.s4 1983009808
        %v884 = vunpack.c.0.s8 %v883
        %v885 = vlaneseq
        %v886 = vshrl.u32 %v885, 7
        %v887 = vsub.s32 %v884, %v886
        %v888 = vrot.slane %v880, %v887
        %v890 = vunpack.c.l.s4 1983009808
        %v891 = vunpack.c.0.s8 %v890
        %v892 = vlaneseq
        %v893 = vshrl.u32 %v892, 7
        %v894 = vsub.s32 %v891, %v893
        %v895 = vrot.slane %v881, %v894
        %v896 = vcombine.low %v871, %v875
        %v897 = vcombine.high %v871, %v875
        %v899 = vunpack.c.l.s4 1983009808
        %v900 = vunpack.c.0.s8 %v899
        %v901 = vlaneseq
        %v902 = vshrl.u32 %v901, 7
        %v903 = vsub.s32 %v900, %v902
        %v904 = vrot.slane %v896, %v903
        %v906 = vunpack.c.l.s4 1983009808
        %v907 = vunpack.c.0.s8 %v906
        %v908 = vlaneseq
        %v909 = vshrl.u32 %v908, 7
        %v910 = vsub.s32 %v907, %v909
        %v911 = vrot.slane %v897, %v910
        %v912 = vcombine.low %v888, %v904
        %v913 = vcombine.high %v888, %v904
        %v915 = vunpack.c.l.s4 1934713408
        %v916 = vunpack.c.0.s8 %v915
        %v917 = vlaneseq
        %v918 = vshrl.u32 %v917, 7
        %v919 = vsub.s32 %v916, %v918
        %v920 = vrot.slane %v912, %v919
        %v922 = vunpack.c.l.s4 1934713408
        %v923 = vunpack.c.0.s8 %v922
        %v924 = vlaneseq
        %v925 = vshrl.u32 %v924, 7
        %v926 = vsub.s32 %v923, %v925
        %v927 = vrot.slane %v913, %v926
        %v928 = vcombine.low %v895, %v911
        %v929 = vcombine.high %v920, 0.0
        %v930 = vcombine.high %v927, 0.0
        %v932 = vunpack.c.l.s4 1934713408
        %v933 = vunpack.c.0.s8 %v932
        %v934 = vlaneseq
        %v935 = vshrl.u32 %v934, 7
        %v936 = vsub.s32 %v933, %v935
        %v937 = vrot.slane %v928, %v936
        %v938 = vpack.c.bf16 %v920, %v920
        %v939 = vpack.c.bf16 %v929, %v929
        %v940 = vpack.c.bf16 %v927, %v927
        %v941 = vpack.c.bf16 %v930, %v930
        %v942 = vpack.c.bf16 %v937, %v937
        %943 = vrot.lane.b32.xlu0 %v789, 64
        %v944 = vpop.permute.xlu0 %943
        %945 = vrot.lane.b32.xlu0 %v800, 64
        %v946 = vpop.permute.xlu0 %945
        %947 = vrot.lane.b32.xlu0 %v803, 64
        %v948 = vpop.permute.xlu0 %947
        %949 = vrot.lane.b32.xlu0 %v806, 64
        %v950 = vpop.permute.xlu0 %949
        %v955 = vcombine.low %v944, %v948
        %v956 = vcombine.high %v944, %v948
        %v958 = vunpack.c.l.s4 1983009808
        %v959 = vunpack.c.0.s8 %v958
        %v960 = vlaneseq
        %v961 = vshrl.u32 %v960, 7
        %v962 = vsub.s32 %v959, %v961
        %v963 = vrot.slane %v955, %v962
        %v965 = vunpack.c.l.s4 1983009808
        %v966 = vunpack.c.0.s8 %v965
        %v967 = vlaneseq
        %v968 = vshrl.u32 %v967, 7
        %v969 = vsub.s32 %v966, %v968
        %v970 = vrot.slane %v956, %v969
        %v971 = vcombine.low %v946, %v950
        %v972 = vcombine.high %v946, %v950
        %v974 = vunpack.c.l.s4 1983009808
        %v975 = vunpack.c.0.s8 %v974
        %v976 = vlaneseq
        %v977 = vshrl.u32 %v976, 7
        %v978 = vsub.s32 %v975, %v977
        %v979 = vrot.slane %v971, %v978
        %v981 = vunpack.c.l.s4 1983009808
        %v982 = vunpack.c.0.s8 %v981
        %v983 = vlaneseq
        %v984 = vshrl.u32 %v983, 7
        %v985 = vsub.s32 %v982, %v984
        %v986 = vrot.slane %v972, %v985
        %v987 = vcombine.low %v963, %v979
        %v988 = vcombine.high %v963, %v979
        %v990 = vunpack.c.l.s4 1934713408
        %v991 = vunpack.c.0.s8 %v990
        %v992 = vlaneseq
        %v993 = vshrl.u32 %v992, 7
        %v994 = vsub.s32 %v991, %v993
        %v995 = vrot.slane %v987, %v994
        %v997 = vunpack.c.l.s4 1934713408
        %v998 = vunpack.c.0.s8 %v997
        %v999 = vlaneseq
        %v1000 = vshrl.u32 %v999, 7
        %v1001 = vsub.s32 %v998, %v1000
        %v1002 = vrot.slane %v988, %v1001
        %v1003 = vcombine.low %v970, %v986
        %v1004 = vcombine.high %v995, 0.0
        %v1005 = vcombine.high %v1002, 0.0
        %v1007 = vunpack.c.l.s4 1934713408
        %v1008 = vunpack.c.0.s8 %v1007
        %v1009 = vlaneseq
        %v1010 = vshrl.u32 %v1009, 7
        %v1011 = vsub.s32 %v1008, %v1010
        %v1012 = vrot.slane %v1003, %v1011
        %v1013 = vpack.c.bf16 %v995, %v995
        %v1014 = vpack.c.bf16 %v1004, %v1004
        %v1015 = vpack.c.bf16 %v1002, %v1002
        %v1016 = vpack.c.bf16 %v1005, %v1005
        %v1017 = vpack.c.bf16 %v1012, %v1012
        %v1018 = vcombine.low %v866, %v867
        %v1020 = vunpack.c.l.s4 1983009808
        %v1021 = vunpack.c.0.s8 %v1020
        %v1022 = vlaneseq
        %v1023 = vshrl.u32 %v1022, 7
        %v1024 = vsub.s32 %v1021, %v1023
        %v1025 = vrot.slane %v1018, %v1024
        %v1026 = vpack.c.bf16 %v855, %v855
        %v1027 = vcombine.low %v1025, %v1026
        %v1029 = vunpack.c.l.s4 1934713408
        %v1030 = vunpack.c.0.s8 %v1029
        %v1031 = vlaneseq
        %v1032 = vshrl.u32 %v1031, 7
        %v1033 = vsub.s32 %v1030, %v1032
        %v1034 = vrot.slane %v1027, %v1033
        %v1035 = vcombine.high %v1034, 0
        %v1036 = vpack.c.bf16 %v857, %v857
        %v1037 = vpack.c.bf16 %v858, %v858
        %v1038 = vcombine.low %v1036, %v1037
        %v1040 = vunpack.c.l.s4 1934713408
        %v1041 = vunpack.c.0.s8 %v1040
        %v1042 = vlaneseq
        %v1043 = vshrl.u32 %v1042, 7
        %v1044 = vsub.s32 %v1041, %v1043
        %v1045 = vrot.slane %v1038, %v1044
        %v1046 = vcombine.high %v1045, 0
        %v1049 = vpack.i.b16 %v1045, %v1034
        %v1050 = vshrl.u32 %v1034, 16
        %v1051 = vshrl.u32 %v1045, 16
        %v1052 = vpack.i.b16 %v1051, %v1050
        %v1055 = vpack.i.b16 %v1046, %v1035
        %v1056 = vshrl.u32 %v1035, 16
        %v1057 = vshrl.u32 %v1046, 16
        %v1058 = vpack.i.b16 %v1057, %v1056
        %1059 = vxpose.xlu0.c.b16.start [1/8] %v938, 128
        %1060 = vxpose.xlu0.c.b16.cont [2/8] 0, 128
        %1061 = vxpose.xlu0.c.b16.cont [3/8] 0, 128
        %1062 = vxpose.xlu0.c.b16.cont [4/8] 0, 128
        %1063 = vxpose.xlu0.c.b16.cont [5/8] 0, 128
        %1064 = vxpose.xlu0.c.b16.cont [6/8] 0, 128
        %1065 = vxpose.xlu0.c.b16.cont [7/8] 0, 128
        %1066 = vxpose.xlu0.c.b16.end [8/8] 0, 128
        %v1067 = vpop.trf.xlu0
        %v1068 = vpop.trf.xlu0
        %v1069 = vpop.trf.xlu0
        %v1070 = vpop.trf.xlu0
        %v1071 = vpop.trf.xlu0
        %v1072 = vpop.trf.xlu0
        %v1073 = vpop.trf.xlu0
        %v1074 = vpop.trf.xlu0
        %1075 = vxpose.xlu0.c.b16.start [1/8] %v939, 128
        %1076 = vxpose.xlu0.c.b16.cont [2/8] 0, 128
        %1077 = vxpose.xlu0.c.b16.cont [3/8] 0, 128
        %1078 = vxpose.xlu0.c.b16.cont [4/8] 0, 128
        %1079 = vxpose.xlu0.c.b16.cont [5/8] 0, 128
        %1080 = vxpose.xlu0.c.b16.cont [6/8] 0, 128
        %1081 = vxpose.xlu0.c.b16.cont [7/8] 0, 128
        %1082 = vxpose.xlu0.c.b16.end [8/8] 0, 128
        %v1083 = vpop.trf.xlu0
        %v1084 = vpop.trf.xlu0
        %v1085 = vpop.trf.xlu0
        %v1086 = vpop.trf.xlu0
        %v1087 = vpop.trf.xlu0
        %v1088 = vpop.trf.xlu0
        %v1089 = vpop.trf.xlu0
        %v1090 = vpop.trf.xlu0
        %1091 = vxpose.xlu0.c.b16.start [1/8] %v940, 128
        %1092 = vxpose.xlu0.c.b16.cont [2/8] 0, 128
        %1093 = vxpose.xlu0.c.b16.cont [3/8] 0, 128
        %1094 = vxpose.xlu0.c.b16.cont [4/8] 0, 128
        %1095 = vxpose.xlu0.c.b16.cont [5/8] 0, 128
        %1096 = vxpose.xlu0.c.b16.cont [6/8] 0, 128
        %1097 = vxpose.xlu0.c.b16.cont [7/8] 0, 128
        %1098 = vxpose.xlu0.c.b16.end [8/8] 0, 128
        %v1099 = vpop.trf.xlu0
        %v1100 = vpop.trf.xlu0
        %v1101 = vpop.trf.xlu0
        %v1102 = vpop.trf.xlu0
        %v1103 = vpop.trf.xlu0
        %v1104 = vpop.trf.xlu0
        %v1105 = vpop.trf.xlu0
        %v1106 = vpop.trf.xlu0
        %1107 = vxpose.xlu0.c.b16.start [1/8] %v941, 128
        %1108 = vxpose.xlu0.c.b16.cont [2/8] 0, 128
        %1109 = vxpose.xlu0.c.b16.cont [3/8] 0, 128
        %1110 = vxpose.xlu0.c.b16.cont [4/8] 0, 128
        %1111 = vxpose.xlu0.c.b16.cont [5/8] 0, 128
        %1112 = vxpose.xlu0.c.b16.cont [6/8] 0, 128
        %1113 = vxpose.xlu0.c.b16.cont [7/8] 0, 128
        %1114 = vxpose.xlu0.c.b16.end [8/8] 0, 128
        %v1115 = vpop.trf.xlu0
        %v1116 = vpop.trf.xlu0
        %v1117 = vpop.trf.xlu0
        %v1118 = vpop.trf.xlu0
        %v1119 = vpop.trf.xlu0
        %v1120 = vpop.trf.xlu0
        %v1121 = vpop.trf.xlu0
        %v1122 = vpop.trf.xlu0
        %1123 = vxpose.xlu0.c.b16.start [1/8] %v942, 128
        %1124 = vxpose.xlu0.c.b16.cont [2/8] 0, 128
        %1125 = vxpose.xlu0.c.b16.cont [3/8] 0, 128
        %1126 = vxpose.xlu0.c.b16.cont [4/8] 0, 128
        %1127 = vxpose.xlu0.c.b16.cont [5/8] 0, 128
        %1128 = vxpose.xlu0.c.b16.cont [6/8] 0, 128
        %1129 = vxpose.xlu0.c.b16.cont [7/8] 0, 128
        %1130 = vxpose.xlu0.c.b16.end [8/8] 0, 128
        %v1131 = vpop.trf.xlu0
        %v1132 = vpop.trf.xlu0
        %v1133 = vpop.trf.xlu0
        %v1134 = vpop.trf.xlu0
        %v1135 = vpop.trf.xlu0
        %v1136 = vpop.trf.xlu0
        %v1137 = vpop.trf.xlu0
        %v1138 = vpop.trf.xlu0
        %v1139 = vcombine.low %v1067, %v1131
        %v1141 = vunpack.c.l.s4 1983009808
        %v1142 = vunpack.c.0.s8 %v1141
        %v1143 = vlaneseq
        %v1144 = vshrl.u32 %v1143, 7
        %v1145 = vsub.s32 %v1142, %v1144
        %v1146 = vrot.slane %v1139, %v1145
        %v1148 = vunpack.c.l.s4 1983009808
        %v1149 = vunpack.c.0.s8 %v1148
        %v1150 = vlaneseq
        %v1151 = vshrl.u32 %v1150, 7
        %v1152 = vsub.s32 %v1149, %v1151
        %v1153 = vrot.slane %v1099, %v1152
        %v1154 = vcombine.low %v1146, %v1153
        %v1155 = vcombine.high %v1146, %v1153
        %v1157 = vunpack.c.l.s4 1934713408
        %v1158 = vunpack.c.0.s8 %v1157
        %v1159 = vlaneseq
        %v1160 = vshrl.u32 %v1159, 7
        %v1161 = vsub.s32 %v1158, %v1160
        %v1162 = vrot.slane %v1154, %v1161
        %v1164 = vunpack.c.l.s4 1934713408
        %v1165 = vunpack.c.0.s8 %v1164
        %v1166 = vlaneseq
        %v1167 = vshrl.u32 %v1166, 7
        %v1168 = vsub.s32 %v1165, %v1167
        %v1169 = vrot.slane %v1155, %v1168
        %v1170 = vcombine.high %v1162, 0
        %v1171 = vcombine.high %v1169, 0
        %v1173 = vunpack.c.l.s4 1983009808
        %v1174 = vunpack.c.0.s8 %v1173
        %v1175 = vlaneseq
        %v1176 = vshrl.u32 %v1175, 7
        %v1177 = vsub.s32 %v1174, %v1176
        %v1178 = vrot.slane %v1083, %v1177
        %v1180 = vunpack.c.l.s4 1983009808
        %v1181 = vunpack.c.0.s8 %v1180
        %v1182 = vlaneseq
        %v1183 = vshrl.u32 %v1182, 7
        %v1184 = vsub.s32 %v1181, %v1183
        %v1185 = vrot.slane %v1115, %v1184
        %v1186 = vcombine.low %v1178, %v1185
        %v1187 = vcombine.high %v1178, %v1185
        %v1189 = vunpack.c.l.s4 1934713408
        %v1190 = vunpack.c.0.s8 %v1189
        %v1191 = vlaneseq
        %v1192 = vshrl.u32 %v1191, 7
        %v1193 = vsub.s32 %v1190, %v1192
        %v1194 = vrot.slane %v1186, %v1193
        %v1196 = vunpack.c.l.s4 1934713408
        %v1197 = vunpack.c.0.s8 %v1196
        %v1198 = vlaneseq
        %v1199 = vshrl.u32 %v1198, 7
        %v1200 = vsub.s32 %v1197, %v1199
        %v1201 = vrot.slane %v1187, %v1200
        %v1202 = vcombine.high %v1194, 0
        %v1203 = vcombine.high %v1201, 0
        %v1206 = vpack.i.b16 %v1194, %v1162
        %v1208 = vshrl.u32 %v1162, 16
        %v1209 = vshrl.u32 %v1194, 16
        %v1210 = vpack.i.b16 %v1209, %v1208
        %v1214 = vpack.i.b16 %v1202, %v1170
        %v1216 = vshrl.u32 %v1170, 16
        %v1217 = vshrl.u32 %v1202, 16
        %v1218 = vpack.i.b16 %v1217, %v1216
        %v1222 = vpack.i.b16 %v1201, %v1169
        %v1224 = vshrl.u32 %v1169, 16
        %v1225 = vshrl.u32 %v1201, 16
        %v1226 = vpack.i.b16 %v1225, %v1224
        %v1230 = vpack.i.b16 %v1203, %v1171
        %v1232 = vshrl.u32 %v1171, 16
        %v1233 = vshrl.u32 %v1203, 16
        %v1234 = vpack.i.b16 %v1233, %v1232
        %1236 = vxpose.xlu0.c.b16.start [1/8] %v1206, 128
        %1237 = vxpose.xlu0.c.b16.cont [2/8] 0, 128
        %1238 = vxpose.xlu0.c.b16.cont [3/8] 0, 128
        %1239 = vxpose.xlu0.c.b16.cont [4/8] 0, 128
        %1240 = vxpose.xlu0.c.b16.cont [5/8] 0, 128
        %1241 = vxpose.xlu0.c.b16.cont [6/8] 0, 128
        %1242 = vxpose.xlu0.c.b16.cont [7/8] 0, 128
        %1243 = vxpose.xlu0.c.b16.end [8/8] 0, 128
        %v1244 = vpop.trf.xlu0
        %v1245 = vpop.trf.xlu0
        %v1246 = vpop.trf.xlu0
        %v1247 = vpop.trf.xlu0
        %v1248 = vpop.trf.xlu0
        %v1249 = vpop.trf.xlu0
        %v1250 = vpop.trf.xlu0
        %v1251 = vpop.trf.xlu0
        %1252 = vxpose.xlu0.c.b16.start [1/8] %v1210, 128
        %1253 = vxpose.xlu0.c.b16.cont [2/8] 0, 128
        %1254 = vxpose.xlu0.c.b16.cont [3/8] 0, 128
        %1255 = vxpose.xlu0.c.b16.cont [4/8] 0, 128
        %1256 = vxpose.xlu0.c.b16.cont [5/8] 0, 128
        %1257 = vxpose.xlu0.c.b16.cont [6/8] 0, 128
        %1258 = vxpose.xlu0.c.b16.cont [7/8] 0, 128
        %1259 = vxpose.xlu0.c.b16.end [8/8] 0, 128
        %v1260 = vpop.trf.xlu0
        %v1261 = vpop.trf.xlu0
        %v1262 = vpop.trf.xlu0
        %v1263 = vpop.trf.xlu0
        %v1264 = vpop.trf.xlu0
        %v1265 = vpop.trf.xlu0
        %v1266 = vpop.trf.xlu0
        %v1267 = vpop.trf.xlu0
        %1268 = vxpose.xlu0.c.b16.start [1/8] %v1214, 128
        %1269 = vxpose.xlu0.c.b16.cont [2/8] 0, 128
        %1270 = vxpose.xlu0.c.b16.cont [3/8] 0, 128
        %1271 = vxpose.xlu0.c.b16.cont [4/8] 0, 128
        %1272 = vxpose.xlu0.c.b16.cont [5/8] 0, 128
        %1273 = vxpose.xlu0.c.b16.cont [6/8] 0, 128
        %1274 = vxpose.xlu0.c.b16.cont [7/8] 0, 128
        %1275 = vxpose.xlu0.c.b16.end [8/8] 0, 128
        %v1276 = vpop.trf.xlu0
        %v1277 = vpop.trf.xlu0
        %v1278 = vpop.trf.xlu0
        %v1279 = vpop.trf.xlu0
        %v1280 = vpop.trf.xlu0
        %v1281 = vpop.trf.xlu0
        %v1282 = vpop.trf.xlu0
        %v1283 = vpop.trf.xlu0
        %1284 = vxpose.xlu0.c.b16.start [1/8] %v1218, 128
        %1285 = vxpose.xlu0.c.b16.cont [2/8] 0, 128
        %1286 = vxpose.xlu0.c.b16.cont [3/8] 0, 128
        %1287 = vxpose.xlu0.c.b16.cont [4/8] 0, 128
        %1288 = vxpose.xlu0.c.b16.cont [5/8] 0, 128
        %1289 = vxpose.xlu0.c.b16.cont [6/8] 0, 128
        %1290 = vxpose.xlu0.c.b16.cont [7/8] 0, 128
        %1291 = vxpose.xlu0.c.b16.end [8/8] 0, 128
        %v1292 = vpop.trf.xlu0
        %v1293 = vpop.trf.xlu0
        %v1294 = vpop.trf.xlu0
        %v1295 = vpop.trf.xlu0
        %v1296 = vpop.trf.xlu0
        %v1297 = vpop.trf.xlu0
        %v1298 = vpop.trf.xlu0
        %v1299 = vpop.trf.xlu0
        %1300 = vxpose.xlu0.c.b16.start [1/8] %v1222, 128
        %1301 = vxpose.xlu0.c.b16.cont [2/8] 0, 128
        %1302 = vxpose.xlu0.c.b16.cont [3/8] 0, 128
        %1303 = vxpose.xlu0.c.b16.cont [4/8] 0, 128
        %1304 = vxpose.xlu0.c.b16.cont [5/8] 0, 128
        %1305 = vxpose.xlu0.c.b16.cont [6/8] 0, 128
        %1306 = vxpose.xlu0.c.b16.cont [7/8] 0, 128
        %1307 = vxpose.xlu0.c.b16.end [8/8] 0, 128
        %v1308 = vpop.trf.xlu0
        %v1309 = vpop.trf.xlu0
        %v1310 = vpop.trf.xlu0
        %v1311 = vpop.trf.xlu0
        %v1312 = vpop.trf.xlu0
        %v1313 = vpop.trf.xlu0
        %v1314 = vpop.trf.xlu0
        %v1315 = vpop.trf.xlu0
        %1316 = vxpose.xlu0.c.b16.start [1/8] %v1226, 128
        %1317 = vxpose.xlu0.c.b16.cont [2/8] 0, 128
        %1318 = vxpose.xlu0.c.b16.cont [3/8] 0, 128
        %1319 = vxpose.xlu0.c.b16.cont [4/8] 0, 128
        %1320 = vxpose.xlu0.c.b16.cont [5/8] 0, 128
        %1321 = vxpose.xlu0.c.b16.cont [6/8] 0, 128
        %1322 = vxpose.xlu0.c.b16.cont [7/8] 0, 128
        %1323 = vxpose.xlu0.c.b16.end [8/8] 0, 128
        %v1324 = vpop.trf.xlu0
        %v1325 = vpop.trf.xlu0
        %v1326 = vpop.trf.xlu0
        %v1327 = vpop.trf.xlu0
        %v1328 = vpop.trf.xlu0
        %v1329 = vpop.trf.xlu0
        %v1330 = vpop.trf.xlu0
        %v1331 = vpop.trf.xlu0
        %1332 = vxpose.xlu0.c.b16.start [1/8] %v1230, 128
        %1333 = vxpose.xlu0.c.b16.cont [2/8] 0, 128
        %1334 = vxpose.xlu0.c.b16.cont [3/8] 0, 128
        %1335 = vxpose.xlu0.c.b16.cont [4/8] 0, 128
        %1336 = vxpose.xlu0.c.b16.cont [5/8] 0, 128
        %1337 = vxpose.xlu0.c.b16.cont [6/8] 0, 128
        %1338 = vxpose.xlu0.c.b16.cont [7/8] 0, 128
        %1339 = vxpose.xlu0.c.b16.end [8/8] 0, 128
        %v1340 = vpop.trf.xlu0
        %v1341 = vpop.trf.xlu0
        %v1342 = vpop.trf.xlu0
        %v1343 = vpop.trf.xlu0
        %v1344 = vpop.trf.xlu0
        %v1345 = vpop.trf.xlu0
        %v1346 = vpop.trf.xlu0
        %v1347 = vpop.trf.xlu0
        %1348 = vxpose.xlu0.c.b16.start [1/8] %v1234, 128
        %1349 = vxpose.xlu0.c.b16.cont [2/8] 0, 128
        %1350 = vxpose.xlu0.c.b16.cont [3/8] 0, 128
        %1351 = vxpose.xlu0.c.b16.cont [4/8] 0, 128
        %1352 = vxpose.xlu0.c.b16.cont [5/8] 0, 128
        %1353 = vxpose.xlu0.c.b16.cont [6/8] 0, 128
        %1354 = vxpose.xlu0.c.b16.cont [7/8] 0, 128
        %1355 = vxpose.xlu0.c.b16.end [8/8] 0, 128
        %v1356 = vpop.trf.xlu0
        %v1357 = vpop.trf.xlu0
        %v1358 = vpop.trf.xlu0
        %v1359 = vpop.trf.xlu0
        %v1360 = vpop.trf.xlu0
        %v1361 = vpop.trf.xlu0
        %v1362 = vpop.trf.xlu0
        %v1363 = vpop.trf.xlu0
        %v1364 = vcombine.low %v1244, %v1308
        %v1366 = vunpack.c.l.s4 1983009808
        %v1367 = vunpack.c.0.s8 %v1366
        %v1368 = vlaneseq
        %v1369 = vshrl.u32 %v1368, 7
        %v1370 = vsub.s32 %v1367, %v1369
        %v1371 = vrot.slane %v1364, %v1370
        %v1372 = vcombine.low %v1276, %v1340
        %v1374 = vunpack.c.l.s4 1983009808
        %v1375 = vunpack.c.0.s8 %v1374
        %v1376 = vlaneseq
        %v1377 = vshrl.u32 %v1376, 7
        %v1378 = vsub.s32 %v1375, %v1377
        %v1379 = vrot.slane %v1372, %v1378
        %v1380 = vcombine.low %v1371, %v1379
        %v1382 = vunpack.c.l.s4 1934713408
        %v1383 = vunpack.c.0.s8 %v1382
        %v1384 = vlaneseq
        %v1385 = vshrl.u32 %v1384, 7
        %v1386 = vsub.s32 %v1383, %v1385
        %v1387 = vrot.slane %v1380, %v1386
        %v1388 = vcombine.high %v1387, 0
        %v1389 = vcombine.low %v1260, %v1324
        %v1391 = vunpack.c.l.s4 1983009808
        %v1392 = vunpack.c.0.s8 %v1391
        %v1393 = vlaneseq
        %v1394 = vshrl.u32 %v1393, 7
        %v1395 = vsub.s32 %v1392, %v1394
        %v1396 = vrot.slane %v1389, %v1395
        %v1397 = vcombine.low %v1292, %v1356
        %v1399 = vunpack.c.l.s4 1983009808
        %v1400 = vunpack.c.0.s8 %v1399
        %v1401 = vlaneseq
        %v1402 = vshrl.u32 %v1401, 7
        %v1403 = vsub.s32 %v1400, %v1402
        %v1404 = vrot.slane %v1397, %v1403
        %v1405 = vcombine.low %v1396, %v1404
        %v1407 = vunpack.c.l.s4 1934713408
        %v1408 = vunpack.c.0.s8 %v1407
        %v1409 = vlaneseq
        %v1410 = vshrl.u32 %v1409, 7
        %v1411 = vsub.s32 %v1408, %v1410
        %v1412 = vrot.slane %v1405, %v1411
        %v1413 = vcombine.high %v1412, 0
        %v1416 = vpack.i.b16 %v1412, %v1387
        %v1417 = vshrl.u32 %v1387, 16
        %v1418 = vshrl.u32 %v1412, 16
        %v1419 = vpack.i.b16 %v1418, %v1417
        %v1422 = vpack.i.b16 %v1413, %v1388
        %v1423 = vshrl.u32 %v1388, 16
        %v1424 = vshrl.u32 %v1413, 16
        %v1425 = vpack.i.b16 %v1424, %v1423
        %vm1426 = vcmask 64512
        %v1428 = vsel %vm1426, %v1049, 0
        %vm1430 = vcmask 1043456
        %v1432 = vsel %vm1430, %v1416, 0
        %1434 = vmatprep.subr.bf16.mxu0 0
        %1435 = vmatpush1.bf16.msra.mxu0 %v1432
        %1436 = vmatprep.subr.bf16.mxu0 0
        %1437 = vmatpush1.bf16.msra.mxu0 0
        %1438 = vmatprep.subr.bf16.mxu0 0
        %1439 = vmatpush1.bf16.msra.mxu0 0
        %1440 = vmatprep.subr.bf16.mxu0 0
        %1441 = vmatpush1.bf16.msra.mxu0 0
        %1442 = vmatprep.subr.bf16.mxu0 0
        %1443 = vmatpush1.bf16.msra.mxu0 0
        %1444 = vmatprep.subr.bf16.mxu0 0
        %1445 = vmatpush1.bf16.msra.mxu0 0
        %1446 = vmatprep.subr.bf16.mxu0 0
        %1447 = vmatpush1.bf16.msra.mxu0 0
        %1448 = vmatprep.subr.bf16.mxu0 0
        %1449 = vmatpush1.bf16.msra.mxu0 0
        %1450 = vmatprep.subr.bf16.mxu0 0
        %1451 = vmatpush1.bf16.msra.mxu0 0
        %1452 = vmatprep.subr.bf16.mxu0 0
        %1453 = vmatpush1.bf16.msra.mxu0 0
        %1454 = vmatprep.subr.bf16.mxu0 0
        %1455 = vmatpush1.bf16.msra.mxu0 0
        %1456 = vmatprep.subr.bf16.mxu0 0
        %1457 = vmatpush1.bf16.msra.mxu0 0
        %1458 = vmatprep.subr.bf16.mxu0 0
        %1459 = vmatpush1.bf16.msra.mxu0 0
        %1460 = vmatprep.subr.bf16.mxu0 0
        %1461 = vmatpush1.bf16.msra.mxu0 0
        %1462 = vmatprep.subr.bf16.mxu0 0
        %1463 = vmatpush1.bf16.msra.mxu0 0
        %1464 = vmatprep.subr.bf16.mxu0 0
        %1465 = vmatpush1.bf16.msra.mxu0 0
        %1466 = vmatprep.mubr.bf16.mxu0 0
        %1467 = vmatmul.mubr.bf16.gmra.mrb[0].mxu0 %v1428
        %v1468 = vpop.f32.mrb[0].mxu0
        %v1469 = vadd.f32 0.0, %v1468
        %v1470 = vpop.f32.mrb[0].mxu0
        %v1471 = vpop.f32.mrb[0].mxu0
        %v1472 = vpop.f32.mrb[0].mxu0
        %1473 = vdwg.mxu0
        %v1475 = vsel %vm1426, %v1052, 0
        %v1478 = vsel %vm1430, %v1419, 0
        %1480 = vmatprep.subr.bf16.mxu0 0
        %1481 = vmatpush1.bf16.msra.mxu0 %v1478
        %1482 = vmatprep.subr.bf16.mxu0 0
        %1483 = vmatpush1.bf16.msra.mxu0 0
        %1484 = vmatprep.subr.bf16.mxu0 0
        %1485 = vmatpush1.bf16.msra.mxu0 0
        %1486 = vmatprep.subr.bf16.mxu0 0
        %1487 = vmatpush1.bf16.msra.mxu0 0
        %1488 = vmatprep.subr.bf16.mxu0 0
        %1489 = vmatpush1.bf16.msra.mxu0 0
        %1490 = vmatprep.subr.bf16.mxu0 0
        %1491 = vmatpush1.bf16.msra.mxu0 0
        %1492 = vmatprep.subr.bf16.mxu0 0
        %1493 = vmatpush1.bf16.msra.mxu0 0
        %1494 = vmatprep.subr.bf16.mxu0 0
        %1495 = vmatpush1.bf16.msra.mxu0 0
        %1496 = vmatprep.subr.bf16.mxu0 0
        %1497 = vmatpush1.bf16.msra.mxu0 0
        %1498 = vmatprep.subr.bf16.mxu0 0
        %1499 = vmatpush1.bf16.msra.mxu0 0
        %1500 = vmatprep.subr.bf16.mxu0 0
        %1501 = vmatpush1.bf16.msra.mxu0 0
        %1502 = vmatprep.subr.bf16.mxu0 0
        %1503 = vmatpush1.bf16.msra.mxu0 0
        %1504 = vmatprep.subr.bf16.mxu0 0
        %1505 = vmatpush1.bf16.msra.mxu0 0
        %1506 = vmatprep.subr.bf16.mxu0 0
        %1507 = vmatpush1.bf16.msra.mxu0 0
        %1508 = vmatprep.subr.bf16.mxu0 0
        %1509 = vmatpush1.bf16.msra.mxu0 0
        %1510 = vmatprep.subr.bf16.mxu0 0
        %1511 = vmatpush1.bf16.msra.mxu0 0
        %1512 = vmatprep.mubr.bf16.mxu0 0
        %1513 = vmatmul.mubr.bf16.gmra.mrb[0].mxu0 %v1475
        %v1514 = vpop.f32.mrb[0].mxu0
        %v1515 = vadd.f32 0.0, %v1514
        %v1516 = vpop.f32.mrb[0].mxu0
        %v1517 = vpop.f32.mrb[0].mxu0
        %v1518 = vpop.f32.mrb[0].mxu0
        %1519 = vdwg.mxu0
        %v1521 = vsel %vm1426, %v1055, 0
        %v1524 = vsel %vm1430, %v1422, 0
        %1526 = vmatprep.subr.bf16.mxu0 0
        %1527 = vmatpush1.bf16.msra.mxu0 %v1524
        %1528 = vmatprep.subr.bf16.mxu0 0
        %1529 = vmatpush1.bf16.msra.mxu0 0
        %1530 = vmatprep.subr.bf16.mxu0 0
        %1531 = vmatpush1.bf16.msra.mxu0 0
        %1532 = vmatprep.subr.bf16.mxu0 0
        %1533 = vmatpush1.bf16.msra.mxu0 0
        %1534 = vmatprep.subr.bf16.mxu0 0
        %1535 = vmatpush1.bf16.msra.mxu0 0
        %1536 = vmatprep.subr.bf16.mxu0 0
        %1537 = vmatpush1.bf16.msra.mxu0 0
        %1538 = vmatprep.subr.bf16.mxu0 0
        %1539 = vmatpush1.bf16.msra.mxu0 0
        %1540 = vmatprep.subr.bf16.mxu0 0
        %1541 = vmatpush1.bf16.msra.mxu0 0
        %1542 = vmatprep.subr.bf16.mxu0 0
        %1543 = vmatpush1.bf16.msra.mxu0 0
        %1544 = vmatprep.subr.bf16.mxu0 0
        %1545 = vmatpush1.bf16.msra.mxu0 0
        %1546 = vmatprep.subr.bf16.mxu0 0
        %1547 = vmatpush1.bf16.msra.mxu0 0
        %1548 = vmatprep.subr.bf16.mxu0 0
        %1549 = vmatpush1.bf16.msra.mxu0 0
        %1550 = vmatprep.subr.bf16.mxu0 0
        %1551 = vmatpush1.bf16.msra.mxu0 0
        %1552 = vmatprep.subr.bf16.mxu0 0
        %1553 = vmatpush1.bf16.msra.mxu0 0
        %1554 = vmatprep.subr.bf16.mxu0 0
        %1555 = vmatpush1.bf16.msra.mxu0 0
        %1556 = vmatprep.subr.bf16.mxu0 0
        %1557 = vmatpush1.bf16.msra.mxu0 0
        %1558 = vmatprep.mubr.bf16.mxu0 0
        %1559 = vmatmul.mubr.bf16.gmra.mrb[0].mxu0 %v1521
        %v1560 = vpop.f32.mrb[0].mxu0
        %v1561 = vadd.f32 0.0, %v1560
        %v1562 = vpop.f32.mrb[0].mxu0
        %v1563 = vpop.f32.mrb[0].mxu0
        %v1564 = vpop.f32.mrb[0].mxu0
        %1565 = vdwg.mxu0
        %v1567 = vsel %vm1426, %v1058, 0
        %v1570 = vsel %vm1430, %v1425, 0
        %1572 = vmatprep.subr.bf16.mxu0 0
        %1573 = vmatpush1.bf16.msra.mxu0 %v1570
        %1574 = vmatprep.subr.bf16.mxu0 0
        %1575 = vmatpush1.bf16.msra.mxu0 0
        %1576 = vmatprep.subr.bf16.mxu0 0
        %1577 = vmatpush1.bf16.msra.mxu0 0
        %1578 = vmatprep.subr.bf16.mxu0 0
        %1579 = vmatpush1.bf16.msra.mxu0 0
        %1580 = vmatprep.subr.bf16.mxu0 0
        %1581 = vmatpush1.bf16.msra.mxu0 0
        %1582 = vmatprep.subr.bf16.mxu0 0
        %1583 = vmatpush1.bf16.msra.mxu0 0
        %1584 = vmatprep.subr.bf16.mxu0 0
        %1585 = vmatpush1.bf16.msra.mxu0 0
        %1586 = vmatprep.subr.bf16.mxu0 0
        %1587 = vmatpush1.bf16.msra.mxu0 0
        %1588 = vmatprep.subr.bf16.mxu0 0
        %1589 = vmatpush1.bf16.msra.mxu0 0
        %1590 = vmatprep.subr.bf16.mxu0 0
        %1591 = vmatpush1.bf16.msra.mxu0 0
        %1592 = vmatprep.subr.bf16.mxu0 0
        %1593 = vmatpush1.bf16.msra.mxu0 0
        %1594 = vmatprep.subr.bf16.mxu0 0
        %1595 = vmatpush1.bf16.msra.mxu0 0
        %1596 = vmatprep.subr.bf16.mxu0 0
        %1597 = vmatpush1.bf16.msra.mxu0 0
        %1598 = vmatprep.subr.bf16.mxu0 0
        %1599 = vmatpush1.bf16.msra.mxu0 0
        %1600 = vmatprep.subr.bf16.mxu0 0
        %1601 = vmatpush1.bf16.msra.mxu0 0
        %1602 = vmatprep.subr.bf16.mxu0 0
        %1603 = vmatpush1.bf16.msra.mxu0 0
        %1604 = vmatprep.mubr.bf16.mxu0 0
        %1605 = vmatmul.mubr.bf16.gmra.mrb[0].mxu0 %v1567
        %v1606 = vpop.f32.mrb[0].mxu0
        %v1607 = vadd.f32 0.0, %v1606
        %v1608 = vpop.f32.mrb[0].mxu0
        %v1609 = vpop.f32.mrb[0].mxu0
        %v1610 = vpop.f32.mrb[0].mxu0
        %1611 = vdwg.mxu0
        %v1612 = vmul.f32 %v1469, 0.35355338
        %v1613 = vmul.f32 %v1515, 0.35355338
        %v1614 = vmul.f32 %v1561, 0.35355338
        %v1615 = vmul.f32 %v1607, 0.35355338
        %vm1616 = vcmask 36864
        %v1617 = vsel %vm1616, %v1612, -inf
        %1618 = vmax.xlane.f32.xlu0 %v1617
        %v1619 = vpop.xlane.xlu0 %1618
        %v1620 = vsel %vm1616, %v1613, -inf
        %1621 = vmax.xlane.f32.xlu0 %v1620
        %v1622 = vpop.xlane.xlu0 %1621
        %v1623 = vsel %vm1616, %v1614, -inf
        %1624 = vmax.xlane.f32.xlu0 %v1623
        %v1625 = vpop.xlane.xlu0 %1624
        %v1626 = vsel %vm1616, %v1615, -inf
        %1627 = vmax.xlane.f32.xlu0 %v1626
        %v1628 = vpop.xlane.xlu0 %1627
        %v1629 = vsub.f32 %v1612, %v1619
        %v1630 = vsub.f32 %v1613, %v1622
        %v1631 = vsub.f32 %v1614, %v1625
        %v1632 = vsub.f32 %v1615, %v1628
        %v1633 = vmul.f32 %v1629, 1.442695
        %v1634 = vpow.pop %v1633
        %v1635 = vmul.f32 %v1630, 1.442695
        %v1636 = vpow.pop %v1635
        %v1637 = vmul.f32 %v1631, 1.442695
        %v1638 = vpow.pop %v1637
        %v1639 = vmul.f32 %v1632, 1.442695
        %v1640 = vpow.pop %v1639
        %v1641 = vsel %vm1616, %v1634, 0.0
        %1642 = vadd.xlane.f32.xlu0 %v1641
        %v1643 = vpop.xlane.xlu0 %1642
        %v1644 = vsel %vm1616, %v1636, 0.0
        %1645 = vadd.xlane.f32.xlu0 %v1644
        %v1646 = vpop.xlane.xlu0 %1645
        %v1647 = vsel %vm1616, %v1638, 0.0
        %1648 = vadd.xlane.f32.xlu0 %v1647
        %v1649 = vpop.xlane.xlu0 %1648
        %v1650 = vsel %vm1616, %v1640, 0.0
        %1651 = vadd.xlane.f32.xlu0 %v1650
        %v1652 = vpop.xlane.xlu0 %1651
        %v1653 = vrcp.pop %v1643
        %v1654 = vrcp.pop %v1646
        %v1655 = vrcp.pop %v1649
        %v1656 = vrcp.pop %v1652
        %v1657 = vmul.f32 %v1634, %v1653
        %v1658 = vmul.f32 %v1636, %v1654
        %v1659 = vmul.f32 %v1638, %v1655
        %v1660 = vmul.f32 %v1640, %v1656
        %v1661 = vpack.c.bf16 %v1657, %v1657
        %v1662 = vpack.c.bf16 %v1658, %v1658
        %v1663 = vpack.c.bf16 %v1659, %v1659
        %v1664 = vpack.c.bf16 %v1660, %v1660
        %1665 = vxpose.xlu0.c.b16.start [1/8] %v1013, 128
        %1666 = vxpose.xlu0.c.b16.cont [2/8] 0, 128
        %1667 = vxpose.xlu0.c.b16.cont [3/8] 0, 128
        %1668 = vxpose.xlu0.c.b16.cont [4/8] 0, 128
        %1669 = vxpose.xlu0.c.b16.cont [5/8] 0, 128
        %1670 = vxpose.xlu0.c.b16.cont [6/8] 0, 128
        %1671 = vxpose.xlu0.c.b16.cont [7/8] 0, 128
        %1672 = vxpose.xlu0.c.b16.end [8/8] 0, 128
        %v1673 = vpop.trf.xlu0
        %v1674 = vpop.trf.xlu0
        %v1675 = vpop.trf.xlu0
        %v1676 = vpop.trf.xlu0
        %v1677 = vpop.trf.xlu0
        %v1678 = vpop.trf.xlu0
        %v1679 = vpop.trf.xlu0
        %v1680 = vpop.trf.xlu0
        %1681 = vxpose.xlu0.c.b16.start [1/8] %v1014, 128
        %1682 = vxpose.xlu0.c.b16.cont [2/8] 0, 128
        %1683 = vxpose.xlu0.c.b16.cont [3/8] 0, 128
        %1684 = vxpose.xlu0.c.b16.cont [4/8] 0, 128
        %1685 = vxpose.xlu0.c.b16.cont [5/8] 0, 128
        %1686 = vxpose.xlu0.c.b16.cont [6/8] 0, 128
        %1687 = vxpose.xlu0.c.b16.cont [7/8] 0, 128
        %1688 = vxpose.xlu0.c.b16.end [8/8] 0, 128
        %v1689 = vpop.trf.xlu0
        %v1690 = vpop.trf.xlu0
        %v1691 = vpop.trf.xlu0
        %v1692 = vpop.trf.xlu0
        %v1693 = vpop.trf.xlu0
        %v1694 = vpop.trf.xlu0
        %v1695 = vpop.trf.xlu0
        %v1696 = vpop.trf.xlu0
        %1697 = vxpose.xlu0.c.b16.start [1/8] %v1015, 128
        %1698 = vxpose.xlu0.c.b16.cont [2/8] 0, 128
        %1699 = vxpose.xlu0.c.b16.cont [3/8] 0, 128
        %1700 = vxpose.xlu0.c.b16.cont [4/8] 0, 128
        %1701 = vxpose.xlu0.c.b16.cont [5/8] 0, 128
        %1702 = vxpose.xlu0.c.b16.cont [6/8] 0, 128
        %1703 = vxpose.xlu0.c.b16.cont [7/8] 0, 128
        %1704 = vxpose.xlu0.c.b16.end [8/8] 0, 128
        %v1705 = vpop.trf.xlu0
        %v1706 = vpop.trf.xlu0
        %v1707 = vpop.trf.xlu0
        %v1708 = vpop.trf.xlu0
        %v1709 = vpop.trf.xlu0
        %v1710 = vpop.trf.xlu0
        %v1711 = vpop.trf.xlu0
        %v1712 = vpop.trf.xlu0
        %1713 = vxpose.xlu0.c.b16.start [1/8] %v1016, 128
        %1714 = vxpose.xlu0.c.b16.cont [2/8] 0, 128
        %1715 = vxpose.xlu0.c.b16.cont [3/8] 0, 128
        %1716 = vxpose.xlu0.c.b16.cont [4/8] 0, 128
        %1717 = vxpose.xlu0.c.b16.cont [5/8] 0, 128
        %1718 = vxpose.xlu0.c.b16.cont [6/8] 0, 128
        %1719 = vxpose.xlu0.c.b16.cont [7/8] 0, 128
        %1720 = vxpose.xlu0.c.b16.end [8/8] 0, 128
        %v1721 = vpop.trf.xlu0
        %v1722 = vpop.trf.xlu0
        %v1723 = vpop.trf.xlu0
        %v1724 = vpop.trf.xlu0
        %v1725 = vpop.trf.xlu0
        %v1726 = vpop.trf.xlu0
        %v1727 = vpop.trf.xlu0
        %v1728 = vpop.trf.xlu0
        %1729 = vxpose.xlu0.c.b16.start [1/8] %v1017, 128
        %1730 = vxpose.xlu0.c.b16.cont [2/8] 0, 128
        %1731 = vxpose.xlu0.c.b16.cont [3/8] 0, 128
        %1732 = vxpose.xlu0.c.b16.cont [4/8] 0, 128
        %1733 = vxpose.xlu0.c.b16.cont [5/8] 0, 128
        %1734 = vxpose.xlu0.c.b16.cont [6/8] 0, 128
        %1735 = vxpose.xlu0.c.b16.cont [7/8] 0, 128
        %1736 = vxpose.xlu0.c.b16.end [8/8] 0, 128
        %v1737 = vpop.trf.xlu0
        %v1738 = vpop.trf.xlu0
        %v1739 = vpop.trf.xlu0
        %v1740 = vpop.trf.xlu0
        %v1741 = vpop.trf.xlu0
        %v1742 = vpop.trf.xlu0
        %v1743 = vpop.trf.xlu0
        %v1744 = vpop.trf.xlu0
        %v1745 = vcombine.low %v1673, %v1737
        %v1747 = vunpack.c.l.s4 1983009808
        %v1748 = vunpack.c.0.s8 %v1747
        %v1749 = vlaneseq
        %v1750 = vshrl.u32 %v1749, 7
        %v1751 = vsub.s32 %v1748, %v1750
        %v1752 = vrot.slane %v1745, %v1751
        %v1754 = vunpack.c.l.s4 1983009808
        %v1755 = vunpack.c.0.s8 %v1754
        %v1756 = vlaneseq
        %v1757 = vshrl.u32 %v1756, 7
        %v1758 = vsub.s32 %v1755, %v1757
        %v1759 = vrot.slane %v1705, %v1758
        %v1760 = vcombine.low %v1752, %v1759
        %v1761 = vcombine.high %v1752, %v1759
        %v1763 = vunpack.c.l.s4 1934713408
        %v1764 = vunpack.c.0.s8 %v1763
        %v1765 = vlaneseq
        %v1766 = vshrl.u32 %v1765, 7
        %v1767 = vsub.s32 %v1764, %v1766
        %v1768 = vrot.slane %v1760, %v1767
        %v1770 = vunpack.c.l.s4 1934713408
        %v1771 = vunpack.c.0.s8 %v1770
        %v1772 = vlaneseq
        %v1773 = vshrl.u32 %v1772, 7
        %v1774 = vsub.s32 %v1771, %v1773
        %v1775 = vrot.slane %v1761, %v1774
        %v1776 = vcombine.high %v1768, 0
        %v1777 = vcombine.high %v1775, 0
        %v1779 = vunpack.c.l.s4 1983009808
        %v1780 = vunpack.c.0.s8 %v1779
        %v1781 = vlaneseq
        %v1782 = vshrl.u32 %v1781, 7
        %v1783 = vsub.s32 %v1780, %v1782
        %v1784 = vrot.slane %v1689, %v1783
        %v1786 = vunpack.c.l.s4 1983009808
        %v1787 = vunpack.c.0.s8 %v1786
        %v1788 = vlaneseq
        %v1789 = vshrl.u32 %v1788, 7
        %v1790 = vsub.s32 %v1787, %v1789
        %v1791 = vrot.slane %v1721, %v1790
        %v1792 = vcombine.low %v1784, %v1791
        %v1793 = vcombine.high %v1784, %v1791
        %v1795 = vunpack.c.l.s4 1934713408
        %v1796 = vunpack.c.0.s8 %v1795
        %v1797 = vlaneseq
        %v1798 = vshrl.u32 %v1797, 7
        %v1799 = vsub.s32 %v1796, %v1798
        %v1800 = vrot.slane %v1792, %v1799
        %v1802 = vunpack.c.l.s4 1934713408
        %v1803 = vunpack.c.0.s8 %v1802
        %v1804 = vlaneseq
        %v1805 = vshrl.u32 %v1804, 7
        %v1806 = vsub.s32 %v1803, %v1805
        %v1807 = vrot.slane %v1793, %v1806
        %v1808 = vcombine.high %v1800, 0
        %v1809 = vcombine.high %v1807, 0
        %v1812 = vpack.i.b16 %v1800, %v1768
        %v1814 = vshrl.u32 %v1768, 16
        %v1815 = vshrl.u32 %v1800, 16
        %v1816 = vpack.i.b16 %v1815, %v1814
        %v1820 = vpack.i.b16 %v1808, %v1776
        %v1822 = vshrl.u32 %v1776, 16
        %v1823 = vshrl.u32 %v1808, 16
        %v1824 = vpack.i.b16 %v1823, %v1822
        %v1828 = vpack.i.b16 %v1807, %v1775
        %v1830 = vshrl.u32 %v1775, 16
        %v1831 = vshrl.u32 %v1807, 16
        %v1832 = vpack.i.b16 %v1831, %v1830
        %v1836 = vpack.i.b16 %v1809, %v1777
        %v1838 = vshrl.u32 %v1777, 16
        %v1839 = vshrl.u32 %v1809, 16
        %v1840 = vpack.i.b16 %v1839, %v1838
        %1842 = vxpose.xlu0.c.b16.start [1/8] %v1812, 128
        %1843 = vxpose.xlu0.c.b16.cont [2/8] 0, 128
        %1844 = vxpose.xlu0.c.b16.cont [3/8] 0, 128
        %1845 = vxpose.xlu0.c.b16.cont [4/8] 0, 128
        %1846 = vxpose.xlu0.c.b16.cont [5/8] 0, 128
        %1847 = vxpose.xlu0.c.b16.cont [6/8] 0, 128
        %1848 = vxpose.xlu0.c.b16.cont [7/8] 0, 128
        %1849 = vxpose.xlu0.c.b16.end [8/8] 0, 128
        %v1850 = vpop.trf.xlu0
        %v1851 = vpop.trf.xlu0
        %v1852 = vpop.trf.xlu0
        %v1853 = vpop.trf.xlu0
        %v1854 = vpop.trf.xlu0
        %v1855 = vpop.trf.xlu0
        %v1856 = vpop.trf.xlu0
        %v1857 = vpop.trf.xlu0
        %1858 = vxpose.xlu0.c.b16.start [1/8] %v1816, 128
        %1859 = vxpose.xlu0.c.b16.cont [2/8] 0, 128
        %1860 = vxpose.xlu0.c.b16.cont [3/8] 0, 128
        %1861 = vxpose.xlu0.c.b16.cont [4/8] 0, 128
        %1862 = vxpose.xlu0.c.b16.cont [5/8] 0, 128
        %1863 = vxpose.xlu0.c.b16.cont [6/8] 0, 128
        %1864 = vxpose.xlu0.c.b16.cont [7/8] 0, 128
        %1865 = vxpose.xlu0.c.b16.end [8/8] 0, 128
        %v1866 = vpop.trf.xlu0
        %v1867 = vpop.trf.xlu0
        %v1868 = vpop.trf.xlu0
        %v1869 = vpop.trf.xlu0
        %v1870 = vpop.trf.xlu0
        %v1871 = vpop.trf.xlu0
        %v1872 = vpop.trf.xlu0
        %v1873 = vpop.trf.xlu0
        %1874 = vxpose.xlu0.c.b16.start [1/8] %v1820, 128
        %1875 = vxpose.xlu0.c.b16.cont [2/8] 0, 128
        %1876 = vxpose.xlu0.c.b16.cont [3/8] 0, 128
        %1877 = vxpose.xlu0.c.b16.cont [4/8] 0, 128
        %1878 = vxpose.xlu0.c.b16.cont [5/8] 0, 128
        %1879 = vxpose.xlu0.c.b16.cont [6/8] 0, 128
        %1880 = vxpose.xlu0.c.b16.cont [7/8] 0, 128
        %1881 = vxpose.xlu0.c.b16.end [8/8] 0, 128
        %v1882 = vpop.trf.xlu0
        %v1883 = vpop.trf.xlu0
        %v1884 = vpop.trf.xlu0
        %v1885 = vpop.trf.xlu0
        %v1886 = vpop.trf.xlu0
        %v1887 = vpop.trf.xlu0
        %v1888 = vpop.trf.xlu0
        %v1889 = vpop.trf.xlu0
        %1890 = vxpose.xlu0.c.b16.start [1/8] %v1824, 128
        %1891 = vxpose.xlu0.c.b16.cont [2/8] 0, 128
        %1892 = vxpose.xlu0.c.b16.cont [3/8] 0, 128
        %1893 = vxpose.xlu0.c.b16.cont [4/8] 0, 128
        %1894 = vxpose.xlu0.c.b16.cont [5/8] 0, 128
        %1895 = vxpose.xlu0.c.b16.cont [6/8] 0, 128
        %1896 = vxpose.xlu0.c.b16.cont [7/8] 0, 128
        %1897 = vxpose.xlu0.c.b16.end [8/8] 0, 128
        %v1898 = vpop.trf.xlu0
        %v1899 = vpop.trf.xlu0
        %v1900 = vpop.trf.xlu0
        %v1901 = vpop.trf.xlu0
        %v1902 = vpop.trf.xlu0
        %v1903 = vpop.trf.xlu0
        %v1904 = vpop.trf.xlu0
        %v1905 = vpop.trf.xlu0
        %1906 = vxpose.xlu0.c.b16.start [1/8] %v1828, 128
        %1907 = vxpose.xlu0.c.b16.cont [2/8] 0, 128
        %1908 = vxpose.xlu0.c.b16.cont [3/8] 0, 128
        %1909 = vxpose.xlu0.c.b16.cont [4/8] 0, 128
        %1910 = vxpose.xlu0.c.b16.cont [5/8] 0, 128
        %1911 = vxpose.xlu0.c.b16.cont [6/8] 0, 128
        %1912 = vxpose.xlu0.c.b16.cont [7/8] 0, 128
        %1913 = vxpose.xlu0.c.b16.end [8/8] 0, 128
        %v1914 = vpop.trf.xlu0
        %v1915 = vpop.trf.xlu0
        %v1916 = vpop.trf.xlu0
        %v1917 = vpop.trf.xlu0
        %v1918 = vpop.trf.xlu0
        %v1919 = vpop.trf.xlu0
        %v1920 = vpop.trf.xlu0
        %v1921 = vpop.trf.xlu0
        %1922 = vxpose.xlu0.c.b16.start [1/8] %v1832, 128
        %1923 = vxpose.xlu0.c.b16.cont [2/8] 0, 128
        %1924 = vxpose.xlu0.c.b16.cont [3/8] 0, 128
        %1925 = vxpose.xlu0.c.b16.cont [4/8] 0, 128
        %1926 = vxpose.xlu0.c.b16.cont [5/8] 0, 128
        %1927 = vxpose.xlu0.c.b16.cont [6/8] 0, 128
        %1928 = vxpose.xlu0.c.b16.cont [7/8] 0, 128
        %1929 = vxpose.xlu0.c.b16.end [8/8] 0, 128
        %v1930 = vpop.trf.xlu0
        %v1931 = vpop.trf.xlu0
        %v1932 = vpop.trf.xlu0
        %v1933 = vpop.trf.xlu0
        %v1934 = vpop.trf.xlu0
        %v1935 = vpop.trf.xlu0
        %v1936 = vpop.trf.xlu0
        %v1937 = vpop.trf.xlu0
        %1938 = vxpose.xlu0.c.b16.start [1/8] %v1836, 128
        %1939 = vxpose.xlu0.c.b16.cont [2/8] 0, 128
        %1940 = vxpose.xlu0.c.b16.cont [3/8] 0, 128
        %1941 = vxpose.xlu0.c.b16.cont [4/8] 0, 128
        %1942 = vxpose.xlu0.c.b16.cont [5/8] 0, 128
        %1943 = vxpose.xlu0.c.b16.cont [6/8] 0, 128
        %1944 = vxpose.xlu0.c.b16.cont [7/8] 0, 128
        %1945 = vxpose.xlu0.c.b16.end [8/8] 0, 128
        %v1946 = vpop.trf.xlu0
        %v1947 = vpop.trf.xlu0
        %v1948 = vpop.trf.xlu0
        %v1949 = vpop.trf.xlu0
        %v1950 = vpop.trf.xlu0
        %v1951 = vpop.trf.xlu0
        %v1952 = vpop.trf.xlu0
        %v1953 = vpop.trf.xlu0
        %1954 = vxpose.xlu0.c.b16.start [1/8] %v1840, 128
        %1955 = vxpose.xlu0.c.b16.cont [2/8] 0, 128
        %1956 = vxpose.xlu0.c.b16.cont [3/8] 0, 128
        %1957 = vxpose.xlu0.c.b16.cont [4/8] 0, 128
        %1958 = vxpose.xlu0.c.b16.cont [5/8] 0, 128
        %1959 = vxpose.xlu0.c.b16.cont [6/8] 0, 128
        %1960 = vxpose.xlu0.c.b16.cont [7/8] 0, 128
        %1961 = vxpose.xlu0.c.b16.end [8/8] 0, 128
        %v1962 = vpop.trf.xlu0
        %v1963 = vpop.trf.xlu0
        %v1964 = vpop.trf.xlu0
        %v1965 = vpop.trf.xlu0
        %v1966 = vpop.trf.xlu0
        %v1967 = vpop.trf.xlu0
        %v1968 = vpop.trf.xlu0
        %v1969 = vpop.trf.xlu0
        %v1970 = vcombine.low %v1850, %v1914
        %v1972 = vunpack.c.l.s4 1983009808
        %v1973 = vunpack.c.0.s8 %v1972
        %v1974 = vlaneseq
        %v1975 = vshrl.u32 %v1974, 7
        %v1976 = vsub.s32 %v1973, %v1975
        %v1977 = vrot.slane %v1970, %v1976
        %v1978 = vcombine.low %v1882, %v1946
        %v1980 = vunpack.c.l.s4 1983009808
        %v1981 = vunpack.c.0.s8 %v1980
        %v1982 = vlaneseq
        %v1983 = vshrl.u32 %v1982, 7
        %v1984 = vsub.s32 %v1981, %v1983
        %v1985 = vrot.slane %v1978, %v1984
        %v1986 = vcombine.low %v1977, %v1985
        %v1988 = vunpack.c.l.s4 1934713408
        %v1989 = vunpack.c.0.s8 %v1988
        %v1990 = vlaneseq
        %v1991 = vshrl.u32 %v1990, 7
        %v1992 = vsub.s32 %v1989, %v1991
        %v1993 = vrot.slane %v1986, %v1992
        %v1994 = vcombine.high %v1993, 0
        %v1995 = vcombine.low %v1866, %v1930
        %v1997 = vunpack.c.l.s4 1983009808
        %v1998 = vunpack.c.0.s8 %v1997
        %v1999 = vlaneseq
        %v2000 = vshrl.u32 %v1999, 7
        %v2001 = vsub.s32 %v1998, %v2000
        %v2002 = vrot.slane %v1995, %v2001
        %v2003 = vcombine.low %v1898, %v1962
        %v2005 = vunpack.c.l.s4 1983009808
        %v2006 = vunpack.c.0.s8 %v2005
        %v2007 = vlaneseq
        %v2008 = vshrl.u32 %v2007, 7
        %v2009 = vsub.s32 %v2006, %v2008
        %v2010 = vrot.slane %v2003, %v2009
        %v2011 = vcombine.low %v2002, %v2010
        %v2013 = vunpack.c.l.s4 1934713408
        %v2014 = vunpack.c.0.s8 %v2013
        %v2015 = vlaneseq
        %v2016 = vshrl.u32 %v2015, 7
        %v2017 = vsub.s32 %v2014, %v2016
        %v2018 = vrot.slane %v2011, %v2017
        %v2019 = vcombine.high %v2018, 0
        %v2022 = vpack.i.b16 %v2018, %v1993
        %v2023 = vshrl.u32 %v1993, 16
        %v2024 = vshrl.u32 %v2018, 16
        %v2025 = vpack.i.b16 %v2024, %v2023
        %v2028 = vpack.i.b16 %v2019, %v1994
        %v2029 = vshrl.u32 %v1994, 16
        %v2030 = vshrl.u32 %v2019, 16
        %v2031 = vpack.i.b16 %v2030, %v2029
        %vm2032 = vcmask 39936
        %v2034 = vsel %vm2032, %v2022, 0
        %v2037 = vsel %vm2032, %v1661, 0
        %2039 = vmatprep.subr.bf16.mxu0 0
        %2040 = vmatpush1.bf16.xpose.msra.mxu0 %v2037
        %2041 = vmatprep.subr.bf16.mxu0 0
        %2042 = vmatpush1.bf16.xpose.msra.mxu0 0
        %2043 = vmatprep.subr.bf16.mxu0 0
        %2044 = vmatpush1.bf16.xpose.msra.mxu0 0
        %2045 = vmatprep.subr.bf16.mxu0 0
        %2046 = vmatpush1.bf16.xpose.msra.mxu0 0
        %2047 = vmatprep.subr.bf16.mxu0 0
        %2048 = vmatpush1.bf16.xpose.msra.mxu0 0
        %2049 = vmatprep.subr.bf16.mxu0 0
        %2050 = vmatpush1.bf16.xpose.msra.mxu0 0
        %2051 = vmatprep.subr.bf16.mxu0 0
        %2052 = vmatpush1.bf16.xpose.msra.mxu0 0
        %2053 = vmatprep.subr.bf16.mxu0 0
        %2054 = vmatpush1.bf16.xpose.msra.mxu0 0
        %2055 = vmatprep.subr.bf16.mxu0 0
        %2056 = vmatpush1.bf16.xpose.msra.mxu0 0
        %2057 = vmatprep.subr.bf16.mxu0 0
        %2058 = vmatpush1.bf16.xpose.msra.mxu0 0
        %2059 = vmatprep.subr.bf16.mxu0 0
        %2060 = vmatpush1.bf16.xpose.msra.mxu0 0
        %2061 = vmatprep.subr.bf16.mxu0 0
        %2062 = vmatpush1.bf16.xpose.msra.mxu0 0
        %2063 = vmatprep.subr.bf16.mxu0 0
        %2064 = vmatpush1.bf16.xpose.msra.mxu0 0
        %2065 = vmatprep.subr.bf16.mxu0 0
        %2066 = vmatpush1.bf16.xpose.msra.mxu0 0
        %2067 = vmatprep.subr.bf16.mxu0 0
        %2068 = vmatpush1.bf16.xpose.msra.mxu0 0
        %2069 = vmatprep.subr.bf16.mxu0 0
        %2070 = vmatpush1.bf16.xpose.msra.mxu0 0
        %2071 = vmatprep.mubr.bf16.mxu0 0
        %2072 = vmatmul.mubr.bf16.gmra.mrb[0].mxu0 %v2034
        %v2073 = vpop.f32.mrb[0].mxu0
        %v2074 = vadd.f32 0.0, %v2073
        %v2075 = vpop.f32.mrb[0].mxu0
        %v2076 = vpop.f32.mrb[0].mxu0
        %v2077 = vpop.f32.mrb[0].mxu0
        %2078 = vdwg.mxu0
        %v2080 = vsel %vm2032, %v2025, 0
        %v2083 = vsel %vm2032, %v1662, 0
        %2085 = vmatprep.subr.bf16.mxu0 0
        %2086 = vmatpush1.bf16.xpose.msra.mxu0 %v2083
        %2087 = vmatprep.subr.bf16.mxu0 0
        %2088 = vmatpush1.bf16.xpose.msra.mxu0 0
        %2089 = vmatprep.subr.bf16.mxu0 0
        %2090 = vmatpush1.bf16.xpose.msra.mxu0 0
        %2091 = vmatprep.subr.bf16.mxu0 0
        %2092 = vmatpush1.bf16.xpose.msra.mxu0 0
        %2093 = vmatprep.subr.bf16.mxu0 0
        %2094 = vmatpush1.bf16.xpose.msra.mxu0 0
        %2095 = vmatprep.subr.bf16.mxu0 0
        %2096 = vmatpush1.bf16.xpose.msra.mxu0 0
        %2097 = vmatprep.subr.bf16.mxu0 0
        %2098 = vmatpush1.bf16.xpose.msra.mxu0 0
        %2099 = vmatprep.subr.bf16.mxu0 0
        %2100 = vmatpush1.bf16.xpose.msra.mxu0 0
        %2101 = vmatprep.subr.bf16.mxu0 0
        %2102 = vmatpush1.bf16.xpose.msra.mxu0 0
        %2103 = vmatprep.subr.bf16.mxu0 0
        %2104 = vmatpush1.bf16.xpose.msra.mxu0 0
        %2105 = vmatprep.subr.bf16.mxu0 0
        %2106 = vmatpush1.bf16.xpose.msra.mxu0 0
        %2107 = vmatprep.subr.bf16.mxu0 0
        %2108 = vmatpush1.bf16.xpose.msra.mxu0 0
        %2109 = vmatprep.subr.bf16.mxu0 0
        %2110 = vmatpush1.bf16.xpose.msra.mxu0 0
        %2111 = vmatprep.subr.bf16.mxu0 0
        %2112 = vmatpush1.bf16.xpose.msra.mxu0 0
        %2113 = vmatprep.subr.bf16.mxu0 0
        %2114 = vmatpush1.bf16.xpose.msra.mxu0 0
        %2115 = vmatprep.subr.bf16.mxu0 0
        %2116 = vmatpush1.bf16.xpose.msra.mxu0 0
        %2117 = vmatprep.mubr.bf16.mxu0 0
        %2118 = vmatmul.mubr.bf16.gmra.mrb[0].mxu0 %v2080
        %v2119 = vpop.f32.mrb[0].mxu0
        %v2120 = vadd.f32 0.0, %v2119
        %v2121 = vpop.f32.mrb[0].mxu0
        %v2122 = vpop.f32.mrb[0].mxu0
        %v2123 = vpop.f32.mrb[0].mxu0
        %2124 = vdwg.mxu0
        %v2126 = vsel %vm2032, %v2028, 0
        %v2129 = vsel %vm2032, %v1663, 0
        %2131 = vmatprep.subr.bf16.mxu0 0
        %2132 = vmatpush1.bf16.xpose.msra.mxu0 %v2129
        %2133 = vmatprep.subr.bf16.mxu0 0
        %2134 = vmatpush1.bf16.xpose.msra.mxu0 0
        %2135 = vmatprep.subr.bf16.mxu0 0
        %2136 = vmatpush1.bf16.xpose.msra.mxu0 0
        %2137 = vmatprep.subr.bf16.mxu0 0
        %2138 = vmatpush1.bf16.xpose.msra.mxu0 0
        %2139 = vmatprep.subr.bf16.mxu0 0
        %2140 = vmatpush1.bf16.xpose.msra.mxu0 0
        %2141 = vmatprep.subr.bf16.mxu0 0
        %2142 = vmatpush1.bf16.xpose.msra.mxu0 0
        %2143 = vmatprep.subr.bf16.mxu0 0
        %2144 = vmatpush1.bf16.xpose.msra.mxu0 0
        %2145 = vmatprep.subr.bf16.mxu0 0
        %2146 = vmatpush1.bf16.xpose.msra.mxu0 0
        %2147 = vmatprep.subr.bf16.mxu0 0
        %2148 = vmatpush1.bf16.xpose.msra.mxu0 0
        %2149 = vmatprep.subr.bf16.mxu0 0
        %2150 = vmatpush1.bf16.xpose.msra.mxu0 0
        %2151 = vmatprep.subr.bf16.mxu0 0
        %2152 = vmatpush1.bf16.xpose.msra.mxu0 0
        %2153 = vmatprep.subr.bf16.mxu0 0
        %2154 = vmatpush1.bf16.xpose.msra.mxu0 0
        %2155 = vmatprep.subr.bf16.mxu0 0
        %2156 = vmatpush1.bf16.xpose.msra.mxu0 0
        %2157 = vmatprep.subr.bf16.mxu0 0
        %2158 = vmatpush1.bf16.xpose.msra.mxu0 0
        %2159 = vmatprep.subr.bf16.mxu0 0
        %2160 = vmatpush1.bf16.xpose.msra.mxu0 0
        %2161 = vmatprep.subr.bf16.mxu0 0
        %2162 = vmatpush1.bf16.xpose.msra.mxu0 0
        %2163 = vmatprep.mubr.bf16.mxu0 0
        %2164 = vmatmul.mubr.bf16.gmra.mrb[0].mxu0 %v2126
        %v2165 = vpop.f32.mrb[0].mxu0
        %v2166 = vadd.f32 0.0, %v2165
        %v2167 = vpop.f32.mrb[0].mxu0
        %v2168 = vpop.f32.mrb[0].mxu0
        %v2169 = vpop.f32.mrb[0].mxu0
        %2170 = vdwg.mxu0
        %v2172 = vsel %vm2032, %v2031, 0
        %v2175 = vsel %vm2032, %v1664, 0
        %2177 = vmatprep.subr.bf16.mxu0 0
        %2178 = vmatpush1.bf16.xpose.msra.mxu0 %v2175
        %2179 = vmatprep.subr.bf16.mxu0 0
        %2180 = vmatpush1.bf16.xpose.msra.mxu0 0
        %2181 = vmatprep.subr.bf16.mxu0 0
        %2182 = vmatpush1.bf16.xpose.msra.mxu0 0
        %2183 = vmatprep.subr.bf16.mxu0 0
        %2184 = vmatpush1.bf16.xpose.msra.mxu0 0
        %2185 = vmatprep.subr.bf16.mxu0 0
        %2186 = vmatpush1.bf16.xpose.msra.mxu0 0
        %2187 = vmatprep.subr.bf16.mxu0 0
        %2188 = vmatpush1.bf16.xpose.msra.mxu0 0
        %2189 = vmatprep.subr.bf16.mxu0 0
        %2190 = vmatpush1.bf16.xpose.msra.mxu0 0
        %2191 = vmatprep.subr.bf16.mxu0 0
        %2192 = vmatpush1.bf16.xpose.msra.mxu0 0
        %2193 = vmatprep.subr.bf16.mxu0 0
        %2194 = vmatpush1.bf16.xpose.msra.mxu0 0
        %2195 = vmatprep.subr.bf16.mxu0 0
        %2196 = vmatpush1.bf16.xpose.msra.mxu0 0
        %2197 = vmatprep.subr.bf16.mxu0 0
        %2198 = vmatpush1.bf16.xpose.msra.mxu0 0
        %2199 = vmatprep.subr.bf16.mxu0 0
        %2200 = vmatpush1.bf16.xpose.msra.mxu0 0
        %2201 = vmatprep.subr.bf16.mxu0 0
        %2202 = vmatpush1.bf16.xpose.msra.mxu0 0
        %2203 = vmatprep.subr.bf16.mxu0 0
        %2204 = vmatpush1.bf16.xpose.msra.mxu0 0
        %2205 = vmatprep.subr.bf16.mxu0 0
        %2206 = vmatpush1.bf16.xpose.msra.mxu0 0
        %2207 = vmatprep.subr.bf16.mxu0 0
        %2208 = vmatpush1.bf16.xpose.msra.mxu0 0
        %2209 = vmatprep.mubr.bf16.mxu0 0
        %2210 = vmatmul.mubr.bf16.gmra.mrb[0].mxu0 %v2172
        %v2211 = vpop.f32.mrb[0].mxu0
        %v2212 = vadd.f32 0.0, %v2211
        %v2213 = vpop.f32.mrb[0].mxu0
        %v2214 = vpop.f32.mrb[0].mxu0
        %v2215 = vpop.f32.mrb[0].mxu0
        %2216 = vdwg.mxu0
        %2217 = vxpose.xlu0.b32.start [1/16] %v2074, 128
        %2218 = vxpose.xlu0.b32.cont [2/16] 0.0, 128
        %2219 = vxpose.xlu0.b32.cont [3/16] 0.0, 128
        %2220 = vxpose.xlu0.b32.cont [4/16] 0.0, 128
        %2221 = vxpose.xlu0.b32.cont [5/16] 0.0, 128
        %2222 = vxpose.xlu0.b32.cont [6/16] 0.0, 128
        %2223 = vxpose.xlu0.b32.cont [7/16] 0.0, 128
        %2224 = vxpose.xlu0.b32.cont [8/16] 0.0, 128
        %2225 = vxpose.xlu0.b32.cont [9/16] 0.0, 128
        %2226 = vxpose.xlu0.b32.cont [10/16] 0.0, 128
        %2227 = vxpose.xlu0.b32.cont [11/16] 0.0, 128
        %2228 = vxpose.xlu0.b32.cont [12/16] 0.0, 128
        %2229 = vxpose.xlu0.b32.cont [13/16] 0.0, 128
        %2230 = vxpose.xlu0.b32.cont [14/16] 0.0, 128
        %2231 = vxpose.xlu0.b32.cont [15/16] 0.0, 128
        %2232 = vxpose.xlu0.b32.end [16/16] 0.0, 128
        %v2233 = vpop.trf.xlu0
        %v2234 = vpop.trf.xlu0
        %v2235 = vpop.trf.xlu0
        %v2236 = vpop.trf.xlu0
        %v2237 = vpop.trf.xlu0
        %v2238 = vpop.trf.xlu0
        %v2239 = vpop.trf.xlu0
        %v2240 = vpop.trf.xlu0
        %v2241 = vpop.trf.xlu0
        %v2242 = vpop.trf.xlu0
        %v2243 = vpop.trf.xlu0
        %v2244 = vpop.trf.xlu0
        %v2245 = vpop.trf.xlu0
        %v2246 = vpop.trf.xlu0
        %v2247 = vpop.trf.xlu0
        %v2248 = vpop.trf.xlu0
        %2249 = vxpose.xlu0.b32.start [1/16] %v2120, 128
        %2250 = vxpose.xlu0.b32.cont [2/16] 0.0, 128
        %2251 = vxpose.xlu0.b32.cont [3/16] 0.0, 128
        %2252 = vxpose.xlu0.b32.cont [4/16] 0.0, 128
        %2253 = vxpose.xlu0.b32.cont [5/16] 0.0, 128
        %2254 = vxpose.xlu0.b32.cont [6/16] 0.0, 128
        %2255 = vxpose.xlu0.b32.cont [7/16] 0.0, 128
        %2256 = vxpose.xlu0.b32.cont [8/16] 0.0, 128
        %2257 = vxpose.xlu0.b32.cont [9/16] 0.0, 128
        %2258 = vxpose.xlu0.b32.cont [10/16] 0.0, 128
        %2259 = vxpose.xlu0.b32.cont [11/16] 0.0, 128
        %2260 = vxpose.xlu0.b32.cont [12/16] 0.0, 128
        %2261 = vxpose.xlu0.b32.cont [13/16] 0.0, 128
        %2262 = vxpose.xlu0.b32.cont [14/16] 0.0, 128
        %2263 = vxpose.xlu0.b32.cont [15/16] 0.0, 128
        %2264 = vxpose.xlu0.b32.end [16/16] 0.0, 128
        %v2265 = vpop.trf.xlu0
        %v2266 = vpop.trf.xlu0
        %v2267 = vpop.trf.xlu0
        %v2268 = vpop.trf.xlu0
        %v2269 = vpop.trf.xlu0
        %v2270 = vpop.trf.xlu0
        %v2271 = vpop.trf.xlu0
        %v2272 = vpop.trf.xlu0
        %v2273 = vpop.trf.xlu0
        %v2274 = vpop.trf.xlu0
        %v2275 = vpop.trf.xlu0
        %v2276 = vpop.trf.xlu0
        %v2277 = vpop.trf.xlu0
        %v2278 = vpop.trf.xlu0
        %v2279 = vpop.trf.xlu0
        %v2280 = vpop.trf.xlu0
        %2281 = vxpose.xlu0.b32.start [1/16] %v2166, 128
        %2282 = vxpose.xlu0.b32.cont [2/16] 0.0, 128
        %2283 = vxpose.xlu0.b32.cont [3/16] 0.0, 128
        %2284 = vxpose.xlu0.b32.cont [4/16] 0.0, 128
        %2285 = vxpose.xlu0.b32.cont [5/16] 0.0, 128
        %2286 = vxpose.xlu0.b32.cont [6/16] 0.0, 128
        %2287 = vxpose.xlu0.b32.cont [7/16] 0.0, 128
        %2288 = vxpose.xlu0.b32.cont [8/16] 0.0, 128
        %2289 = vxpose.xlu0.b32.cont [9/16] 0.0, 128
        %2290 = vxpose.xlu0.b32.cont [10/16] 0.0, 128
        %2291 = vxpose.xlu0.b32.cont [11/16] 0.0, 128
        %2292 = vxpose.xlu0.b32.cont [12/16] 0.0, 128
        %2293 = vxpose.xlu0.b32.cont [13/16] 0.0, 128
        %2294 = vxpose.xlu0.b32.cont [14/16] 0.0, 128
        %2295 = vxpose.xlu0.b32.cont [15/16] 0.0, 128
        %2296 = vxpose.xlu0.b32.end [16/16] 0.0, 128
        %v2297 = vpop.trf.xlu0
        %v2298 = vpop.trf.xlu0
        %v2299 = vpop.trf.xlu0
        %v2300 = vpop.trf.xlu0
        %v2301 = vpop.trf.xlu0
        %v2302 = vpop.trf.xlu0
        %v2303 = vpop.trf.xlu0
        %v2304 = vpop.trf.xlu0
        %v2305 = vpop.trf.xlu0
        %v2306 = vpop.trf.xlu0
        %v2307 = vpop.trf.xlu0
        %v2308 = vpop.trf.xlu0
        %v2309 = vpop.trf.xlu0
        %v2310 = vpop.trf.xlu0
        %v2311 = vpop.trf.xlu0
        %v2312 = vpop.trf.xlu0
        %2313 = vxpose.xlu0.b32.start [1/16] %v2212, 128
        %2314 = vxpose.xlu0.b32.cont [2/16] 0.0, 128
        %2315 = vxpose.xlu0.b32.cont [3/16] 0.0, 128
        %2316 = vxpose.xlu0.b32.cont [4/16] 0.0, 128
        %2317 = vxpose.xlu0.b32.cont [5/16] 0.0, 128
        %2318 = vxpose.xlu0.b32.cont [6/16] 0.0, 128
        %2319 = vxpose.xlu0.b32.cont [7/16] 0.0, 128
        %2320 = vxpose.xlu0.b32.cont [8/16] 0.0, 128
        %2321 = vxpose.xlu0.b32.cont [9/16] 0.0, 128
        %2322 = vxpose.xlu0.b32.cont [10/16] 0.0, 128
        %2323 = vxpose.xlu0.b32.cont [11/16] 0.0, 128
        %2324 = vxpose.xlu0.b32.cont [12/16] 0.0, 128
        %2325 = vxpose.xlu0.b32.cont [13/16] 0.0, 128
        %2326 = vxpose.xlu0.b32.cont [14/16] 0.0, 128
        %2327 = vxpose.xlu0.b32.cont [15/16] 0.0, 128
        %2328 = vxpose.xlu0.b32.end [16/16] 0.0, 128
        %v2329 = vpop.trf.xlu0
        %v2330 = vpop.trf.xlu0
        %v2331 = vpop.trf.xlu0
        %v2332 = vpop.trf.xlu0
        %v2333 = vpop.trf.xlu0
        %v2334 = vpop.trf.xlu0
        %v2335 = vpop.trf.xlu0
        %v2336 = vpop.trf.xlu0
        %v2337 = vpop.trf.xlu0
        %v2338 = vpop.trf.xlu0
        %v2339 = vpop.trf.xlu0
        %v2340 = vpop.trf.xlu0
        %v2341 = vpop.trf.xlu0
        %v2342 = vpop.trf.xlu0
        %v2343 = vpop.trf.xlu0
        %v2344 = vpop.trf.xlu0
        %v2345 = vcombine.low %v2233, %v2297
        %v2346 = vcombine.high %v2233, %v2297
        %v2348 = vunpack.c.l.s4 1983009808
        %v2349 = vunpack.c.0.s8 %v2348
        %v2350 = vlaneseq
        %v2351 = vshrl.u32 %v2350, 7
        %v2352 = vsub.s32 %v2349, %v2351
        %v2353 = vrot.slane %v2345, %v2352
        %v2355 = vunpack.c.l.s4 1983009808
        %v2356 = vunpack.c.0.s8 %v2355
        %v2357 = vlaneseq
        %v2358 = vshrl.u32 %v2357, 7
        %v2359 = vsub.s32 %v2356, %v2358
        %v2360 = vrot.slane %v2346, %v2359
        %v2361 = vcombine.low %v2265, %v2329
        %v2362 = vcombine.high %v2265, %v2329
        %v2364 = vunpack.c.l.s4 1983009808
        %v2365 = vunpack.c.0.s8 %v2364
        %v2366 = vlaneseq
        %v2367 = vshrl.u32 %v2366, 7
        %v2368 = vsub.s32 %v2365, %v2367
        %v2369 = vrot.slane %v2361, %v2368
        %v2371 = vunpack.c.l.s4 1983009808
        %v2372 = vunpack.c.0.s8 %v2371
        %v2373 = vlaneseq
        %v2374 = vshrl.u32 %v2373, 7
        %v2375 = vsub.s32 %v2372, %v2374
        %v2376 = vrot.slane %v2362, %v2375
        %v2377 = vcombine.low %v2353, %v2369
        %v2378 = vcombine.high %v2353, %v2369
        %v2380 = vunpack.c.l.s4 1934713408
        %v2381 = vunpack.c.0.s8 %v2380
        %v2382 = vlaneseq
        %v2383 = vshrl.u32 %v2382, 7
        %v2384 = vsub.s32 %v2381, %v2383
        %v2385 = vrot.slane %v2377, %v2384
        %v2387 = vunpack.c.l.s4 1934713408
        %v2388 = vunpack.c.0.s8 %v2387
        %v2389 = vlaneseq
        %v2390 = vshrl.u32 %v2389, 7
        %v2391 = vsub.s32 %v2388, %v2390
        %v2392 = vrot.slane %v2378, %v2391
        %v2393 = vcombine.low %v2360, %v2376
        %v2394 = vcombine.high %v2385, 0.0
        %v2395 = vcombine.high %v2392, 0.0
        %v2396 = vcombine.low %v2385, %v2392
        %v2398 = vunpack.c.l.s4 1983009808
        %v2399 = vunpack.c.0.s8 %v2398
        %v2400 = vlaneseq
        %v2401 = vshrl.u32 %v2400, 7
        %v2402 = vsub.s32 %v2399, %v2401
        %v2403 = vrot.slane %v2396, %v2402
        %v2404 = vcombine.low %v2394, %v2395
        %v2406 = vunpack.c.l.s4 1983009808
        %v2407 = vunpack.c.0.s8 %v2406
        %v2408 = vlaneseq
        %v2409 = vshrl.u32 %v2408, 7
        %v2410 = vsub.s32 %v2407, %v2409
        %v2411 = vrot.slane %v2404, %v2410
        %v2413 = vunpack.c.l.s4 1934713408
        %v2414 = vunpack.c.0.s8 %v2413
        %v2415 = vlaneseq
        %v2416 = vshrl.u32 %v2415, 7
        %v2417 = vsub.s32 %v2414, %v2416
        %v2418 = vrot.slane %v2393, %v2417
        %v2420 = vunpack.c.l.s4 1983009808
        %v2421 = vunpack.c.0.s8 %v2420
        %v2422 = vlaneseq
        %v2423 = vshrl.u32 %v2422, 7
        %v2424 = vsub.s32 %v2421, %v2423
        %v2425 = vrot.slane %v2418, %v2424
        %v2426 = vcombine.low %v2403, %v2411
        %v2427 = vcombine.high %v2403, %v2411
        %v2429 = vunpack.c.l.s4 1934713408
        %v2430 = vunpack.c.0.s8 %v2429
        %v2431 = vlaneseq
        %v2432 = vshrl.u32 %v2431, 7
        %v2433 = vsub.s32 %v2430, %v2432
        %v2434 = vrot.slane %v2426, %v2433
        %v2436 = vunpack.c.l.s4 1934713408
        %v2437 = vunpack.c.0.s8 %v2436
        %v2438 = vlaneseq
        %v2439 = vshrl.u32 %v2438, 7
        %v2440 = vsub.s32 %v2437, %v2439
        %v2441 = vrot.slane %v2427, %v2440
        %v2442 = vcombine.high %v2425, 0.0
        %v2444 = vunpack.c.l.s4 1934713408
        %v2445 = vunpack.c.0.s8 %v2444
        %v2446 = vlaneseq
        %v2447 = vshrl.u32 %v2446, 7
        %v2448 = vsub.s32 %v2445, %v2447
        %v2449 = vrot.slane %v2425, %v2448
        %v2451 = vunpack.c.l.s4 1934713408
        %v2452 = vunpack.c.0.s8 %v2451
        %v2453 = vlaneseq
        %v2454 = vshrl.u32 %v2453, 7
        %v2455 = vsub.s32 %v2452, %v2454
        %v2456 = vrot.slane %v2442, %v2455
        %v2457 = vcombine.low %v2434, %v2449
        %v2458 = vcombine.high %v2434, %v2449
        %v2459 = vcombine.low %v2441, %v2456
        %v2460 = vcombine.high %v2441, %v2456
        %2462 = vrot.lane.b32.xlu0 %v2458, 8
        %v2463 = vpop.permute.xlu0 %2462
        %2466 = vrot.lane.b32.xlu0 %v2459, 16
        %v2467 = vpop.permute.xlu0 %2466
        %2470 = vrot.lane.b32.xlu0 %v2460, 24
        %v2471 = vpop.permute.xlu0 %2470
        %v2473 = vsel %vm1426, %v2457, %v2463
        %vm2474 = vcmask 130048
        %v2475 = vsel %vm2474, %v2473, %v2467
        %vm2476 = vcmask 195584
        %v2477 = vsel %vm2476, %v2475, %v2471
        %v2478 = vpack.c.bf16 %v2477, %v2477
        %v2479 = vld [vmem:[#allocation13] sm:$0x1]
        %v2481 = vlaneseq
        %v2482 = vshrl.u32 %v2481, 7
        %v2483 = vsub.s32 0, %v2482
        %v2484 = vrot.slane %v2479, %v2483
        %v2490 = vunpack.c.l.b16 %v794
        %v2491 = vunpack.c.l.b16 %v795
        %v2492 = vunpack.c.l.b16 %v796
        %v2493 = vunpack.c.l.b16 %v797
        %v2494 = vpack.c.b16 %v2491, %v2490
        %v2495 = vpack.c.b16 %v2493, %v2492
        %v2499 = vsel %vm750, %v2478, 0
        %2501 = vmatprep.subr.bf16.mxu0 0
        %2502 = vmatpush1.bf16.msra.mxu0 %v2494
        %2503 = vmatprep.subr.bf16.mxu0 0
        %2504 = vmatpush1.bf16.msra.mxu0 %v2495
        %2505 = vmatprep.subr.bf16.mxu0 0
        %2506 = vmatpush1.bf16.msra.mxu0 0
        %2507 = vmatprep.subr.bf16.mxu0 0
        %2508 = vmatpush1.bf16.msra.mxu0 0
        %2509 = vmatprep.subr.bf16.mxu0 0
        %2510 = vmatpush1.bf16.msra.mxu0 0
        %2511 = vmatprep.subr.bf16.mxu0 0
        %2512 = vmatpush1.bf16.msra.mxu0 0
        %2513 = vmatprep.subr.bf16.mxu0 0
        %2514 = vmatpush1.bf16.msra.mxu0 0
        %2515 = vmatprep.subr.bf16.mxu0 0
        %2516 = vmatpush1.bf16.msra.mxu0 0
        %2517 = vmatprep.subr.bf16.mxu0 0
        %2518 = vmatpush1.bf16.msra.mxu0 0
        %2519 = vmatprep.subr.bf16.mxu0 0
        %2520 = vmatpush1.bf16.msra.mxu0 0
        %2521 = vmatprep.subr.bf16.mxu0 0
        %2522 = vmatpush1.bf16.msra.mxu0 0
        %2523 = vmatprep.subr.bf16.mxu0 0
        %2524 = vmatpush1.bf16.msra.mxu0 0
        %2525 = vmatprep.subr.bf16.mxu0 0
        %2526 = vmatpush1.bf16.msra.mxu0 0
        %2527 = vmatprep.subr.bf16.mxu0 0
        %2528 = vmatpush1.bf16.msra.mxu0 0
        %2529 = vmatprep.subr.bf16.mxu0 0
        %2530 = vmatpush1.bf16.msra.mxu0 0
        %2531 = vmatprep.subr.bf16.mxu0 0
        %2532 = vmatpush1.bf16.msra.mxu0 0
        %2533 = vmatprep.mubr.bf16.mxu0 0
        %2534 = vmatmul.mubr.bf16.gmra.mrb[0].mxu0 %v2499
        %v2535 = vpop.f32.mrb[0].mxu0
        %v2536 = vadd.f32 %v2484, %v2535
        %v2537 = vpop.f32.mrb[0].mxu0
        %v2538 = vpop.f32.mrb[0].mxu0
        %v2539 = vpop.f32.mrb[0].mxu0
        %2540 = vdwg.mxu0
        %v2541 = vadd.f32 %v694, %v2536
        %v2542 = vld [vmem:[#allocation14] sm:$0x1]
        %v2543 = vld [vmem:[#allocation16] sm:$0x1]
        %v2544 = vsel %vm697, %v2541, 0.0
        %2545 = vadd.xlane.f32.xlu0 %v2544
        %v2546 = vpop.xlane.xlu0 %2545
        %v2547 = vmul.f32 %v2546, %v701
        %v2548 = vsub.f32 %v2541, %v2547
        %v2549 = vmul.f32 %v2548, %v2548
        %v2550 = vsel %vm697, %v2549, 0.0
        %2551 = vadd.xlane.f32.xlu0 %v2550
        %v2552 = vpop.xlane.xlu0 %2551
        %v2553 = vmul.f32 %v2552, %v701
        %v2554 = vadd.f32 %v2553, 1e-06
        %v2555 = vrsqrt.pop %v2554
        %v2556 = vmul.f32 %v2548, %v2555
        %v2558 = vlaneseq
        %v2559 = vshrl.u32 %v2558, 7
        %v2560 = vsub.s32 0, %v2559
        %v2561 = vrot.slane %v2542, %v2560
        %v2563 = vmul.f32 %v2556, %v2561
        %v2565 = vlaneseq
        %v2566 = vshrl.u32 %v2565, 7
        %v2567 = vsub.s32 0, %v2566
        %v2568 = vrot.slane %v2543, %v2567
        %v2570 = vadd.f32 %v2563, %v2568
        %v2571 = vld [vmem:[#allocation17] sm:$0xf]
        %v2572 = vld [vmem:[#allocation17 + $0x4] sm:$0xf]
        %v2573 = vld [vmem:[#allocation17 + $0x8] sm:$0xf]
        %v2574 = vld [vmem:[#allocation17 + $0xc] sm:$0xf]
        %v2575 = vpack.c.bf16 %v2570, %v2570
        %v2576 = vld [vmem:[#allocation19] sm:$0x1]
        %v2578 = vlaneseq
        %v2579 = vshrl.u32 %v2578, 7
        %v2580 = vsub.s32 0, %v2579
        %v2581 = vrot.slane %v2576, %v2580
        %v2587 = vunpack.c.l.b16 %v2571
        %v2588 = vunpack.c.l.b16 %v2572
        %v2589 = vunpack.c.l.b16 %v2573
        %v2590 = vunpack.c.l.b16 %v2574
        %v2591 = vpack.c.b16 %v2588, %v2587
        %v2592 = vpack.c.b16 %v2590, %v2589
        %v2596 = vsel %vm750, %v2575, 0
        %2598 = vmatprep.subr.bf16.mxu0 0
        %2599 = vmatpush1.bf16.msra.mxu0 %v2591
        %2600 = vmatprep.subr.bf16.mxu0 0
        %2601 = vmatpush1.bf16.msra.mxu0 %v2592
        %2602 = vmatprep.subr.bf16.mxu0 0
        %2603 = vmatpush1.bf16.msra.mxu0 0
        %2604 = vmatprep.subr.bf16.mxu0 0
        %2605 = vmatpush1.bf16.msra.mxu0 0
        %2606 = vmatprep.subr.bf16.mxu0 0
        %2607 = vmatpush1.bf16.msra.mxu0 0
        %2608 = vmatprep.subr.bf16.mxu0 0
        %2609 = vmatpush1.bf16.msra.mxu0 0
        %2610 = vmatprep.subr.bf16.mxu0 0
        %2611 = vmatpush1.bf16.msra.mxu0 0
        %2612 = vmatprep.subr.bf16.mxu0 0
        %2613 = vmatpush1.bf16.msra.mxu0 0
        %2614 = vmatprep.subr.bf16.mxu0 0
        %2615 = vmatpush1.bf16.msra.mxu0 0
        %2616 = vmatprep.subr.bf16.mxu0 0
        %2617 = vmatpush1.bf16.msra.mxu0 0
        %2618 = vmatprep.subr.bf16.mxu0 0
        %2619 = vmatpush1.bf16.msra.mxu0 0
        %2620 = vmatprep.subr.bf16.mxu0 0
        %2621 = vmatpush1.bf16.msra.mxu0 0
        %2622 = vmatprep.subr.bf16.mxu0 0
        %2623 = vmatpush1.bf16.msra.mxu0 0
        %2624 = vmatprep.subr.bf16.mxu0 0
        %2625 = vmatpush1.bf16.msra.mxu0 0
        %2626 = vmatprep.subr.bf16.mxu0 0
        %2627 = vmatpush1.bf16.msra.mxu0 0
        %2628 = vmatprep.subr.bf16.mxu0 0
        %2629 = vmatpush1.bf16.msra.mxu0 0
        %2630 = vmatprep.mubr.bf16.mxu0 0
        %2631 = vmatmul.mubr.bf16.gmra.mrb[0].mxu0 %v2596
        %v2632 = vpop.f32.mrb[0].mxu0
        %v2633 = vadd.f32 %v2581, %v2632
        %v2634 = vpop.f32.mrb[0].mxu0
        %v2635 = vpop.f32.mrb[0].mxu0
        %v2636 = vpop.f32.mrb[0].mxu0
        %2637 = vdwg.mxu0
        %v2638 = vmul.f32 %v2633, 0.5
        %v2639 = vmul.f32 %v2633, 0.044715
        %v2640 = vmul.f32 %v2639, %v2633
        %v2641 = vmul.f32 %v2640, %v2633
        %v2642 = vadd.f32 %v2633, %v2641
        %v2643 = vmul.f32 %v2642, 0.7978846
        %v2644 = vtanh.pop %v2643
        %v2645 = vadd.f32 %v2644, 1.0
        %v2646 = vmul.f32 %v2638, %v2645
        %v2647 = vld [vmem:[#allocation20] sm:$0xf]
        %v2648 = vld [vmem:[#allocation20 + $0x4] sm:$0xf]
        %v2649 = vld [vmem:[#allocation20 + $0x8] sm:$0xf]
        %v2650 = vld [vmem:[#allocation20 + $0xc] sm:$0xf]
        %v2651 = vld [vmem:[#allocation20 + $0x10] sm:$0xf]
        %v2652 = vld [vmem:[#allocation20 + $0x14] sm:$0xf]
        %v2653 = vld [vmem:[#allocation20 + $0x18] sm:$0xf]
        %v2654 = vld [vmem:[#allocation20 + $0x1c] sm:$0xf]
        %v2655 = vld [vmem:[#allocation20 + $0x20] sm:$0xf]
        %v2656 = vld [vmem:[#allocation20 + $0x24] sm:$0xf]
        %v2657 = vld [vmem:[#allocation20 + $0x28] sm:$0xf]
        %v2658 = vld [vmem:[#allocation20 + $0x2c] sm:$0xf]
        %v2659 = vld [vmem:[#allocation20 + $0x30] sm:$0xf]
        %v2660 = vld [vmem:[#allocation20 + $0x34] sm:$0xf]
        %v2661 = vld [vmem:[#allocation20 + $0x38] sm:$0xf]
        %v2662 = vld [vmem:[#allocation20 + $0x3c] sm:$0xf]
        %v2663 = vpack.c.bf16 %v2646, %v2646
        %v2680 = vunpack.c.l.b16 %v2647
        %v2681 = vunpack.c.l.b16 %v2648
        %v2682 = vunpack.c.l.b16 %v2649
        %v2683 = vunpack.c.l.b16 %v2650
        %v2684 = vunpack.c.l.b16 %v2651
        %v2685 = vunpack.c.l.b16 %v2652
        %v2686 = vunpack.c.l.b16 %v2653
        %v2687 = vunpack.c.l.b16 %v2654
        %v2688 = vunpack.c.l.b16 %v2655
        %v2689 = vunpack.c.l.b16 %v2656
        %v2690 = vunpack.c.l.b16 %v2657
        %v2691 = vunpack.c.l.b16 %v2658
        %v2692 = vunpack.c.l.b16 %v2659
        %v2693 = vunpack.c.l.b16 %v2660
        %v2694 = vunpack.c.l.b16 %v2661
        %v2695 = vunpack.c.l.b16 %v2662
        %v2696 = vpack.c.b16 %v2681, %v2680
        %v2697 = vpack.c.b16 %v2683, %v2682
        %v2698 = vpack.c.b16 %v2685, %v2684
        %v2699 = vpack.c.b16 %v2687, %v2686
        %v2700 = vpack.c.b16 %v2689, %v2688
        %v2701 = vpack.c.b16 %v2691, %v2690
        %v2702 = vpack.c.b16 %v2693, %v2692
        %v2703 = vpack.c.b16 %v2695, %v2694
        %2712 = vmatprep.subr.bf16.mxu0 0
        %2713 = vmatpush1.bf16.msra.mxu0 %v2696
        %2714 = vmatprep.subr.bf16.mxu0 0
        %2715 = vmatpush1.bf16.msra.mxu0 %v2697
        %2716 = vmatprep.subr.bf16.mxu0 0
        %2717 = vmatpush1.bf16.msra.mxu0 %v2698
        %2718 = vmatprep.subr.bf16.mxu0 0
        %2719 = vmatpush1.bf16.msra.mxu0 %v2699
        %2720 = vmatprep.subr.bf16.mxu0 0
        %2721 = vmatpush1.bf16.msra.mxu0 %v2700
        %2722 = vmatprep.subr.bf16.mxu0 0
        %2723 = vmatpush1.bf16.msra.mxu0 %v2701
        %2724 = vmatprep.subr.bf16.mxu0 0
        %2725 = vmatpush1.bf16.msra.mxu0 %v2702
        %2726 = vmatprep.subr.bf16.mxu0 0
        %2727 = vmatpush1.bf16.msra.mxu0 %v2703
        %2728 = vmatprep.subr.bf16.mxu0 0
        %2729 = vmatpush1.bf16.msra.mxu0 0
        %2730 = vmatprep.subr.bf16.mxu0 0
        %2731 = vmatpush1.bf16.msra.mxu0 0
        %2732 = vmatprep.subr.bf16.mxu0 0
        %2733 = vmatpush1.bf16.msra.mxu0 0
        %2734 = vmatprep.subr.bf16.mxu0 0
        %2735 = vmatpush1.bf16.msra.mxu0 0
        %2736 = vmatprep.subr.bf16.mxu0 0
        %2737 = vmatpush1.bf16.msra.mxu0 0
        %2738 = vmatprep.subr.bf16.mxu0 0
        %2739 = vmatpush1.bf16.msra.mxu0 0
        %2740 = vmatprep.subr.bf16.mxu0 0
        %2741 = vmatpush1.bf16.msra.mxu0 0
        %2742 = vmatprep.subr.bf16.mxu0 0
        %2743 = vmatpush1.bf16.msra.mxu0 0
        %2744 = vmatprep.mubr.bf16.mxu0 0
        %2745 = vmatmul.mubr.bf16.gmra.mrb[0].mxu0 %v2663
        %v2746 = vpop.f32.mrb[0].mxu0
        %v2747 = vadd.f32 0.0, %v2746
        %v2748 = vpop.f32.mrb[0].mxu0
        %v2749 = vpop.f32.mrb[0].mxu0
        %v2750 = vpop.f32.mrb[0].mxu0
        %2751 = vdwg.mxu0
        %v2752 = vadd.f32 %v2541, %v2747
        %v2753 = vld [vmem:[#allocation22] sm:$0x1]
        %v2755 = vlaneseq
        %v2756 = vshrl.u32 %v2755, 7
        %v2757 = vsub.s32 0, %v2756
        %v2758 = vrot.slane %v2753, %v2757
        %v2760 = vadd.f32 %v2752, %v2758
        %v2761 = vld [vmem:[#allocation23] sm:$0x1]
        %v2762 = vld [vmem:[#allocation25] sm:$0x1]
        %v2763 = vsel %vm697, %v2760, 0.0
        %2764 = vadd.xlane.f32.xlu0 %v2763
        %v2765 = vpop.xlane.xlu0 %2764
        %v2766 = vmul.f32 %v2765, %v701
        %v2767 = vsub.f32 %v2760, %v2766
        %v2768 = vmul.f32 %v2767, %v2767
        %v2769 = vsel %vm697, %v2768, 0.0
        %2770 = vadd.xlane.f32.xlu0 %v2769
        %v2771 = vpop.xlane.xlu0 %2770
        %v2772 = vmul.f32 %v2771, %v701
        %v2773 = vadd.f32 %v2772, 1e-06
        %v2774 = vrsqrt.pop %v2773
        %v2775 = vmul.f32 %v2767, %v2774
        %v2777 = vlaneseq
        %v2778 = vshrl.u32 %v2777, 7
        %v2779 = vsub.s32 0, %v2778
        %v2780 = vrot.slane %v2761, %v2779
        %v2782 = vmul.f32 %v2775, %v2780
        %v2784 = vlaneseq
        %v2785 = vshrl.u32 %v2784, 7
        %v2786 = vsub.s32 0, %v2785
        %v2787 = vrot.slane %v2762, %v2786
        %v2789 = vadd.f32 %v2782, %v2787
        %2790 = vst.msk [vmem:[%s692] sm:$0x1f] %vm697, %v2789
        %s2791 = sand.u32 %s367, 1
        %s2792 = scalar_lea.sflag [#allocation4], %s2791
        %s2793 = sand.u32 %s367, 1
        %s2794 = smul.addr %s2793, 8
        %s2795 = scalar_lea.vmem [#allocation26], %s2794
        // Predicated region
        $region141: #{blip_base_forward.5} parent=79 // pred_check
          %p2796 = pneg %p377
        $region142: #{blip_base_forward.5} parent=79 // pred_check_branch
          %2798 = sbr.rel (%p2796) target = $region144
        $region143: #{blip_base_forward.5} parent=79 // pred_region
          %s2800 = ssub.s32 128, 128
          %2801 = vsyncadd %s2792, %s2800
          %s2802 = smul.addr %s39, 128
          %s2803 = scalar_lea.hbm %s15, %s2802
          %s2805 = sshll.u32 %s2795, 4
          %s2806 = int_to_ptr.vmem [resolvable:$true] %s2805
          %2808 = dma.vmem_to_hbm [thread:$0]  %s2806, 128, %s2803, %s2792
        $region144: #{blip_base_forward.5} parent=79 // pred_fallthru
          _
      $region80: #{blip_base_forward.5} parent=5 // pred_fallthru
        _
      %p2809 = scmp.le.s32.totalorder 2, %s34
      // Predicated region
      $region145: #{blip_base_forward.5} parent=5 // pred_check
        %p2810 = pneg %p2809
      $region146: #{blip_base_forward.5} parent=5 // pred_check_branch
        %2812 = sbr.rel (%p2810) target = $region148
      $region147: #{blip_base_forward.5} parent=5 // pred_region
        %s2813 = ssub.s32 %s34, 2
        // Predicated region
        $region149: #{blip_base_forward.5} parent=147 // pred_check
          %p2814 = pneg %p383
        $region150: #{blip_base_forward.5} parent=147 // pred_check_branch
          %2816 = sbr.rel (%p2814) target = $region152
        $region151: #{blip_base_forward.5} parent=147 // pred_region
          %s2817 = sand.u32 %s368, 1
          %s2818 = scalar_lea.sflag [#allocation4], %s2817
          %s2819 = sand.u32 %s368, 1
          %s2820 = smul.addr %s2819, 8
          %s2821 = scalar_lea.vmem [#allocation26], %s2820
          %2822 = dma.done %s2818, 128
        $region152: #{blip_base_forward.5} parent=147 // pred_fallthru
          _
      $region148: #{blip_base_forward.5} parent=5 // pred_fallthru
        _
    $region6: #{blip_base_forward.5} parent=1 // loop_footer
      %s38 = sadd.s32 1, %s34
    $region7: #{blip_base_forward.5} parent=1 // loop_footer_branch
      %33 = sbr.rel target = $region3
    $region8: #{blip_base_forward.5} parent=1 // loop_exit
      _
    %2823 = vsyncpa [#allocation3], 1
    %s2824 = scalar_lea.sflag [#allocation3], 1
    %2825 = vsyncpa %s2824, 1
    %2826 = vsyncpa [#allocation6], 1
    %2827 = vsyncpa [#allocation9], 1
    %2828 = vsyncpa [#allocation12], 1
    %2829 = vsyncpa [#allocation15], 1
    %2830 = vsyncpa [#allocation18], 1
    %2831 = vsyncpa [#allocation21], 1
    %2832 = vsyncpa [#allocation24], 1
    %2833 = vsyncpa [#allocation4], 1
    %s2834 = scalar_lea.sflag [#allocation4], 1
    %2835 = vsyncpa %s2834, 1

// kernel: blip_base_forward.4
$region0: #{blip_base_forward.4}
  #allocation0 [shape = 'u32[]', space=smem, size = 0x4, offset = 0x4, fixed_abs, tag = 'smem constant byte address 0x4 - core index']
  #allocation1 [shape = 'u32[144,128]{1,0:T(1,128)}', space=vmem, size = 0x12000, scoped, tag = 'internal scratch']
  %s0 = inlined_call_operand.hbm [shape: f32[2,5,32], index: 0, kind: input, shape index: {}]
  %s1 = inlined_call_operand.hbm [shape: f32[1,32], index: 1, kind: input, shape index: {}]
  %s2 = inlined_call_operand.hbm [shape: f32[1,32], index: 2, kind: input, shape index: {}]
  %s3 = inlined_call_operand.hbm [shape: bf16[32,96], index: 3, kind: input, shape index: {}]
  %s4 = inlined_call_operand.hbm [shape: f32[1,96], index: 4, kind: input, shape index: {}]
  %s5 = inlined_call_operand.hbm [shape: bf16[32,32], index: 5, kind: input, shape index: {}]
  %s6 = inlined_call_operand.hbm [shape: f32[1,32], index: 6, kind: input, shape index: {}]
  %s7 = inlined_call_operand.hbm [shape: f32[1,32], index: 7, kind: input, shape index: {}]
  %s8 = inlined_call_operand.hbm [shape: f32[1,32], index: 8, kind: input, shape index: {}]
  %s9 = inlined_call_operand.hbm [shape: bf16[32,128], index: 9, kind: input, shape index: {}]
  %s10 = inlined_call_operand.hbm [shape: f32[1,128], index: 10, kind: input, shape index: {}]
  %s11 = inlined_call_operand.hbm [shape: bf16[128,32], index: 11, kind: input, shape index: {}]
  %s12 = inlined_call_operand.hbm [shape: f32[1,32], index: 12, kind: input, shape index: {}]
  %s13 = inlined_call_operand.hbm [shape: f32[2,5,32], index: 13, kind: output, shape index: {}]
  %s14 = sld [smem:[#allocation0]]
  $region137: #{blip_base_forward.4} parent=0
    _
  %s16 = ssub.s32 1, %s14
  %s17 = scalar_select 0, %s16, %s14
  $region1: #{blip_base_forward.4} parent=0
    #allocation2 [shape = 'u8[8192]{0}', space=vmem, size = 0x2000, scoped, tag = 'input window, operand 0']
    #allocation3 [shape = 's32[2]{0}', space=sflag, size = 0x8, scoped, tag = 'scoped memory for blip_base_forward.4']
    #allocation4 [shape = 's32[2]{0}', space=sflag, size = 0x8, scoped, tag = 'scoped memory for blip_base_forward.4']
    #allocation5 [shape = 'u8[512]{0}', space=vmem, size = 0x400, scoped, tag = 'input window, operand 1, single buffered']
    #allocation6 [shape = 's32[1]{0}', space=sflag, size = 0x4, scoped, tag = 'scoped memory for blip_base_forward.4']
    #allocation7 [shape = 'u8[512]{0}', space=vmem, size = 0x400, scoped, tag = 'input window, operand 2, single buffered']
    #allocation8 [shape = 'u8[8192]{0}', space=vmem, size = 0x2000, scoped, tag = 'input window, operand 3, single buffered']
    #allocation9 [shape = 's32[1]{0}', space=sflag, size = 0x4, scoped, tag = 'scoped memory for blip_base_forward.4']
    #allocation10 [shape = 'u8[512]{0}', space=vmem, size = 0x400, scoped, tag = 'input window, operand 4, single buffered']
    #allocation11 [shape = 'u8[8192]{0}', space=vmem, size = 0x2000, scoped, tag = 'input window, operand 5, single buffered']
    #allocation12 [shape = 's32[1]{0}', space=sflag, size = 0x4, scoped, tag = 'scoped memory for blip_base_forward.4']
    #allocation13 [shape = 'u8[512]{0}', space=vmem, size = 0x400, scoped, tag = 'input window, operand 6, single buffered']
    #allocation14 [shape = 'u8[512]{0}', space=vmem, size = 0x400, scoped, tag = 'input window, operand 7, single buffered']
    #allocation15 [shape = 's32[1]{0}', space=sflag, size = 0x4, scoped, tag = 'scoped memory for blip_base_forward.4']
    #allocation16 [shape = 'u8[512]{0}', space=vmem, size = 0x400, scoped, tag = 'input window, operand 8, single buffered']
    #allocation17 [shape = 'u8[8192]{0}', space=vmem, size = 0x2000, scoped, tag = 'input window, operand 9, single buffered']
    #allocation18 [shape = 's32[1]{0}', space=sflag, size = 0x4, scoped, tag = 'scoped memory for blip_base_forward.4']
    #allocation19 [shape = 'u8[512]{0}', space=vmem, size = 0x400, scoped, tag = 'input window, operand 10, single buffered']
    #allocation20 [shape = 'u8[32768]{0}', space=vmem, size = 0x8000, scoped, tag = 'input window, operand 11, single buffered']
    #allocation21 [shape = 's32[1]{0}', space=sflag, size = 0x4, scoped, tag = 'scoped memory for blip_base_forward.4']
    #allocation22 [shape = 'u8[512]{0}', space=vmem, size = 0x400, scoped, tag = 'input window, operand 12, single buffered']
    #allocation23 [shape = 'u8[8192]{0}', space=vmem, size = 0x2000, scoped, tag = 'output window, operand 0']
    %18 = vsyncpa [#allocation3], 0
    %s19 = scalar_lea.sflag [#allocation3], 1
    %20 = vsyncpa %s19, 0
    %21 = vsyncpa [#allocation6], 0
    %22 = vsyncpa [#allocation9], 0
    %23 = vsyncpa [#allocation12], 0
    %24 = vsyncpa [#allocation15], 0
    %25 = vsyncpa [#allocation18], 0
    %26 = vsyncpa [#allocation21], 0
    %27 = vsyncpa [#allocation4], 0
    %s28 = scalar_lea.sflag [#allocation4], 1
    %29 = vsyncpa %s28, 0
    loop: start=0, step=1, limit=4
    $region2: #{blip_base_forward.4} parent=1 // loop_pre_header
      _
    $region3: #{blip_base_forward.4} parent=1 // loop_header
      %s31 = sphi 0, %s35
      %p32 = scmp.ge.s32.totalorder %s31, 4
      %s41 = sphi 0, %s43
      %s44 = sphi 0, %s41
      %s45 = sphi 0, %s44
      %s61 = sphi 0, %s45
      %s65 = sphi 0, %s65
      %s67 = sphi 0, %s65
      %s68 = sphi 0, %s67
      %s82 = sphi 0, %s68
      %s86 = sphi 0, %s86
      %s88 = sphi 0, %s86
      %s89 = sphi 0, %s88
      %s103 = sphi 0, %s89
      %s107 = sphi 0, %s107
      %s109 = sphi 0, %s107
      %s110 = sphi 0, %s109
      %s124 = sphi 0, %s110
      %s128 = sphi 0, %s128
      %s130 = sphi 0, %s128
      %s131 = sphi 0, %s130
      %s145 = sphi 0, %s131
      %s149 = sphi 0, %s149
      %s151 = sphi 0, %s149
      %s152 = sphi 0, %s151
      %s166 = sphi 0, %s152
      %s170 = sphi 0, %s170
      %s172 = sphi 0, %s170
      %s173 = sphi 0, %s172
      %s187 = sphi 0, %s173
      %s191 = sphi 0, %s191
      %s193 = sphi 0, %s191
      %s194 = sphi 0, %s193
      %s208 = sphi 0, %s194
      %s212 = sphi 0, %s212
      %s214 = sphi 0, %s212
      %s215 = sphi 0, %s214
      %s229 = sphi 0, %s215
      %s233 = sphi 0, %s233
      %s235 = sphi 0, %s233
      %s236 = sphi 0, %s235
      %s250 = sphi 0, %s236
      %s254 = sphi 0, %s254
      %s256 = sphi 0, %s254
      %s257 = sphi 0, %s256
      %s271 = sphi 0, %s257
      %s275 = sphi 0, %s275
      %s277 = sphi 0, %s275
      %s278 = sphi 0, %s277
      %s292 = sphi 0, %s278
      %s296 = sphi 0, %s296
      %s298 = sphi 0, %s296
      %s299 = sphi 0, %s298
      %s313 = sphi 0, %s299
      %s319 = sphi 0, %s321
      %s322 = sphi 0, %s319
      %s323 = sphi 0, %s322
      %s339 = sphi 0, %s323
    $region4: #{blip_base_forward.4} parent=1 // loop_header_branch
      %34 = sbr.rel (%p32) target = $region8
    $region5: #{blip_base_forward.4} parent=1 // loop_body
      %s36 = ssub.s32 %s31, 1
      %s37 = ssub.s32 %s31, 2
      %s38 = sadd.s32 %s31, 1
      %s39 = ssub.s32 %s31, %s38
      %p40 = scmp.eq.s32.totalorder %s39, 0
      %s42 = sadd.s32 %s41, 1
      %s43 = scalar_select %p40, %s41, %s42
      %p46 = pneg %p40
      %p47 = scmp.eq.s32.totalorder %s31, 1
      %p48 = por %p46, %p47
      %p49 = scmp.ne.s32.totalorder %s41, %s44
      %p50 = scmp.eq.s32.totalorder %s31, 0
      %p51 = por %p49, %p50
      %p52 = scmp.ne.s32.totalorder %s41, %s44
      %p53 = scmp.eq.s32.totalorder %s36, 1
      %p54 = por %p52, %p53
      %p55 = scmp.ne.s32.totalorder %s44, %s45
      %p56 = scmp.eq.s32.totalorder %s36, 0
      %p57 = por %p55, %p56
      %p58 = scmp.ne.s32.totalorder %s44, %s45
      %p59 = scmp.eq.s32.totalorder %s37, 1
      %p60 = por %p58, %p59
      %p62 = scmp.ne.s32.totalorder %s45, %s61
      %p63 = scmp.eq.s32.totalorder %s37, 0
      %p64 = por %p62, %p63
      %s66 = sadd.s32 %s65, 1
      %p69 = scmp.eq.s32.totalorder %s31, 1
      %p70 = scmp.ne.s32.totalorder %s65, %s67
      %p71 = scmp.eq.s32.totalorder %s31, 0
      %p72 = por %p70, %p71
      %p73 = scmp.ne.s32.totalorder %s65, %s67
      %p74 = scmp.eq.s32.totalorder %s36, 1
      %p75 = por %p73, %p74
      %p76 = scmp.ne.s32.totalorder %s67, %s68
      %p77 = scmp.eq.s32.totalorder %s36, 0
      %p78 = por %p76, %p77
      %p79 = scmp.ne.s32.totalorder %s67, %s68
      %p80 = scmp.eq.s32.totalorder %s37, 1
      %p81 = por %p79, %p80
      %p83 = scmp.ne.s32.totalorder %s68, %s82
      %p84 = scmp.eq.s32.totalorder %s37, 0
      %p85 = por %p83, %p84
      %s87 = sadd.s32 %s86, 1
      %p90 = scmp.eq.s32.totalorder %s31, 1
      %p91 = scmp.ne.s32.totalorder %s86, %s88
      %p92 = scmp.eq.s32.totalorder %s31, 0
      %p93 = por %p91, %p92
      %p94 = scmp.ne.s32.totalorder %s86, %s88
      %p95 = scmp.eq.s32.totalorder %s36, 1
      %p96 = por %p94, %p95
      %p97 = scmp.ne.s32.totalorder %s88, %s89
      %p98 = scmp.eq.s32.totalorder %s36, 0
      %p99 = por %p97, %p98
      %p100 = scmp.ne.s32.totalorder %s88, %s89
      %p101 = scmp.eq.s32.totalorder %s37, 1
      %p102 = por %p100, %p101
      %p104 = scmp.ne.s32.totalorder %s89, %s103
      %p105 = scmp.eq.s32.totalorder %s37, 0
      %p106 = por %p104, %p105
      %s108 = sadd.s32 %s107, 1
      %p111 = scmp.eq.s32.totalorder %s31, 1
      %p112 = scmp.ne.s32.totalorder %s107, %s109
      %p113 = scmp.eq.s32.totalorder %s31, 0
      %p114 = por %p112, %p113
      %p115 = scmp.ne.s32.totalorder %s107, %s109
      %p116 = scmp.eq.s32.totalorder %s36, 1
      %p117 = por %p115, %p116
      %p118 = scmp.ne.s32.totalorder %s109, %s110
      %p119 = scmp.eq.s32.totalorder %s36, 0
      %p120 = por %p118, %p119
      %p121 = scmp.ne.s32.totalorder %s109, %s110
      %p122 = scmp.eq.s32.totalorder %s37, 1
      %p123 = por %p121, %p122
      %p125 = scmp.ne.s32.totalorder %s110, %s124
      %p126 = scmp.eq.s32.totalorder %s37, 0
      %p127 = por %p125, %p126
      %s129 = sadd.s32 %s128, 1
      %p132 = scmp.eq.s32.totalorder %s31, 1
      %p133 = scmp.ne.s32.totalorder %s128, %s130
      %p134 = scmp.eq.s32.totalorder %s31, 0
      %p135 = por %p133, %p134
      %p136 = scmp.ne.s32.totalorder %s128, %s130
      %p137 = scmp.eq.s32.totalorder %s36, 1
      %p138 = por %p136, %p137
      %p139 = scmp.ne.s32.totalorder %s130, %s131
      %p140 = scmp.eq.s32.totalorder %s36, 0
      %p141 = por %p139, %p140
      %p142 = scmp.ne.s32.totalorder %s130, %s131
      %p143 = scmp.eq.s32.totalorder %s37, 1
      %p144 = por %p142, %p143
      %p146 = scmp.ne.s32.totalorder %s131, %s145
      %p147 = scmp.eq.s32.totalorder %s37, 0
      %p148 = por %p146, %p147
      %s150 = sadd.s32 %s149, 1
      %p153 = scmp.eq.s32.totalorder %s31, 1
      %p154 = scmp.ne.s32.totalorder %s149, %s151
      %p155 = scmp.eq.s32.totalorder %s31, 0
      %p156 = por %p154, %p155
      %p157 = scmp.ne.s32.totalorder %s149, %s151
      %p158 = scmp.eq.s32.totalorder %s36, 1
      %p159 = por %p157, %p158
      %p160 = scmp.ne.s32.totalorder %s151, %s152
      %p161 = scmp.eq.s32.totalorder %s36, 0
      %p162 = por %p160, %p161
      %p163 = scmp.ne.s32.totalorder %s151, %s152
      %p164 = scmp.eq.s32.totalorder %s37, 1
      %p165 = por %p163, %p164
      %p167 = scmp.ne.s32.totalorder %s152, %s166
      %p168 = scmp.eq.s32.totalorder %s37, 0
      %p169 = por %p167, %p168
      %s171 = sadd.s32 %s170, 1
      %p174 = scmp.eq.s32.totalorder %s31, 1
      %p175 = scmp.ne.s32.totalorder %s170, %s172
      %p176 = scmp.eq.s32.totalorder %s31, 0
      %p177 = por %p175, %p176
      %p178 = scmp.ne.s32.totalorder %s170, %s172
      %p179 = scmp.eq.s32.totalorder %s36, 1
      %p180 = por %p178, %p179
      %p181 = scmp.ne.s32.totalorder %s172, %s173
      %p182 = scmp.eq.s32.totalorder %s36, 0
      %p183 = por %p181, %p182
      %p184 = scmp.ne.s32.totalorder %s172, %s173
      %p185 = scmp.eq.s32.totalorder %s37, 1
      %p186 = por %p184, %p185
      %p188 = scmp.ne.s32.totalorder %s173, %s187
      %p189 = scmp.eq.s32.totalorder %s37, 0
      %p190 = por %p188, %p189
      %s192 = sadd.s32 %s191, 1
      %p195 = scmp.eq.s32.totalorder %s31, 1
      %p196 = scmp.ne.s32.totalorder %s191, %s193
      %p197 = scmp.eq.s32.totalorder %s31, 0
      %p198 = por %p196, %p197
      %p199 = scmp.ne.s32.totalorder %s191, %s193
      %p200 = scmp.eq.s32.totalorder %s36, 1
      %p201 = por %p199, %p200
      %p202 = scmp.ne.s32.totalorder %s193, %s194
      %p203 = scmp.eq.s32.totalorder %s36, 0
      %p204 = por %p202, %p203
      %p205 = scmp.ne.s32.totalorder %s193, %s194
      %p206 = scmp.eq.s32.totalorder %s37, 1
      %p207 = por %p205, %p206
      %p209 = scmp.ne.s32.totalorder %s194, %s208
      %p210 = scmp.eq.s32.totalorder %s37, 0
      %p211 = por %p209, %p210
      %s213 = sadd.s32 %s212, 1
      %p216 = scmp.eq.s32.totalorder %s31, 1
      %p217 = scmp.ne.s32.totalorder %s212, %s214
      %p218 = scmp.eq.s32.totalorder %s31, 0
      %p219 = por %p217, %p218
      %p220 = scmp.ne.s32.totalorder %s212, %s214
      %p221 = scmp.eq.s32.totalorder %s36, 1
      %p222 = por %p220, %p221
      %p223 = scmp.ne.s32.totalorder %s214, %s215
      %p224 = scmp.eq.s32.totalorder %s36, 0
      %p225 = por %p223, %p224
      %p226 = scmp.ne.s32.totalorder %s214, %s215
      %p227 = scmp.eq.s32.totalorder %s37, 1
      %p228 = por %p226, %p227
      %p230 = scmp.ne.s32.totalorder %s215, %s229
      %p231 = scmp.eq.s32.totalorder %s37, 0
      %p232 = por %p230, %p231
      %s234 = sadd.s32 %s233, 1
      %p237 = scmp.eq.s32.totalorder %s31, 1
      %p238 = scmp.ne.s32.totalorder %s233, %s235
      %p239 = scmp.eq.s32.totalorder %s31, 0
      %p240 = por %p238, %p239
      %p241 = scmp.ne.s32.totalorder %s233, %s235
      %p242 = scmp.eq.s32.totalorder %s36, 1
      %p243 = por %p241, %p242
      %p244 = scmp.ne.s32.totalorder %s235, %s236
      %p245 = scmp.eq.s32.totalorder %s36, 0
      %p246 = por %p244, %p245
      %p247 = scmp.ne.s32.totalorder %s235, %s236
      %p248 = scmp.eq.s32.totalorder %s37, 1
      %p249 = por %p247, %p248
      %p251 = scmp.ne.s32.totalorder %s236, %s250
      %p252 = scmp.eq.s32.totalorder %s37, 0
      %p253 = por %p251, %p252
      %s255 = sadd.s32 %s254, 1
      %p258 = scmp.eq.s32.totalorder %s31, 1
      %p259 = scmp.ne.s32.totalorder %s254, %s256
      %p260 = scmp.eq.s32.totalorder %s31, 0
      %p261 = por %p259, %p260
      %p262 = scmp.ne.s32.totalorder %s254, %s256
      %p263 = scmp.eq.s32.totalorder %s36, 1
      %p264 = por %p262, %p263
      %p265 = scmp.ne.s32.totalorder %s256, %s257
      %p266 = scmp.eq.s32.totalorder %s36, 0
      %p267 = por %p265, %p266
      %p268 = scmp.ne.s32.totalorder %s256, %s257
      %p269 = scmp.eq.s32.totalorder %s37, 1
      %p270 = por %p268, %p269
      %p272 = scmp.ne.s32.totalorder %s257, %s271
      %p273 = scmp.eq.s32.totalorder %s37, 0
      %p274 = por %p272, %p273
      %s276 = sadd.s32 %s275, 1
      %p279 = scmp.eq.s32.totalorder %s31, 1
      %p280 = scmp.ne.s32.totalorder %s275, %s277
      %p281 = scmp.eq.s32.totalorder %s31, 0
      %p282 = por %p280, %p281
      %p283 = scmp.ne.s32.totalorder %s275, %s277
      %p284 = scmp.eq.s32.totalorder %s36, 1
      %p285 = por %p283, %p284
      %p286 = scmp.ne.s32.totalorder %s277, %s278
      %p287 = scmp.eq.s32.totalorder %s36, 0
      %p288 = por %p286, %p287
      %p289 = scmp.ne.s32.totalorder %s277, %s278
      %p290 = scmp.eq.s32.totalorder %s37, 1
      %p291 = por %p289, %p290
      %p293 = scmp.ne.s32.totalorder %s278, %s292
      %p294 = scmp.eq.s32.totalorder %s37, 0
      %p295 = por %p293, %p294
      %s297 = sadd.s32 %s296, 1
      %p300 = scmp.eq.s32.totalorder %s31, 1
      %p301 = scmp.ne.s32.totalorder %s296, %s298
      %p302 = scmp.eq.s32.totalorder %s31, 0
      %p303 = por %p301, %p302
      %p304 = scmp.ne.s32.totalorder %s296, %s298
      %p305 = scmp.eq.s32.totalorder %s36, 1
      %p306 = por %p304, %p305
      %p307 = scmp.ne.s32.totalorder %s298, %s299
      %p308 = scmp.eq.s32.totalorder %s36, 0
      %p309 = por %p307, %p308
      %p310 = scmp.ne.s32.totalorder %s298, %s299
      %p311 = scmp.eq.s32.totalorder %s37, 1
      %p312 = por %p310, %p311
      %p314 = scmp.ne.s32.totalorder %s299, %s313
      %p315 = scmp.eq.s32.totalorder %s37, 0
      %p316 = por %p314, %p315
      %s317 = ssub.s32 %s31, %s38
      %p318 = scmp.eq.s32.totalorder %s317, 0
      %s320 = sadd.s32 %s319, 1
      %s321 = scalar_select %p318, %s319, %s320
      %p324 = pneg %p318
      %p325 = scmp.eq.s32.totalorder %s31, 1
      %p326 = por %p324, %p325
      %p327 = scmp.ne.s32.totalorder %s319, %s322
      %p328 = scmp.eq.s32.totalorder %s31, 0
      %p329 = por %p327, %p328
      %p330 = scmp.ne.s32.totalorder %s319, %s322
      %p331 = scmp.eq.s32.totalorder %s36, 1
      %p332 = por %p330, %p331
      %p333 = scmp.ne.s32.totalorder %s322, %s323
      %p334 = scmp.eq.s32.totalorder %s36, 0
      %p335 = por %p333, %p334
      %p336 = scmp.ne.s32.totalorder %s322, %s323
      %p337 = scmp.eq.s32.totalorder %s37, 1
      %p338 = por %p336, %p337
      %p340 = scmp.ne.s32.totalorder %s323, %s339
      %p341 = scmp.eq.s32.totalorder %s37, 0
      %p342 = por %p340, %p341
      %p343 = scmp.le.s32.totalorder 1, %s31
      %p344 = scmp.lt.s32.totalorder %s31, 3
      %p345 = pnand %p343, %p344
      %p346 = pneg %p345
      // Predicated region
      $region9: #{blip_base_forward.4} parent=5 // pred_check
        _
      $region10: #{blip_base_forward.4} parent=5 // pred_check_branch
        %348 = sbr.rel (%p345) target = $region12
      $region11: #{blip_base_forward.4} parent=5 // pred_region
        %s349 = ssub.s32 %s31, 1
        // Predicated region
        $region13: #{blip_base_forward.4} parent=11 // pred_check
          %p350 = pneg %p78
        $region14: #{blip_base_forward.4} parent=11 // pred_check_branch
          %352 = sbr.rel (%p350) target = $region16
        $region15: #{blip_base_forward.4} parent=11 // pred_region
          %s354 = ssub.s32 16, 16
          %355 = vsyncadd [#allocation6], %s354
          %s357 = sshll.u32 [#allocation5], 4
          %s358 = int_to_ptr.vmem [resolvable:$true] %s357
          %360 = dma.hbm_to_vmem [thread:$0]  %s1, 16, %s358, [#allocation6]
        $region16: #{blip_base_forward.4} parent=11 // pred_fallthru
          _
        // Predicated region
        $region17: #{blip_base_forward.4} parent=11 // pred_check
          %p361 = pneg %p99
        $region18: #{blip_base_forward.4} parent=11 // pred_check_branch
          %363 = sbr.rel (%p361) target = $region20
        $region19: #{blip_base_forward.4} parent=11 // pred_region
          %s365 = ssub.s32 16, 16
          %366 = vsyncadd [#allocation6], %s365
          %s368 = sshll.u32 [#allocation7], 4
          %s369 = int_to_ptr.vmem [resolvable:$true] %s368
          %371 = dma.hbm_to_vmem [thread:$0]  %s2, 16, %s369, [#allocation6]
        $region20: #{blip_base_forward.4} parent=11 // pred_fallthru
          _
        // Predicated region
        $region21: #{blip_base_forward.4} parent=11 // pred_check
          %p372 = pneg %p120
        $region22: #{blip_base_forward.4} parent=11 // pred_check_branch
          %374 = sbr.rel (%p372) target = $region24
        $region23: #{blip_base_forward.4} parent=11 // pred_region
          %s376 = ssub.s32 256, 256
          %377 = vsyncadd [#allocation9], %s376
          %s378 = sshll.u32 [#allocation8], 4
          %s379 = int_to_ptr.vmem [resolvable:$true] %s378
          %384 = dma.hbm_to_vmem [thread:$0]  %s3, 256, %s379, [#allocation9], 64, 64, 4
        $region24: #{blip_base_forward.4} parent=11 // pred_fallthru
          _
        // Predicated region
        $region25: #{blip_base_forward.4} parent=11 // pred_check
          %p385 = pneg %p141
        $region26: #{blip_base_forward.4} parent=11 // pred_check_branch
          %387 = sbr.rel (%p385) target = $region28
        $region27: #{blip_base_forward.4} parent=11 // pred_region
          %s389 = ssub.s32 16, 16
          %390 = vsyncadd [#allocation9], %s389
          %s392 = sshll.u32 [#allocation10], 4
          %s393 = int_to_ptr.vmem [resolvable:$true] %s392
          %395 = dma.hbm_to_vmem [thread:$0]  %s4, 16, %s393, [#allocation9]
        $region28: #{blip_base_forward.4} parent=11 // pred_fallthru
          _
        // Predicated region
        $region29: #{blip_base_forward.4} parent=11 // pred_check
          %p396 = pneg %p162
        $region30: #{blip_base_forward.4} parent=11 // pred_check_branch
          %398 = sbr.rel (%p396) target = $region32
        $region31: #{blip_base_forward.4} parent=11 // pred_region
          %s400 = ssub.s32 256, 256
          %401 = vsyncadd [#allocation12], %s400
          %s402 = sshll.u32 [#allocation11], 4
          %s403 = int_to_ptr.vmem [resolvable:$true] %s402
          %408 = dma.hbm_to_vmem [thread:$0]  %s5, 256, %s403, [#allocation12], 64, 64, 4
        $region32: #{blip_base_forward.4} parent=11 // pred_fallthru
          _
        // Predicated region
        $region33: #{blip_base_forward.4} parent=11 // pred_check
          %p409 = pneg %p183
        $region34: #{blip_base_forward.4} parent=11 // pred_check_branch
          %411 = sbr.rel (%p409) target = $region36
        $region35: #{blip_base_forward.4} parent=11 // pred_region
          %s413 = ssub.s32 16, 16
          %414 = vsyncadd [#allocation12], %s413
          %s416 = sshll.u32 [#allocation13], 4
          %s417 = int_to_ptr.vmem [resolvable:$true] %s416
          %419 = dma.hbm_to_vmem [thread:$0]  %s6, 16, %s417, [#allocation12]
        $region36: #{blip_base_forward.4} parent=11 // pred_fallthru
          _
        // Predicated region
        $region37: #{blip_base_forward.4} parent=11 // pred_check
          %p420 = pneg %p204
        $region38: #{blip_base_forward.4} parent=11 // pred_check_branch
          %422 = sbr.rel (%p420) target = $region40
        $region39: #{blip_base_forward.4} parent=11 // pred_region
          %s424 = ssub.s32 16, 16
          %425 = vsyncadd [#allocation15], %s424
          %s427 = sshll.u32 [#allocation14], 4
          %s428 = int_to_ptr.vmem [resolvable:$true] %s427
          %430 = dma.hbm_to_vmem [thread:$0]  %s7, 16, %s428, [#allocation15]
        $region40: #{blip_base_forward.4} parent=11 // pred_fallthru
          _
        // Predicated region
        $region41: #{blip_base_forward.4} parent=11 // pred_check
          %p431 = pneg %p225
        $region42: #{blip_base_forward.4} parent=11 // pred_check_branch
          %433 = sbr.rel (%p431) target = $region44
        $region43: #{blip_base_forward.4} parent=11 // pred_region
          %s435 = ssub.s32 16, 16
          %436 = vsyncadd [#allocation15], %s435
          %s438 = sshll.u32 [#allocation16], 4
          %s439 = int_to_ptr.vmem [resolvable:$true] %s438
          %441 = dma.hbm_to_vmem [thread:$0]  %s8, 16, %s439, [#allocation15]
        $region44: #{blip_base_forward.4} parent=11 // pred_fallthru
          _
        // Predicated region
        $region45: #{blip_base_forward.4} parent=11 // pred_check
          %p442 = pneg %p246
        $region46: #{blip_base_forward.4} parent=11 // pred_check_branch
          %444 = sbr.rel (%p442) target = $region48
        $region47: #{blip_base_forward.4} parent=11 // pred_region
          %s446 = ssub.s32 256, 256
          %447 = vsyncadd [#allocation18], %s446
          %s448 = sshll.u32 [#allocation17], 4
          %s449 = int_to_ptr.vmem [resolvable:$true] %s448
          %454 = dma.hbm_to_vmem [thread:$0]  %s9, 256, %s449, [#allocation18], 64, 64, 4
        $region48: #{blip_base_forward.4} parent=11 // pred_fallthru
          _
        // Predicated region
        $region49: #{blip_base_forward.4} parent=11 // pred_check
          %p455 = pneg %p267
        $region50: #{blip_base_forward.4} parent=11 // pred_check_branch
          %457 = sbr.rel (%p455) target = $region52
        $region51: #{blip_base_forward.4} parent=11 // pred_region
          %s459 = ssub.s32 16, 16
          %460 = vsyncadd [#allocation18], %s459
          %s462 = sshll.u32 [#allocation19], 4
          %s463 = int_to_ptr.vmem [resolvable:$true] %s462
          %465 = dma.hbm_to_vmem [thread:$0]  %s10, 16, %s463, [#allocation18]
        $region52: #{blip_base_forward.4} parent=11 // pred_fallthru
          _
        // Predicated region
        $region53: #{blip_base_forward.4} parent=11 // pred_check
          %p466 = pneg %p288
        $region54: #{blip_base_forward.4} parent=11 // pred_check_branch
          %468 = sbr.rel (%p466) target = $region56
        $region55: #{blip_base_forward.4} parent=11 // pred_region
          %s470 = ssub.s32 1024, 1024
          %471 = vsyncadd [#allocation21], %s470
          %s472 = sshll.u32 [#allocation20], 4
          %s473 = int_to_ptr.vmem [resolvable:$true] %s472
          %478 = dma.hbm_to_vmem [thread:$0]  %s11, 1024, %s473, [#allocation21], 64, 64, 4
        $region56: #{blip_base_forward.4} parent=11 // pred_fallthru
          _
        // Predicated region
        $region57: #{blip_base_forward.4} parent=11 // pred_check
          %p479 = pneg %p309
        $region58: #{blip_base_forward.4} parent=11 // pred_check_branch
          %481 = sbr.rel (%p479) target = $region60
        $region59: #{blip_base_forward.4} parent=11 // pred_region
          %s483 = ssub.s32 16, 16
          %484 = vsyncadd [#allocation21], %s483
          %s486 = sshll.u32 [#allocation22], 4
          %s487 = int_to_ptr.vmem [resolvable:$true] %s486
          %489 = dma.hbm_to_vmem [thread:$0]  %s12, 16, %s487, [#allocation21]
        $region60: #{blip_base_forward.4} parent=11 // pred_fallthru
          _
      $region12: #{blip_base_forward.4} parent=5 // pred_fallthru
        _
      %p490 = scmp.lt.s32.totalorder %s31, 2
      // Predicated region
      $region61: #{blip_base_forward.4} parent=5 // pred_check
        %p491 = pneg %p490
      $region62: #{blip_base_forward.4} parent=5 // pred_check_branch
        %493 = sbr.rel (%p491) target = $region64
      $region63: #{blip_base_forward.4} parent=5 // pred_region
        // Predicated region
        $region65: #{blip_base_forward.4} parent=63 // pred_check
          %p494 = pneg %p51
        $region66: #{blip_base_forward.4} parent=63 // pred_check_branch
          %496 = sbr.rel (%p494) target = $region68
        $region67: #{blip_base_forward.4} parent=63 // pred_region
          %s497 = sand.u32 %s41, 1
          %s498 = scalar_lea.sflag [#allocation3], %s497
          %s499 = sand.u32 %s41, 1
          %s500 = smul.addr %s499, 8
          %s501 = scalar_lea.vmem [#allocation2], %s500
          %s503 = ssub.s32 128, 128
          %504 = vsyncadd %s498, %s503
          %s505 = smul.addr %s31, 128
          %s506 = scalar_lea.hbm %s0, %s505
          %s508 = sshll.u32 %s501, 4
          %s509 = int_to_ptr.vmem [resolvable:$true] %s508
          %511 = dma.hbm_to_vmem [thread:$0]  %s506, 128, %s509, %s498
        $region68: #{blip_base_forward.4} parent=63 // pred_fallthru
          _
      $region64: #{blip_base_forward.4} parent=5 // pred_fallthru
        _
      %p512 = scmp.le.s32.totalorder 1, %s31
      %p513 = scmp.lt.s32.totalorder %s31, 3
      %p514 = pnand %p512, %p513
      %p515 = pneg %p514
      // Predicated region
      $region69: #{blip_base_forward.4} parent=5 // pred_check
        _
      $region70: #{blip_base_forward.4} parent=5 // pred_check_branch
        %517 = sbr.rel (%p514) target = $region72
      $region71: #{blip_base_forward.4} parent=5 // pred_region
        %s518 = ssub.s32 %s31, 1
        %s519 = sand.u32 %s44, 1
        %s520 = scalar_lea.sflag [#allocation3], %s519
        %s521 = sand.u32 %s44, 1
        %s522 = smul.addr %s521, 8
        %s523 = scalar_lea.vmem [#allocation2], %s522
        // Predicated region
        $region73: #{blip_base_forward.4} parent=71 // pred_check
          %p524 = pneg %p57
        $region74: #{blip_base_forward.4} parent=71 // pred_check_branch
          %526 = sbr.rel (%p524) target = $region76
        $region75: #{blip_base_forward.4} parent=71 // pred_region
          %527 = dma.done %s520, 128
        $region76: #{blip_base_forward.4} parent=71 // pred_fallthru
          _
        // Predicated region
        $region77: #{blip_base_forward.4} parent=71 // pred_check
          %p528 = pneg %p78
        $region78: #{blip_base_forward.4} parent=71 // pred_check_branch
          %530 = sbr.rel (%p528) target = $region80
        $region79: #{blip_base_forward.4} parent=71 // pred_region
          %531 = dma.done [#allocation6], 16
        $region80: #{blip_base_forward.4} parent=71 // pred_fallthru
          _
        // Predicated region
        $region81: #{blip_base_forward.4} parent=71 // pred_check
          %p532 = pneg %p99
        $region82: #{blip_base_forward.4} parent=71 // pred_check_branch
          %534 = sbr.rel (%p532) target = $region84
        $region83: #{blip_base_forward.4} parent=71 // pred_region
          %535 = dma.done [#allocation6], 16
        $region84: #{blip_base_forward.4} parent=71 // pred_fallthru
          _
        // Predicated region
        $region85: #{blip_base_forward.4} parent=71 // pred_check
          %p536 = pneg %p120
        $region86: #{blip_base_forward.4} parent=71 // pred_check_branch
          %538 = sbr.rel (%p536) target = $region88
        $region87: #{blip_base_forward.4} parent=71 // pred_region
          %539 = dma.done [#allocation9], 256
        $region88: #{blip_base_forward.4} parent=71 // pred_fallthru
          _
        // Predicated region
        $region89: #{blip_base_forward.4} parent=71 // pred_check
          %p540 = pneg %p141
        $region90: #{blip_base_forward.4} parent=71 // pred_check_branch
          %542 = sbr.rel (%p540) target = $region92
        $region91: #{blip_base_forward.4} parent=71 // pred_region
          %543 = dma.done [#allocation9], 16
        $region92: #{blip_base_forward.4} parent=71 // pred_fallthru
          _
        // Predicated region
        $region93: #{blip_base_forward.4} parent=71 // pred_check
          %p544 = pneg %p162
        $region94: #{blip_base_forward.4} parent=71 // pred_check_branch
          %546 = sbr.rel (%p544) target = $region96
        $region95: #{blip_base_forward.4} parent=71 // pred_region
          %547 = dma.done [#allocation12], 256
        $region96: #{blip_base_forward.4} parent=71 // pred_fallthru
          _
        // Predicated region
        $region97: #{blip_base_forward.4} parent=71 // pred_check
          %p548 = pneg %p183
        $region98: #{blip_base_forward.4} parent=71 // pred_check_branch
          %550 = sbr.rel (%p548) target = $region100
        $region99: #{blip_base_forward.4} parent=71 // pred_region
          %551 = dma.done [#allocation12], 16
        $region100: #{blip_base_forward.4} parent=71 // pred_fallthru
          _
        // Predicated region
        $region101: #{blip_base_forward.4} parent=71 // pred_check
          %p552 = pneg %p204
        $region102: #{blip_base_forward.4} parent=71 // pred_check_branch
          %554 = sbr.rel (%p552) target = $region104
        $region103: #{blip_base_forward.4} parent=71 // pred_region
          %555 = dma.done [#allocation15], 16
        $region104: #{blip_base_forward.4} parent=71 // pred_fallthru
          _
        // Predicated region
        $region105: #{blip_base_forward.4} parent=71 // pred_check
          %p556 = pneg %p225
        $region106: #{blip_base_forward.4} parent=71 // pred_check_branch
          %558 = sbr.rel (%p556) target = $region108
        $region107: #{blip_base_forward.4} parent=71 // pred_region
          %559 = dma.done [#allocation15], 16
        $region108: #{blip_base_forward.4} parent=71 // pred_fallthru
          _
        // Predicated region
        $region109: #{blip_base_forward.4} parent=71 // pred_check
          %p560 = pneg %p246
        $region110: #{blip_base_forward.4} parent=71 // pred_check_branch
          %562 = sbr.rel (%p560) target = $region112
        $region111: #{blip_base_forward.4} parent=71 // pred_region
          %563 = dma.done [#allocation18], 256
        $region112: #{blip_base_forward.4} parent=71 // pred_fallthru
          _
        // Predicated region
        $region113: #{blip_base_forward.4} parent=71 // pred_check
          %p564 = pneg %p267
        $region114: #{blip_base_forward.4} parent=71 // pred_check_branch
          %566 = sbr.rel (%p564) target = $region116
        $region115: #{blip_base_forward.4} parent=71 // pred_region
          %567 = dma.done [#allocation18], 16
        $region116: #{blip_base_forward.4} parent=71 // pred_fallthru
          _
        // Predicated region
        $region117: #{blip_base_forward.4} parent=71 // pred_check
          %p568 = pneg %p288
        $region118: #{blip_base_forward.4} parent=71 // pred_check_branch
          %570 = sbr.rel (%p568) target = $region120
        $region119: #{blip_base_forward.4} parent=71 // pred_region
          %571 = dma.done [#allocation21], 1024
        $region120: #{blip_base_forward.4} parent=71 // pred_fallthru
          _
        // Predicated region
        $region121: #{blip_base_forward.4} parent=71 // pred_check
          %p572 = pneg %p309
        $region122: #{blip_base_forward.4} parent=71 // pred_check_branch
          %574 = sbr.rel (%p572) target = $region124
        $region123: #{blip_base_forward.4} parent=71 // pred_region
          %575 = dma.done [#allocation21], 16
        $region124: #{blip_base_forward.4} parent=71 // pred_fallthru
          _
        %s576 = sand.u32 %s44, 1
        %s577 = scalar_lea.sflag [#allocation3], %s576
        %s578 = sand.u32 %s44, 1
        %s579 = smul.addr %s578, 8
        %s580 = scalar_lea.vmem [#allocation2], %s579
        %p581 = pneg %p57
        %p582 = pneg %p54
        %p583 = pneg %p78
        %p584 = pneg %p75
        %p585 = pneg %p99
        %p586 = pneg %p96
        %p587 = pneg %p120
        %p588 = pneg %p117
        %p589 = pneg %p141
        %p590 = pneg %p138
        %p591 = pneg %p162
        %p592 = pneg %p159
        %p593 = pneg %p183
        %p594 = pneg %p180
        %p595 = pneg %p204
        %p596 = pneg %p201
        %p597 = pneg %p225
        %p598 = pneg %p222
        %p599 = pneg %p246
        %p600 = pneg %p243
        %p601 = pneg %p267
        %p602 = pneg %p264
        %p603 = pneg %p288
        %p604 = pneg %p285
        %p605 = pneg %p309
        %p606 = pneg %p306
        %p607 = pneg %p335
        %p608 = pneg %p332
        %s609 = sand.u32 %s322, 1
        %s610 = scalar_lea.sflag [#allocation4], %s609
        %s611 = sand.u32 %s322, 1
        %s612 = smul.addr %s611, 8
        %s613 = scalar_lea.vmem [#allocation23], %s612
        %v615 = vld [vmem:[%s523] sm:$0x1f]
        %v616 = vld [vmem:[#allocation5] sm:$0x1]
        %v617 = vld [vmem:[#allocation7] sm:$0x1]
        %vm618 = vcmask 258048
        %v619 = vsel %vm618, %v615, 0.0
        %620 = vadd.xlane.f32.xlu0 %v619
        %v621 = vpop.xlane.xlu0 %620
        %v622 = vrcp.pop 32.0
        %v623 = vmul.f32 %v621, %v622
        %v624 = vsub.f32 %v615, %v623
        %v625 = vmul.f32 %v624, %v624
        %v626 = vsel %vm618, %v625, 0.0
        %627 = vadd.xlane.f32.xlu0 %v626
        %v628 = vpop.xlane.xlu0 %627
        %v629 = vmul.f32 %v628, %v622
        %v630 = vadd.f32 %v629, 1e-06
        %v631 = vrsqrt.pop %v630
        %v632 = vmul.f32 %v624, %v631
        %v634 = vlaneseq
        %v635 = vshrl.u32 %v634, 7
        %v636 = vsub.s32 0, %v635
        %v637 = vrot.slane %v616, %v636
        %v639 = vmul.f32 %v632, %v637
        %v641 = vlaneseq
        %v642 = vshrl.u32 %v641, 7
        %v643 = vsub.s32 0, %v642
        %v644 = vrot.slane %v617, %v643
        %v646 = vadd.f32 %v639, %v644
        %v647 = vld [vmem:[#allocation8] sm:$0xf]
        %v648 = vld [vmem:[#allocation8 + $0x4] sm:$0xf]
        %v649 = vld [vmem:[#allocation8 + $0x8] sm:$0xf]
        %v650 = vld [vmem:[#allocation8 + $0xc] sm:$0xf]
        %v651 = vpack.c.bf16 %v646, %v646
        %v652 = vld [vmem:[#allocation10] sm:$0x1]
        %v654 = vlaneseq
        %v655 = vshrl.u32 %v654, 7
        %v656 = vsub.s32 0, %v655
        %v657 = vrot.slane %v652, %v656
        %v663 = vunpack.c.l.b16 %v647
        %v664 = vunpack.c.l.b16 %v648
        %v665 = vunpack.c.l.b16 %v649
        %v666 = vunpack.c.l.b16 %v650
        %v667 = vpack.c.b16 %v664, %v663
        %v668 = vpack.c.b16 %v666, %v665
        %vm671 = vcmask 261120
        %v673 = vsel %vm671, %v651, 0
        %675 = vmatprep.subr.bf16.mxu0 0
        %676 = vmatpush1.bf16.msra.mxu0 %v667
        %677 = vmatprep.subr.bf16.mxu0 0
        %678 = vmatpush1.bf16.msra.mxu0 %v668
        %679 = vmatprep.subr.bf16.mxu0 0
        %680 = vmatpush1.bf16.msra.mxu0 0
        %681 = vmatprep.subr.bf16.mxu0 0
        %682 = vmatpush1.bf16.msra.mxu0 0
        %683 = vmatprep.subr.bf16.mxu0 0
        %684 = vmatpush1.bf16.msra.mxu0 0
        %685 = vmatprep.subr.bf16.mxu0 0
        %686 = vmatpush1.bf16.msra.mxu0 0
        %687 = vmatprep.subr.bf16.mxu0 0
        %688 = vmatpush1.bf16.msra.mxu0 0
        %689 = vmatprep.subr.bf16.mxu0 0
        %690 = vmatpush1.bf16.msra.mxu0 0
        %691 = vmatprep.subr.bf16.mxu0 0
        %692 = vmatpush1.bf16.msra.mxu0 0
        %693 = vmatprep.subr.bf16.mxu0 0
        %694 = vmatpush1.bf16.msra.mxu0 0
        %695 = vmatprep.subr.bf16.mxu0 0
        %696 = vmatpush1.bf16.msra.mxu0 0
        %697 = vmatprep.subr.bf16.mxu0 0
        %698 = vmatpush1.bf16.msra.mxu0 0
        %699 = vmatprep.subr.bf16.mxu0 0
        %700 = vmatpush1.bf16.msra.mxu0 0
        %701 = vmatprep.subr.bf16.mxu0 0
        %702 = vmatpush1.bf16.msra.mxu0 0
        %703 = vmatprep.subr.bf16.mxu0 0
        %704 = vmatpush1.bf16.msra.mxu0 0
        %705 = vmatprep.subr.bf16.mxu0 0
        %706 = vmatpush1.bf16.msra.mxu0 0
        %707 = vmatprep.mubr.bf16.mxu0 0
        %708 = vmatmul.mubr.bf16.gmra.mrb[0].mxu0 %v673
        %v709 = vpop.f32.mrb[0].mxu0
        %v710 = vadd.f32 %v657, %v709
        %v711 = vpop.f32.mrb[0].mxu0
        %v712 = vpop.f32.mrb[0].mxu0
        %v713 = vpop.f32.mrb[0].mxu0
        %714 = vdwg.mxu0
        %v715 = vld [vmem:[#allocation11] sm:$0xf]
        %v716 = vld [vmem:[#allocation11 + $0x4] sm:$0xf]
        %v717 = vld [vmem:[#allocation11 + $0x8] sm:$0xf]
        %v718 = vld [vmem:[#allocation11 + $0xc] sm:$0xf]
        %720 = vrot.lane.b32.xlu0 %v710, 120
        %v721 = vpop.permute.xlu0 %720
        %723 = vrot.lane.b32.xlu0 %v710, 112
        %v724 = vpop.permute.xlu0 %723
        %726 = vrot.lane.b32.xlu0 %v710, 104
        %v727 = vpop.permute.xlu0 %726
        %v729 = vcombine.low %v710, %v724
        %v730 = vcombine.high %v710, %v724
        %v732 = vunpack.c.l.s4 1983009808
        %v733 = vunpack.c.0.s8 %v732
        %v734 = vlaneseq
        %v735 = vshrl.u32 %v734, 7
        %v736 = vsub.s32 %v733, %v735
        %v737 = vrot.slane %v729, %v736
        %v739 = vunpack.c.l.s4 1983009808
        %v740 = vunpack.c.0.s8 %v739
        %v741 = vlaneseq
        %v742 = vshrl.u32 %v741, 7
        %v743 = vsub.s32 %v740, %v742
        %v744 = vrot.slane %v730, %v743
        %v745 = vcombine.low %v721, %v727
        %v746 = vcombine.high %v721, %v727
        %v748 = vunpack.c.l.s4 1983009808
        %v749 = vunpack.c.0.s8 %v748
        %v750 = vlaneseq
        %v751 = vshrl.u32 %v750, 7
        %v752 = vsub.s32 %v749, %v751
        %v753 = vrot.slane %v745, %v752
        %v755 = vunpack.c.l.s4 1983009808
        %v756 = vunpack.c.0.s8 %v755
        %v757 = vlaneseq
        %v758 = vshrl.u32 %v757, 7
        %v759 = vsub.s32 %v756, %v758
        %v760 = vrot.slane %v746, %v759
        %v761 = vcombine.low %v737, %v753
        %v762 = vcombine.high %v737, %v753
        %v764 = vunpack.c.l.s4 1934713408
        %v765 = vunpack.c.0.s8 %v764
        %v766 = vlaneseq
        %v767 = vshrl.u32 %v766, 7
        %v768 = vsub.s32 %v765, %v767
        %v769 = vrot.slane %v761, %v768
        %v771 = vunpack.c.l.s4 1934713408
        %v772 = vunpack.c.0.s8 %v771
        %v773 = vlaneseq
        %v774 = vshrl.u32 %v773, 7
        %v775 = vsub.s32 %v772, %v774
        %v776 = vrot.slane %v762, %v775
        %v777 = vcombine.low %v744, %v760
        %v778 = vcombine.high %v769, 0.0
        %v779 = vcombine.high %v776, 0.0
        %v781 = vunpack.c.l.s4 1934713408
        %v782 = vunpack.c.0.s8 %v781
        %v783 = vlaneseq
        %v784 = vshrl.u32 %v783, 7
        %v785 = vsub.s32 %v782, %v784
        %v786 = vrot.slane %v777, %v785
        %v787 = vpack.c.bf16 %v769, %v769
        %v788 = vpack.c.bf16 %v786, %v786
        %789 = vrot.lane.b32.xlu0 %v710, 96
        %v790 = vpop.permute.xlu0 %789
        %791 = vrot.lane.b32.xlu0 %v721, 96
        %v792 = vpop.permute.xlu0 %791
        %793 = vrot.lane.b32.xlu0 %v724, 96
        %v794 = vpop.permute.xlu0 %793
        %795 = vrot.lane.b32.xlu0 %v727, 96
        %v796 = vpop.permute.xlu0 %795
        %v801 = vcombine.low %v790, %v794
        %v802 = vcombine.high %v790, %v794
        %v804 = vunpack.c.l.s4 1983009808
        %v805 = vunpack.c.0.s8 %v804
        %v806 = vlaneseq
        %v807 = vshrl.u32 %v806, 7
        %v808 = vsub.s32 %v805, %v807
        %v809 = vrot.slane %v801, %v808
        %v811 = vunpack.c.l.s4 1983009808
        %v812 = vunpack.c.0.s8 %v811
        %v813 = vlaneseq
        %v814 = vshrl.u32 %v813, 7
        %v815 = vsub.s32 %v812, %v814
        %v816 = vrot.slane %v802, %v815
        %v817 = vcombine.low %v792, %v796
        %v818 = vcombine.high %v792, %v796
        %v820 = vunpack.c.l.s4 1983009808
        %v821 = vunpack.c.0.s8 %v820
        %v822 = vlaneseq
        %v823 = vshrl.u32 %v822, 7
        %v824 = vsub.s32 %v821, %v823
        %v825 = vrot.slane %v817, %v824
        %v827 = vunpack.c.l.s4 1983009808
        %v828 = vunpack.c.0.s8 %v827
        %v829 = vlaneseq
        %v830 = vshrl.u32 %v829, 7
        %v831 = vsub.s32 %v828, %v830
        %v832 = vrot.slane %v818, %v831
        %v833 = vcombine.low %v809, %v825
        %v834 = vcombine.high %v809, %v825
        %v836 = vunpack.c.l.s4 1934713408
        %v837 = vunpack.c.0.s8 %v836
        %v838 = vlaneseq
        %v839 = vshrl.u32 %v838, 7
        %v840 = vsub.s32 %v837, %v839
        %v841 = vrot.slane %v833, %v840
        %v843 = vunpack.c.l.s4 1934713408
        %v844 = vunpack.c.0.s8 %v843
        %v845 = vlaneseq
        %v846 = vshrl.u32 %v845, 7
        %v847 = vsub.s32 %v844, %v846
        %v848 = vrot.slane %v834, %v847
        %v849 = vcombine.low %v816, %v832
        %v850 = vcombine.high %v841, 0.0
        %v851 = vcombine.high %v848, 0.0
        %v853 = vunpack.c.l.s4 1934713408
        %v854 = vunpack.c.0.s8 %v853
        %v855 = vlaneseq
        %v856 = vshrl.u32 %v855, 7
        %v857 = vsub.s32 %v854, %v856
        %v858 = vrot.slane %v849, %v857
        %v859 = vpack.c.bf16 %v841, %v841
        %v860 = vpack.c.bf16 %v850, %v850
        %v861 = vpack.c.bf16 %v848, %v848
        %v862 = vpack.c.bf16 %v851, %v851
        %v863 = vpack.c.bf16 %v858, %v858
        %864 = vrot.lane.b32.xlu0 %v710, 64
        %v865 = vpop.permute.xlu0 %864
        %866 = vrot.lane.b32.xlu0 %v721, 64
        %v867 = vpop.permute.xlu0 %866
        %868 = vrot.lane.b32.xlu0 %v724, 64
        %v869 = vpop.permute.xlu0 %868
        %870 = vrot.lane.b32.xlu0 %v727, 64
        %v871 = vpop.permute.xlu0 %870
        %v876 = vcombine.low %v865, %v869
        %v877 = vcombine.high %v865, %v869
        %v879 = vunpack.c.l.s4 1983009808
        %v880 = vunpack.c.0.s8 %v879
        %v881 = vlaneseq
        %v882 = vshrl.u32 %v881, 7
        %v883 = vsub.s32 %v880, %v882
        %v884 = vrot.slane %v876, %v883
        %v886 = vunpack.c.l.s4 1983009808
        %v887 = vunpack.c.0.s8 %v886
        %v888 = vlaneseq
        %v889 = vshrl.u32 %v888, 7
        %v890 = vsub.s32 %v887, %v889
        %v891 = vrot.slane %v877, %v890
        %v892 = vcombine.low %v867, %v871
        %v893 = vcombine.high %v867, %v871
        %v895 = vunpack.c.l.s4 1983009808
        %v896 = vunpack.c.0.s8 %v895
        %v897 = vlaneseq
        %v898 = vshrl.u32 %v897, 7
        %v899 = vsub.s32 %v896, %v898
        %v900 = vrot.slane %v892, %v899
        %v902 = vunpack.c.l.s4 1983009808
        %v903 = vunpack.c.0.s8 %v902
        %v904 = vlaneseq
        %v905 = vshrl.u32 %v904, 7
        %v906 = vsub.s32 %v903, %v905
        %v907 = vrot.slane %v893, %v906
        %v908 = vcombine.low %v884, %v900
        %v909 = vcombine.high %v884, %v900
        %v911 = vunpack.c.l.s4 1934713408
        %v912 = vunpack.c.0.s8 %v911
        %v913 = vlaneseq
        %v914 = vshrl.u32 %v913, 7
        %v915 = vsub.s32 %v912, %v914
        %v916 = vrot.slane %v908, %v915
        %v918 = vunpack.c.l.s4 1934713408
        %v919 = vunpack.c.0.s8 %v918
        %v920 = vlaneseq
        %v921 = vshrl.u32 %v920, 7
        %v922 = vsub.s32 %v919, %v921
        %v923 = vrot.slane %v909, %v922
        %v924 = vcombine.low %v891, %v907
        %v925 = vcombine.high %v916, 0.0
        %v926 = vcombine.high %v923, 0.0
        %v928 = vunpack.c.l.s4 1934713408
        %v929 = vunpack.c.0.s8 %v928
        %v930 = vlaneseq
        %v931 = vshrl.u32 %v930, 7
        %v932 = vsub.s32 %v929, %v931
        %v933 = vrot.slane %v924, %v932
        %v934 = vpack.c.bf16 %v916, %v916
        %v935 = vpack.c.bf16 %v925, %v925
        %v936 = vpack.c.bf16 %v923, %v923
        %v937 = vpack.c.bf16 %v926, %v926
        %v938 = vpack.c.bf16 %v933, %v933
        %v939 = vcombine.low %v787, %v788
        %v941 = vunpack.c.l.s4 1983009808
        %v942 = vunpack.c.0.s8 %v941
        %v943 = vlaneseq
        %v944 = vshrl.u32 %v943, 7
        %v945 = vsub.s32 %v942, %v944
        %v946 = vrot.slane %v939, %v945
        %v947 = vpack.c.bf16 %v776, %v776
        %v948 = vcombine.low %v946, %v947
        %v950 = vunpack.c.l.s4 1934713408
        %v951 = vunpack.c.0.s8 %v950
        %v952 = vlaneseq
        %v953 = vshrl.u32 %v952, 7
        %v954 = vsub.s32 %v951, %v953
        %v955 = vrot.slane %v948, %v954
        %v956 = vcombine.high %v955, 0
        %v957 = vpack.c.bf16 %v778, %v778
        %v958 = vpack.c.bf16 %v779, %v779
        %v959 = vcombine.low %v957, %v958
        %v961 = vunpack.c.l.s4 1934713408
        %v962 = vunpack.c.0.s8 %v961
        %v963 = vlaneseq
        %v964 = vshrl.u32 %v963, 7
        %v965 = vsub.s32 %v962, %v964
        %v966 = vrot.slane %v959, %v965
        %v967 = vcombine.high %v966, 0
        %v970 = vpack.i.b16 %v966, %v955
        %v971 = vshrl.u32 %v955, 16
        %v972 = vshrl.u32 %v966, 16
        %v973 = vpack.i.b16 %v972, %v971
        %v976 = vpack.i.b16 %v967, %v956
        %v977 = vshrl.u32 %v956, 16
        %v978 = vshrl.u32 %v967, 16
        %v979 = vpack.i.b16 %v978, %v977
        %980 = vxpose.xlu0.c.b16.start [1/8] %v859, 128
        %981 = vxpose.xlu0.c.b16.cont [2/8] 0, 128
        %982 = vxpose.xlu0.c.b16.cont [3/8] 0, 128
        %983 = vxpose.xlu0.c.b16.cont [4/8] 0, 128
        %984 = vxpose.xlu0.c.b16.cont [5/8] 0, 128
        %985 = vxpose.xlu0.c.b16.cont [6/8] 0, 128
        %986 = vxpose.xlu0.c.b16.cont [7/8] 0, 128
        %987 = vxpose.xlu0.c.b16.end [8/8] 0, 128
        %v988 = vpop.trf.xlu0
        %v989 = vpop.trf.xlu0
        %v990 = vpop.trf.xlu0
        %v991 = vpop.trf.xlu0
        %v992 = vpop.trf.xlu0
        %v993 = vpop.trf.xlu0
        %v994 = vpop.trf.xlu0
        %v995 = vpop.trf.xlu0
        %996 = vxpose.xlu0.c.b16.start [1/8] %v860, 128
        %997 = vxpose.xlu0.c.b16.cont [2/8] 0, 128
        %998 = vxpose.xlu0.c.b16.cont [3/8] 0, 128
        %999 = vxpose.xlu0.c.b16.cont [4/8] 0, 128
        %1000 = vxpose.xlu0.c.b16.cont [5/8] 0, 128
        %1001 = vxpose.xlu0.c.b16.cont [6/8] 0, 128
        %1002 = vxpose.xlu0.c.b16.cont [7/8] 0, 128
        %1003 = vxpose.xlu0.c.b16.end [8/8] 0, 128
        %v1004 = vpop.trf.xlu0
        %v1005 = vpop.trf.xlu0
        %v1006 = vpop.trf.xlu0
        %v1007 = vpop.trf.xlu0
        %v1008 = vpop.trf.xlu0
        %v1009 = vpop.trf.xlu0
        %v1010 = vpop.trf.xlu0
        %v1011 = vpop.trf.xlu0
        %1012 = vxpose.xlu0.c.b16.start [1/8] %v861, 128
        %1013 = vxpose.xlu0.c.b16.cont [2/8] 0, 128
        %1014 = vxpose.xlu0.c.b16.cont [3/8] 0, 128
        %1015 = vxpose.xlu0.c.b16.cont [4/8] 0, 128
        %1016 = vxpose.xlu0.c.b16.cont [5/8] 0, 128
        %1017 = vxpose.xlu0.c.b16.cont [6/8] 0, 128
        %1018 = vxpose.xlu0.c.b16.cont [7/8] 0, 128
        %1019 = vxpose.xlu0.c.b16.end [8/8] 0, 128
        %v1020 = vpop.trf.xlu0
        %v1021 = vpop.trf.xlu0
        %v1022 = vpop.trf.xlu0
        %v1023 = vpop.trf.xlu0
        %v1024 = vpop.trf.xlu0
        %v1025 = vpop.trf.xlu0
        %v1026 = vpop.trf.xlu0
        %v1027 = vpop.trf.xlu0
        %1028 = vxpose.xlu0.c.b16.start [1/8] %v862, 128
        %1029 = vxpose.xlu0.c.b16.cont [2/8] 0, 128
        %1030 = vxpose.xlu0.c.b16.cont [3/8] 0, 128
        %1031 = vxpose.xlu0.c.b16.cont [4/8] 0, 128
        %1032 = vxpose.xlu0.c.b16.cont [5/8] 0, 128
        %1033 = vxpose.xlu0.c.b16.cont [6/8] 0, 128
        %1034 = vxpose.xlu0.c.b16.cont [7/8] 0, 128
        %1035 = vxpose.xlu0.c.b16.end [8/8] 0, 128
        %v1036 = vpop.trf.xlu0
        %v1037 = vpop.trf.xlu0
        %v1038 = vpop.trf.xlu0
        %v1039 = vpop.trf.xlu0
        %v1040 = vpop.trf.xlu0
        %v1041 = vpop.trf.xlu0
        %v1042 = vpop.trf.xlu0
        %v1043 = vpop.trf.xlu0
        %1044 = vxpose.xlu0.c.b16.start [1/8] %v863, 128
        %1045 = vxpose.xlu0.c.b16.cont [2/8] 0, 128
        %1046 = vxpose.xlu0.c.b16.cont [3/8] 0, 128
        %1047 = vxpose.xlu0.c.b16.cont [4/8] 0, 128
        %1048 = vxpose.xlu0.c.b16.cont [5/8] 0, 128
        %1049 = vxpose.xlu0.c.b16.cont [6/8] 0, 128
        %1050 = vxpose.xlu0.c.b16.cont [7/8] 0, 128
        %1051 = vxpose.xlu0.c.b16.end [8/8] 0, 128
        %v1052 = vpop.trf.xlu0
        %v1053 = vpop.trf.xlu0
        %v1054 = vpop.trf.xlu0
        %v1055 = vpop.trf.xlu0
        %v1056 = vpop.trf.xlu0
        %v1057 = vpop.trf.xlu0
        %v1058 = vpop.trf.xlu0
        %v1059 = vpop.trf.xlu0
        %v1060 = vcombine.low %v988, %v1052
        %v1062 = vunpack.c.l.s4 1983009808
        %v1063 = vunpack.c.0.s8 %v1062
        %v1064 = vlaneseq
        %v1065 = vshrl.u32 %v1064, 7
        %v1066 = vsub.s32 %v1063, %v1065
        %v1067 = vrot.slane %v1060, %v1066
        %v1069 = vunpack.c.l.s4 1983009808
        %v1070 = vunpack.c.0.s8 %v1069
        %v1071 = vlaneseq
        %v1072 = vshrl.u32 %v1071, 7
        %v1073 = vsub.s32 %v1070, %v1072
        %v1074 = vrot.slane %v1020, %v1073
        %v1075 = vcombine.low %v1067, %v1074
        %v1076 = vcombine.high %v1067, %v1074
        %v1078 = vunpack.c.l.s4 1934713408
        %v1079 = vunpack.c.0.s8 %v1078
        %v1080 = vlaneseq
        %v1081 = vshrl.u32 %v1080, 7
        %v1082 = vsub.s32 %v1079, %v1081
        %v1083 = vrot.slane %v1075, %v1082
        %v1085 = vunpack.c.l.s4 1934713408
        %v1086 = vunpack.c.0.s8 %v1085
        %v1087 = vlaneseq
        %v1088 = vshrl.u32 %v1087, 7
        %v1089 = vsub.s32 %v1086, %v1088
        %v1090 = vrot.slane %v1076, %v1089
        %v1091 = vcombine.high %v1083, 0
        %v1092 = vcombine.high %v1090, 0
        %v1094 = vunpack.c.l.s4 1983009808
        %v1095 = vunpack.c.0.s8 %v1094
        %v1096 = vlaneseq
        %v1097 = vshrl.u32 %v1096, 7
        %v1098 = vsub.s32 %v1095, %v1097
        %v1099 = vrot.slane %v1004, %v1098
        %v1101 = vunpack.c.l.s4 1983009808
        %v1102 = vunpack.c.0.s8 %v1101
        %v1103 = vlaneseq
        %v1104 = vshrl.u32 %v1103, 7
        %v1105 = vsub.s32 %v1102, %v1104
        %v1106 = vrot.slane %v1036, %v1105
        %v1107 = vcombine.low %v1099, %v1106
        %v1108 = vcombine.high %v1099, %v1106
        %v1110 = vunpack.c.l.s4 1934713408
        %v1111 = vunpack.c.0.s8 %v1110
        %v1112 = vlaneseq
        %v1113 = vshrl.u32 %v1112, 7
        %v1114 = vsub.s32 %v1111, %v1113
        %v1115 = vrot.slane %v1107, %v1114
        %v1117 = vunpack.c.l.s4 1934713408
        %v1118 = vunpack.c.0.s8 %v1117
        %v1119 = vlaneseq
        %v1120 = vshrl.u32 %v1119, 7
        %v1121 = vsub.s32 %v1118, %v1120
        %v1122 = vrot.slane %v1108, %v1121
        %v1123 = vcombine.high %v1115, 0
        %v1124 = vcombine.high %v1122, 0
        %v1127 = vpack.i.b16 %v1115, %v1083
        %v1129 = vshrl.u32 %v1083, 16
        %v1130 = vshrl.u32 %v1115, 16
        %v1131 = vpack.i.b16 %v1130, %v1129
        %v1135 = vpack.i.b16 %v1123, %v1091
        %v1137 = vshrl.u32 %v1091, 16
        %v1138 = vshrl.u32 %v1123, 16
        %v1139 = vpack.i.b16 %v1138, %v1137
        %v1143 = vpack.i.b16 %v1122, %v1090
        %v1145 = vshrl.u32 %v1090, 16
        %v1146 = vshrl.u32 %v1122, 16
        %v1147 = vpack.i.b16 %v1146, %v1145
        %v1151 = vpack.i.b16 %v1124, %v1092
        %v1153 = vshrl.u32 %v1092, 16
        %v1154 = vshrl.u32 %v1124, 16
        %v1155 = vpack.i.b16 %v1154, %v1153
        %1157 = vxpose.xlu0.c.b16.start [1/8] %v1127, 128
        %1158 = vxpose.xlu0.c.b16.cont [2/8] 0, 128
        %1159 = vxpose.xlu0.c.b16.cont [3/8] 0, 128
        %1160 = vxpose.xlu0.c.b16.cont [4/8] 0, 128
        %1161 = vxpose.xlu0.c.b16.cont [5/8] 0, 128
        %1162 = vxpose.xlu0.c.b16.cont [6/8] 0, 128
        %1163 = vxpose.xlu0.c.b16.cont [7/8] 0, 128
        %1164 = vxpose.xlu0.c.b16.end [8/8] 0, 128
        %v1165 = vpop.trf.xlu0
        %v1166 = vpop.trf.xlu0
        %v1167 = vpop.trf.xlu0
        %v1168 = vpop.trf.xlu0
        %v1169 = vpop.trf.xlu0
        %v1170 = vpop.trf.xlu0
        %v1171 = vpop.trf.xlu0
        %v1172 = vpop.trf.xlu0
        %1173 = vxpose.xlu0.c.b16.start [1/8] %v1131, 128
        %1174 = vxpose.xlu0.c.b16.cont [2/8] 0, 128
        %1175 = vxpose.xlu0.c.b16.cont [3/8] 0, 128
        %1176 = vxpose.xlu0.c.b16.cont [4/8] 0, 128
        %1177 = vxpose.xlu0.c.b16.cont [5/8] 0, 128
        %1178 = vxpose.xlu0.c.b16.cont [6/8] 0, 128
        %1179 = vxpose.xlu0.c.b16.cont [7/8] 0, 128
        %1180 = vxpose.xlu0.c.b16.end [8/8] 0, 128
        %v1181 = vpop.trf.xlu0
        %v1182 = vpop.trf.xlu0
        %v1183 = vpop.trf.xlu0
        %v1184 = vpop.trf.xlu0
        %v1185 = vpop.trf.xlu0
        %v1186 = vpop.trf.xlu0
        %v1187 = vpop.trf.xlu0
        %v1188 = vpop.trf.xlu0
        %1189 = vxpose.xlu0.c.b16.start [1/8] %v1135, 128
        %1190 = vxpose.xlu0.c.b16.cont [2/8] 0, 128
        %1191 = vxpose.xlu0.c.b16.cont [3/8] 0, 128
        %1192 = vxpose.xlu0.c.b16.cont [4/8] 0, 128
        %1193 = vxpose.xlu0.c.b16.cont [5/8] 0, 128
        %1194 = vxpose.xlu0.c.b16.cont [6/8] 0, 128
        %1195 = vxpose.xlu0.c.b16.cont [7/8] 0, 128
        %1196 = vxpose.xlu0.c.b16.end [8/8] 0, 128
        %v1197 = vpop.trf.xlu0
        %v1198 = vpop.trf.xlu0
        %v1199 = vpop.trf.xlu0
        %v1200 = vpop.trf.xlu0
        %v1201 = vpop.trf.xlu0
        %v1202 = vpop.trf.xlu0
        %v1203 = vpop.trf.xlu0
        %v1204 = vpop.trf.xlu0
        %1205 = vxpose.xlu0.c.b16.start [1/8] %v1139, 128
        %1206 = vxpose.xlu0.c.b16.cont [2/8] 0, 128
        %1207 = vxpose.xlu0.c.b16.cont [3/8] 0, 128
        %1208 = vxpose.xlu0.c.b16.cont [4/8] 0, 128
        %1209 = vxpose.xlu0.c.b16.cont [5/8] 0, 128
        %1210 = vxpose.xlu0.c.b16.cont [6/8] 0, 128
        %1211 = vxpose.xlu0.c.b16.cont [7/8] 0, 128
        %1212 = vxpose.xlu0.c.b16.end [8/8] 0, 128
        %v1213 = vpop.trf.xlu0
        %v1214 = vpop.trf.xlu0
        %v1215 = vpop.trf.xlu0
        %v1216 = vpop.trf.xlu0
        %v1217 = vpop.trf.xlu0
        %v1218 = vpop.trf.xlu0
        %v1219 = vpop.trf.xlu0
        %v1220 = vpop.trf.xlu0
        %1221 = vxpose.xlu0.c.b16.start [1/8] %v1143, 128
        %1222 = vxpose.xlu0.c.b16.cont [2/8] 0, 128
        %1223 = vxpose.xlu0.c.b16.cont [3/8] 0, 128
        %1224 = vxpose.xlu0.c.b16.cont [4/8] 0, 128
        %1225 = vxpose.xlu0.c.b16.cont [5/8] 0, 128
        %1226 = vxpose.xlu0.c.b16.cont [6/8] 0, 128
        %1227 = vxpose.xlu0.c.b16.cont [7/8] 0, 128
        %1228 = vxpose.xlu0.c.b16.end [8/8] 0, 128
        %v1229 = vpop.trf.xlu0
        %v1230 = vpop.trf.xlu0
        %v1231 = vpop.trf.xlu0
        %v1232 = vpop.trf.xlu0
        %v1233 = vpop.trf.xlu0
        %v1234 = vpop.trf.xlu0
        %v1235 = vpop.trf.xlu0
        %v1236 = vpop.trf.xlu0
        %1237 = vxpose.xlu0.c.b16.start [1/8] %v1147, 128
        %1238 = vxpose.xlu0.c.b16.cont [2/8] 0, 128
        %1239 = vxpose.xlu0.c.b16.cont [3/8] 0, 128
        %1240 = vxpose.xlu0.c.b16.cont [4/8] 0, 128
        %1241 = vxpose.xlu0.c.b16.cont [5/8] 0, 128
        %1242 = vxpose.xlu0.c.b16.cont [6/8] 0, 128
        %1243 = vxpose.xlu0.c.b16.cont [7/8] 0, 128
        %1244 = vxpose.xlu0.c.b16.end [8/8] 0, 128
        %v1245 = vpop.trf.xlu0
        %v1246 = vpop.trf.xlu0
        %v1247 = vpop.trf.xlu0
        %v1248 = vpop.trf.xlu0
        %v1249 = vpop.trf.xlu0
        %v1250 = vpop.trf.xlu0
        %v1251 = vpop.trf.xlu0
        %v1252 = vpop.trf.xlu0
        %1253 = vxpose.xlu0.c.b16.start [1/8] %v1151, 128
        %1254 = vxpose.xlu0.c.b16.cont [2/8] 0, 128
        %1255 = vxpose.xlu0.c.b16.cont [3/8] 0, 128
        %1256 = vxpose.xlu0.c.b16.cont [4/8] 0, 128
        %1257 = vxpose.xlu0.c.b16.cont [5/8] 0, 128
        %1258 = vxpose.xlu0.c.b16.cont [6/8] 0, 128
        %1259 = vxpose.xlu0.c.b16.cont [7/8] 0, 128
        %1260 = vxpose.xlu0.c.b16.end [8/8] 0, 128
        %v1261 = vpop.trf.xlu0
        %v1262 = vpop.trf.xlu0
        %v1263 = vpop.trf.xlu0
        %v1264 = vpop.trf.xlu0
        %v1265 = vpop.trf.xlu0
        %v1266 = vpop.trf.xlu0
        %v1267 = vpop.trf.xlu0
        %v1268 = vpop.trf.xlu0
        %1269 = vxpose.xlu0.c.b16.start [1/8] %v1155, 128
        %1270 = vxpose.xlu0.c.b16.cont [2/8] 0, 128
        %1271 = vxpose.xlu0.c.b16.cont [3/8] 0, 128
        %1272 = vxpose.xlu0.c.b16.cont [4/8] 0, 128
        %1273 = vxpose.xlu0.c.b16.cont [5/8] 0, 128
        %1274 = vxpose.xlu0.c.b16.cont [6/8] 0, 128
        %1275 = vxpose.xlu0.c.b16.cont [7/8] 0, 128
        %1276 = vxpose.xlu0.c.b16.end [8/8] 0, 128
        %v1277 = vpop.trf.xlu0
        %v1278 = vpop.trf.xlu0
        %v1279 = vpop.trf.xlu0
        %v1280 = vpop.trf.xlu0
        %v1281 = vpop.trf.xlu0
        %v1282 = vpop.trf.xlu0
        %v1283 = vpop.trf.xlu0
        %v1284 = vpop.trf.xlu0
        %v1285 = vcombine.low %v1165, %v1229
        %v1287 = vunpack.c.l.s4 1983009808
        %v1288 = vunpack.c.0.s8 %v1287
        %v1289 = vlaneseq
        %v1290 = vshrl.u32 %v1289, 7
        %v1291 = vsub.s32 %v1288, %v1290
        %v1292 = vrot.slane %v1285, %v1291
        %v1293 = vcombine.low %v1197, %v1261
        %v1295 = vunpack.c.l.s4 1983009808
        %v1296 = vunpack.c.0.s8 %v1295
        %v1297 = vlaneseq
        %v1298 = vshrl.u32 %v1297, 7
        %v1299 = vsub.s32 %v1296, %v1298
        %v1300 = vrot.slane %v1293, %v1299
        %v1301 = vcombine.low %v1292, %v1300
        %v1303 = vunpack.c.l.s4 1934713408
        %v1304 = vunpack.c.0.s8 %v1303
        %v1305 = vlaneseq
        %v1306 = vshrl.u32 %v1305, 7
        %v1307 = vsub.s32 %v1304, %v1306
        %v1308 = vrot.slane %v1301, %v1307
        %v1309 = vcombine.high %v1308, 0
        %v1310 = vcombine.low %v1181, %v1245
        %v1312 = vunpack.c.l.s4 1983009808
        %v1313 = vunpack.c.0.s8 %v1312
        %v1314 = vlaneseq
        %v1315 = vshrl.u32 %v1314, 7
        %v1316 = vsub.s32 %v1313, %v1315
        %v1317 = vrot.slane %v1310, %v1316
        %v1318 = vcombine.low %v1213, %v1277
        %v1320 = vunpack.c.l.s4 1983009808
        %v1321 = vunpack.c.0.s8 %v1320
        %v1322 = vlaneseq
        %v1323 = vshrl.u32 %v1322, 7
        %v1324 = vsub.s32 %v1321, %v1323
        %v1325 = vrot.slane %v1318, %v1324
        %v1326 = vcombine.low %v1317, %v1325
        %v1328 = vunpack.c.l.s4 1934713408
        %v1329 = vunpack.c.0.s8 %v1328
        %v1330 = vlaneseq
        %v1331 = vshrl.u32 %v1330, 7
        %v1332 = vsub.s32 %v1329, %v1331
        %v1333 = vrot.slane %v1326, %v1332
        %v1334 = vcombine.high %v1333, 0
        %v1337 = vpack.i.b16 %v1333, %v1308
        %v1338 = vshrl.u32 %v1308, 16
        %v1339 = vshrl.u32 %v1333, 16
        %v1340 = vpack.i.b16 %v1339, %v1338
        %v1343 = vpack.i.b16 %v1334, %v1309
        %v1344 = vshrl.u32 %v1309, 16
        %v1345 = vshrl.u32 %v1334, 16
        %v1346 = vpack.i.b16 %v1345, %v1344
        %vm1347 = vcmask 64512
        %v1349 = vsel %vm1347, %v970, 0
        %vm1351 = vcmask 1043456
        %v1353 = vsel %vm1351, %v1337, 0
        %1355 = vmatprep.subr.bf16.mxu0 0
        %1356 = vmatpush1.bf16.msra.mxu0 %v1353
        %1357 = vmatprep.subr.bf16.mxu0 0
        %1358 = vmatpush1.bf16.msra.mxu0 0
        %1359 = vmatprep.subr.bf16.mxu0 0
        %1360 = vmatpush1.bf16.msra.mxu0 0
        %1361 = vmatprep.subr.bf16.mxu0 0
        %1362 = vmatpush1.bf16.msra.mxu0 0
        %1363 = vmatprep.subr.bf16.mxu0 0
        %1364 = vmatpush1.bf16.msra.mxu0 0
        %1365 = vmatprep.subr.bf16.mxu0 0
        %1366 = vmatpush1.bf16.msra.mxu0 0
        %1367 = vmatprep.subr.bf16.mxu0 0
        %1368 = vmatpush1.bf16.msra.mxu0 0
        %1369 = vmatprep.subr.bf16.mxu0 0
        %1370 = vmatpush1.bf16.msra.mxu0 0
        %1371 = vmatprep.subr.bf16.mxu0 0
        %1372 = vmatpush1.bf16.msra.mxu0 0
        %1373 = vmatprep.subr.bf16.mxu0 0
        %1374 = vmatpush1.bf16.msra.mxu0 0
        %1375 = vmatprep.subr.bf16.mxu0 0
        %1376 = vmatpush1.bf16.msra.mxu0 0
        %1377 = vmatprep.subr.bf16.mxu0 0
        %1378 = vmatpush1.bf16.msra.mxu0 0
        %1379 = vmatprep.subr.bf16.mxu0 0
        %1380 = vmatpush1.bf16.msra.mxu0 0
        %1381 = vmatprep.subr.bf16.mxu0 0
        %1382 = vmatpush1.bf16.msra.mxu0 0
        %1383 = vmatprep.subr.bf16.mxu0 0
        %1384 = vmatpush1.bf16.msra.mxu0 0
        %1385 = vmatprep.subr.bf16.mxu0 0
        %1386 = vmatpush1.bf16.msra.mxu0 0
        %1387 = vmatprep.mubr.bf16.mxu0 0
        %1388 = vmatmul.mubr.bf16.gmra.mrb[0].mxu0 %v1349
        %v1389 = vpop.f32.mrb[0].mxu0
        %v1390 = vadd.f32 0.0, %v1389
        %v1391 = vpop.f32.mrb[0].mxu0
        %v1392 = vpop.f32.mrb[0].mxu0
        %v1393 = vpop.f32.mrb[0].mxu0
        %1394 = vdwg.mxu0
        %v1396 = vsel %vm1347, %v973, 0
        %v1399 = vsel %vm1351, %v1340, 0
        %1401 = vmatprep.subr.bf16.mxu0 0
        %1402 = vmatpush1.bf16.msra.mxu0 %v1399
        %1403 = vmatprep.subr.bf16.mxu0 0
        %1404 = vmatpush1.bf16.msra.mxu0 0
        %1405 = vmatprep.subr.bf16.mxu0 0
        %1406 = vmatpush1.bf16.msra.mxu0 0
        %1407 = vmatprep.subr.bf16.mxu0 0
        %1408 = vmatpush1.bf16.msra.mxu0 0
        %1409 = vmatprep.subr.bf16.mxu0 0
        %1410 = vmatpush1.bf16.msra.mxu0 0
        %1411 = vmatprep.subr.bf16.mxu0 0
        %1412 = vmatpush1.bf16.msra.mxu0 0
        %1413 = vmatprep.subr.bf16.mxu0 0
        %1414 = vmatpush1.bf16.msra.mxu0 0
        %1415 = vmatprep.subr.bf16.mxu0 0
        %1416 = vmatpush1.bf16.msra.mxu0 0
        %1417 = vmatprep.subr.bf16.mxu0 0
        %1418 = vmatpush1.bf16.msra.mxu0 0
        %1419 = vmatprep.subr.bf16.mxu0 0
        %1420 = vmatpush1.bf16.msra.mxu0 0
        %1421 = vmatprep.subr.bf16.mxu0 0
        %1422 = vmatpush1.bf16.msra.mxu0 0
        %1423 = vmatprep.subr.bf16.mxu0 0
        %1424 = vmatpush1.bf16.msra.mxu0 0
        %1425 = vmatprep.subr.bf16.mxu0 0
        %1426 = vmatpush1.bf16.msra.mxu0 0
        %1427 = vmatprep.subr.bf16.mxu0 0
        %1428 = vmatpush1.bf16.msra.mxu0 0
        %1429 = vmatprep.subr.bf16.mxu0 0
        %1430 = vmatpush1.bf16.msra.mxu0 0
        %1431 = vmatprep.subr.bf16.mxu0 0
        %1432 = vmatpush1.bf16.msra.mxu0 0
        %1433 = vmatprep.mubr.bf16.mxu0 0
        %1434 = vmatmul.mubr.bf16.gmra.mrb[0].mxu0 %v1396
        %v1435 = vpop.f32.mrb[0].mxu0
        %v1436 = vadd.f32 0.0, %v1435
        %v1437 = vpop.f32.mrb[0].mxu0
        %v1438 = vpop.f32.mrb[0].mxu0
        %v1439 = vpop.f32.mrb[0].mxu0
        %1440 = vdwg.mxu0
        %v1442 = vsel %vm1347, %v976, 0
        %v1445 = vsel %vm1351, %v1343, 0
        %1447 = vmatprep.subr.bf16.mxu0 0
        %1448 = vmatpush1.bf16.msra.mxu0 %v1445
        %1449 = vmatprep.subr.bf16.mxu0 0
        %1450 = vmatpush1.bf16.msra.mxu0 0
        %1451 = vmatprep.subr.bf16.mxu0 0
        %1452 = vmatpush1.bf16.msra.mxu0 0
        %1453 = vmatprep.subr.bf16.mxu0 0
        %1454 = vmatpush1.bf16.msra.mxu0 0
        %1455 = vmatprep.subr.bf16.mxu0 0
        %1456 = vmatpush1.bf16.msra.mxu0 0
        %1457 = vmatprep.subr.bf16.mxu0 0
        %1458 = vmatpush1.bf16.msra.mxu0 0
        %1459 = vmatprep.subr.bf16.mxu0 0
        %1460 = vmatpush1.bf16.msra.mxu0 0
        %1461 = vmatprep.subr.bf16.mxu0 0
        %1462 = vmatpush1.bf16.msra.mxu0 0
        %1463 = vmatprep.subr.bf16.mxu0 0
        %1464 = vmatpush1.bf16.msra.mxu0 0
        %1465 = vmatprep.subr.bf16.mxu0 0
        %1466 = vmatpush1.bf16.msra.mxu0 0
        %1467 = vmatprep.subr.bf16.mxu0 0
        %1468 = vmatpush1.bf16.msra.mxu0 0
        %1469 = vmatprep.subr.bf16.mxu0 0
        %1470 = vmatpush1.bf16.msra.mxu0 0
        %1471 = vmatprep.subr.bf16.mxu0 0
        %1472 = vmatpush1.bf16.msra.mxu0 0
        %1473 = vmatprep.subr.bf16.mxu0 0
        %1474 = vmatpush1.bf16.msra.mxu0 0
        %1475 = vmatprep.subr.bf16.mxu0 0
        %1476 = vmatpush1.bf16.msra.mxu0 0
        %1477 = vmatprep.subr.bf16.mxu0 0
        %1478 = vmatpush1.bf16.msra.mxu0 0
        %1479 = vmatprep.mubr.bf16.mxu0 0
        %1480 = vmatmul.mubr.bf16.gmra.mrb[0].mxu0 %v1442
        %v1481 = vpop.f32.mrb[0].mxu0
        %v1482 = vadd.f32 0.0, %v1481
        %v1483 = vpop.f32.mrb[0].mxu0
        %v1484 = vpop.f32.mrb[0].mxu0
        %v1485 = vpop.f32.mrb[0].mxu0
        %1486 = vdwg.mxu0
        %v1488 = vsel %vm1347, %v979, 0
        %v1491 = vsel %vm1351, %v1346, 0
        %1493 = vmatprep.subr.bf16.mxu0 0
        %1494 = vmatpush1.bf16.msra.mxu0 %v1491
        %1495 = vmatprep.subr.bf16.mxu0 0
        %1496 = vmatpush1.bf16.msra.mxu0 0
        %1497 = vmatprep.subr.bf16.mxu0 0
        %1498 = vmatpush1.bf16.msra.mxu0 0
        %1499 = vmatprep.subr.bf16.mxu0 0
        %1500 = vmatpush1.bf16.msra.mxu0 0
        %1501 = vmatprep.subr.bf16.mxu0 0
        %1502 = vmatpush1.bf16.msra.mxu0 0
        %1503 = vmatprep.subr.bf16.mxu0 0
        %1504 = vmatpush1.bf16.msra.mxu0 0
        %1505 = vmatprep.subr.bf16.mxu0 0
        %1506 = vmatpush1.bf16.msra.mxu0 0
        %1507 = vmatprep.subr.bf16.mxu0 0
        %1508 = vmatpush1.bf16.msra.mxu0 0
        %1509 = vmatprep.subr.bf16.mxu0 0
        %1510 = vmatpush1.bf16.msra.mxu0 0
        %1511 = vmatprep.subr.bf16.mxu0 0
        %1512 = vmatpush1.bf16.msra.mxu0 0
        %1513 = vmatprep.subr.bf16.mxu0 0
        %1514 = vmatpush1.bf16.msra.mxu0 0
        %1515 = vmatprep.subr.bf16.mxu0 0
        %1516 = vmatpush1.bf16.msra.mxu0 0
        %1517 = vmatprep.subr.bf16.mxu0 0
        %1518 = vmatpush1.bf16.msra.mxu0 0
        %1519 = vmatprep.subr.bf16.mxu0 0
        %1520 = vmatpush1.bf16.msra.mxu0 0
        %1521 = vmatprep.subr.bf16.mxu0 0
        %1522 = vmatpush1.bf16.msra.mxu0 0
        %1523 = vmatprep.subr.bf16.mxu0 0
        %1524 = vmatpush1.bf16.msra.mxu0 0
        %1525 = vmatprep.mubr.bf16.mxu0 0
        %1526 = vmatmul.mubr.bf16.gmra.mrb[0].mxu0 %v1488
        %v1527 = vpop.f32.mrb[0].mxu0
        %v1528 = vadd.f32 0.0, %v1527
        %v1529 = vpop.f32.mrb[0].mxu0
        %v1530 = vpop.f32.mrb[0].mxu0
        %v1531 = vpop.f32.mrb[0].mxu0
        %1532 = vdwg.mxu0
        %v1533 = vmul.f32 %v1390, 0.35355338
        %v1534 = vmul.f32 %v1436, 0.35355338
        %v1535 = vmul.f32 %v1482, 0.35355338
        %v1536 = vmul.f32 %v1528, 0.35355338
        %vm1537 = vcmask 36864
        %v1538 = vsel %vm1537, %v1533, -inf
        %1539 = vmax.xlane.f32.xlu0 %v1538
        %v1540 = vpop.xlane.xlu0 %1539
        %v1541 = vsel %vm1537, %v1534, -inf
        %1542 = vmax.xlane.f32.xlu0 %v1541
        %v1543 = vpop.xlane.xlu0 %1542
        %v1544 = vsel %vm1537, %v1535, -inf
        %1545 = vmax.xlane.f32.xlu0 %v1544
        %v1546 = vpop.xlane.xlu0 %1545
        %v1547 = vsel %vm1537, %v1536, -inf
        %1548 = vmax.xlane.f32.xlu0 %v1547
        %v1549 = vpop.xlane.xlu0 %1548
        %v1550 = vsub.f32 %v1533, %v1540
        %v1551 = vsub.f32 %v1534, %v1543
        %v1552 = vsub.f32 %v1535, %v1546
        %v1553 = vsub.f32 %v1536, %v1549
        %v1554 = vmul.f32 %v1550, 1.442695
        %v1555 = vpow.pop %v1554
        %v1556 = vmul.f32 %v1551, 1.442695
        %v1557 = vpow.pop %v1556
        %v1558 = vmul.f32 %v1552, 1.442695
        %v1559 = vpow.pop %v1558
        %v1560 = vmul.f32 %v1553, 1.442695
        %v1561 = vpow.pop %v1560
        %v1562 = vsel %vm1537, %v1555, 0.0
        %1563 = vadd.xlane.f32.xlu0 %v1562
        %v1564 = vpop.xlane.xlu0 %1563
        %v1565 = vsel %vm1537, %v1557, 0.0
        %1566 = vadd.xlane.f32.xlu0 %v1565
        %v1567 = vpop.xlane.xlu0 %1566
        %v1568 = vsel %vm1537, %v1559, 0.0
        %1569 = vadd.xlane.f32.xlu0 %v1568
        %v1570 = vpop.xlane.xlu0 %1569
        %v1571 = vsel %vm1537, %v1561, 0.0
        %1572 = vadd.xlane.f32.xlu0 %v1571
        %v1573 = vpop.xlane.xlu0 %1572
        %v1574 = vrcp.pop %v1564
        %v1575 = vrcp.pop %v1567
        %v1576 = vrcp.pop %v1570
        %v1577 = vrcp.pop %v1573
        %v1578 = vmul.f32 %v1555, %v1574
        %v1579 = vmul.f32 %v1557, %v1575
        %v1580 = vmul.f32 %v1559, %v1576
        %v1581 = vmul.f32 %v1561, %v1577
        %v1582 = vpack.c.bf16 %v1578, %v1578
        %v1583 = vpack.c.bf16 %v1579, %v1579
        %v1584 = vpack.c.bf16 %v1580, %v1580
        %v1585 = vpack.c.bf16 %v1581, %v1581
        %1586 = vxpose.xlu0.c.b16.start [1/8] %v934, 128
        %1587 = vxpose.xlu0.c.b16.cont [2/8] 0, 128
        %1588 = vxpose.xlu0.c.b16.cont [3/8] 0, 128
        %1589 = vxpose.xlu0.c.b16.cont [4/8] 0, 128
        %1590 = vxpose.xlu0.c.b16.cont [5/8] 0, 128
        %1591 = vxpose.xlu0.c.b16.cont [6/8] 0, 128
        %1592 = vxpose.xlu0.c.b16.cont [7/8] 0, 128
        %1593 = vxpose.xlu0.c.b16.end [8/8] 0, 128
        %v1594 = vpop.trf.xlu0
        %v1595 = vpop.trf.xlu0
        %v1596 = vpop.trf.xlu0
        %v1597 = vpop.trf.xlu0
        %v1598 = vpop.trf.xlu0
        %v1599 = vpop.trf.xlu0
        %v1600 = vpop.trf.xlu0
        %v1601 = vpop.trf.xlu0
        %1602 = vxpose.xlu0.c.b16.start [1/8] %v935, 128
        %1603 = vxpose.xlu0.c.b16.cont [2/8] 0, 128
        %1604 = vxpose.xlu0.c.b16.cont [3/8] 0, 128
        %1605 = vxpose.xlu0.c.b16.cont [4/8] 0, 128
        %1606 = vxpose.xlu0.c.b16.cont [5/8] 0, 128
        %1607 = vxpose.xlu0.c.b16.cont [6/8] 0, 128
        %1608 = vxpose.xlu0.c.b16.cont [7/8] 0, 128
        %1609 = vxpose.xlu0.c.b16.end [8/8] 0, 128
        %v1610 = vpop.trf.xlu0
        %v1611 = vpop.trf.xlu0
        %v1612 = vpop.trf.xlu0
        %v1613 = vpop.trf.xlu0
        %v1614 = vpop.trf.xlu0
        %v1615 = vpop.trf.xlu0
        %v1616 = vpop.trf.xlu0
        %v1617 = vpop.trf.xlu0
        %1618 = vxpose.xlu0.c.b16.start [1/8] %v936, 128
        %1619 = vxpose.xlu0.c.b16.cont [2/8] 0, 128
        %1620 = vxpose.xlu0.c.b16.cont [3/8] 0, 128
        %1621 = vxpose.xlu0.c.b16.cont [4/8] 0, 128
        %1622 = vxpose.xlu0.c.b16.cont [5/8] 0, 128
        %1623 = vxpose.xlu0.c.b16.cont [6/8] 0, 128
        %1624 = vxpose.xlu0.c.b16.cont [7/8] 0, 128
        %1625 = vxpose.xlu0.c.b16.end [8/8] 0, 128
        %v1626 = vpop.trf.xlu0
        %v1627 = vpop.trf.xlu0
        %v1628 = vpop.trf.xlu0
        %v1629 = vpop.trf.xlu0
        %v1630 = vpop.trf.xlu0
        %v1631 = vpop.trf.xlu0
        %v1632 = vpop.trf.xlu0
        %v1633 = vpop.trf.xlu0
        %1634 = vxpose.xlu0.c.b16.start [1/8] %v937, 128
        %1635 = vxpose.xlu0.c.b16.cont [2/8] 0, 128
        %1636 = vxpose.xlu0.c.b16.cont [3/8] 0, 128
        %1637 = vxpose.xlu0.c.b16.cont [4/8] 0, 128
        %1638 = vxpose.xlu0.c.b16.cont [5/8] 0, 128
        %1639 = vxpose.xlu0.c.b16.cont [6/8] 0, 128
        %1640 = vxpose.xlu0.c.b16.cont [7/8] 0, 128
        %1641 = vxpose.xlu0.c.b16.end [8/8] 0, 128
        %v1642 = vpop.trf.xlu0
        %v1643 = vpop.trf.xlu0
        %v1644 = vpop.trf.xlu0
        %v1645 = vpop.trf.xlu0
        %v1646 = vpop.trf.xlu0
        %v1647 = vpop.trf.xlu0
        %v1648 = vpop.trf.xlu0
        %v1649 = vpop.trf.xlu0
        %1650 = vxpose.xlu0.c.b16.start [1/8] %v938, 128
        %1651 = vxpose.xlu0.c.b16.cont [2/8] 0, 128
        %1652 = vxpose.xlu0.c.b16.cont [3/8] 0, 128
        %1653 = vxpose.xlu0.c.b16.cont [4/8] 0, 128
        %1654 = vxpose.xlu0.c.b16.cont [5/8] 0, 128
        %1655 = vxpose.xlu0.c.b16.cont [6/8] 0, 128
        %1656 = vxpose.xlu0.c.b16.cont [7/8] 0, 128
        %1657 = vxpose.xlu0.c.b16.end [8/8] 0, 128
        %v1658 = vpop.trf.xlu0
        %v1659 = vpop.trf.xlu0
        %v1660 = vpop.trf.xlu0
        %v1661 = vpop.trf.xlu0
        %v1662 = vpop.trf.xlu0
        %v1663 = vpop.trf.xlu0
        %v1664 = vpop.trf.xlu0
        %v1665 = vpop.trf.xlu0
        %v1666 = vcombine.low %v1594, %v1658
        %v1668 = vunpack.c.l.s4 1983009808
        %v1669 = vunpack.c.0.s8 %v1668
        %v1670 = vlaneseq
        %v1671 = vshrl.u32 %v1670, 7
        %v1672 = vsub.s32 %v1669, %v1671
        %v1673 = vrot.slane %v1666, %v1672
        %v1675 = vunpack.c.l.s4 1983009808
        %v1676 = vunpack.c.0.s8 %v1675
        %v1677 = vlaneseq
        %v1678 = vshrl.u32 %v1677, 7
        %v1679 = vsub.s32 %v1676, %v1678
        %v1680 = vrot.slane %v1626, %v1679
        %v1681 = vcombine.low %v1673, %v1680
        %v1682 = vcombine.high %v1673, %v1680
        %v1684 = vunpack.c.l.s4 1934713408
        %v1685 = vunpack.c.0.s8 %v1684
        %v1686 = vlaneseq
        %v1687 = vshrl.u32 %v1686, 7
        %v1688 = vsub.s32 %v1685, %v1687
        %v1689 = vrot.slane %v1681, %v1688
        %v1691 = vunpack.c.l.s4 1934713408
        %v1692 = vunpack.c.0.s8 %v1691
        %v1693 = vlaneseq
        %v1694 = vshrl.u32 %v1693, 7
        %v1695 = vsub.s32 %v1692, %v1694
        %v1696 = vrot.slane %v1682, %v1695
        %v1697 = vcombine.high %v1689, 0
        %v1698 = vcombine.high %v1696, 0
        %v1700 = vunpack.c.l.s4 1983009808
        %v1701 = vunpack.c.0.s8 %v1700
        %v1702 = vlaneseq
        %v1703 = vshrl.u32 %v1702, 7
        %v1704 = vsub.s32 %v1701, %v1703
        %v1705 = vrot.slane %v1610, %v1704
        %v1707 = vunpack.c.l.s4 1983009808
        %v1708 = vunpack.c.0.s8 %v1707
        %v1709 = vlaneseq
        %v1710 = vshrl.u32 %v1709, 7
        %v1711 = vsub.s32 %v1708, %v1710
        %v1712 = vrot.slane %v1642, %v1711
        %v1713 = vcombine.low %v1705, %v1712
        %v1714 = vcombine.high %v1705, %v1712
        %v1716 = vunpack.c.l.s4 1934713408
        %v1717 = vunpack.c.0.s8 %v1716
        %v1718 = vlaneseq
        %v1719 = vshrl.u32 %v1718, 7
        %v1720 = vsub.s32 %v1717, %v1719
        %v1721 = vrot.slane %v1713, %v1720
        %v1723 = vunpack.c.l.s4 1934713408
        %v1724 = vunpack.c.0.s8 %v1723
        %v1725 = vlaneseq
        %v1726 = vshrl.u32 %v1725, 7
        %v1727 = vsub.s32 %v1724, %v1726
        %v1728 = vrot.slane %v1714, %v1727
        %v1729 = vcombine.high %v1721, 0
        %v1730 = vcombine.high %v1728, 0
        %v1733 = vpack.i.b16 %v1721, %v1689
        %v1735 = vshrl.u32 %v1689, 16
        %v1736 = vshrl.u32 %v1721, 16
        %v1737 = vpack.i.b16 %v1736, %v1735
        %v1741 = vpack.i.b16 %v1729, %v1697
        %v1743 = vshrl.u32 %v1697, 16
        %v1744 = vshrl.u32 %v1729, 16
        %v1745 = vpack.i.b16 %v1744, %v1743
        %v1749 = vpack.i.b16 %v1728, %v1696
        %v1751 = vshrl.u32 %v1696, 16
        %v1752 = vshrl.u32 %v1728, 16
        %v1753 = vpack.i.b16 %v1752, %v1751
        %v1757 = vpack.i.b16 %v1730, %v1698
        %v1759 = vshrl.u32 %v1698, 16
        %v1760 = vshrl.u32 %v1730, 16
        %v1761 = vpack.i.b16 %v1760, %v1759
        %1763 = vxpose.xlu0.c.b16.start [1/8] %v1733, 128
        %1764 = vxpose.xlu0.c.b16.cont [2/8] 0, 128
        %1765 = vxpose.xlu0.c.b16.cont [3/8] 0, 128
        %1766 = vxpose.xlu0.c.b16.cont [4/8] 0, 128
        %1767 = vxpose.xlu0.c.b16.cont [5/8] 0, 128
        %1768 = vxpose.xlu0.c.b16.cont [6/8] 0, 128
        %1769 = vxpose.xlu0.c.b16.cont [7/8] 0, 128
        %1770 = vxpose.xlu0.c.b16.end [8/8] 0, 128
        %v1771 = vpop.trf.xlu0
        %v1772 = vpop.trf.xlu0
        %v1773 = vpop.trf.xlu0
        %v1774 = vpop.trf.xlu0
        %v1775 = vpop.trf.xlu0
        %v1776 = vpop.trf.xlu0
        %v1777 = vpop.trf.xlu0
        %v1778 = vpop.trf.xlu0
        %1779 = vxpose.xlu0.c.b16.start [1/8] %v1737, 128
        %1780 = vxpose.xlu0.c.b16.cont [2/8] 0, 128
        %1781 = vxpose.xlu0.c.b16.cont [3/8] 0, 128
        %1782 = vxpose.xlu0.c.b16.cont [4/8] 0, 128
        %1783 = vxpose.xlu0.c.b16.cont [5/8] 0, 128
        %1784 = vxpose.xlu0.c.b16.cont [6/8] 0, 128
        %1785 = vxpose.xlu0.c.b16.cont [7/8] 0, 128
        %1786 = vxpose.xlu0.c.b16.end [8/8] 0, 128
        %v1787 = vpop.trf.xlu0
        %v1788 = vpop.trf.xlu0
        %v1789 = vpop.trf.xlu0
        %v1790 = vpop.trf.xlu0
        %v1791 = vpop.trf.xlu0
        %v1792 = vpop.trf.xlu0
        %v1793 = vpop.trf.xlu0
        %v1794 = vpop.trf.xlu0
        %1795 = vxpose.xlu0.c.b16.start [1/8] %v1741, 128
        %1796 = vxpose.xlu0.c.b16.cont [2/8] 0, 128
        %1797 = vxpose.xlu0.c.b16.cont [3/8] 0, 128
        %1798 = vxpose.xlu0.c.b16.cont [4/8] 0, 128
        %1799 = vxpose.xlu0.c.b16.cont [5/8] 0, 128
        %1800 = vxpose.xlu0.c.b16.cont [6/8] 0, 128
        %1801 = vxpose.xlu0.c.b16.cont [7/8] 0, 128
        %1802 = vxpose.xlu0.c.b16.end [8/8] 0, 128
        %v1803 = vpop.trf.xlu0
        %v1804 = vpop.trf.xlu0
        %v1805 = vpop.trf.xlu0
        %v1806 = vpop.trf.xlu0
        %v1807 = vpop.trf.xlu0
        %v1808 = vpop.trf.xlu0
        %v1809 = vpop.trf.xlu0
        %v1810 = vpop.trf.xlu0
        %1811 = vxpose.xlu0.c.b16.start [1/8] %v1745, 128
        %1812 = vxpose.xlu0.c.b16.cont [2/8] 0, 128
        %1813 = vxpose.xlu0.c.b16.cont [3/8] 0, 128
        %1814 = vxpose.xlu0.c.b16.cont [4/8] 0, 128
        %1815 = vxpose.xlu0.c.b16.cont [5/8] 0, 128
        %1816 = vxpose.xlu0.c.b16.cont [6/8] 0, 128
        %1817 = vxpose.xlu0.c.b16.cont [7/8] 0, 128
        %1818 = vxpose.xlu0.c.b16.end [8/8] 0, 128
        %v1819 = vpop.trf.xlu0
        %v1820 = vpop.trf.xlu0
        %v1821 = vpop.trf.xlu0
        %v1822 = vpop.trf.xlu0
        %v1823 = vpop.trf.xlu0
        %v1824 = vpop.trf.xlu0
        %v1825 = vpop.trf.xlu0
        %v1826 = vpop.trf.xlu0
        %1827 = vxpose.xlu0.c.b16.start [1/8] %v1749, 128
        %1828 = vxpose.xlu0.c.b16.cont [2/8] 0, 128
        %1829 = vxpose.xlu0.c.b16.cont [3/8] 0, 128
        %1830 = vxpose.xlu0.c.b16.cont [4/8] 0, 128
        %1831 = vxpose.xlu0.c.b16.cont [5/8] 0, 128
        %1832 = vxpose.xlu0.c.b16.cont [6/8] 0, 128
        %1833 = vxpose.xlu0.c.b16.cont [7/8] 0, 128
        %1834 = vxpose.xlu0.c.b16.end [8/8] 0, 128
        %v1835 = vpop.trf.xlu0
        %v1836 = vpop.trf.xlu0
        %v1837 = vpop.trf.xlu0
        %v1838 = vpop.trf.xlu0
        %v1839 = vpop.trf.xlu0
        %v1840 = vpop.trf.xlu0
        %v1841 = vpop.trf.xlu0
        %v1842 = vpop.trf.xlu0
        %1843 = vxpose.xlu0.c.b16.start [1/8] %v1753, 128
        %1844 = vxpose.xlu0.c.b16.cont [2/8] 0, 128
        %1845 = vxpose.xlu0.c.b16.cont [3/8] 0, 128
        %1846 = vxpose.xlu0.c.b16.cont [4/8] 0, 128
        %1847 = vxpose.xlu0.c.b16.cont [5/8] 0, 128
        %1848 = vxpose.xlu0.c.b16.cont [6/8] 0, 128
        %1849 = vxpose.xlu0.c.b16.cont [7/8] 0, 128
        %1850 = vxpose.xlu0.c.b16.end [8/8] 0, 128
        %v1851 = vpop.trf.xlu0
        %v1852 = vpop.trf.xlu0
        %v1853 = vpop.trf.xlu0
        %v1854 = vpop.trf.xlu0
        %v1855 = vpop.trf.xlu0
        %v1856 = vpop.trf.xlu0
        %v1857 = vpop.trf.xlu0
        %v1858 = vpop.trf.xlu0
        %1859 = vxpose.xlu0.c.b16.start [1/8] %v1757, 128
        %1860 = vxpose.xlu0.c.b16.cont [2/8] 0, 128
        %1861 = vxpose.xlu0.c.b16.cont [3/8] 0, 128
        %1862 = vxpose.xlu0.c.b16.cont [4/8] 0, 128
        %1863 = vxpose.xlu0.c.b16.cont [5/8] 0, 128
        %1864 = vxpose.xlu0.c.b16.cont [6/8] 0, 128
        %1865 = vxpose.xlu0.c.b16.cont [7/8] 0, 128
        %1866 = vxpose.xlu0.c.b16.end [8/8] 0, 128
        %v1867 = vpop.trf.xlu0
        %v1868 = vpop.trf.xlu0
        %v1869 = vpop.trf.xlu0
        %v1870 = vpop.trf.xlu0
        %v1871 = vpop.trf.xlu0
        %v1872 = vpop.trf.xlu0
        %v1873 = vpop.trf.xlu0
        %v1874 = vpop.trf.xlu0
        %1875 = vxpose.xlu0.c.b16.start [1/8] %v1761, 128
        %1876 = vxpose.xlu0.c.b16.cont [2/8] 0, 128
        %1877 = vxpose.xlu0.c.b16.cont [3/8] 0, 128
        %1878 = vxpose.xlu0.c.b16.cont [4/8] 0, 128
        %1879 = vxpose.xlu0.c.b16.cont [5/8] 0, 128
        %1880 = vxpose.xlu0.c.b16.cont [6/8] 0, 128
        %1881 = vxpose.xlu0.c.b16.cont [7/8] 0, 128
        %1882 = vxpose.xlu0.c.b16.end [8/8] 0, 128
        %v1883 = vpop.trf.xlu0
        %v1884 = vpop.trf.xlu0
        %v1885 = vpop.trf.xlu0
        %v1886 = vpop.trf.xlu0
        %v1887 = vpop.trf.xlu0
        %v1888 = vpop.trf.xlu0
        %v1889 = vpop.trf.xlu0
        %v1890 = vpop.trf.xlu0
        %v1891 = vcombine.low %v1771, %v1835
        %v1893 = vunpack.c.l.s4 1983009808
        %v1894 = vunpack.c.0.s8 %v1893
        %v1895 = vlaneseq
        %v1896 = vshrl.u32 %v1895, 7
        %v1897 = vsub.s32 %v1894, %v1896
        %v1898 = vrot.slane %v1891, %v1897
        %v1899 = vcombine.low %v1803, %v1867
        %v1901 = vunpack.c.l.s4 1983009808
        %v1902 = vunpack.c.0.s8 %v1901
        %v1903 = vlaneseq
        %v1904 = vshrl.u32 %v1903, 7
        %v1905 = vsub.s32 %v1902, %v1904
        %v1906 = vrot.slane %v1899, %v1905
        %v1907 = vcombine.low %v1898, %v1906
        %v1909 = vunpack.c.l.s4 1934713408
        %v1910 = vunpack.c.0.s8 %v1909
        %v1911 = vlaneseq
        %v1912 = vshrl.u32 %v1911, 7
        %v1913 = vsub.s32 %v1910, %v1912
        %v1914 = vrot.slane %v1907, %v1913
        %v1915 = vcombine.high %v1914, 0
        %v1916 = vcombine.low %v1787, %v1851
        %v1918 = vunpack.c.l.s4 1983009808
        %v1919 = vunpack.c.0.s8 %v1918
        %v1920 = vlaneseq
        %v1921 = vshrl.u32 %v1920, 7
        %v1922 = vsub.s32 %v1919, %v1921
        %v1923 = vrot.slane %v1916, %v1922
        %v1924 = vcombine.low %v1819, %v1883
        %v1926 = vunpack.c.l.s4 1983009808
        %v1927 = vunpack.c.0.s8 %v1926
        %v1928 = vlaneseq
        %v1929 = vshrl.u32 %v1928, 7
        %v1930 = vsub.s32 %v1927, %v1929
        %v1931 = vrot.slane %v1924, %v1930
        %v1932 = vcombine.low %v1923, %v1931
        %v1934 = vunpack.c.l.s4 1934713408
        %v1935 = vunpack.c.0.s8 %v1934
        %v1936 = vlaneseq
        %v1937 = vshrl.u32 %v1936, 7
        %v1938 = vsub.s32 %v1935, %v1937
        %v1939 = vrot.slane %v1932, %v1938
        %v1940 = vcombine.high %v1939, 0
        %v1943 = vpack.i.b16 %v1939, %v1914
        %v1944 = vshrl.u32 %v1914, 16
        %v1945 = vshrl.u32 %v1939, 16
        %v1946 = vpack.i.b16 %v1945, %v1944
        %v1949 = vpack.i.b16 %v1940, %v1915
        %v1950 = vshrl.u32 %v1915, 16
        %v1951 = vshrl.u32 %v1940, 16
        %v1952 = vpack.i.b16 %v1951, %v1950
        %vm1953 = vcmask 39936
        %v1955 = vsel %vm1953, %v1943, 0
        %v1958 = vsel %vm1953, %v1582, 0
        %1960 = vmatprep.subr.bf16.mxu0 0
        %1961 = vmatpush1.bf16.xpose.msra.mxu0 %v1958
        %1962 = vmatprep.subr.bf16.mxu0 0
        %1963 = vmatpush1.bf16.xpose.msra.mxu0 0
        %1964 = vmatprep.subr.bf16.mxu0 0
        %1965 = vmatpush1.bf16.xpose.msra.mxu0 0
        %1966 = vmatprep.subr.bf16.mxu0 0
        %1967 = vmatpush1.bf16.xpose.msra.mxu0 0
        %1968 = vmatprep.subr.bf16.mxu0 0
        %1969 = vmatpush1.bf16.xpose.msra.mxu0 0
        %1970 = vmatprep.subr.bf16.mxu0 0
        %1971 = vmatpush1.bf16.xpose.msra.mxu0 0
        %1972 = vmatprep.subr.bf16.mxu0 0
        %1973 = vmatpush1.bf16.xpose.msra.mxu0 0
        %1974 = vmatprep.subr.bf16.mxu0 0
        %1975 = vmatpush1.bf16.xpose.msra.mxu0 0
        %1976 = vmatprep.subr.bf16.mxu0 0
        %1977 = vmatpush1.bf16.xpose.msra.mxu0 0
        %1978 = vmatprep.subr.bf16.mxu0 0
        %1979 = vmatpush1.bf16.xpose.msra.mxu0 0
        %1980 = vmatprep.subr.bf16.mxu0 0
        %1981 = vmatpush1.bf16.xpose.msra.mxu0 0
        %1982 = vmatprep.subr.bf16.mxu0 0
        %1983 = vmatpush1.bf16.xpose.msra.mxu0 0
        %1984 = vmatprep.subr.bf16.mxu0 0
        %1985 = vmatpush1.bf16.xpose.msra.mxu0 0
        %1986 = vmatprep.subr.bf16.mxu0 0
        %1987 = vmatpush1.bf16.xpose.msra.mxu0 0
        %1988 = vmatprep.subr.bf16.mxu0 0
        %1989 = vmatpush1.bf16.xpose.msra.mxu0 0
        %1990 = vmatprep.subr.bf16.mxu0 0
        %1991 = vmatpush1.bf16.xpose.msra.mxu0 0
        %1992 = vmatprep.mubr.bf16.mxu0 0
        %1993 = vmatmul.mubr.bf16.gmra.mrb[0].mxu0 %v1955
        %v1994 = vpop.f32.mrb[0].mxu0
        %v1995 = vadd.f32 0.0, %v1994
        %v1996 = vpop.f32.mrb[0].mxu0
        %v1997 = vpop.f32.mrb[0].mxu0
        %v1998 = vpop.f32.mrb[0].mxu0
        %1999 = vdwg.mxu0
        %v2001 = vsel %vm1953, %v1946, 0
        %v2004 = vsel %vm1953, %v1583, 0
        %2006 = vmatprep.subr.bf16.mxu0 0
        %2007 = vmatpush1.bf16.xpose.msra.mxu0 %v2004
        %2008 = vmatprep.subr.bf16.mxu0 0
        %2009 = vmatpush1.bf16.xpose.msra.mxu0 0
        %2010 = vmatprep.subr.bf16.mxu0 0
        %2011 = vmatpush1.bf16.xpose.msra.mxu0 0
        %2012 = vmatprep.subr.bf16.mxu0 0
        %2013 = vmatpush1.bf16.xpose.msra.mxu0 0
        %2014 = vmatprep.subr.bf16.mxu0 0
        %2015 = vmatpush1.bf16.xpose.msra.mxu0 0
        %2016 = vmatprep.subr.bf16.mxu0 0
        %2017 = vmatpush1.bf16.xpose.msra.mxu0 0
        %2018 = vmatprep.subr.bf16.mxu0 0
        %2019 = vmatpush1.bf16.xpose.msra.mxu0 0
        %2020 = vmatprep.subr.bf16.mxu0 0
        %2021 = vmatpush1.bf16.xpose.msra.mxu0 0
        %2022 = vmatprep.subr.bf16.mxu0 0
        %2023 = vmatpush1.bf16.xpose.msra.mxu0 0
        %2024 = vmatprep.subr.bf16.mxu0 0
        %2025 = vmatpush1.bf16.xpose.msra.mxu0 0
        %2026 = vmatprep.subr.bf16.mxu0 0
        %2027 = vmatpush1.bf16.xpose.msra.mxu0 0
        %2028 = vmatprep.subr.bf16.mxu0 0
        %2029 = vmatpush1.bf16.xpose.msra.mxu0 0
        %2030 = vmatprep.subr.bf16.mxu0 0
        %2031 = vmatpush1.bf16.xpose.msra.mxu0 0
        %2032 = vmatprep.subr.bf16.mxu0 0
        %2033 = vmatpush1.bf16.xpose.msra.mxu0 0
        %2034 = vmatprep.subr.bf16.mxu0 0
        %2035 = vmatpush1.bf16.xpose.msra.mxu0 0
        %2036 = vmatprep.subr.bf16.mxu0 0
        %2037 = vmatpush1.bf16.xpose.msra.mxu0 0
        %2038 = vmatprep.mubr.bf16.mxu0 0
        %2039 = vmatmul.mubr.bf16.gmra.mrb[0].mxu0 %v2001
        %v2040 = vpop.f32.mrb[0].mxu0
        %v2041 = vadd.f32 0.0, %v2040
        %v2042 = vpop.f32.mrb[0].mxu0
        %v2043 = vpop.f32.mrb[0].mxu0
        %v2044 = vpop.f32.mrb[0].mxu0
        %2045 = vdwg.mxu0
        %v2047 = vsel %vm1953, %v1949, 0
        %v2050 = vsel %vm1953, %v1584, 0
        %2052 = vmatprep.subr.bf16.mxu0 0
        %2053 = vmatpush1.bf16.xpose.msra.mxu0 %v2050
        %2054 = vmatprep.subr.bf16.mxu0 0
        %2055 = vmatpush1.bf16.xpose.msra.mxu0 0
        %2056 = vmatprep.subr.bf16.mxu0 0
        %2057 = vmatpush1.bf16.xpose.msra.mxu0 0
        %2058 = vmatprep.subr.bf16.mxu0 0
        %2059 = vmatpush1.bf16.xpose.msra.mxu0 0
        %2060 = vmatprep.subr.bf16.mxu0 0
        %2061 = vmatpush1.bf16.xpose.msra.mxu0 0
        %2062 = vmatprep.subr.bf16.mxu0 0
        %2063 = vmatpush1.bf16.xpose.msra.mxu0 0
        %2064 = vmatprep.subr.bf16.mxu0 0
        %2065 = vmatpush1.bf16.xpose.msra.mxu0 0
        %2066 = vmatprep.subr.bf16.mxu0 0
        %2067 = vmatpush1.bf16.xpose.msra.mxu0 0
        %2068 = vmatprep.subr.bf16.mxu0 0
        %2069 = vmatpush1.bf16.xpose.msra.mxu0 0
        %2070 = vmatprep.subr.bf16.mxu0 0
        %2071 = vmatpush1.bf16.xpose.msra.mxu0 0
        %2072 = vmatprep.subr.bf16.mxu0 0
        %2073 = vmatpush1.bf16.xpose.msra.mxu0 0
        %2074 = vmatprep.subr.bf16.mxu0 0
        %2075 = vmatpush1.bf16.xpose.msra.mxu0 0
        %2076 = vmatprep.subr.bf16.mxu0 0
        %2077 = vmatpush1.bf16.xpose.msra.mxu0 0
        %2078 = vmatprep.subr.bf16.mxu0 0
        %2079 = vmatpush1.bf16.xpose.msra.mxu0 0
        %2080 = vmatprep.subr.bf16.mxu0 0
        %2081 = vmatpush1.bf16.xpose.msra.mxu0 0
        %2082 = vmatprep.subr.bf16.mxu0 0
        %2083 = vmatpush1.bf16.xpose.msra.mxu0 0
        %2084 = vmatprep.mubr.bf16.mxu0 0
        %2085 = vmatmul.mubr.bf16.gmra.mrb[0].mxu0 %v2047
        %v2086 = vpop.f32.mrb[0].mxu0
        %v2087 = vadd.f32 0.0, %v2086
        %v2088 = vpop.f32.mrb[0].mxu0
        %v2089 = vpop.f32.mrb[0].mxu0
        %v2090 = vpop.f32.mrb[0].mxu0
        %2091 = vdwg.mxu0
        %v2093 = vsel %vm1953, %v1952, 0
        %v2096 = vsel %vm1953, %v1585, 0
        %2098 = vmatprep.subr.bf16.mxu0 0
        %2099 = vmatpush1.bf16.xpose.msra.mxu0 %v2096
        %2100 = vmatprep.subr.bf16.mxu0 0
        %2101 = vmatpush1.bf16.xpose.msra.mxu0 0
        %2102 = vmatprep.subr.bf16.mxu0 0
        %2103 = vmatpush1.bf16.xpose.msra.mxu0 0
        %2104 = vmatprep.subr.bf16.mxu0 0
        %2105 = vmatpush1.bf16.xpose.msra.mxu0 0
        %2106 = vmatprep.subr.bf16.mxu0 0
        %2107 = vmatpush1.bf16.xpose.msra.mxu0 0
        %2108 = vmatprep.subr.bf16.mxu0 0
        %2109 = vmatpush1.bf16.xpose.msra.mxu0 0
        %2110 = vmatprep.subr.bf16.mxu0 0
        %2111 = vmatpush1.bf16.xpose.msra.mxu0 0
        %2112 = vmatprep.subr.bf16.mxu0 0
        %2113 = vmatpush1.bf16.xpose.msra.mxu0 0
        %2114 = vmatprep.subr.bf16.mxu0 0
        %2115 = vmatpush1.bf16.xpose.msra.mxu0 0
        %2116 = vmatprep.subr.bf16.mxu0 0
        %2117 = vmatpush1.bf16.xpose.msra.mxu0 0
        %2118 = vmatprep.subr.bf16.mxu0 0
        %2119 = vmatpush1.bf16.xpose.msra.mxu0 0
        %2120 = vmatprep.subr.bf16.mxu0 0
        %2121 = vmatpush1.bf16.xpose.msra.mxu0 0
        %2122 = vmatprep.subr.bf16.mxu0 0
        %2123 = vmatpush1.bf16.xpose.msra.mxu0 0
        %2124 = vmatprep.subr.bf16.mxu0 0
        %2125 = vmatpush1.bf16.xpose.msra.mxu0 0
        %2126 = vmatprep.subr.bf16.mxu0 0
        %2127 = vmatpush1.bf16.xpose.msra.mxu0 0
        %2128 = vmatprep.subr.bf16.mxu0 0
        %2129 = vmatpush1.bf16.xpose.msra.mxu0 0
        %2130 = vmatprep.mubr.bf16.mxu0 0
        %2131 = vmatmul.mubr.bf16.gmra.mrb[0].mxu0 %v2093
        %v2132 = vpop.f32.mrb[0].mxu0
        %v2133 = vadd.f32 0.0, %v2132
        %v2134 = vpop.f32.mrb[0].mxu0
        %v2135 = vpop.f32.mrb[0].mxu0
        %v2136 = vpop.f32.mrb[0].mxu0
        %2137 = vdwg.mxu0
        %2138 = vxpose.xlu0.b32.start [1/16] %v1995, 128
        %2139 = vxpose.xlu0.b32.cont [2/16] 0.0, 128
        %2140 = vxpose.xlu0.b32.cont [3/16] 0.0, 128
        %2141 = vxpose.xlu0.b32.cont [4/16] 0.0, 128
        %2142 = vxpose.xlu0.b32.cont [5/16] 0.0, 128
        %2143 = vxpose.xlu0.b32.cont [6/16] 0.0, 128
        %2144 = vxpose.xlu0.b32.cont [7/16] 0.0, 128
        %2145 = vxpose.xlu0.b32.cont [8/16] 0.0, 128
        %2146 = vxpose.xlu0.b32.cont [9/16] 0.0, 128
        %2147 = vxpose.xlu0.b32.cont [10/16] 0.0, 128
        %2148 = vxpose.xlu0.b32.cont [11/16] 0.0, 128
        %2149 = vxpose.xlu0.b32.cont [12/16] 0.0, 128
        %2150 = vxpose.xlu0.b32.cont [13/16] 0.0, 128
        %2151 = vxpose.xlu0.b32.cont [14/16] 0.0, 128
        %2152 = vxpose.xlu0.b32.cont [15/16] 0.0, 128
        %2153 = vxpose.xlu0.b32.end [16/16] 0.0, 128
        %v2154 = vpop.trf.xlu0
        %v2155 = vpop.trf.xlu0
        %v2156 = vpop.trf.xlu0
        %v2157 = vpop.trf.xlu0
        %v2158 = vpop.trf.xlu0
        %v2159 = vpop.trf.xlu0
        %v2160 = vpop.trf.xlu0
        %v2161 = vpop.trf.xlu0
        %v2162 = vpop.trf.xlu0
        %v2163 = vpop.trf.xlu0
        %v2164 = vpop.trf.xlu0
        %v2165 = vpop.trf.xlu0
        %v2166 = vpop.trf.xlu0
        %v2167 = vpop.trf.xlu0
        %v2168 = vpop.trf.xlu0
        %v2169 = vpop.trf.xlu0
        %2170 = vxpose.xlu0.b32.start [1/16] %v2041, 128
        %2171 = vxpose.xlu0.b32.cont [2/16] 0.0, 128
        %2172 = vxpose.xlu0.b32.cont [3/16] 0.0, 128
        %2173 = vxpose.xlu0.b32.cont [4/16] 0.0, 128
        %2174 = vxpose.xlu0.b32.cont [5/16] 0.0, 128
        %2175 = vxpose.xlu0.b32.cont [6/16] 0.0, 128
        %2176 = vxpose.xlu0.b32.cont [7/16] 0.0, 128
        %2177 = vxpose.xlu0.b32.cont [8/16] 0.0, 128
        %2178 = vxpose.xlu0.b32.cont [9/16] 0.0, 128
        %2179 = vxpose.xlu0.b32.cont [10/16] 0.0, 128
        %2180 = vxpose.xlu0.b32.cont [11/16] 0.0, 128
        %2181 = vxpose.xlu0.b32.cont [12/16] 0.0, 128
        %2182 = vxpose.xlu0.b32.cont [13/16] 0.0, 128
        %2183 = vxpose.xlu0.b32.cont [14/16] 0.0, 128
        %2184 = vxpose.xlu0.b32.cont [15/16] 0.0, 128
        %2185 = vxpose.xlu0.b32.end [16/16] 0.0, 128
        %v2186 = vpop.trf.xlu0
        %v2187 = vpop.trf.xlu0
        %v2188 = vpop.trf.xlu0
        %v2189 = vpop.trf.xlu0
        %v2190 = vpop.trf.xlu0
        %v2191 = vpop.trf.xlu0
        %v2192 = vpop.trf.xlu0
        %v2193 = vpop.trf.xlu0
        %v2194 = vpop.trf.xlu0
        %v2195 = vpop.trf.xlu0
        %v2196 = vpop.trf.xlu0
        %v2197 = vpop.trf.xlu0
        %v2198 = vpop.trf.xlu0
        %v2199 = vpop.trf.xlu0
        %v2200 = vpop.trf.xlu0
        %v2201 = vpop.trf.xlu0
        %2202 = vxpose.xlu0.b32.start [1/16] %v2087, 128
        %2203 = vxpose.xlu0.b32.cont [2/16] 0.0, 128
        %2204 = vxpose.xlu0.b32.cont [3/16] 0.0, 128
        %2205 = vxpose.xlu0.b32.cont [4/16] 0.0, 128
        %2206 = vxpose.xlu0.b32.cont [5/16] 0.0, 128
        %2207 = vxpose.xlu0.b32.cont [6/16] 0.0, 128
        %2208 = vxpose.xlu0.b32.cont [7/16] 0.0, 128
        %2209 = vxpose.xlu0.b32.cont [8/16] 0.0, 128
        %2210 = vxpose.xlu0.b32.cont [9/16] 0.0, 128
        %2211 = vxpose.xlu0.b32.cont [10/16] 0.0, 128
        %2212 = vxpose.xlu0.b32.cont [11/16] 0.0, 128
        %2213 = vxpose.xlu0.b32.cont [12/16] 0.0, 128
        %2214 = vxpose.xlu0.b32.cont [13/16] 0.0, 128
        %2215 = vxpose.xlu0.b32.cont [14/16] 0.0, 128
        %2216 = vxpose.xlu0.b32.cont [15/16] 0.0, 128
        %2217 = vxpose.xlu0.b32.end [16/16] 0.0, 128
        %v2218 = vpop.trf.xlu0
        %v2219 = vpop.trf.xlu0
        %v2220 = vpop.trf.xlu0
        %v2221 = vpop.trf.xlu0
        %v2222 = vpop.trf.xlu0
        %v2223 = vpop.trf.xlu0
        %v2224 = vpop.trf.xlu0
        %v2225 = vpop.trf.xlu0
        %v2226 = vpop.trf.xlu0
        %v2227 = vpop.trf.xlu0
        %v2228 = vpop.trf.xlu0
        %v2229 = vpop.trf.xlu0
        %v2230 = vpop.trf.xlu0
        %v2231 = vpop.trf.xlu0
        %v2232 = vpop.trf.xlu0
        %v2233 = vpop.trf.xlu0
        %2234 = vxpose.xlu0.b32.start [1/16] %v2133, 128
        %2235 = vxpose.xlu0.b32.cont [2/16] 0.0, 128
        %2236 = vxpose.xlu0.b32.cont [3/16] 0.0, 128
        %2237 = vxpose.xlu0.b32.cont [4/16] 0.0, 128
        %2238 = vxpose.xlu0.b32.cont [5/16] 0.0, 128
        %2239 = vxpose.xlu0.b32.cont [6/16] 0.0, 128
        %2240 = vxpose.xlu0.b32.cont [7/16] 0.0, 128
        %2241 = vxpose.xlu0.b32.cont [8/16] 0.0, 128
        %2242 = vxpose.xlu0.b32.cont [9/16] 0.0, 128
        %2243 = vxpose.xlu0.b32.cont [10/16] 0.0, 128
        %2244 = vxpose.xlu0.b32.cont [11/16] 0.0, 128
        %2245 = vxpose.xlu0.b32.cont [12/16] 0.0, 128
        %2246 = vxpose.xlu0.b32.cont [13/16] 0.0, 128
        %2247 = vxpose.xlu0.b32.cont [14/16] 0.0, 128
        %2248 = vxpose.xlu0.b32.cont [15/16] 0.0, 128
        %2249 = vxpose.xlu0.b32.end [16/16] 0.0, 128
        %v2250 = vpop.trf.xlu0
        %v2251 = vpop.trf.xlu0
        %v2252 = vpop.trf.xlu0
        %v2253 = vpop.trf.xlu0
        %v2254 = vpop.trf.xlu0
        %v2255 = vpop.trf.xlu0
        %v2256 = vpop.trf.xlu0
        %v2257 = vpop.trf.xlu0
        %v2258 = vpop.trf.xlu0
        %v2259 = vpop.trf.xlu0
        %v2260 = vpop.trf.xlu0
        %v2261 = vpop.trf.xlu0
        %v2262 = vpop.trf.xlu0
        %v2263 = vpop.trf.xlu0
        %v2264 = vpop.trf.xlu0
        %v2265 = vpop.trf.xlu0
        %v2266 = vcombine.low %v2154, %v2218
        %v2267 = vcombine.high %v2154, %v2218
        %v2269 = vunpack.c.l.s4 1983009808
        %v2270 = vunpack.c.0.s8 %v2269
        %v2271 = vlaneseq
        %v2272 = vshrl.u32 %v2271, 7
        %v2273 = vsub.s32 %v2270, %v2272
        %v2274 = vrot.slane %v2266, %v2273
        %v2276 = vunpack.c.l.s4 1983009808
        %v2277 = vunpack.c.0.s8 %v2276
        %v2278 = vlaneseq
        %v2279 = vshrl.u32 %v2278, 7
        %v2280 = vsub.s32 %v2277, %v2279
        %v2281 = vrot.slane %v2267, %v2280
        %v2282 = vcombine.low %v2186, %v2250
        %v2283 = vcombine.high %v2186, %v2250
        %v2285 = vunpack.c.l.s4 1983009808
        %v2286 = vunpack.c.0.s8 %v2285
        %v2287 = vlaneseq
        %v2288 = vshrl.u32 %v2287, 7
        %v2289 = vsub.s32 %v2286, %v2288
        %v2290 = vrot.slane %v2282, %v2289
        %v2292 = vunpack.c.l.s4 1983009808
        %v2293 = vunpack.c.0.s8 %v2292
        %v2294 = vlaneseq
        %v2295 = vshrl.u32 %v2294, 7
        %v2296 = vsub.s32 %v2293, %v2295
        %v2297 = vrot.slane %v2283, %v2296
        %v2298 = vcombine.low %v2274, %v2290
        %v2299 = vcombine.high %v2274, %v2290
        %v2301 = vunpack.c.l.s4 1934713408
        %v2302 = vunpack.c.0.s8 %v2301
        %v2303 = vlaneseq
        %v2304 = vshrl.u32 %v2303, 7
        %v2305 = vsub.s32 %v2302, %v2304
        %v2306 = vrot.slane %v2298, %v2305
        %v2308 = vunpack.c.l.s4 1934713408
        %v2309 = vunpack.c.0.s8 %v2308
        %v2310 = vlaneseq
        %v2311 = vshrl.u32 %v2310, 7
        %v2312 = vsub.s32 %v2309, %v2311
        %v2313 = vrot.slane %v2299, %v2312
        %v2314 = vcombine.low %v2281, %v2297
        %v2315 = vcombine.high %v2306, 0.0
        %v2316 = vcombine.high %v2313, 0.0
        %v2317 = vcombine.low %v2306, %v2313
        %v2319 = vunpack.c.l.s4 1983009808
        %v2320 = vunpack.c.0.s8 %v2319
        %v2321 = vlaneseq
        %v2322 = vshrl.u32 %v2321, 7
        %v2323 = vsub.s32 %v2320, %v2322
        %v2324 = vrot.slane %v2317, %v2323
        %v2325 = vcombine.low %v2315, %v2316
        %v2327 = vunpack.c.l.s4 1983009808
        %v2328 = vunpack.c.0.s8 %v2327
        %v2329 = vlaneseq
        %v2330 = vshrl.u32 %v2329, 7
        %v2331 = vsub.s32 %v2328, %v2330
        %v2332 = vrot.slane %v2325, %v2331
        %v2334 = vunpack.c.l.s4 1934713408
        %v2335 = vunpack.c.0.s8 %v2334
        %v2336 = vlaneseq
        %v2337 = vshrl.u32 %v2336, 7
        %v2338 = vsub.s32 %v2335, %v2337
        %v2339 = vrot.slane %v2314, %v2338
        %v2341 = vunpack.c.l.s4 1983009808
        %v2342 = vunpack.c.0.s8 %v2341
        %v2343 = vlaneseq
        %v2344 = vshrl.u32 %v2343, 7
        %v2345 = vsub.s32 %v2342, %v2344
        %v2346 = vrot.slane %v2339, %v2345
        %v2347 = vcombine.low %v2324, %v2332
        %v2348 = vcombine.high %v2324, %v2332
        %v2350 = vunpack.c.l.s4 1934713408
        %v2351 = vunpack.c.0.s8 %v2350
        %v2352 = vlaneseq
        %v2353 = vshrl.u32 %v2352, 7
        %v2354 = vsub.s32 %v2351, %v2353
        %v2355 = vrot.slane %v2347, %v2354
        %v2357 = vunpack.c.l.s4 1934713408
        %v2358 = vunpack.c.0.s8 %v2357
        %v2359 = vlaneseq
        %v2360 = vshrl.u32 %v2359, 7
        %v2361 = vsub.s32 %v2358, %v2360
        %v2362 = vrot.slane %v2348, %v2361
        %v2363 = vcombine.high %v2346, 0.0
        %v2365 = vunpack.c.l.s4 1934713408
        %v2366 = vunpack.c.0.s8 %v2365
        %v2367 = vlaneseq
        %v2368 = vshrl.u32 %v2367, 7
        %v2369 = vsub.s32 %v2366, %v2368
        %v2370 = vrot.slane %v2346, %v2369
        %v2372 = vunpack.c.l.s4 1934713408
        %v2373 = vunpack.c.0.s8 %v2372
        %v2374 = vlaneseq
        %v2375 = vshrl.u32 %v2374, 7
        %v2376 = vsub.s32 %v2373, %v2375
        %v2377 = vrot.slane %v2363, %v2376
        %v2378 = vcombine.low %v2355, %v2370
        %v2379 = vcombine.high %v2355, %v2370
        %v2380 = vcombine.low %v2362, %v2377
        %v2381 = vcombine.high %v2362, %v2377
        %2383 = vrot.lane.b32.xlu0 %v2379, 8
        %v2384 = vpop.permute.xlu0 %2383
        %2387 = vrot.lane.b32.xlu0 %v2380, 16
        %v2388 = vpop.permute.xlu0 %2387
        %2391 = vrot.lane.b32.xlu0 %v2381, 24
        %v2392 = vpop.permute.xlu0 %2391
        %v2394 = vsel %vm1347, %v2378, %v2384
        %vm2395 = vcmask 130048
        %v2396 = vsel %vm2395, %v2394, %v2388
        %vm2397 = vcmask 195584
        %v2398 = vsel %vm2397, %v2396, %v2392
        %v2399 = vpack.c.bf16 %v2398, %v2398
        %v2400 = vld [vmem:[#allocation13] sm:$0x1]
        %v2402 = vlaneseq
        %v2403 = vshrl.u32 %v2402, 7
        %v2404 = vsub.s32 0, %v2403
        %v2405 = vrot.slane %v2400, %v2404
        %v2411 = vunpack.c.l.b16 %v715
        %v2412 = vunpack.c.l.b16 %v716
        %v2413 = vunpack.c.l.b16 %v717
        %v2414 = vunpack.c.l.b16 %v718
        %v2415 = vpack.c.b16 %v2412, %v2411
        %v2416 = vpack.c.b16 %v2414, %v2413
        %v2420 = vsel %vm671, %v2399, 0
        %2422 = vmatprep.subr.bf16.mxu0 0
        %2423 = vmatpush1.bf16.msra.mxu0 %v2415
        %2424 = vmatprep.subr.bf16.mxu0 0
        %2425 = vmatpush1.bf16.msra.mxu0 %v2416
        %2426 = vmatprep.subr.bf16.mxu0 0
        %2427 = vmatpush1.bf16.msra.mxu0 0
        %2428 = vmatprep.subr.bf16.mxu0 0
        %2429 = vmatpush1.bf16.msra.mxu0 0
        %2430 = vmatprep.subr.bf16.mxu0 0
        %2431 = vmatpush1.bf16.msra.mxu0 0
        %2432 = vmatprep.subr.bf16.mxu0 0
        %2433 = vmatpush1.bf16.msra.mxu0 0
        %2434 = vmatprep.subr.bf16.mxu0 0
        %2435 = vmatpush1.bf16.msra.mxu0 0
        %2436 = vmatprep.subr.bf16.mxu0 0
        %2437 = vmatpush1.bf16.msra.mxu0 0
        %2438 = vmatprep.subr.bf16.mxu0 0
        %2439 = vmatpush1.bf16.msra.mxu0 0
        %2440 = vmatprep.subr.bf16.mxu0 0
        %2441 = vmatpush1.bf16.msra.mxu0 0
        %2442 = vmatprep.subr.bf16.mxu0 0
        %2443 = vmatpush1.bf16.msra.mxu0 0
        %2444 = vmatprep.subr.bf16.mxu0 0
        %2445 = vmatpush1.bf16.msra.mxu0 0
        %2446 = vmatprep.subr.bf16.mxu0 0
        %2447 = vmatpush1.bf16.msra.mxu0 0
        %2448 = vmatprep.subr.bf16.mxu0 0
        %2449 = vmatpush1.bf16.msra.mxu0 0
        %2450 = vmatprep.subr.bf16.mxu0 0
        %2451 = vmatpush1.bf16.msra.mxu0 0
        %2452 = vmatprep.subr.bf16.mxu0 0
        %2453 = vmatpush1.bf16.msra.mxu0 0
        %2454 = vmatprep.mubr.bf16.mxu0 0
        %2455 = vmatmul.mubr.bf16.gmra.mrb[0].mxu0 %v2420
        %v2456 = vpop.f32.mrb[0].mxu0
        %v2457 = vadd.f32 %v2405, %v2456
        %v2458 = vpop.f32.mrb[0].mxu0
        %v2459 = vpop.f32.mrb[0].mxu0
        %v2460 = vpop.f32.mrb[0].mxu0
        %2461 = vdwg.mxu0
        %v2462 = vadd.f32 %v615, %v2457
        %v2463 = vld [vmem:[#allocation14] sm:$0x1]
        %v2464 = vld [vmem:[#allocation16] sm:$0x1]
        %v2465 = vsel %vm618, %v2462, 0.0
        %2466 = vadd.xlane.f32.xlu0 %v2465
        %v2467 = vpop.xlane.xlu0 %2466
        %v2468 = vmul.f32 %v2467, %v622
        %v2469 = vsub.f32 %v2462, %v2468
        %v2470 = vmul.f32 %v2469, %v2469
        %v2471 = vsel %vm618, %v2470, 0.0
        %2472 = vadd.xlane.f32.xlu0 %v2471
        %v2473 = vpop.xlane.xlu0 %2472
        %v2474 = vmul.f32 %v2473, %v622
        %v2475 = vadd.f32 %v2474, 1e-06
        %v2476 = vrsqrt.pop %v2475
        %v2477 = vmul.f32 %v2469, %v2476
        %v2479 = vlaneseq
        %v2480 = vshrl.u32 %v2479, 7
        %v2481 = vsub.s32 0, %v2480
        %v2482 = vrot.slane %v2463, %v2481
        %v2484 = vmul.f32 %v2477, %v2482
        %v2486 = vlaneseq
        %v2487 = vshrl.u32 %v2486, 7
        %v2488 = vsub.s32 0, %v2487
        %v2489 = vrot.slane %v2464, %v2488
        %v2491 = vadd.f32 %v2484, %v2489
        %v2492 = vld [vmem:[#allocation17] sm:$0xf]
        %v2493 = vld [vmem:[#allocation17 + $0x4] sm:$0xf]
        %v2494 = vld [vmem:[#allocation17 + $0x8] sm:$0xf]
        %v2495 = vld [vmem:[#allocation17 + $0xc] sm:$0xf]
        %v2496 = vpack.c.bf16 %v2491, %v2491
        %v2497 = vld [vmem:[#allocation19] sm:$0x1]
        %v2499 = vlaneseq
        %v2500 = vshrl.u32 %v2499, 7
        %v2501 = vsub.s32 0, %v2500
        %v2502 = vrot.slane %v2497, %v2501
        %v2508 = vunpack.c.l.b16 %v2492
        %v2509 = vunpack.c.l.b16 %v2493
        %v2510 = vunpack.c.l.b16 %v2494
        %v2511 = vunpack.c.l.b16 %v2495
        %v2512 = vpack.c.b16 %v2509, %v2508
        %v2513 = vpack.c.b16 %v2511, %v2510
        %v2517 = vsel %vm671, %v2496, 0
        %2519 = vmatprep.subr.bf16.mxu0 0
        %2520 = vmatpush1.bf16.msra.mxu0 %v2512
        %2521 = vmatprep.subr.bf16.mxu0 0
        %2522 = vmatpush1.bf16.msra.mxu0 %v2513
        %2523 = vmatprep.subr.bf16.mxu0 0
        %2524 = vmatpush1.bf16.msra.mxu0 0
        %2525 = vmatprep.subr.bf16.mxu0 0
        %2526 = vmatpush1.bf16.msra.mxu0 0
        %2527 = vmatprep.subr.bf16.mxu0 0
        %2528 = vmatpush1.bf16.msra.mxu0 0
        %2529 = vmatprep.subr.bf16.mxu0 0
        %2530 = vmatpush1.bf16.msra.mxu0 0
        %2531 = vmatprep.subr.bf16.mxu0 0
        %2532 = vmatpush1.bf16.msra.mxu0 0
        %2533 = vmatprep.subr.bf16.mxu0 0
        %2534 = vmatpush1.bf16.msra.mxu0 0
        %2535 = vmatprep.subr.bf16.mxu0 0
        %2536 = vmatpush1.bf16.msra.mxu0 0
        %2537 = vmatprep.subr.bf16.mxu0 0
        %2538 = vmatpush1.bf16.msra.mxu0 0
        %2539 = vmatprep.subr.bf16.mxu0 0
        %2540 = vmatpush1.bf16.msra.mxu0 0
        %2541 = vmatprep.subr.bf16.mxu0 0
        %2542 = vmatpush1.bf16.msra.mxu0 0
        %2543 = vmatprep.subr.bf16.mxu0 0
        %2544 = vmatpush1.bf16.msra.mxu0 0
        %2545 = vmatprep.subr.bf16.mxu0 0
        %2546 = vmatpush1.bf16.msra.mxu0 0
        %2547 = vmatprep.subr.bf16.mxu0 0
        %2548 = vmatpush1.bf16.msra.mxu0 0
        %2549 = vmatprep.subr.bf16.mxu0 0
        %2550 = vmatpush1.bf16.msra.mxu0 0
        %2551 = vmatprep.mubr.bf16.mxu0 0
        %2552 = vmatmul.mubr.bf16.gmra.mrb[0].mxu0 %v2517
        %v2553 = vpop.f32.mrb[0].mxu0
        %v2554 = vadd.f32 %v2502, %v2553
        %v2555 = vpop.f32.mrb[0].mxu0
        %v2556 = vpop.f32.mrb[0].mxu0
        %v2557 = vpop.f32.mrb[0].mxu0
        %2558 = vdwg.mxu0
        %v2559 = vmul.f32 %v2554, 0.5
        %v2560 = vmul.f32 %v2554, 0.044715
        %v2561 = vmul.f32 %v2560, %v2554
        %v2562 = vmul.f32 %v2561, %v2554
        %v2563 = vadd.f32 %v2554, %v2562
        %v2564 = vmul.f32 %v2563, 0.7978846
        %v2565 = vtanh.pop %v2564
        %v2566 = vadd.f32 %v2565, 1.0
        %v2567 = vmul.f32 %v2559, %v2566
        %v2568 = vld [vmem:[#allocation20] sm:$0xf]
        %v2569 = vld [vmem:[#allocation20 + $0x4] sm:$0xf]
        %v2570 = vld [vmem:[#allocation20 + $0x8] sm:$0xf]
        %v2571 = vld [vmem:[#allocation20 + $0xc] sm:$0xf]
        %v2572 = vld [vmem:[#allocation20 + $0x10] sm:$0xf]
        %v2573 = vld [vmem:[#allocation20 + $0x14] sm:$0xf]
        %v2574 = vld [vmem:[#allocation20 + $0x18] sm:$0xf]
        %v2575 = vld [vmem:[#allocation20 + $0x1c] sm:$0xf]
        %v2576 = vld [vmem:[#allocation20 + $0x20] sm:$0xf]
        %v2577 = vld [vmem:[#allocation20 + $0x24] sm:$0xf]
        %v2578 = vld [vmem:[#allocation20 + $0x28] sm:$0xf]
        %v2579 = vld [vmem:[#allocation20 + $0x2c] sm:$0xf]
        %v2580 = vld [vmem:[#allocation20 + $0x30] sm:$0xf]
        %v2581 = vld [vmem:[#allocation20 + $0x34] sm:$0xf]
        %v2582 = vld [vmem:[#allocation20 + $0x38] sm:$0xf]
        %v2583 = vld [vmem:[#allocation20 + $0x3c] sm:$0xf]
        %v2584 = vpack.c.bf16 %v2567, %v2567
        %v2601 = vunpack.c.l.b16 %v2568
        %v2602 = vunpack.c.l.b16 %v2569
        %v2603 = vunpack.c.l.b16 %v2570
        %v2604 = vunpack.c.l.b16 %v2571
        %v2605 = vunpack.c.l.b16 %v2572
        %v2606 = vunpack.c.l.b16 %v2573
        %v2607 = vunpack.c.l.b16 %v2574
        %v2608 = vunpack.c.l.b16 %v2575
        %v2609 = vunpack.c.l.b16 %v2576
        %v2610 = vunpack.c.l.b16 %v2577
        %v2611 = vunpack.c.l.b16 %v2578
        %v2612 = vunpack.c.l.b16 %v2579
        %v2613 = vunpack.c.l.b16 %v2580
        %v2614 = vunpack.c.l.b16 %v2581
        %v2615 = vunpack.c.l.b16 %v2582
        %v2616 = vunpack.c.l.b16 %v2583
        %v2617 = vpack.c.b16 %v2602, %v2601
        %v2618 = vpack.c.b16 %v2604, %v2603
        %v2619 = vpack.c.b16 %v2606, %v2605
        %v2620 = vpack.c.b16 %v2608, %v2607
        %v2621 = vpack.c.b16 %v2610, %v2609
        %v2622 = vpack.c.b16 %v2612, %v2611
        %v2623 = vpack.c.b16 %v2614, %v2613
        %v2624 = vpack.c.b16 %v2616, %v2615
        %2633 = vmatprep.subr.bf16.mxu0 0
        %2634 = vmatpush1.bf16.msra.mxu0 %v2617
        %2635 = vmatprep.subr.bf16.mxu0 0
        %2636 = vmatpush1.bf16.msra.mxu0 %v2618
        %2637 = vmatprep.subr.bf16.mxu0 0
        %2638 = vmatpush1.bf16.msra.mxu0 %v2619
        %2639 = vmatprep.subr.bf16.mxu0 0
        %2640 = vmatpush1.bf16.msra.mxu0 %v2620
        %2641 = vmatprep.subr.bf16.mxu0 0
        %2642 = vmatpush1.bf16.msra.mxu0 %v2621
        %2643 = vmatprep.subr.bf16.mxu0 0
        %2644 = vmatpush1.bf16.msra.mxu0 %v2622
        %2645 = vmatprep.subr.bf16.mxu0 0
        %2646 = vmatpush1.bf16.msra.mxu0 %v2623
        %2647 = vmatprep.subr.bf16.mxu0 0
        %2648 = vmatpush1.bf16.msra.mxu0 %v2624
        %2649 = vmatprep.subr.bf16.mxu0 0
        %2650 = vmatpush1.bf16.msra.mxu0 0
        %2651 = vmatprep.subr.bf16.mxu0 0
        %2652 = vmatpush1.bf16.msra.mxu0 0
        %2653 = vmatprep.subr.bf16.mxu0 0
        %2654 = vmatpush1.bf16.msra.mxu0 0
        %2655 = vmatprep.subr.bf16.mxu0 0
        %2656 = vmatpush1.bf16.msra.mxu0 0
        %2657 = vmatprep.subr.bf16.mxu0 0
        %2658 = vmatpush1.bf16.msra.mxu0 0
        %2659 = vmatprep.subr.bf16.mxu0 0
        %2660 = vmatpush1.bf16.msra.mxu0 0
        %2661 = vmatprep.subr.bf16.mxu0 0
        %2662 = vmatpush1.bf16.msra.mxu0 0
        %2663 = vmatprep.subr.bf16.mxu0 0
        %2664 = vmatpush1.bf16.msra.mxu0 0
        %2665 = vmatprep.mubr.bf16.mxu0 0
        %2666 = vmatmul.mubr.bf16.gmra.mrb[0].mxu0 %v2584
        %v2667 = vpop.f32.mrb[0].mxu0
        %v2668 = vadd.f32 0.0, %v2667
        %v2669 = vpop.f32.mrb[0].mxu0
        %v2670 = vpop.f32.mrb[0].mxu0
        %v2671 = vpop.f32.mrb[0].mxu0
        %2672 = vdwg.mxu0
        %v2673 = vadd.f32 %v2462, %v2668
        %v2674 = vld [vmem:[#allocation22] sm:$0x1]
        %v2676 = vlaneseq
        %v2677 = vshrl.u32 %v2676, 7
        %v2678 = vsub.s32 0, %v2677
        %v2679 = vrot.slane %v2674, %v2678
        %v2681 = vadd.f32 %v2673, %v2679
        %2682 = vst.msk [vmem:[%s613] sm:$0x1f] %vm618, %v2681
        %s2683 = sand.u32 %s322, 1
        %s2684 = scalar_lea.sflag [#allocation4], %s2683
        %s2685 = sand.u32 %s322, 1
        %s2686 = smul.addr %s2685, 8
        %s2687 = scalar_lea.vmem [#allocation23], %s2686
        // Predicated region
        $region125: #{blip_base_forward.4} parent=71 // pred_check
          %p2688 = pneg %p332
        $region126: #{blip_base_forward.4} parent=71 // pred_check_branch
          %2690 = sbr.rel (%p2688) target = $region128
        $region127: #{blip_base_forward.4} parent=71 // pred_region
          %s2692 = ssub.s32 128, 128
          %2693 = vsyncadd %s2684, %s2692
          %s2694 = smul.addr %s36, 128
          %s2695 = scalar_lea.hbm %s13, %s2694
          %s2697 = sshll.u32 %s2687, 4
          %s2698 = int_to_ptr.vmem [resolvable:$true] %s2697
          %2700 = dma.vmem_to_hbm [thread:$0]  %s2698, 128, %s2695, %s2684
        $region128: #{blip_base_forward.4} parent=71 // pred_fallthru
          _
      $region72: #{blip_base_forward.4} parent=5 // pred_fallthru
        _
      %p2701 = scmp.le.s32.totalorder 2, %s31
      // Predicated region
      $region129: #{blip_base_forward.4} parent=5 // pred_check
        %p2702 = pneg %p2701
      $region130: #{blip_base_forward.4} parent=5 // pred_check_branch
        %2704 = sbr.rel (%p2702) target = $region132
      $region131: #{blip_base_forward.4} parent=5 // pred_region
        %s2705 = ssub.s32 %s31, 2
        // Predicated region
        $region133: #{blip_base_forward.4} parent=131 // pred_check
          %p2706 = pneg %p338
        $region134: #{blip_base_forward.4} parent=131 // pred_check_branch
          %2708 = sbr.rel (%p2706) target = $region136
        $region135: #{blip_base_forward.4} parent=131 // pred_region
          %s2709 = sand.u32 %s323, 1
          %s2710 = scalar_lea.sflag [#allocation4], %s2709
          %s2711 = sand.u32 %s323, 1
          %s2712 = smul.addr %s2711, 8
          %s2713 = scalar_lea.vmem [#allocation23], %s2712
          %2714 = dma.done %s2710, 128
        $region136: #{blip_base_forward.4} parent=131 // pred_fallthru
          _
      $region132: #{blip_base_forward.4} parent=5 // pred_fallthru
        _
    $region6: #{blip_base_forward.4} parent=1 // loop_footer
      %s35 = sadd.s32 1, %s31
    $region7: #{blip_base_forward.4} parent=1 // loop_footer_branch
      %30 = sbr.rel target = $region3
    $region8: #{blip_base_forward.4} parent=1 // loop_exit
      _
    %2715 = vsyncpa [#allocation3], 1
    %s2716 = scalar_lea.sflag [#allocation3], 1
    %2717 = vsyncpa %s2716, 1
    %2718 = vsyncpa [#allocation6], 1
    %2719 = vsyncpa [#allocation9], 1
    %2720 = vsyncpa [#allocation12], 1
    %2721 = vsyncpa [#allocation15], 1
    %2722 = vsyncpa [#allocation18], 1
    %2723 = vsyncpa [#allocation21], 1
    %2724 = vsyncpa [#allocation4], 1
    %s2725 = scalar_lea.sflag [#allocation4], 1
    %2726 = vsyncpa %s2725, 1

</llo_original>
